<compile_context>
chip_gen: v6e
topology: v6e:2x2x1
jax: 0.10.0
libtpu: 0.0.40
codegen_flags: <defaults>
</compile_context>

<pallas_src>
import jax
import jax.numpy as jnp
from jax.experimental import pallas as pl
from jax.experimental.pallas import tpu as pltpu


def _round_up(x, m):
    return ((x + m - 1) // m) * m


# ---------------------------------------------------------------------------
# Fused conv kernel: sum_t relu?(x[shift_t : shift_t+tm]) @ w[t]  + b (+ res)
# ---------------------------------------------------------------------------
def _make_conv_kernel(shifts, tm, relu_in, has_residual, mm_dtype):
    def body(x_ref, w_ref, b_ref, res_ref, o_ref, acc_ref):
        acc_ref[...] = jnp.zeros_like(acc_ref)
        for t, s in enumerate(shifts):                     # static unroll
            lhs = x_ref[0, 0, pl.ds(s, tm), :]             # (tm, Cin) f32
            if relu_in:
                lhs = jnp.maximum(lhs, 0.0)
            acc_ref[...] += jnp.dot(                        # bf16 x bf16 -> f32
                lhs.astype(mm_dtype), w_ref[t],
                preferred_element_type=jnp.float32)
        out = acc_ref[...] + b_ref[...]                     # (tm,Cout) + (1,Cout)
        if has_residual:
            out = out + res_ref[0].astype(jnp.float32)
        o_ref[0] = out.astype(o_ref.dtype)

    if has_residual:
        def kernel(x_ref, w_ref, b_ref, res_ref, o_ref, acc_ref):
            body(x_ref, w_ref, b_ref, res_ref, o_ref, acc_ref)
    else:
        def kernel(x_ref, w_ref, b_ref, o_ref, acc_ref):
            body(x_ref, w_ref, b_ref, None, o_ref, acc_ref)
    return kernel


def conv2d_pallas(x_nhwc, w_hwio, b, *, pad, relu_in=False, residual=None,
                  mm_dtype=jnp.bfloat16, tile_rows=2048):
    """Stride-1 KhxKw conv with fused bias / input-ReLU / residual add.

    `pad` is ((pad_top, pad_bottom), (pad_left, pad_right)).

    The padded image is flattened to (Hp*Wp, Cin) rows; output is computed on a
    virtual Ho x Wp grid (the last Kw-1 columns per row are garbage and sliced
    off), so each tap is a contiguous row-shifted slice of the halo tile — no
    im2col materialisation and no in-kernel reshapes.
    """
    N, H, W, Cin = x_nhwc.shape
    Kh, Kw = w_hwio.shape[0], w_hwio.shape[1]
    Cout = w_hwio.shape[-1]
    (ph0, ph1), (pw0, pw1) = pad

    xp = jnp.pad(x_nhwc, ((0, 0), (ph0, ph1), (pw0, pw1), (0, 0)))
    Hp, Wp = H + ph0 + ph1, W + pw0 + pw1
    Ho, Wo = Hp - Kh + 1, Wp - Kw + 1

    M = Ho * Wp                                  # virtual output rows
    tm = min(int(tile_rows), _round_up(M, 8))
    tm = _round_up(tm, 8)
    n_tiles = -(-M // tm)
    halo = (Kh - 1) * Wp + (Kw - 1)
    shifts = tuple(ky * Wp + kx for ky in range(Kh) for kx in range(Kw))

    # Flatten rows and build halo tiles (only ~halo/tm duplication, vs K*K for
    # im2col); BlockSpec then auto-double-buffers the DMA.
    xf = xp.reshape(N, Hp * Wp, Cin)
    rows_needed = n_tiles * tm + halo
    xf = jnp.pad(xf, ((0, 0), (0, rows_needed - Hp * Wp), (0, 0)))
    if n_tiles == 1:
        x_tiles = xf[:, None, :, :]                              # (N,1,tm+halo,Cin)
    else:
        x_tiles = jnp.stack(
            [xf[:, i * tm:i * tm + tm + halo, :] for i in range(n_tiles)], axis=1)

    w_taps = w_hwio.reshape(Kh * Kw, Cin, Cout).astype(mm_dtype)  # resident
    b2 = b.reshape(1, Cout).astype(jnp.float32)

    args = [x_tiles, w_taps, b2]
    in_specs = [
        pl.BlockSpec((1, 1, tm + halo, Cin), lambda n, i: (n, i, 0, 0)),
        pl.BlockSpec((Kh * Kw, Cin, Cout), lambda n, i: (0, 0, 0)),
        pl.BlockSpec((1, Cout), lambda n, i: (0, 0)),
    ]
    if residual is not None:
        res = residual                                            # (N, Ho, Wo, Cout)
        if res.shape[2] != Wp:
            res = jnp.pad(res, ((0, 0), (0, 0), (0, Wp - res.shape[2]), (0, 0)))
        res = res.reshape(N, Ho * Wp, Cout)
        res = jnp.pad(res, ((0, 0), (0, n_tiles * tm - Ho * Wp), (0, 0)))
        args.append(res)
        in_specs.append(pl.BlockSpec((1, tm, Cout), lambda n, i: (n, i, 0)))

    kernel = _make_conv_kernel(shifts, tm, relu_in, residual is not None, mm_dtype)

    out = pl.pallas_call(
        kernel,
        out_shape=jax.ShapeDtypeStruct((N, n_tiles * tm, Cout), x_nhwc.dtype),
        grid=(N, n_tiles),
        in_specs=in_specs,
        out_specs=pl.BlockSpec((1, tm, Cout), lambda n, i: (n, i, 0)),
        scratch_shapes=[pltpu.VMEM((tm, Cout), jnp.float32)],
        compiler_params=pltpu.CompilerParams(
            dimension_semantics=("parallel", "parallel")),
    )(*args)

    out = out[:, :M].reshape(N, Ho, Wp, Cout)[:, :, :Wo, :]
    return out


def conv_transpose2d_pallas(x_nhwc, w_t, b, *, relu_in=False,
                            mm_dtype=jnp.bfloat16):
    """PyTorch ConvTranspose2d(Cin, Cout, 4, stride=2, padding=1).

    Phase (sub-pixel) decomposition: each output parity (py, px) is a 2x2
    stride-1 conv over the *un-dilated* input using a 2x2 subset of the flipped
    4x4 kernel — no zero-insertion, 4x fewer MACs.  The folded input-ReLU is
    valid because relu(0) == 0 on the padded zeros.
    """
    N, H, W, Cin = x_nhwc.shape
    Cout = w_t.shape[1]
    wf = jnp.transpose(w_t[:, :, ::-1, ::-1], (2, 3, 0, 1))   # (4,4,Cin,Cout), flipped

    phase_out = []
    for py in (0, 1):
        for px in (0, 1):
            w_sub = wf[(0 if py == 0 else 1)::2, (0 if px == 0 else 1)::2]  # (2,2,..)
            pad_h = (1, 0) if py == 0 else (0, 1)
            pad_w = (1, 0) if px == 0 else (0, 1)
            phase_out.append(
                conv2d_pallas(x_nhwc, w_sub, b, pad=(pad_h, pad_w),
                              relu_in=relu_in, mm_dtype=mm_dtype))

    y = jnp.stack(phase_out, axis=3)                      # (N,H,W,4,Cout)
    y = y.reshape(N, H, W, 2, 2, Cout)
    y = jnp.transpose(y, (0, 1, 3, 2, 4, 5)).reshape(N, 2 * H, 2 * W, Cout)
    return y


# ---------------------------------------------------------------------------
# Decoder: parameter init + forward
# ---------------------------------------------------------------------------
def init_decoder_params(key, in_channel, out_channel, channel,
                        n_res_block, n_res_channel, stride):
    def conv_p(k, ksz, cin, cout):
        kw, kb = jax.random.split(k)
        bound = 1.0 / (cin * ksz * ksz) ** 0.5
        w = jax.random.uniform(kw, (ksz, ksz, cin, cout), jnp.float32, -bound, bound)
        bb = jax.random.uniform(kb, (cout,), jnp.float32, -bound, bound)
        return w, bb

    def convt_p(k, ksz, cin, cout):
        kw, kb = jax.random.split(k)
        bound = 1.0 / (cin * ksz * ksz) ** 0.5
        w = jax.random.uniform(kw, (cin, cout, ksz, ksz), jnp.float32, -bound, bound)
        bb = jax.random.uniform(kb, (cout,), jnp.float32, -bound, bound)
        return w, bb

    n_keys = 1 + 2 * n_res_block + (2 if stride == 4 else 1)
    keys = iter(jax.random.split(key, n_keys))
    params = {"conv_in": conv_p(next(keys), 3, in_channel, channel)}
    for i in range(n_res_block):
        params[f"res{i}_conv1"] = conv_p(next(keys), 3, channel, n_res_channel)
        params[f"res{i}_conv2"] = conv_p(next(keys), 1, n_res_channel, channel)
    if stride == 4:
        params["convt1"] = convt_p(next(keys), 4, channel, channel // 2)
        params["convt2"] = convt_p(next(keys), 4, channel // 2, out_channel)
    elif stride == 2:
        params["convt1"] = convt_p(next(keys), 4, channel, out_channel)
    return params


def decoder_forward(params, x_nchw, *, n_res_block, stride,
                    mm_dtype=jnp.bfloat16):
    pad1 = ((1, 1), (1, 1))
    pad0 = ((0, 0), (0, 0))
    x = jnp.transpose(x_nchw, (0, 2, 3, 1))                  # NCHW -> NHWC
    w, b = params["conv_in"]
    x = conv2d_pallas(x, w, b, pad=pad1, mm_dtype=mm_dtype)
    for i in range(n_res_block):
        w1, b1 = params[f"res{i}_conv1"]
        w2, b2 = params[f"res{i}_conv2"]
        h = conv2d_pallas(x, w1, b1, pad=pad1, relu_in=True, mm_dtype=mm_dtype)
        x = conv2d_pallas(h, w2, b2, pad=pad0, relu_in=True,
                          residual=x, mm_dtype=mm_dtype)
    # trailing nn.ReLU is folded into the first transposed conv (relu_in=True)
    if stride == 4:
        wt1, bt1 = params["convt1"]
        x = conv_transpose2d_pallas(x, wt1, bt1, relu_in=True, mm_dtype=mm_dtype)
        wt2, bt2 = params["convt2"]
        x = conv_transpose2d_pallas(x, wt2, bt2, relu_in=True, mm_dtype=mm_dtype)
    elif stride == 2:
        wt, bt = params["convt1"]
        x = conv_transpose2d_pallas(x, wt, bt, relu_in=True, mm_dtype=mm_dtype)
    return jnp.transpose(x, (0, 3, 1, 2))                    # NHWC -> NCHW


# ---------------------------------------------------------------------------
# Pure-JAX reference (lax convolutions, same bf16-operand / f32-accum math)
# ---------------------------------------------------------------------------
def decoder_forward_ref(params, x_nchw, *, n_res_block, stride,
                        mm_dtype=jnp.bfloat16):
    dn = ("NHWC", "HWIO", "NHWC")

    def conv(x, w, b, pad):
        y = jax.lax.conv_general_dilated(
            x.astype(mm_dtype), w.astype(mm_dtype), (1, 1), [(pad, pad)] * 2,
            dimension_numbers=dn, preferred_element_type=jnp.float32)
        return y + b

    def convt(x, w_t, b):
        K, S, P = 4, 2, 1
        w_eff = jnp.transpose(w_t[:, :, ::-1, ::-1], (2, 3, 0, 1))
        y = jax.lax.conv_general_dilated(
            x.astype(mm_dtype), w_eff.astype(mm_dtype), (1, 1),
            [(K - 1 - P, K - 1 - P)] * 2, lhs_dilation=(S, S),
            dimension_numbers=dn, preferred_element_type=jnp.float32)
        return y + b

    x = jnp.transpose(x_nchw, (0, 2, 3, 1))
    w, b = params["conv_in"]
    x = conv(x, w, b, 1)
    for i in range(n_res_block):
        w1, b1 = params[f"res{i}_conv1"]
        w2, b2 = params[f"res{i}_conv2"]
        h = conv(jax.nn.relu(x), w1, b1, 1)
        x = x + conv(jax.nn.relu(h), w2, b2, 0)
    x = jax.nn.relu(x)
    if stride == 4:
        wt1, bt1 = params["convt1"]
        x = jax.nn.relu(convt(x, wt1, bt1))
        wt2, bt2 = params["convt2"]
        x = convt(x, wt2, bt2)
    elif stride == 2:
        wt, bt = params["convt1"]
        x = convt(x, wt, bt)
    return jnp.transpose(x, (0, 3, 1, 2))


if __name__ == "__main__":
    # Small, module-consistent shapes.
    in_channel, out_channel = 4, 3
    channel, n_res_block, n_res_channel, stride = 32, 2, 16, 4
    N, H, W = 2, 8, 8

    kx, kp = jax.random.split(jax.random.PRNGKey(0))
    x = jax.random.normal(kx, (N, in_channel, H, W), jnp.float32)
    params = init_decoder_params(kp, in_channel, out_channel, channel,
                                 n_res_block, n_res_channel, stride)

    fwd = jax.jit(lambda p, xx: decoder_forward(
        p, xx, n_res_block=n_res_block, stride=stride))
    out = jax.block_until_ready(fwd(params, x))
    assert out.shape == (N, out_channel, H * 4, W * 4), out.shape

    ref = decoder_forward_ref(params, x, n_res_block=n_res_block, stride=stride)
    ref = jax.block_until_ready(ref)
    max_err = float(jnp.max(jnp.abs(out - ref)))
    assert max_err < 1e-2, f"max abs err {max_err}"

    print("KERNEL_OK")
</pallas_src>

<mosaic_0001>
module attributes {stable_mosaic.version = 11 : i64} {
  func.func @kernel(%arg0: i32, %arg1: i32, %arg2: memref<1x1x102x4xf32, #tpu.memory_space<vmem>>, %arg3: memref<9x4x32xbf16, #tpu.memory_space<vmem>>, %arg4: memref<1x32xf32, #tpu.memory_space<vmem>>, %arg5: memref<1x80x32xf32, #tpu.memory_space<vmem>>, %arg6: memref<80x32xf32, #tpu.memory_space<vmem>>) attributes {dimension_semantics = [#tpu.dimension_semantics<parallel>, #tpu.dimension_semantics<parallel>], iteration_bounds = array<i64: 2, 1>, scalar_prefetch = 0 : i64, scratch_operands = 1 : i64, tpu.core_type = #tpu.core_type<tc>, window_params = [{transform_indices = @transform_0, window_bounds = array<i64: 1, 1, 102, 4>}, {pipeline_mode = #tpu.pipeline_mode<synchronous>, transform_indices = @transform_1, window_bounds = array<i64: 9, 4, 32>}, {pipeline_mode = #tpu.pipeline_mode<synchronous>, transform_indices = @transform_2, window_bounds = array<i64: 1, 32>}, {transform_indices = @transform_3, window_bounds = array<i64: 1, 80, 32>}]} {
    %cst = arith.constant 0.000000e+00 : f32
    %0 = vector.broadcast %cst : f32 to vector<80x32xf32>
    %c0 = arith.constant 0 : index
    %c0_0 = arith.constant 0 : index
    %1 = vector.load %arg6[%c0, %c0_0] : memref<80x32xf32, #tpu.memory_space<vmem>>, vector<80x32xf32>
    tpu.vector_store %arg6[%c0, %c0_0], %0 {strides = array<i32>} : memref<80x32xf32, #tpu.memory_space<vmem>>, vector<80x32xf32>,
    %c0_1 = arith.constant 0 : index
    %c0_2 = arith.constant 0 : index
    %c0_3 = arith.constant 0 : index
    %c0_4 = arith.constant 0 : index
    %2 = vector.load %arg2[%c0_1, %c0_2, %c0_3, %c0_4] : memref<1x1x102x4xf32, #tpu.memory_space<vmem>>, vector<1x1x80x4xf32>
    %3 = vector.shape_cast %2 : vector<1x1x80x4xf32> to vector<80x4xf32>
    %c0_5 = arith.constant 0 : index
    %c0_6 = arith.constant 0 : index
    %4 = vector.load %arg6[%c0_5, %c0_6] : memref<80x32xf32, #tpu.memory_space<vmem>>, vector<80x32xf32>
    %5 = arith.truncf %3 : vector<80x4xf32> to vector<80x4xbf16>
    %c0_7 = arith.constant 0 : index
    %c0_8 = arith.constant 0 : index
    %c0_9 = arith.constant 0 : index
    %6 = vector.load %arg3[%c0_7, %c0_8, %c0_9] : memref<9x4x32xbf16, #tpu.memory_space<vmem>>, vector<1x4x32xbf16>
    %7 = vector.shape_cast %6 : vector<1x4x32xbf16> to vector<4x32xbf16>
    %cst_10 = arith.constant dense<0.000000e+00> : vector<80x32xf32>
    %8 = tpu.matmul %5, %7, %cst_10 {dimension_numbers = #tpu.dot_dimension_numbers<[1], [0], [0], [1], [0, 0, 1, 1], [], []>} : vector<80x4xbf16>, vector<4x32xbf16>, vector<80x32xf32> -> vector<80x32xf32>
    %9 = arith.addf %4, %8 : vector<80x32xf32>
    %c0_11 = arith.constant 0 : index
    %c0_12 = arith.constant 0 : index
    %10 = vector.load %arg6[%c0_11, %c0_12] : memref<80x32xf32, #tpu.memory_space<vmem>>, vector<80x32xf32>
    tpu.vector_store %arg6[%c0_11, %c0_12], %9 {strides = array<i32>} : memref<80x32xf32, #tpu.memory_space<vmem>>, vector<80x32xf32>,
    %c0_13 = arith.constant 0 : index
    %c0_14 = arith.constant 0 : index
    %c1 = arith.constant 1 : index
    %c0_15 = arith.constant 0 : index
    %11 = vector.load %arg2[%c0_13, %c0_14, %c1, %c0_15] : memref<1x1x102x4xf32, #tpu.memory_space<vmem>>, vector<1x1x80x4xf32>
    %12 = vector.shape_cast %11 : vector<1x1x80x4xf32> to vector<80x4xf32>
    %c0_16 = arith.constant 0 : index
    %c0_17 = arith.constant 0 : index
    %13 = vector.load %arg6[%c0_16, %c0_17] : memref<80x32xf32, #tpu.memory_space<vmem>>, vector<80x32xf32>
    %14 = arith.truncf %12 : vector<80x4xf32> to vector<80x4xbf16>
    %c1_18 = arith.constant 1 : index
    %c0_19 = arith.constant 0 : index
    %c0_20 = arith.constant 0 : index
    %15 = vector.load %arg3[%c1_18, %c0_19, %c0_20] : memref<9x4x32xbf16, #tpu.memory_space<vmem>>, vector<1x4x32xbf16>
    %16 = vector.shape_cast %15 : vector<1x4x32xbf16> to vector<4x32xbf16>
    %cst_21 = arith.constant dense<0.000000e+00> : vector<80x32xf32>
    %17 = tpu.matmul %14, %16, %cst_21 {dimension_numbers = #tpu.dot_dimension_numbers<[1], [0], [0], [1], [0, 0, 1, 1], [], []>} : vector<80x4xbf16>, vector<4x32xbf16>, vector<80x32xf32> -> vector<80x32xf32>
    %18 = arith.addf %13, %17 : vector<80x32xf32>
    %c0_22 = arith.constant 0 : index
    %c0_23 = arith.constant 0 : index
    %19 = vector.load %arg6[%c0_22, %c0_23] : memref<80x32xf32, #tpu.memory_space<vmem>>, vector<80x32xf32>
    tpu.vector_store %arg6[%c0_22, %c0_23], %18 {strides = array<i32>} : memref<80x32xf32, #tpu.memory_space<vmem>>, vector<80x32xf32>,
    %c0_24 = arith.constant 0 : index
    %c0_25 = arith.constant 0 : index
    %c2 = arith.constant 2 : index
    %c0_26 = arith.constant 0 : index
    %20 = vector.load %arg2[%c0_24, %c0_25, %c2, %c0_26] : memref<1x1x102x4xf32, #tpu.memory_space<vmem>>, vector<1x1x80x4xf32>
    %21 = vector.shape_cast %20 : vector<1x1x80x4xf32> to vector<80x4xf32>
    %c0_27 = arith.constant 0 : index
    %c0_28 = arith.constant 0 : index
    %22 = vector.load %arg6[%c0_27, %c0_28] : memref<80x32xf32, #tpu.memory_space<vmem>>, vector<80x32xf32>
    %23 = arith.truncf %21 : vector<80x4xf32> to vector<80x4xbf16>
    %c2_29 = arith.constant 2 : index
    %c0_30 = arith.constant 0 : index
    %c0_31 = arith.constant 0 : index
    %24 = vector.load %arg3[%c2_29, %c0_30, %c0_31] : memref<9x4x32xbf16, #tpu.memory_space<vmem>>, vector<1x4x32xbf16>
    %25 = vector.shape_cast %24 : vector<1x4x32xbf16> to vector<4x32xbf16>
    %cst_32 = arith.constant dense<0.000000e+00> : vector<80x32xf32>
    %26 = tpu.matmul %23, %25, %cst_32 {dimension_numbers = #tpu.dot_dimension_numbers<[1], [0], [0], [1], [0, 0, 1, 1], [], []>} : vector<80x4xbf16>, vector<4x32xbf16>, vector<80x32xf32> -> vector<80x32xf32>
    %27 = arith.addf %22, %26 : vector<80x32xf32>
    %c0_33 = arith.constant 0 : index
    %c0_34 = arith.constant 0 : index
    %28 = vector.load %arg6[%c0_33, %c0_34] : memref<80x32xf32, #tpu.memory_space<vmem>>, vector<80x32xf32>
    tpu.vector_store %arg6[%c0_33, %c0_34], %27 {strides = array<i32>} : memref<80x32xf32, #tpu.memory_space<vmem>>, vector<80x32xf32>,
    %c0_35 = arith.constant 0 : index
    %c0_36 = arith.constant 0 : index
    %c10 = arith.constant 10 : index
    %c0_37 = arith.constant 0 : index
    %29 = vector.load %arg2[%c0_35, %c0_36, %c10, %c0_37] : memref<1x1x102x4xf32, #tpu.memory_space<vmem>>, vector<1x1x80x4xf32>
    %30 = vector.shape_cast %29 : vector<1x1x80x4xf32> to vector<80x4xf32>
    %c0_38 = arith.constant 0 : index
    %c0_39 = arith.constant 0 : index
    %31 = vector.load %arg6[%c0_38, %c0_39] : memref<80x32xf32, #tpu.memory_space<vmem>>, vector<80x32xf32>
    %32 = arith.truncf %30 : vector<80x4xf32> to vector<80x4xbf16>
    %c3 = arith.constant 3 : index
    %c0_40 = arith.constant 0 : index
    %c0_41 = arith.constant 0 : index
    %33 = vector.load %arg3[%c3, %c0_40, %c0_41] : memref<9x4x32xbf16, #tpu.memory_space<vmem>>, vector<1x4x32xbf16>
    %34 = vector.shape_cast %33 : vector<1x4x32xbf16> to vector<4x32xbf16>
    %cst_42 = arith.constant dense<0.000000e+00> : vector<80x32xf32>
    %35 = tpu.matmul %32, %34, %cst_42 {dimension_numbers = #tpu.dot_dimension_numbers<[1], [0], [0], [1], [0, 0, 1, 1], [], []>} : vector<80x4xbf16>, vector<4x32xbf16>, vector<80x32xf32> -> vector<80x32xf32>
    %36 = arith.addf %31, %35 : vector<80x32xf32>
    %c0_43 = arith.constant 0 : index
    %c0_44 = arith.constant 0 : index
    %37 = vector.load %arg6[%c0_43, %c0_44] : memref<80x32xf32, #tpu.memory_space<vmem>>, vector<80x32xf32>
    tpu.vector_store %arg6[%c0_43, %c0_44], %36 {strides = array<i32>} : memref<80x32xf32, #tpu.memory_space<vmem>>, vector<80x32xf32>,
    %c0_45 = arith.constant 0 : index
    %c0_46 = arith.constant 0 : index
    %c11 = arith.constant 11 : index
    %c0_47 = arith.constant 0 : index
    %38 = vector.load %arg2[%c0_45, %c0_46, %c11, %c0_47] : memref<1x1x102x4xf32, #tpu.memory_space<vmem>>, vector<1x1x80x4xf32>
    %39 = vector.shape_cast %38 : vector<1x1x80x4xf32> to vector<80x4xf32>
    %c0_48 = arith.constant 0 : index
    %c0_49 = arith.constant 0 : index
    %40 = vector.load %arg6[%c0_48, %c0_49] : memref<80x32xf32, #tpu.memory_space<vmem>>, vector<80x32xf32>
    %41 = arith.truncf %39 : vector<80x4xf32> to vector<80x4xbf16>
    %c4 = arith.constant 4 : index
    %c0_50 = arith.constant 0 : index
    %c0_51 = arith.constant 0 : index
    %42 = vector.load %arg3[%c4, %c0_50, %c0_51] : memref<9x4x32xbf16, #tpu.memory_space<vmem>>, vector<1x4x32xbf16>
    %43 = vector.shape_cast %42 : vector<1x4x32xbf16> to vector<4x32xbf16>
    %cst_52 = arith.constant dense<0.000000e+00> : vector<80x32xf32>
    %44 = tpu.matmul %41, %43, %cst_52 {dimension_numbers = #tpu.dot_dimension_numbers<[1], [0], [0], [1], [0, 0, 1, 1], [], []>} : vector<80x4xbf16>, vector<4x32xbf16>, vector<80x32xf32> -> vector<80x32xf32>
    %45 = arith.addf %40, %44 : vector<80x32xf32>
    %c0_53 = arith.constant 0 : index
    %c0_54 = arith.constant 0 : index
    %46 = vector.load %arg6[%c0_53, %c0_54] : memref<80x32xf32, #tpu.memory_space<vmem>>, vector<80x32xf32>
    tpu.vector_store %arg6[%c0_53, %c0_54], %45 {strides = array<i32>} : memref<80x32xf32, #tpu.memory_space<vmem>>, vector<80x32xf32>,
    %c0_55 = arith.constant 0 : index
    %c0_56 = arith.constant 0 : index
    %c12 = arith.constant 12 : index
    %c0_57 = arith.constant 0 : index
    %47 = vector.load %arg2[%c0_55, %c0_56, %c12, %c0_57] : memref<1x1x102x4xf32, #tpu.memory_space<vmem>>, vector<1x1x80x4xf32>
    %48 = vector.shape_cast %47 : vector<1x1x80x4xf32> to vector<80x4xf32>
    %c0_58 = arith.constant 0 : index
    %c0_59 = arith.constant 0 : index
    %49 = vector.load %arg6[%c0_58, %c0_59] : memref<80x32xf32, #tpu.memory_space<vmem>>, vector<80x32xf32>
    %50 = arith.truncf %48 : vector<80x4xf32> to vector<80x4xbf16>
    %c5 = arith.constant 5 : index
    %c0_60 = arith.constant 0 : index
    %c0_61 = arith.constant 0 : index
    %51 = vector.load %arg3[%c5, %c0_60, %c0_61] : memref<9x4x32xbf16, #tpu.memory_space<vmem>>, vector<1x4x32xbf16>
    %52 = vector.shape_cast %51 : vector<1x4x32xbf16> to vector<4x32xbf16>
    %cst_62 = arith.constant dense<0.000000e+00> : vector<80x32xf32>
    %53 = tpu.matmul %50, %52, %cst_62 {dimension_numbers = #tpu.dot_dimension_numbers<[1], [0], [0], [1], [0, 0, 1, 1], [], []>} : vector<80x4xbf16>, vector<4x32xbf16>, vector<80x32xf32> -> vector<80x32xf32>
    %54 = arith.addf %49, %53 : vector<80x32xf32>
    %c0_63 = arith.constant 0 : index
    %c0_64 = arith.constant 0 : index
    %55 = vector.load %arg6[%c0_63, %c0_64] : memref<80x32xf32, #tpu.memory_space<vmem>>, vector<80x32xf32>
    tpu.vector_store %arg6[%c0_63, %c0_64], %54 {strides = array<i32>} : memref<80x32xf32, #tpu.memory_space<vmem>>, vector<80x32xf32>,
    %c0_65 = arith.constant 0 : index
    %c0_66 = arith.constant 0 : index
    %c20 = arith.constant 20 : index
    %c0_67 = arith.constant 0 : index
    %56 = vector.load %arg2[%c0_65, %c0_66, %c20, %c0_67] : memref<1x1x102x4xf32, #tpu.memory_space<vmem>>, vector<1x1x80x4xf32>
    %57 = vector.shape_cast %56 : vector<1x1x80x4xf32> to vector<80x4xf32>
    %c0_68 = arith.constant 0 : index
    %c0_69 = arith.constant 0 : index
    %58 = vector.load %arg6[%c0_68, %c0_69] : memref<80x32xf32, #tpu.memory_space<vmem>>, vector<80x32xf32>
    %59 = arith.truncf %57 : vector<80x4xf32> to vector<80x4xbf16>
    %c6 = arith.constant 6 : index
    %c0_70 = arith.constant 0 : index
    %c0_71 = arith.constant 0 : index
    %60 = vector.load %arg3[%c6, %c0_70, %c0_71] : memref<9x4x32xbf16, #tpu.memory_space<vmem>>, vector<1x4x32xbf16>
    %61 = vector.shape_cast %60 : vector<1x4x32xbf16> to vector<4x32xbf16>
    %cst_72 = arith.constant dense<0.000000e+00> : vector<80x32xf32>
    %62 = tpu.matmul %59, %61, %cst_72 {dimension_numbers = #tpu.dot_dimension_numbers<[1], [0], [0], [1], [0, 0, 1, 1], [], []>} : vector<80x4xbf16>, vector<4x32xbf16>, vector<80x32xf32> -> vector<80x32xf32>
    %63 = arith.addf %58, %62 : vector<80x32xf32>
    %c0_73 = arith.constant 0 : index
    %c0_74 = arith.constant 0 : index
    %64 = vector.load %arg6[%c0_73, %c0_74] : memref<80x32xf32, #tpu.memory_space<vmem>>, vector<80x32xf32>
    tpu.vector_store %arg6[%c0_73, %c0_74], %63 {strides = array<i32>} : memref<80x32xf32, #tpu.memory_space<vmem>>, vector<80x32xf32>,
    %c0_75 = arith.constant 0 : index
    %c0_76 = arith.constant 0 : index
    %c21 = arith.constant 21 : index
    %c0_77 = arith.constant 0 : index
    %65 = vector.load %arg2[%c0_75, %c0_76, %c21, %c0_77] : memref<1x1x102x4xf32, #tpu.memory_space<vmem>>, vector<1x1x80x4xf32>
    %66 = vector.shape_cast %65 : vector<1x1x80x4xf32> to vector<80x4xf32>
    %c0_78 = arith.constant 0 : index
    %c0_79 = arith.constant 0 : index
    %67 = vector.load %arg6[%c0_78, %c0_79] : memref<80x32xf32, #tpu.memory_space<vmem>>, vector<80x32xf32>
    %68 = arith.truncf %66 : vector<80x4xf32> to vector<80x4xbf16>
    %c7 = arith.constant 7 : index
    %c0_80 = arith.constant 0 : index
    %c0_81 = arith.constant 0 : index
    %69 = vector.load %arg3[%c7, %c0_80, %c0_81] : memref<9x4x32xbf16, #tpu.memory_space<vmem>>, vector<1x4x32xbf16>
    %70 = vector.shape_cast %69 : vector<1x4x32xbf16> to vector<4x32xbf16>
    %cst_82 = arith.constant dense<0.000000e+00> : vector<80x32xf32>
    %71 = tpu.matmul %68, %70, %cst_82 {dimension_numbers = #tpu.dot_dimension_numbers<[1], [0], [0], [1], [0, 0, 1, 1], [], []>} : vector<80x4xbf16>, vector<4x32xbf16>, vector<80x32xf32> -> vector<80x32xf32>
    %72 = arith.addf %67, %71 : vector<80x32xf32>
    %c0_83 = arith.constant 0 : index
    %c0_84 = arith.constant 0 : index
    %73 = vector.load %arg6[%c0_83, %c0_84] : memref<80x32xf32, #tpu.memory_space<vmem>>, vector<80x32xf32>
    tpu.vector_store %arg6[%c0_83, %c0_84], %72 {strides = array<i32>} : memref<80x32xf32, #tpu.memory_space<vmem>>, vector<80x32xf32>,
    %c0_85 = arith.constant 0 : index
    %c0_86 = arith.constant 0 : index
    %c22 = arith.constant 22 : index
    %c0_87 = arith.constant 0 : index
    %74 = vector.load %arg2[%c0_85, %c0_86, %c22, %c0_87] : memref<1x1x102x4xf32, #tpu.memory_space<vmem>>, vector<1x1x80x4xf32>
    %75 = vector.shape_cast %74 : vector<1x1x80x4xf32> to vector<80x4xf32>
    %c0_88 = arith.constant 0 : index
    %c0_89 = arith.constant 0 : index
    %76 = vector.load %arg6[%c0_88, %c0_89] : memref<80x32xf32, #tpu.memory_space<vmem>>, vector<80x32xf32>
    %77 = arith.truncf %75 : vector<80x4xf32> to vector<80x4xbf16>
    %c8 = arith.constant 8 : index
    %c0_90 = arith.constant 0 : index
    %c0_91 = arith.constant 0 : index
    %78 = vector.load %arg3[%c8, %c0_90, %c0_91] : memref<9x4x32xbf16, #tpu.memory_space<vmem>>, vector<1x4x32xbf16>
    %79 = vector.shape_cast %78 : vector<1x4x32xbf16> to vector<4x32xbf16>
    %cst_92 = arith.constant dense<0.000000e+00> : vector<80x32xf32>
    %80 = tpu.matmul %77, %79, %cst_92 {dimension_numbers = #tpu.dot_dimension_numbers<[1], [0], [0], [1], [0, 0, 1, 1], [], []>} : vector<80x4xbf16>, vector<4x32xbf16>, vector<80x32xf32> -> vector<80x32xf32>
    %81 = arith.addf %76, %80 : vector<80x32xf32>
    %c0_93 = arith.constant 0 : index
    %c0_94 = arith.constant 0 : index
    %82 = vector.load %arg6[%c0_93, %c0_94] : memref<80x32xf32, #tpu.memory_space<vmem>>, vector<80x32xf32>
    tpu.vector_store %arg6[%c0_93, %c0_94], %81 {strides = array<i32>} : memref<80x32xf32, #tpu.memory_space<vmem>>, vector<80x32xf32>,
    %c0_95 = arith.constant 0 : index
    %c0_96 = arith.constant 0 : index
    %83 = vector.load %arg6[%c0_95, %c0_96] : memref<80x32xf32, #tpu.memory_space<vmem>>, vector<80x32xf32>
    %c0_97 = arith.constant 0 : index
    %c0_98 = arith.constant 0 : index
    %84 = vector.load %arg4[%c0_97, %c0_98] : memref<1x32xf32, #tpu.memory_space<vmem>>, vector<1x32xf32>
    %85 = vector.broadcast %84 : vector<1x32xf32> to vector<80x32xf32>
    %86 = arith.addf %83, %85 : vector<80x32xf32>
    %c0_99 = arith.constant 0 : index
    %c0_100 = arith.constant 0 : index
    %c0_101 = arith.constant 0 : index
    %87 = vector.load %arg5[%c0_99, %c0_100, %c0_101] : memref<1x80x32xf32, #tpu.memory_space<vmem>>, vector<1x80x32xf32>
    %88 = vector.shape_cast %87 : vector<1x80x32xf32> to vector<80x32xf32>
    %89 = vector.shape_cast %86 : vector<80x32xf32> to vector<1x80x32xf32>
    tpu.vector_store %arg5[%c0_99, %c0_100, %c0_101], %89 {strides = array<i32>} : memref<1x80x32xf32, #tpu.memory_space<vmem>>, vector<1x80x32xf32>,
    return
  }
  func.func @transform_0(%arg0: i32, %arg1: i32) -> (i32, i32, i32, i32) {
    %c0_i32 = arith.constant 0 : i32
    %c0_i32_0 = arith.constant 0 : i32
    %c0_i32_1 = arith.constant 0 : i32
    return %arg0, %arg1, %c0_i32, %c0_i32_0 : i32, i32, i32, i32
  }
  func.func @transform_1(%arg0: i32, %arg1: i32) -> (i32, i32, i32) {
    %c0_i32 = arith.constant 0 : i32
    %c0_i32_0 = arith.constant 0 : i32
    %c0_i32_1 = arith.constant 0 : i32
    %c0_i32_2 = arith.constant 0 : i32
    return %c0_i32, %c0_i32_0, %c0_i32_1 : i32, i32, i32
  }
  func.func @transform_2(%arg0: i32, %arg1: i32) -> (i32, i32) {
    %c0_i32 = arith.constant 0 : i32
    %c0_i32_0 = arith.constant 0 : i32
    %c0_i32_1 = arith.constant 0 : i32
    return %c0_i32, %c0_i32_0 : i32, i32
  }
  func.func @transform_3(%arg0: i32, %arg1: i32) -> (i32, i32, i32) {
    %c0_i32 = arith.constant 0 : i32
    %c0_i32_0 = arith.constant 0 : i32
    return %arg0, %arg1, %c0_i32 : i32, i32, i32
  }
}

module attributes {stable_mosaic.version = 11 : i64} {
  func.func @kernel(%arg0: i32, %arg1: i32, %arg2: memref<1x1x102x32xf32, #tpu.memory_space<vmem>>, %arg3: memref<9x32x16xbf16, #tpu.memory_space<vmem>>, %arg4: memref<1x16xf32, #tpu.memory_space<vmem>>, %arg5: memref<1x80x16xf32, #tpu.memory_space<vmem>>, %arg6: memref<80x16xf32, #tpu.memory_space<vmem>>) attributes {dimension_semantics = [#tpu.dimension_semantics<parallel>, #tpu.dimension_semantics<parallel>], iteration_bounds = array<i64: 2, 1>, scalar_prefetch = 0 : i64, scratch_operands = 1 : i64, tpu.core_type = #tpu.core_type<tc>, window_params = [{transform_indices = @transform_0, window_bounds = array<i64: 1, 1, 102, 32>}, {pipeline_mode = #tpu.pipeline_mode<synchronous>, transform_indices = @transform_1, window_bounds = array<i64: 9, 32, 16>}, {pipeline_mode = #tpu.pipeline_mode<synchronous>, transform_indices = @transform_2, window_bounds = array<i64: 1, 16>}, {transform_indices = @transform_3, window_bounds = array<i64: 1, 80, 16>}]} {
    %cst = arith.constant 0.000000e+00 : f32
    %0 = vector.broadcast %cst : f32 to vector<80x16xf32>
    %c0 = arith.constant 0 : index
    %c0_0 = arith.constant 0 : index
    %1 = vector.load %arg6[%c0, %c0_0] : memref<80x16xf32, #tpu.memory_space<vmem>>, vector<80x16xf32>
    tpu.vector_store %arg6[%c0, %c0_0], %0 {strides = array<i32>} : memref<80x16xf32, #tpu.memory_space<vmem>>, vector<80x16xf32>,
    %c0_1 = arith.constant 0 : index
    %c0_2 = arith.constant 0 : index
    %c0_3 = arith.constant 0 : index
    %c0_4 = arith.constant 0 : index
    %2 = vector.load %arg2[%c0_1, %c0_2, %c0_3, %c0_4] : memref<1x1x102x32xf32, #tpu.memory_space<vmem>>, vector<1x1x80x32xf32>
    %3 = vector.shape_cast %2 : vector<1x1x80x32xf32> to vector<80x32xf32>
    %cst_5 = arith.constant 0.000000e+00 : f32
    %4 = vector.broadcast %cst_5 : f32 to vector<80x32xf32>
    %5 = arith.maximumf %3, %4 : vector<80x32xf32>
    %c0_6 = arith.constant 0 : index
    %c0_7 = arith.constant 0 : index
    %6 = vector.load %arg6[%c0_6, %c0_7] : memref<80x16xf32, #tpu.memory_space<vmem>>, vector<80x16xf32>
    %7 = arith.truncf %5 : vector<80x32xf32> to vector<80x32xbf16>
    %c0_8 = arith.constant 0 : index
    %c0_9 = arith.constant 0 : index
    %c0_10 = arith.constant 0 : index
    %8 = vector.load %arg3[%c0_8, %c0_9, %c0_10] : memref<9x32x16xbf16, #tpu.memory_space<vmem>>, vector<1x32x16xbf16>
    %9 = vector.shape_cast %8 : vector<1x32x16xbf16> to vector<32x16xbf16>
    %cst_11 = arith.constant dense<0.000000e+00> : vector<80x16xf32>
    %10 = tpu.matmul %7, %9, %cst_11 {dimension_numbers = #tpu.dot_dimension_numbers<[1], [0], [0], [1], [0, 0, 1, 1], [], []>} : vector<80x32xbf16>, vector<32x16xbf16>, vector<80x16xf32> -> vector<80x16xf32>
    %11 = arith.addf %6, %10 : vector<80x16xf32>
    %c0_12 = arith.constant 0 : index
    %c0_13 = arith.constant 0 : index
    %12 = vector.load %arg6[%c0_12, %c0_13] : memref<80x16xf32, #tpu.memory_space<vmem>>, vector<80x16xf32>
    tpu.vector_store %arg6[%c0_12, %c0_13], %11 {strides = array<i32>} : memref<80x16xf32, #tpu.memory_space<vmem>>, vector<80x16xf32>,
    %c0_14 = arith.constant 0 : index
    %c0_15 = arith.constant 0 : index
    %c1 = arith.constant 1 : index
    %c0_16 = arith.constant 0 : index
    %13 = vector.load %arg2[%c0_14, %c0_15, %c1, %c0_16] : memref<1x1x102x32xf32, #tpu.memory_space<vmem>>, vector<1x1x80x32xf32>
    %14 = vector.shape_cast %13 : vector<1x1x80x32xf32> to vector<80x32xf32>
    %cst_17 = arith.constant 0.000000e+00 : f32
    %15 = vector.broadcast %cst_17 : f32 to vector<80x32xf32>
    %16 = arith.maximumf %14, %15 : vector<80x32xf32>
    %c0_18 = arith.constant 0 : index
    %c0_19 = arith.constant 0 : index
    %17 = vector.load %arg6[%c0_18, %c0_19] : memref<80x16xf32, #tpu.memory_space<vmem>>, vector<80x16xf32>
    %18 = arith.truncf %16 : vector<80x32xf32> to vector<80x32xbf16>
    %c1_20 = arith.constant 1 : index
    %c0_21 = arith.constant 0 : index
    %c0_22 = arith.constant 0 : index
    %19 = vector.load %arg3[%c1_20, %c0_21, %c0_22] : memref<9x32x16xbf16, #tpu.memory_space<vmem>>, vector<1x32x16xbf16>
    %20 = vector.shape_cast %19 : vector<1x32x16xbf16> to vector<32x16xbf16>
    %cst_23 = arith.constant dense<0.000000e+00> : vector<80x16xf32>
    %21 = tpu.matmul %18, %20, %cst_23 {dimension_numbers = #tpu.dot_dimension_numbers<[1], [0], [0], [1], [0, 0, 1, 1], [], []>} : vector<80x32xbf16>, vector<32x16xbf16>, vector<80x16xf32> -> vector<80x16xf32>
    %22 = arith.addf %17, %21 : vector<80x16xf32>
    %c0_24 = arith.constant 0 : index
    %c0_25 = arith.constant 0 : index
    %23 = vector.load %arg6[%c0_24, %c0_25] : memref<80x16xf32, #tpu.memory_space<vmem>>, vector<80x16xf32>
    tpu.vector_store %arg6[%c0_24, %c0_25], %22 {strides = array<i32>} : memref<80x16xf32, #tpu.memory_space<vmem>>, vector<80x16xf32>,
    %c0_26 = arith.constant 0 : index
    %c0_27 = arith.constant 0 : index
    %c2 = arith.constant 2 : index
    %c0_28 = arith.constant 0 : index
    %24 = vector.load %arg2[%c0_26, %c0_27, %c2, %c0_28] : memref<1x1x102x32xf32, #tpu.memory_space<vmem>>, vector<1x1x80x32xf32>
    %25 = vector.shape_cast %24 : vector<1x1x80x32xf32> to vector<80x32xf32>
    %cst_29 = arith.constant 0.000000e+00 : f32
    %26 = vector.broadcast %cst_29 : f32 to vector<80x32xf32>
    %27 = arith.maximumf %25, %26 : vector<80x32xf32>
    %c0_30 = arith.constant 0 : index
    %c0_31 = arith.constant 0 : index
    %28 = vector.load %arg6[%c0_30, %c0_31] : memref<80x16xf32, #tpu.memory_space<vmem>>, vector<80x16xf32>
    %29 = arith.truncf %27 : vector<80x32xf32> to vector<80x32xbf16>
    %c2_32 = arith.constant 2 : index
    %c0_33 = arith.constant 0 : index
    %c0_34 = arith.constant 0 : index
    %30 = vector.load %arg3[%c2_32, %c0_33, %c0_34] : memref<9x32x16xbf16, #tpu.memory_space<vmem>>, vector<1x32x16xbf16>
    %31 = vector.shape_cast %30 : vector<1x32x16xbf16> to vector<32x16xbf16>
    %cst_35 = arith.constant dense<0.000000e+00> : vector<80x16xf32>
    %32 = tpu.matmul %29, %31, %cst_35 {dimension_numbers = #tpu.dot_dimension_numbers<[1], [0], [0], [1], [0, 0, 1, 1], [], []>} : vector<80x32xbf16>, vector<32x16xbf16>, vector<80x16xf32> -> vector<80x16xf32>
    %33 = arith.addf %28, %32 : vector<80x16xf32>
    %c0_36 = arith.constant 0 : index
    %c0_37 = arith.constant 0 : index
    %34 = vector.load %arg6[%c0_36, %c0_37] : memref<80x16xf32, #tpu.memory_space<vmem>>, vector<80x16xf32>
    tpu.vector_store %arg6[%c0_36, %c0_37], %33 {strides = array<i32>} : memref<80x16xf32, #tpu.memory_space<vmem>>, vector<80x16xf32>,
    %c0_38 = arith.constant 0 : index
    %c0_39 = arith.constant 0 : index
    %c10 = arith.constant 10 : index
    %c0_40 = arith.constant 0 : index
    %35 = vector.load %arg2[%c0_38, %c0_39, %c10, %c0_40] : memref<1x1x102x32xf32, #tpu.memory_space<vmem>>, vector<1x1x80x32xf32>
    %36 = vector.shape_cast %35 : vector<1x1x80x32xf32> to vector<80x32xf32>
    %cst_41 = arith.constant 0.000000e+00 : f32
    %37 = vector.broadcast %cst_41 : f32 to vector<80x32xf32>
    %38 = arith.maximumf %36, %37 : vector<80x32xf32>
    %c0_42 = arith.constant 0 : index
    %c0_43 = arith.constant 0 : index
    %39 = vector.load %arg6[%c0_42, %c0_43] : memref<80x16xf32, #tpu.memory_space<vmem>>, vector<80x16xf32>
    %40 = arith.truncf %38 : vector<80x32xf32> to vector<80x32xbf16>
    %c3 = arith.constant 3 : index
    %c0_44 = arith.constant 0 : index
    %c0_45 = arith.constant 0 : index
    %41 = vector.load %arg3[%c3, %c0_44, %c0_45] : memref<9x32x16xbf16, #tpu.memory_space<vmem>>, vector<1x32x16xbf16>
    %42 = vector.shape_cast %41 : vector<1x32x16xbf16> to vector<32x16xbf16>
    %cst_46 = arith.constant dense<0.000000e+00> : vector<80x16xf32>
    %43 = tpu.matmul %40, %42, %cst_46 {dimension_numbers = #tpu.dot_dimension_numbers<[1], [0], [0], [1], [0, 0, 1, 1], [], []>} : vector<80x32xbf16>, vector<32x16xbf16>, vector<80x16xf32> -> vector<80x16xf32>
    %44 = arith.addf %39, %43 : vector<80x16xf32>
    %c0_47 = arith.constant 0 : index
    %c0_48 = arith.constant 0 : index
    %45 = vector.load %arg6[%c0_47, %c0_48] : memref<80x16xf32, #tpu.memory_space<vmem>>, vector<80x16xf32>
    tpu.vector_store %arg6[%c0_47, %c0_48], %44 {strides = array<i32>} : memref<80x16xf32, #tpu.memory_space<vmem>>, vector<80x16xf32>,
    %c0_49 = arith.constant 0 : index
    %c0_50 = arith.constant 0 : index
    %c11 = arith.constant 11 : index
    %c0_51 = arith.constant 0 : index
    %46 = vector.load %arg2[%c0_49, %c0_50, %c11, %c0_51] : memref<1x1x102x32xf32, #tpu.memory_space<vmem>>, vector<1x1x80x32xf32>
    %47 = vector.shape_cast %46 : vector<1x1x80x32xf32> to vector<80x32xf32>
    %cst_52 = arith.constant 0.000000e+00 : f32
    %48 = vector.broadcast %cst_52 : f32 to vector<80x32xf32>
    %49 = arith.maximumf %47, %48 : vector<80x32xf32>
    %c0_53 = arith.constant 0 : index
    %c0_54 = arith.constant 0 : index
    %50 = vector.load %arg6[%c0_53, %c0_54] : memref<80x16xf32, #tpu.memory_space<vmem>>, vector<80x16xf32>
    %51 = arith.truncf %49 : vector<80x32xf32> to vector<80x32xbf16>
    %c4 = arith.constant 4 : index
    %c0_55 = arith.constant 0 : index
    %c0_56 = arith.constant 0 : index
    %52 = vector.load %arg3[%c4, %c0_55, %c0_56] : memref<9x32x16xbf16, #tpu.memory_space<vmem>>, vector<1x32x16xbf16>
    %53 = vector.shape_cast %52 : vector<1x32x16xbf16> to vector<32x16xbf16>
    %cst_57 = arith.constant dense<0.000000e+00> : vector<80x16xf32>
    %54 = tpu.matmul %51, %53, %cst_57 {dimension_numbers = #tpu.dot_dimension_numbers<[1], [0], [0], [1], [0, 0, 1, 1], [], []>} : vector<80x32xbf16>, vector<32x16xbf16>, vector<80x16xf32> -> vector<80x16xf32>
    %55 = arith.addf %50, %54 : vector<80x16xf32>
    %c0_58 = arith.constant 0 : index
    %c0_59 = arith.constant 0 : index
    %56 = vector.load %arg6[%c0_58, %c0_59] : memref<80x16xf32, #tpu.memory_space<vmem>>, vector<80x16xf32>
    tpu.vector_store %arg6[%c0_58, %c0_59], %55 {strides = array<i32>} : memref<80x16xf32, #tpu.memory_space<vmem>>, vector<80x16xf32>,
    %c0_60 = arith.constant 0 : index
    %c0_61 = arith.constant 0 : index
    %c12 = arith.constant 12 : index
    %c0_62 = arith.constant 0 : index
    %57 = vector.load %arg2[%c0_60, %c0_61, %c12, %c0_62] : memref<1x1x102x32xf32, #tpu.memory_space<vmem>>, vector<1x1x80x32xf32>
    %58 = vector.shape_cast %57 : vector<1x1x80x32xf32> to vector<80x32xf32>
    %cst_63 = arith.constant 0.000000e+00 : f32
    %59 = vector.broadcast %cst_63 : f32 to vector<80x32xf32>
    %60 = arith.maximumf %58, %59 : vector<80x32xf32>
    %c0_64 = arith.constant 0 : index
    %c0_65 = arith.constant 0 : index
    %61 = vector.load %arg6[%c0_64, %c0_65] : memref<80x16xf32, #tpu.memory_space<vmem>>, vector<80x16xf32>
    %62 = arith.truncf %60 : vector<80x32xf32> to vector<80x32xbf16>
    %c5 = arith.constant 5 : index
    %c0_66 = arith.constant 0 : index
    %c0_67 = arith.constant 0 : index
    %63 = vector.load %arg3[%c5, %c0_66, %c0_67] : memref<9x32x16xbf16, #tpu.memory_space<vmem>>, vector<1x32x16xbf16>
    %64 = vector.shape_cast %63 : vector<1x32x16xbf16> to vector<32x16xbf16>
    %cst_68 = arith.constant dense<0.000000e+00> : vector<80x16xf32>
    %65 = tpu.matmul %62, %64, %cst_68 {dimension_numbers = #tpu.dot_dimension_numbers<[1], [0], [0], [1], [0, 0, 1, 1], [], []>} : vector<80x32xbf16>, vector<32x16xbf16>, vector<80x16xf32> -> vector<80x16xf32>
    %66 = arith.addf %61, %65 : vector<80x16xf32>
    %c0_69 = arith.constant 0 : index
    %c0_70 = arith.constant 0 : index
    %67 = vector.load %arg6[%c0_69, %c0_70] : memref<80x16xf32, #tpu.memory_space<vmem>>, vector<80x16xf32>
    tpu.vector_store %arg6[%c0_69, %c0_70], %66 {strides = array<i32>} : memref<80x16xf32, #tpu.memory_space<vmem>>, vector<80x16xf32>,
    %c0_71 = arith.constant 0 : index
    %c0_72 = arith.constant 0 : index
    %c20 = arith.constant 20 : index
    %c0_73 = arith.constant 0 : index
    %68 = vector.load %arg2[%c0_71, %c0_72, %c20, %c0_73] : memref<1x1x102x32xf32, #tpu.memory_space<vmem>>, vector<1x1x80x32xf32>
    %69 = vector.shape_cast %68 : vector<1x1x80x32xf32> to vector<80x32xf32>
    %cst_74 = arith.constant 0.000000e+00 : f32
    %70 = vector.broadcast %cst_74 : f32 to vector<80x32xf32>
    %71 = arith.maximumf %69, %70 : vector<80x32xf32>
    %c0_75 = arith.constant 0 : index
    %c0_76 = arith.constant 0 : index
    %72 = vector.load %arg6[%c0_75, %c0_76] : memref<80x16xf32, #tpu.memory_space<vmem>>, vector<80x16xf32>
    %73 = arith.truncf %71 : vector<80x32xf32> to vector<80x32xbf16>
    %c6 = arith.constant 6 : index
    %c0_77 = arith.constant 0 : index
    %c0_78 = arith.constant 0 : index
    %74 = vector.load %arg3[%c6, %c0_77, %c0_78] : memref<9x32x16xbf16, #tpu.memory_space<vmem>>, vector<1x32x16xbf16>
    %75 = vector.shape_cast %74 : vector<1x32x16xbf16> to vector<32x16xbf16>
    %cst_79 = arith.constant dense<0.000000e+00> : vector<80x16xf32>
    %76 = tpu.matmul %73, %75, %cst_79 {dimension_numbers = #tpu.dot_dimension_numbers<[1], [0], [0], [1], [0, 0, 1, 1], [], []>} : vector<80x32xbf16>, vector<32x16xbf16>, vector<80x16xf32> -> vector<80x16xf32>
    %77 = arith.addf %72, %76 : vector<80x16xf32>
    %c0_80 = arith.constant 0 : index
    %c0_81 = arith.constant 0 : index
    %78 = vector.load %arg6[%c0_80, %c0_81] : memref<80x16xf32, #tpu.memory_space<vmem>>, vector<80x16xf32>
    tpu.vector_store %arg6[%c0_80, %c0_81], %77 {strides = array<i32>} : memref<80x16xf32, #tpu.memory_space<vmem>>, vector<80x16xf32>,
    %c0_82 = arith.constant 0 : index
    %c0_83 = arith.constant 0 : index
    %c21 = arith.constant 21 : index
    %c0_84 = arith.constant 0 : index
    %79 = vector.load %arg2[%c0_82, %c0_83, %c21, %c0_84] : memref<1x1x102x32xf32, #tpu.memory_space<vmem>>, vector<1x1x80x32xf32>
    %80 = vector.shape_cast %79 : vector<1x1x80x32xf32> to vector<80x32xf32>
    %cst_85 = arith.constant 0.000000e+00 : f32
    %81 = vector.broadcast %cst_85 : f32 to vector<80x32xf32>
    %82 = arith.maximumf %80, %81 : vector<80x32xf32>
    %c0_86 = arith.constant 0 : index
    %c0_87 = arith.constant 0 : index
    %83 = vector.load %arg6[%c0_86, %c0_87] : memref<80x16xf32, #tpu.memory_space<vmem>>, vector<80x16xf32>
    %84 = arith.truncf %82 : vector<80x32xf32> to vector<80x32xbf16>
    %c7 = arith.constant 7 : index
    %c0_88 = arith.constant 0 : index
    %c0_89 = arith.constant 0 : index
    %85 = vector.load %arg3[%c7, %c0_88, %c0_89] : memref<9x32x16xbf16, #tpu.memory_space<vmem>>, vector<1x32x16xbf16>
    %86 = vector.shape_cast %85 : vector<1x32x16xbf16> to vector<32x16xbf16>
    %cst_90 = arith.constant dense<0.000000e+00> : vector<80x16xf32>
    %87 = tpu.matmul %84, %86, %cst_90 {dimension_numbers = #tpu.dot_dimension_numbers<[1], [0], [0], [1], [0, 0, 1, 1], [], []>} : vector<80x32xbf16>, vector<32x16xbf16>, vector<80x16xf32> -> vector<80x16xf32>
    %88 = arith.addf %83, %87 : vector<80x16xf32>
    %c0_91 = arith.constant 0 : index
    %c0_92 = arith.constant 0 : index
    %89 = vector.load %arg6[%c0_91, %c0_92] : memref<80x16xf32, #tpu.memory_space<vmem>>, vector<80x16xf32>
    tpu.vector_store %arg6[%c0_91, %c0_92], %88 {strides = array<i32>} : memref<80x16xf32, #tpu.memory_space<vmem>>, vector<80x16xf32>,
    %c0_93 = arith.constant 0 : index
    %c0_94 = arith.constant 0 : index
    %c22 = arith.constant 22 : index
    %c0_95 = arith.constant 0 : index
    %90 = vector.load %arg2[%c0_93, %c0_94, %c22, %c0_95] : memref<1x1x102x32xf32, #tpu.memory_space<vmem>>, vector<1x1x80x32xf32>
    %91 = vector.shape_cast %90 : vector<1x1x80x32xf32> to vector<80x32xf32>
    %cst_96 = arith.constant 0.000000e+00 : f32
    %92 = vector.broadcast %cst_96 : f32 to vector<80x32xf32>
    %93 = arith.maximumf %91, %92 : vector<80x32xf32>
    %c0_97 = arith.constant 0 : index
    %c0_98 = arith.constant 0 : index
    %94 = vector.load %arg6[%c0_97, %c0_98] : memref<80x16xf32, #tpu.memory_space<vmem>>, vector<80x16xf32>
    %95 = arith.truncf %93 : vector<80x32xf32> to vector<80x32xbf16>
    %c8 = arith.constant 8 : index
    %c0_99 = arith.constant 0 : index
    %c0_100 = arith.constant 0 : index
    %96 = vector.load %arg3[%c8, %c0_99, %c0_100] : memref<9x32x16xbf16, #tpu.memory_space<vmem>>, vector<1x32x16xbf16>
    %97 = vector.shape_cast %96 : vector<1x32x16xbf16> to vector<32x16xbf16>
    %cst_101 = arith.constant dense<0.000000e+00> : vector<80x16xf32>
    %98 = tpu.matmul %95, %97, %cst_101 {dimension_numbers = #tpu.dot_dimension_numbers<[1], [0], [0], [1], [0, 0, 1, 1], [], []>} : vector<80x32xbf16>, vector<32x16xbf16>, vector<80x16xf32> -> vector<80x16xf32>
    %99 = arith.addf %94, %98 : vector<80x16xf32>
    %c0_102 = arith.constant 0 : index
    %c0_103 = arith.constant 0 : index
    %100 = vector.load %arg6[%c0_102, %c0_103] : memref<80x16xf32, #tpu.memory_space<vmem>>, vector<80x16xf32>
    tpu.vector_store %arg6[%c0_102, %c0_103], %99 {strides = array<i32>} : memref<80x16xf32, #tpu.memory_space<vmem>>, vector<80x16xf32>,
    %c0_104 = arith.constant 0 : index
    %c0_105 = arith.constant 0 : index
    %101 = vector.load %arg6[%c0_104, %c0_105] : memref<80x16xf32, #tpu.memory_space<vmem>>, vector<80x16xf32>
    %c0_106 = arith.constant 0 : index
    %c0_107 = arith.constant 0 : index
    %102 = vector.load %arg4[%c0_106, %c0_107] : memref<1x16xf32, #tpu.memory_space<vmem>>, vector<1x16xf32>
    %103 = vector.broadcast %102 : vector<1x16xf32> to vector<80x16xf32>
    %104 = arith.addf %101, %103 : vector<80x16xf32>
    %c0_108 = arith.constant 0 : index
    %c0_109 = arith.constant 0 : index
    %c0_110 = arith.constant 0 : index
    %105 = vector.load %arg5[%c0_108, %c0_109, %c0_110] : memref<1x80x16xf32, #tpu.memory_space<vmem>>, vector<1x80x16xf32>
    %106 = vector.shape_cast %105 : vector<1x80x16xf32> to vector<80x16xf32>
    %107 = vector.shape_cast %104 : vector<80x16xf32> to vector<1x80x16xf32>
    tpu.vector_store %arg5[%c0_108, %c0_109, %c0_110], %107 {strides = array<i32>} : memref<1x80x16xf32, #tpu.memory_space<vmem>>, vector<1x80x16xf32>,
    return
  }
  func.func @transform_0(%arg0: i32, %arg1: i32) -> (i32, i32, i32, i32) {
    %c0_i32 = arith.constant 0 : i32
    %c0_i32_0 = arith.constant 0 : i32
    %c0_i32_1 = arith.constant 0 : i32
    return %arg0, %arg1, %c0_i32, %c0_i32_0 : i32, i32, i32, i32
  }
  func.func @transform_1(%arg0: i32, %arg1: i32) -> (i32, i32, i32) {
    %c0_i32 = arith.constant 0 : i32
    %c0_i32_0 = arith.constant 0 : i32
    %c0_i32_1 = arith.constant 0 : i32
    %c0_i32_2 = arith.constant 0 : i32
    return %c0_i32, %c0_i32_0, %c0_i32_1 : i32, i32, i32
  }
  func.func @transform_2(%arg0: i32, %arg1: i32) -> (i32, i32) {
    %c0_i32 = arith.constant 0 : i32
    %c0_i32_0 = arith.constant 0 : i32
    %c0_i32_1 = arith.constant 0 : i32
    return %c0_i32, %c0_i32_0 : i32, i32
  }
  func.func @transform_3(%arg0: i32, %arg1: i32) -> (i32, i32, i32) {
    %c0_i32 = arith.constant 0 : i32
    %c0_i32_0 = arith.constant 0 : i32
    return %arg0, %arg1, %c0_i32 : i32, i32, i32
  }
}

module attributes {stable_mosaic.version = 11 : i64} {
  func.func @kernel(%arg0: i32, %arg1: i32, %arg2: memref<1x1x64x16xf32, #tpu.memory_space<vmem>>, %arg3: memref<1x16x32xbf16, #tpu.memory_space<vmem>>, %arg4: memref<1x32xf32, #tpu.memory_space<vmem>>, %arg5: memref<1x64x32xf32, #tpu.memory_space<vmem>>, %arg6: memref<1x64x32xf32, #tpu.memory_space<vmem>>, %arg7: memref<64x32xf32, #tpu.memory_space<vmem>>) attributes {dimension_semantics = [#tpu.dimension_semantics<parallel>, #tpu.dimension_semantics<parallel>], iteration_bounds = array<i64: 2, 1>, scalar_prefetch = 0 : i64, scratch_operands = 1 : i64, tpu.core_type = #tpu.core_type<tc>, window_params = [{transform_indices = @transform_0, window_bounds = array<i64: 1, 1, 64, 16>}, {pipeline_mode = #tpu.pipeline_mode<synchronous>, transform_indices = @transform_1, window_bounds = array<i64: 1, 16, 32>}, {pipeline_mode = #tpu.pipeline_mode<synchronous>, transform_indices = @transform_2, window_bounds = array<i64: 1, 32>}, {transform_indices = @transform_3, window_bounds = array<i64: 1, 64, 32>}, {transform_indices = @transform_4, window_bounds = array<i64: 1, 64, 32>}]} {
    %cst = arith.constant 0.000000e+00 : f32
    %0 = vector.broadcast %cst : f32 to vector<64x32xf32>
    %c0 = arith.constant 0 : index
    %c0_0 = arith.constant 0 : index
    %1 = vector.load %arg7[%c0, %c0_0] : memref<64x32xf32, #tpu.memory_space<vmem>>, vector<64x32xf32>
    tpu.vector_store %arg7[%c0, %c0_0], %0 {strides = array<i32>} : memref<64x32xf32, #tpu.memory_space<vmem>>, vector<64x32xf32>,
    %c0_1 = arith.constant 0 : index
    %c0_2 = arith.constant 0 : index
    %c0_3 = arith.constant 0 : index
    %c0_4 = arith.constant 0 : index
    %2 = vector.load %arg2[%c0_1, %c0_2, %c0_3, %c0_4] : memref<1x1x64x16xf32, #tpu.memory_space<vmem>>, vector<1x1x64x16xf32>
    %3 = vector.shape_cast %2 : vector<1x1x64x16xf32> to vector<64x16xf32>
    %cst_5 = arith.constant 0.000000e+00 : f32
    %4 = vector.broadcast %cst_5 : f32 to vector<64x16xf32>
    %5 = arith.maximumf %3, %4 : vector<64x16xf32>
    %c0_6 = arith.constant 0 : index
    %c0_7 = arith.constant 0 : index
    %6 = vector.load %arg7[%c0_6, %c0_7] : memref<64x32xf32, #tpu.memory_space<vmem>>, vector<64x32xf32>
    %7 = arith.truncf %5 : vector<64x16xf32> to vector<64x16xbf16>
    %c0_8 = arith.constant 0 : index
    %c0_9 = arith.constant 0 : index
    %c0_10 = arith.constant 0 : index
    %8 = vector.load %arg3[%c0_8, %c0_9, %c0_10] : memref<1x16x32xbf16, #tpu.memory_space<vmem>>, vector<1x16x32xbf16>
    %9 = vector.shape_cast %8 : vector<1x16x32xbf16> to vector<16x32xbf16>
    %cst_11 = arith.constant dense<0.000000e+00> : vector<64x32xf32>
    %10 = tpu.matmul %7, %9, %cst_11 {dimension_numbers = #tpu.dot_dimension_numbers<[1], [0], [0], [1], [0, 0, 1, 1], [], []>} : vector<64x16xbf16>, vector<16x32xbf16>, vector<64x32xf32> -> vector<64x32xf32>
    %11 = arith.addf %6, %10 : vector<64x32xf32>
    %c0_12 = arith.constant 0 : index
    %c0_13 = arith.constant 0 : index
    %12 = vector.load %arg7[%c0_12, %c0_13] : memref<64x32xf32, #tpu.memory_space<vmem>>, vector<64x32xf32>
    tpu.vector_store %arg7[%c0_12, %c0_13], %11 {strides = array<i32>} : memref<64x32xf32, #tpu.memory_space<vmem>>, vector<64x32xf32>,
    %c0_14 = arith.constant 0 : index
    %c0_15 = arith.constant 0 : index
    %13 = vector.load %arg7[%c0_14, %c0_15] : memref<64x32xf32, #tpu.memory_space<vmem>>, vector<64x32xf32>
    %c0_16 = arith.constant 0 : index
    %c0_17 = arith.constant 0 : index
    %14 = vector.load %arg4[%c0_16, %c0_17] : memref<1x32xf32, #tpu.memory_space<vmem>>, vector<1x32xf32>
    %15 = vector.broadcast %14 : vector<1x32xf32> to vector<64x32xf32>
    %16 = arith.addf %13, %15 : vector<64x32xf32>
    %c0_18 = arith.constant 0 : index
    %c0_19 = arith.constant 0 : index
    %c0_20 = arith.constant 0 : index
    %17 = vector.load %arg5[%c0_18, %c0_19, %c0_20] : memref<1x64x32xf32, #tpu.memory_space<vmem>>, vector<1x64x32xf32>
    %18 = vector.shape_cast %17 : vector<1x64x32xf32> to vector<64x32xf32>
    %19 = arith.addf %16, %18 : vector<64x32xf32>
    %c0_21 = arith.constant 0 : index
    %c0_22 = arith.constant 0 : index
    %c0_23 = arith.constant 0 : index
    %20 = vector.load %arg6[%c0_21, %c0_22, %c0_23] : memref<1x64x32xf32, #tpu.memory_space<vmem>>, vector<1x64x32xf32>
    %21 = vector.shape_cast %20 : vector<1x64x32xf32> to vector<64x32xf32>
    %22 = vector.shape_cast %19 : vector<64x32xf32> to vector<1x64x32xf32>
    tpu.vector_store %arg6[%c0_21, %c0_22, %c0_23], %22 {strides = array<i32>} : memref<1x64x32xf32, #tpu.memory_space<vmem>>, vector<1x64x32xf32>,
    return
  }
  func.func @transform_0(%arg0: i32, %arg1: i32) -> (i32, i32, i32, i32) {
    %c0_i32 = arith.constant 0 : i32
    %c0_i32_0 = arith.constant 0 : i32
    %c0_i32_1 = arith.constant 0 : i32
    return %arg0, %arg1, %c0_i32, %c0_i32_0 : i32, i32, i32, i32
  }
  func.func @transform_1(%arg0: i32, %arg1: i32) -> (i32, i32, i32) {
    %c0_i32 = arith.constant 0 : i32
    %c0_i32_0 = arith.constant 0 : i32
    %c0_i32_1 = arith.constant 0 : i32
    %c0_i32_2 = arith.constant 0 : i32
    return %c0_i32, %c0_i32_0, %c0_i32_1 : i32, i32, i32
  }
  func.func @transform_2(%arg0: i32, %arg1: i32) -> (i32, i32) {
    %c0_i32 = arith.constant 0 : i32
    %c0_i32_0 = arith.constant 0 : i32
    %c0_i32_1 = arith.constant 0 : i32
    return %c0_i32, %c0_i32_0 : i32, i32
  }
  func.func @transform_3(%arg0: i32, %arg1: i32) -> (i32, i32, i32) {
    %c0_i32 = arith.constant 0 : i32
    %c0_i32_0 = arith.constant 0 : i32
    return %arg0, %arg1, %c0_i32 : i32, i32, i32
  }
  func.func @transform_4(%arg0: i32, %arg1: i32) -> (i32, i32, i32) {
    %c0_i32 = arith.constant 0 : i32
    %c0_i32_0 = arith.constant 0 : i32
    return %arg0, %arg1, %c0_i32 : i32, i32, i32
  }
}

module attributes {stable_mosaic.version = 11 : i64} {
  func.func @kernel(%arg0: i32, %arg1: i32, %arg2: memref<1x1x82x32xf32, #tpu.memory_space<vmem>>, %arg3: memref<4x32x16xbf16, #tpu.memory_space<vmem>>, %arg4: memref<1x16xf32, #tpu.memory_space<vmem>>, %arg5: memref<1x72x16xf32, #tpu.memory_space<vmem>>, %arg6: memref<72x16xf32, #tpu.memory_space<vmem>>) attributes {dimension_semantics = [#tpu.dimension_semantics<parallel>, #tpu.dimension_semantics<parallel>], iteration_bounds = array<i64: 2, 1>, scalar_prefetch = 0 : i64, scratch_operands = 1 : i64, tpu.core_type = #tpu.core_type<tc>, window_params = [{transform_indices = @transform_0, window_bounds = array<i64: 1, 1, 82, 32>}, {pipeline_mode = #tpu.pipeline_mode<synchronous>, transform_indices = @transform_1, window_bounds = array<i64: 4, 32, 16>}, {pipeline_mode = #tpu.pipeline_mode<synchronous>, transform_indices = @transform_2, window_bounds = array<i64: 1, 16>}, {transform_indices = @transform_3, window_bounds = array<i64: 1, 72, 16>}]} {
    %cst = arith.constant 0.000000e+00 : f32
    %0 = vector.broadcast %cst : f32 to vector<72x16xf32>
    %c0 = arith.constant 0 : index
    %c0_0 = arith.constant 0 : index
    %1 = vector.load %arg6[%c0, %c0_0] : memref<72x16xf32, #tpu.memory_space<vmem>>, vector<72x16xf32>
    tpu.vector_store %arg6[%c0, %c0_0], %0 {strides = array<i32>} : memref<72x16xf32, #tpu.memory_space<vmem>>, vector<72x16xf32>,
    %c0_1 = arith.constant 0 : index
    %c0_2 = arith.constant 0 : index
    %c0_3 = arith.constant 0 : index
    %c0_4 = arith.constant 0 : index
    %2 = vector.load %arg2[%c0_1, %c0_2, %c0_3, %c0_4] : memref<1x1x82x32xf32, #tpu.memory_space<vmem>>, vector<1x1x72x32xf32>
    %3 = vector.shape_cast %2 : vector<1x1x72x32xf32> to vector<72x32xf32>
    %cst_5 = arith.constant 0.000000e+00 : f32
    %4 = vector.broadcast %cst_5 : f32 to vector<72x32xf32>
    %5 = arith.maximumf %3, %4 : vector<72x32xf32>
    %c0_6 = arith.constant 0 : index
    %c0_7 = arith.constant 0 : index
    %6 = vector.load %arg6[%c0_6, %c0_7] : memref<72x16xf32, #tpu.memory_space<vmem>>, vector<72x16xf32>
    %7 = arith.truncf %5 : vector<72x32xf32> to vector<72x32xbf16>
    %c0_8 = arith.constant 0 : index
    %c0_9 = arith.constant 0 : index
    %c0_10 = arith.constant 0 : index
    %8 = vector.load %arg3[%c0_8, %c0_9, %c0_10] : memref<4x32x16xbf16, #tpu.memory_space<vmem>>, vector<1x32x16xbf16>
    %9 = vector.shape_cast %8 : vector<1x32x16xbf16> to vector<32x16xbf16>
    %cst_11 = arith.constant dense<0.000000e+00> : vector<72x16xf32>
    %10 = tpu.matmul %7, %9, %cst_11 {dimension_numbers = #tpu.dot_dimension_numbers<[1], [0], [0], [1], [0, 0, 1, 1], [], []>} : vector<72x32xbf16>, vector<32x16xbf16>, vector<72x16xf32> -> vector<72x16xf32>
    %11 = arith.addf %6, %10 : vector<72x16xf32>
    %c0_12 = arith.constant 0 : index
    %c0_13 = arith.constant 0 : index
    %12 = vector.load %arg6[%c0_12, %c0_13] : memref<72x16xf32, #tpu.memory_space<vmem>>, vector<72x16xf32>
    tpu.vector_store %arg6[%c0_12, %c0_13], %11 {strides = array<i32>} : memref<72x16xf32, #tpu.memory_space<vmem>>, vector<72x16xf32>,
    %c0_14 = arith.constant 0 : index
    %c0_15 = arith.constant 0 : index
    %c1 = arith.constant 1 : index
    %c0_16 = arith.constant 0 : index
    %13 = vector.load %arg2[%c0_14, %c0_15, %c1, %c0_16] : memref<1x1x82x32xf32, #tpu.memory_space<vmem>>, vector<1x1x72x32xf32>
    %14 = vector.shape_cast %13 : vector<1x1x72x32xf32> to vector<72x32xf32>
    %cst_17 = arith.constant 0.000000e+00 : f32
    %15 = vector.broadcast %cst_17 : f32 to vector<72x32xf32>
    %16 = arith.maximumf %14, %15 : vector<72x32xf32>
    %c0_18 = arith.constant 0 : index
    %c0_19 = arith.constant 0 : index
    %17 = vector.load %arg6[%c0_18, %c0_19] : memref<72x16xf32, #tpu.memory_space<vmem>>, vector<72x16xf32>
    %18 = arith.truncf %16 : vector<72x32xf32> to vector<72x32xbf16>
    %c1_20 = arith.constant 1 : index
    %c0_21 = arith.constant 0 : index
    %c0_22 = arith.constant 0 : index
    %19 = vector.load %arg3[%c1_20, %c0_21, %c0_22] : memref<4x32x16xbf16, #tpu.memory_space<vmem>>, vector<1x32x16xbf16>
    %20 = vector.shape_cast %19 : vector<1x32x16xbf16> to vector<32x16xbf16>
    %cst_23 = arith.constant dense<0.000000e+00> : vector<72x16xf32>
    %21 = tpu.matmul %18, %20, %cst_23 {dimension_numbers = #tpu.dot_dimension_numbers<[1], [0], [0], [1], [0, 0, 1, 1], [], []>} : vector<72x32xbf16>, vector<32x16xbf16>, vector<72x16xf32> -> vector<72x16xf32>
    %22 = arith.addf %17, %21 : vector<72x16xf32>
    %c0_24 = arith.constant 0 : index
    %c0_25 = arith.constant 0 : index
    %23 = vector.load %arg6[%c0_24, %c0_25] : memref<72x16xf32, #tpu.memory_space<vmem>>, vector<72x16xf32>
    tpu.vector_store %arg6[%c0_24, %c0_25], %22 {strides = array<i32>} : memref<72x16xf32, #tpu.memory_space<vmem>>, vector<72x16xf32>,
    %c0_26 = arith.constant 0 : index
    %c0_27 = arith.constant 0 : index
    %c9 = arith.constant 9 : index
    %c0_28 = arith.constant 0 : index
    %24 = vector.load %arg2[%c0_26, %c0_27, %c9, %c0_28] : memref<1x1x82x32xf32, #tpu.memory_space<vmem>>, vector<1x1x72x32xf32>
    %25 = vector.shape_cast %24 : vector<1x1x72x32xf32> to vector<72x32xf32>
    %cst_29 = arith.constant 0.000000e+00 : f32
    %26 = vector.broadcast %cst_29 : f32 to vector<72x32xf32>
    %27 = arith.maximumf %25, %26 : vector<72x32xf32>
    %c0_30 = arith.constant 0 : index
    %c0_31 = arith.constant 0 : index
    %28 = vector.load %arg6[%c0_30, %c0_31] : memref<72x16xf32, #tpu.memory_space<vmem>>, vector<72x16xf32>
    %29 = arith.truncf %27 : vector<72x32xf32> to vector<72x32xbf16>
    %c2 = arith.constant 2 : index
    %c0_32 = arith.constant 0 : index
    %c0_33 = arith.constant 0 : index
    %30 = vector.load %arg3[%c2, %c0_32, %c0_33] : memref<4x32x16xbf16, #tpu.memory_space<vmem>>, vector<1x32x16xbf16>
    %31 = vector.shape_cast %30 : vector<1x32x16xbf16> to vector<32x16xbf16>
    %cst_34 = arith.constant dense<0.000000e+00> : vector<72x16xf32>
    %32 = tpu.matmul %29, %31, %cst_34 {dimension_numbers = #tpu.dot_dimension_numbers<[1], [0], [0], [1], [0, 0, 1, 1], [], []>} : vector<72x32xbf16>, vector<32x16xbf16>, vector<72x16xf32> -> vector<72x16xf32>
    %33 = arith.addf %28, %32 : vector<72x16xf32>
    %c0_35 = arith.constant 0 : index
    %c0_36 = arith.constant 0 : index
    %34 = vector.load %arg6[%c0_35, %c0_36] : memref<72x16xf32, #tpu.memory_space<vmem>>, vector<72x16xf32>
    tpu.vector_store %arg6[%c0_35, %c0_36], %33 {strides = array<i32>} : memref<72x16xf32, #tpu.memory_space<vmem>>, vector<72x16xf32>,
    %c0_37 = arith.constant 0 : index
    %c0_38 = arith.constant 0 : index
    %c10 = arith.constant 10 : index
    %c0_39 = arith.constant 0 : index
    %35 = vector.load %arg2[%c0_37, %c0_38, %c10, %c0_39] : memref<1x1x82x32xf32, #tpu.memory_space<vmem>>, vector<1x1x72x32xf32>
    %36 = vector.shape_cast %35 : vector<1x1x72x32xf32> to vector<72x32xf32>
    %cst_40 = arith.constant 0.000000e+00 : f32
    %37 = vector.broadcast %cst_40 : f32 to vector<72x32xf32>
    %38 = arith.maximumf %36, %37 : vector<72x32xf32>
    %c0_41 = arith.constant 0 : index
    %c0_42 = arith.constant 0 : index
    %39 = vector.load %arg6[%c0_41, %c0_42] : memref<72x16xf32, #tpu.memory_space<vmem>>, vector<72x16xf32>
    %40 = arith.truncf %38 : vector<72x32xf32> to vector<72x32xbf16>
    %c3 = arith.constant 3 : index
    %c0_43 = arith.constant 0 : index
    %c0_44 = arith.constant 0 : index
    %41 = vector.load %arg3[%c3, %c0_43, %c0_44] : memref<4x32x16xbf16, #tpu.memory_space<vmem>>, vector<1x32x16xbf16>
    %42 = vector.shape_cast %41 : vector<1x32x16xbf16> to vector<32x16xbf16>
    %cst_45 = arith.constant dense<0.000000e+00> : vector<72x16xf32>
    %43 = tpu.matmul %40, %42, %cst_45 {dimension_numbers = #tpu.dot_dimension_numbers<[1], [0], [0], [1], [0, 0, 1, 1], [], []>} : vector<72x32xbf16>, vector<32x16xbf16>, vector<72x16xf32> -> vector<72x16xf32>
    %44 = arith.addf %39, %43 : vector<72x16xf32>
    %c0_46 = arith.constant 0 : index
    %c0_47 = arith.constant 0 : index
    %45 = vector.load %arg6[%c0_46, %c0_47] : memref<72x16xf32, #tpu.memory_space<vmem>>, vector<72x16xf32>
    tpu.vector_store %arg6[%c0_46, %c0_47], %44 {strides = array<i32>} : memref<72x16xf32, #tpu.memory_space<vmem>>, vector<72x16xf32>,
    %c0_48 = arith.constant 0 : index
    %c0_49 = arith.constant 0 : index
    %46 = vector.load %arg6[%c0_48, %c0_49] : memref<72x16xf32, #tpu.memory_space<vmem>>, vector<72x16xf32>
    %c0_50 = arith.constant 0 : index
    %c0_51 = arith.constant 0 : index
    %47 = vector.load %arg4[%c0_50, %c0_51] : memref<1x16xf32, #tpu.memory_space<vmem>>, vector<1x16xf32>
    %48 = vector.broadcast %47 : vector<1x16xf32> to vector<72x16xf32>
    %49 = arith.addf %46, %48 : vector<72x16xf32>
    %c0_52 = arith.constant 0 : index
    %c0_53 = arith.constant 0 : index
    %c0_54 = arith.constant 0 : index
    %50 = vector.load %arg5[%c0_52, %c0_53, %c0_54] : memref<1x72x16xf32, #tpu.memory_space<vmem>>, vector<1x72x16xf32>
    %51 = vector.shape_cast %50 : vector<1x72x16xf32> to vector<72x16xf32>
    %52 = vector.shape_cast %49 : vector<72x16xf32> to vector<1x72x16xf32>
    tpu.vector_store %arg5[%c0_52, %c0_53, %c0_54], %52 {strides = array<i32>} : memref<1x72x16xf32, #tpu.memory_space<vmem>>, vector<1x72x16xf32>,
    return
  }
  func.func @transform_0(%arg0: i32, %arg1: i32) -> (i32, i32, i32, i32) {
    %c0_i32 = arith.constant 0 : i32
    %c0_i32_0 = arith.constant 0 : i32
    %c0_i32_1 = arith.constant 0 : i32
    return %arg0, %arg1, %c0_i32, %c0_i32_0 : i32, i32, i32, i32
  }
  func.func @transform_1(%arg0: i32, %arg1: i32) -> (i32, i32, i32) {
    %c0_i32 = arith.constant 0 : i32
    %c0_i32_0 = arith.constant 0 : i32
    %c0_i32_1 = arith.constant 0 : i32
    %c0_i32_2 = arith.constant 0 : i32
    return %c0_i32, %c0_i32_0, %c0_i32_1 : i32, i32, i32
  }
  func.func @transform_2(%arg0: i32, %arg1: i32) -> (i32, i32) {
    %c0_i32 = arith.constant 0 : i32
    %c0_i32_0 = arith.constant 0 : i32
    %c0_i32_1 = arith.constant 0 : i32
    return %c0_i32, %c0_i32_0 : i32, i32
  }
  func.func @transform_3(%arg0: i32, %arg1: i32) -> (i32, i32, i32) {
    %c0_i32 = arith.constant 0 : i32
    %c0_i32_0 = arith.constant 0 : i32
    return %arg0, %arg1, %c0_i32 : i32, i32, i32
  }
}

module attributes {stable_mosaic.version = 11 : i64} {
  func.func @kernel(%arg0: i32, %arg1: i32, %arg2: memref<1x1x290x16xf32, #tpu.memory_space<vmem>>, %arg3: memref<4x16x3xbf16, #tpu.memory_space<vmem>>, %arg4: memref<1x3xf32, #tpu.memory_space<vmem>>, %arg5: memref<1x272x3xf32, #tpu.memory_space<vmem>>, %arg6: memref<272x3xf32, #tpu.memory_space<vmem>>) attributes {dimension_semantics = [#tpu.dimension_semantics<parallel>, #tpu.dimension_semantics<parallel>], iteration_bounds = array<i64: 2, 1>, scalar_prefetch = 0 : i64, scratch_operands = 1 : i64, tpu.core_type = #tpu.core_type<tc>, window_params = [{transform_indices = @transform_0, window_bounds = array<i64: 1, 1, 290, 16>}, {pipeline_mode = #tpu.pipeline_mode<synchronous>, transform_indices = @transform_1, window_bounds = array<i64: 4, 16, 3>}, {pipeline_mode = #tpu.pipeline_mode<synchronous>, transform_indices = @transform_2, window_bounds = array<i64: 1, 3>}, {transform_indices = @transform_3, window_bounds = array<i64: 1, 272, 3>}]} {
    %cst = arith.constant 0.000000e+00 : f32
    %0 = vector.broadcast %cst : f32 to vector<272x3xf32>
    %c0 = arith.constant 0 : index
    %c0_0 = arith.constant 0 : index
    %1 = vector.load %arg6[%c0, %c0_0] : memref<272x3xf32, #tpu.memory_space<vmem>>, vector<272x3xf32>
    tpu.vector_store %arg6[%c0, %c0_0], %0 {strides = array<i32>} : memref<272x3xf32, #tpu.memory_space<vmem>>, vector<272x3xf32>,
    %c0_1 = arith.constant 0 : index
    %c0_2 = arith.constant 0 : index
    %c0_3 = arith.constant 0 : index
    %c0_4 = arith.constant 0 : index
    %2 = vector.load %arg2[%c0_1, %c0_2, %c0_3, %c0_4] : memref<1x1x290x16xf32, #tpu.memory_space<vmem>>, vector<1x1x272x16xf32>
    %3 = vector.shape_cast %2 : vector<1x1x272x16xf32> to vector<272x16xf32>
    %cst_5 = arith.constant 0.000000e+00 : f32
    %4 = vector.broadcast %cst_5 : f32 to vector<272x16xf32>
    %5 = arith.maximumf %3, %4 : vector<272x16xf32>
    %c0_6 = arith.constant 0 : index
    %c0_7 = arith.constant 0 : index
    %6 = vector.load %arg6[%c0_6, %c0_7] : memref<272x3xf32, #tpu.memory_space<vmem>>, vector<272x3xf32>
    %7 = arith.truncf %5 : vector<272x16xf32> to vector<272x16xbf16>
    %c0_8 = arith.constant 0 : index
    %c0_9 = arith.constant 0 : index
    %c0_10 = arith.constant 0 : index
    %8 = vector.load %arg3[%c0_8, %c0_9, %c0_10] : memref<4x16x3xbf16, #tpu.memory_space<vmem>>, vector<1x16x3xbf16>
    %9 = vector.shape_cast %8 : vector<1x16x3xbf16> to vector<16x3xbf16>
    %cst_11 = arith.constant dense<0.000000e+00> : vector<272x3xf32>
    %10 = tpu.matmul %7, %9, %cst_11 {dimension_numbers = #tpu.dot_dimension_numbers<[1], [0], [0], [1], [0, 0, 1, 1], [], []>} : vector<272x16xbf16>, vector<16x3xbf16>, vector<272x3xf32> -> vector<272x3xf32>
    %11 = arith.addf %6, %10 : vector<272x3xf32>
    %c0_12 = arith.constant 0 : index
    %c0_13 = arith.constant 0 : index
    %12 = vector.load %arg6[%c0_12, %c0_13] : memref<272x3xf32, #tpu.memory_space<vmem>>, vector<272x3xf32>
    tpu.vector_store %arg6[%c0_12, %c0_13], %11 {strides = array<i32>} : memref<272x3xf32, #tpu.memory_space<vmem>>, vector<272x3xf32>,
    %c0_14 = arith.constant 0 : index
    %c0_15 = arith.constant 0 : index
    %c1 = arith.constant 1 : index
    %c0_16 = arith.constant 0 : index
    %13 = vector.load %arg2[%c0_14, %c0_15, %c1, %c0_16] : memref<1x1x290x16xf32, #tpu.memory_space<vmem>>, vector<1x1x272x16xf32>
    %14 = vector.shape_cast %13 : vector<1x1x272x16xf32> to vector<272x16xf32>
    %cst_17 = arith.constant 0.000000e+00 : f32
    %15 = vector.broadcast %cst_17 : f32 to vector<272x16xf32>
    %16 = arith.maximumf %14, %15 : vector<272x16xf32>
    %c0_18 = arith.constant 0 : index
    %c0_19 = arith.constant 0 : index
    %17 = vector.load %arg6[%c0_18, %c0_19] : memref<272x3xf32, #tpu.memory_space<vmem>>, vector<272x3xf32>
    %18 = arith.truncf %16 : vector<272x16xf32> to vector<272x16xbf16>
    %c1_20 = arith.constant 1 : index
    %c0_21 = arith.constant 0 : index
    %c0_22 = arith.constant 0 : index
    %19 = vector.load %arg3[%c1_20, %c0_21, %c0_22] : memref<4x16x3xbf16, #tpu.memory_space<vmem>>, vector<1x16x3xbf16>
    %20 = vector.shape_cast %19 : vector<1x16x3xbf16> to vector<16x3xbf16>
    %cst_23 = arith.constant dense<0.000000e+00> : vector<272x3xf32>
    %21 = tpu.matmul %18, %20, %cst_23 {dimension_numbers = #tpu.dot_dimension_numbers<[1], [0], [0], [1], [0, 0, 1, 1], [], []>} : vector<272x16xbf16>, vector<16x3xbf16>, vector<272x3xf32> -> vector<272x3xf32>
    %22 = arith.addf %17, %21 : vector<272x3xf32>
    %c0_24 = arith.constant 0 : index
    %c0_25 = arith.constant 0 : index
    %23 = vector.load %arg6[%c0_24, %c0_25] : memref<272x3xf32, #tpu.memory_space<vmem>>, vector<272x3xf32>
    tpu.vector_store %arg6[%c0_24, %c0_25], %22 {strides = array<i32>} : memref<272x3xf32, #tpu.memory_space<vmem>>, vector<272x3xf32>,
    %c0_26 = arith.constant 0 : index
    %c0_27 = arith.constant 0 : index
    %c17 = arith.constant 17 : index
    %c0_28 = arith.constant 0 : index
    %24 = vector.load %arg2[%c0_26, %c0_27, %c17, %c0_28] : memref<1x1x290x16xf32, #tpu.memory_space<vmem>>, vector<1x1x272x16xf32>
    %25 = vector.shape_cast %24 : vector<1x1x272x16xf32> to vector<272x16xf32>
    %cst_29 = arith.constant 0.000000e+00 : f32
    %26 = vector.broadcast %cst_29 : f32 to vector<272x16xf32>
    %27 = arith.maximumf %25, %26 : vector<272x16xf32>
    %c0_30 = arith.constant 0 : index
    %c0_31 = arith.constant 0 : index
    %28 = vector.load %arg6[%c0_30, %c0_31] : memref<272x3xf32, #tpu.memory_space<vmem>>, vector<272x3xf32>
    %29 = arith.truncf %27 : vector<272x16xf32> to vector<272x16xbf16>
    %c2 = arith.constant 2 : index
    %c0_32 = arith.constant 0 : index
    %c0_33 = arith.constant 0 : index
    %30 = vector.load %arg3[%c2, %c0_32, %c0_33] : memref<4x16x3xbf16, #tpu.memory_space<vmem>>, vector<1x16x3xbf16>
    %31 = vector.shape_cast %30 : vector<1x16x3xbf16> to vector<16x3xbf16>
    %cst_34 = arith.constant dense<0.000000e+00> : vector<272x3xf32>
    %32 = tpu.matmul %29, %31, %cst_34 {dimension_numbers = #tpu.dot_dimension_numbers<[1], [0], [0], [1], [0, 0, 1, 1], [], []>} : vector<272x16xbf16>, vector<16x3xbf16>, vector<272x3xf32> -> vector<272x3xf32>
    %33 = arith.addf %28, %32 : vector<272x3xf32>
    %c0_35 = arith.constant 0 : index
    %c0_36 = arith.constant 0 : index
    %34 = vector.load %arg6[%c0_35, %c0_36] : memref<272x3xf32, #tpu.memory_space<vmem>>, vector<272x3xf32>
    tpu.vector_store %arg6[%c0_35, %c0_36], %33 {strides = array<i32>} : memref<272x3xf32, #tpu.memory_space<vmem>>, vector<272x3xf32>,
    %c0_37 = arith.constant 0 : index
    %c0_38 = arith.constant 0 : index
    %c18 = arith.constant 18 : index
    %c0_39 = arith.constant 0 : index
    %35 = vector.load %arg2[%c0_37, %c0_38, %c18, %c0_39] : memref<1x1x290x16xf32, #tpu.memory_space<vmem>>, vector<1x1x272x16xf32>
    %36 = vector.shape_cast %35 : vector<1x1x272x16xf32> to vector<272x16xf32>
    %cst_40 = arith.constant 0.000000e+00 : f32
    %37 = vector.broadcast %cst_40 : f32 to vector<272x16xf32>
    %38 = arith.maximumf %36, %37 : vector<272x16xf32>
    %c0_41 = arith.constant 0 : index
    %c0_42 = arith.constant 0 : index
    %39 = vector.load %arg6[%c0_41, %c0_42] : memref<272x3xf32, #tpu.memory_space<vmem>>, vector<272x3xf32>
    %40 = arith.truncf %38 : vector<272x16xf32> to vector<272x16xbf16>
    %c3 = arith.constant 3 : index
    %c0_43 = arith.constant 0 : index
    %c0_44 = arith.constant 0 : index
    %41 = vector.load %arg3[%c3, %c0_43, %c0_44] : memref<4x16x3xbf16, #tpu.memory_space<vmem>>, vector<1x16x3xbf16>
    %42 = vector.shape_cast %41 : vector<1x16x3xbf16> to vector<16x3xbf16>
    %cst_45 = arith.constant dense<0.000000e+00> : vector<272x3xf32>
    %43 = tpu.matmul %40, %42, %cst_45 {dimension_numbers = #tpu.dot_dimension_numbers<[1], [0], [0], [1], [0, 0, 1, 1], [], []>} : vector<272x16xbf16>, vector<16x3xbf16>, vector<272x3xf32> -> vector<272x3xf32>
    %44 = arith.addf %39, %43 : vector<272x3xf32>
    %c0_46 = arith.constant 0 : index
    %c0_47 = arith.constant 0 : index
    %45 = vector.load %arg6[%c0_46, %c0_47] : memref<272x3xf32, #tpu.memory_space<vmem>>, vector<272x3xf32>
    tpu.vector_store %arg6[%c0_46, %c0_47], %44 {strides = array<i32>} : memref<272x3xf32, #tpu.memory_space<vmem>>, vector<272x3xf32>,
    %c0_48 = arith.constant 0 : index
    %c0_49 = arith.constant 0 : index
    %46 = vector.load %arg6[%c0_48, %c0_49] : memref<272x3xf32, #tpu.memory_space<vmem>>, vector<272x3xf32>
    %c0_50 = arith.constant 0 : index
    %c0_51 = arith.constant 0 : index
    %47 = vector.load %arg4[%c0_50, %c0_51] : memref<1x3xf32, #tpu.memory_space<vmem>>, vector<1x3xf32>
    %48 = vector.broadcast %47 : vector<1x3xf32> to vector<272x3xf32>
    %49 = arith.addf %46, %48 : vector<272x3xf32>
    %c0_52 = arith.constant 0 : index
    %c0_53 = arith.constant 0 : index
    %c0_54 = arith.constant 0 : index
    %50 = vector.load %arg5[%c0_52, %c0_53, %c0_54] : memref<1x272x3xf32, #tpu.memory_space<vmem>>, vector<1x272x3xf32>
    %51 = vector.shape_cast %50 : vector<1x272x3xf32> to vector<272x3xf32>
    %52 = vector.shape_cast %49 : vector<272x3xf32> to vector<1x272x3xf32>
    tpu.vector_store %arg5[%c0_52, %c0_53, %c0_54], %52 {strides = array<i32>} : memref<1x272x3xf32, #tpu.memory_space<vmem>>, vector<1x272x3xf32>,
    return
  }
  func.func @transform_0(%arg0: i32, %arg1: i32) -> (i32, i32, i32, i32) {
    %c0_i32 = arith.constant 0 : i32
    %c0_i32_0 = arith.constant 0 : i32
    %c0_i32_1 = arith.constant 0 : i32
    return %arg0, %arg1, %c0_i32, %c0_i32_0 : i32, i32, i32, i32
  }
  func.func @transform_1(%arg0: i32, %arg1: i32) -> (i32, i32, i32) {
    %c0_i32 = arith.constant 0 : i32
    %c0_i32_0 = arith.constant 0 : i32
    %c0_i32_1 = arith.constant 0 : i32
    %c0_i32_2 = arith.constant 0 : i32
    return %c0_i32, %c0_i32_0, %c0_i32_1 : i32, i32, i32
  }
  func.func @transform_2(%arg0: i32, %arg1: i32) -> (i32, i32) {
    %c0_i32 = arith.constant 0 : i32
    %c0_i32_0 = arith.constant 0 : i32
    %c0_i32_1 = arith.constant 0 : i32
    return %c0_i32, %c0_i32_0 : i32, i32
  }
  func.func @transform_3(%arg0: i32, %arg1: i32) -> (i32, i32, i32) {
    %c0_i32 = arith.constant 0 : i32
    %c0_i32_0 = arith.constant 0 : i32
    return %arg0, %arg1, %c0_i32 : i32, i32, i32
  }
}

</mosaic_0001>

<llo_original>
// kernel: _lambda_.15
$region0: #{_lambda_.15}
  #allocation0 [shape = 'u32[]', space=smem, size = 0x4, offset = 0x4, fixed_abs, tag = 'smem constant byte address 0x4 - core index']
  #allocation1 [shape = 'u32[144,128]{1,0:T(1,128)}', space=vmem, size = 0x12000, scoped, tag = 'internal scratch']
  #allocation2 [shape = 'f32[64,32]{1,0:T(8,128)}', space=vmem, size = 0x8000, scoped, tag = 'scratch operand']
  %s0 = inlined_call_operand.vmem [shape: f32[2,1,64,16], index: 0, kind: input, shape index: {}]
  %s1 = inlined_call_operand.vmem [shape: bf16[1,16,32], index: 1, kind: input, shape index: {}]
  %s2 = inlined_call_operand.vmem [shape: f32[1,32], index: 2, kind: input, shape index: {}]
  %s3 = inlined_call_operand.vmem [shape: f32[2,64,32], index: 3, kind: input, shape index: {}]
  %s4 = inlined_call_operand.vmem [shape: f32[2,64,32], index: 4, kind: output, shape index: {}]
  %s5 = sld [smem:[#allocation0]]
  $region49: #{_lambda_.15} parent=0
    _
  %s7 = ssub.s32 1, %s5
  %s8 = scalar_select 0, %s7, %s5
  loop: start=0, step=1, limit=4
  $region2: #{_lambda_.15} parent=0 // loop_pre_header
    _
  $region3: #{_lambda_.15} parent=0 // loop_header
    %s10 = sphi 0, %s14
    %p11 = scmp.ge.s32.totalorder %s10, 4
    %s17 = sphi 0, %s29
    %s18 = sphi 0, %s25
    %s19 = sphi 0, %s17
    %s20 = sphi 0, %s18
    %s21 = sphi 0, %s19
    %s22 = sphi 0, %s20
    %s34 = sphi 0, %s36
    %s37 = sphi 0, %s34
    %s38 = sphi 0, %s37
    %s54 = sphi 0, %s38
    %s58 = sphi 0, %s58
    %s60 = sphi 0, %s58
    %s61 = sphi 0, %s60
    %s75 = sphi 0, %s61
    %s79 = sphi 0, %s79
    %s81 = sphi 0, %s79
    %s82 = sphi 0, %s81
    %s96 = sphi 0, %s82
    %s104 = sphi 0, %s106
    %s107 = sphi 0, %s104
    %s108 = sphi 0, %s107
    %s124 = sphi 0, %s108
    %s132 = sphi 0, %s134
    %s135 = sphi 0, %s132
    %s136 = sphi 0, %s135
    %s152 = sphi 0, %s136
  $region4: #{_lambda_.15} parent=0 // loop_header_branch
    %13 = sbr.rel (%p11) target = $region8
  $region5: #{_lambda_.15} parent=0 // loop_body
    %s15 = ssub.s32 %s10, 1
    %s16 = ssub.s32 %s10, 2
    %s23 = sadd.s32 1, %s18
    %p24 = scmp.ge.s32.totalorder %s23, 1
    %s25 = scalar_select %p24, 0, %s23
    %s26 = sadd.s32 1, %s17
    %s27 = scalar_select %p24, %s26, %s17
    %p28 = scmp.ge.s32.totalorder %s27, 2
    %s29 = scalar_select %p28, 0, %s27
    %s30 = ssub.s32 %s17, %s29
    %s31 = ssub.s32 %s18, %s25
    %s32 = sor.u32 %s30, %s31
    %p33 = scmp.eq.s32.totalorder %s32, 0
    %s35 = sadd.s32 %s34, 1
    %s36 = scalar_select %p33, %s34, %s35
    %p39 = pneg %p33
    %p40 = scmp.eq.s32.totalorder %s10, 1
    %p41 = por %p39, %p40
    %p42 = scmp.ne.s32.totalorder %s34, %s37
    %p43 = scmp.eq.s32.totalorder %s10, 0
    %p44 = por %p42, %p43
    %p45 = scmp.ne.s32.totalorder %s34, %s37
    %p46 = scmp.eq.s32.totalorder %s15, 1
    %p47 = por %p45, %p46
    %p48 = scmp.ne.s32.totalorder %s37, %s38
    %p49 = scmp.eq.s32.totalorder %s15, 0
    %p50 = por %p48, %p49
    %p51 = scmp.ne.s32.totalorder %s37, %s38
    %p52 = scmp.eq.s32.totalorder %s16, 1
    %p53 = por %p51, %p52
    %p55 = scmp.ne.s32.totalorder %s38, %s54
    %p56 = scmp.eq.s32.totalorder %s16, 0
    %p57 = por %p55, %p56
    %s59 = sadd.s32 %s58, 1
    %p62 = scmp.eq.s32.totalorder %s10, 1
    %p63 = scmp.ne.s32.totalorder %s58, %s60
    %p64 = scmp.eq.s32.totalorder %s10, 0
    %p65 = por %p63, %p64
    %p66 = scmp.ne.s32.totalorder %s58, %s60
    %p67 = scmp.eq.s32.totalorder %s15, 1
    %p68 = por %p66, %p67
    %p69 = scmp.ne.s32.totalorder %s60, %s61
    %p70 = scmp.eq.s32.totalorder %s15, 0
    %p71 = por %p69, %p70
    %p72 = scmp.ne.s32.totalorder %s60, %s61
    %p73 = scmp.eq.s32.totalorder %s16, 1
    %p74 = por %p72, %p73
    %p76 = scmp.ne.s32.totalorder %s61, %s75
    %p77 = scmp.eq.s32.totalorder %s16, 0
    %p78 = por %p76, %p77
    %s80 = sadd.s32 %s79, 1
    %p83 = scmp.eq.s32.totalorder %s10, 1
    %p84 = scmp.ne.s32.totalorder %s79, %s81
    %p85 = scmp.eq.s32.totalorder %s10, 0
    %p86 = por %p84, %p85
    %p87 = scmp.ne.s32.totalorder %s79, %s81
    %p88 = scmp.eq.s32.totalorder %s15, 1
    %p89 = por %p87, %p88
    %p90 = scmp.ne.s32.totalorder %s81, %s82
    %p91 = scmp.eq.s32.totalorder %s15, 0
    %p92 = por %p90, %p91
    %p93 = scmp.ne.s32.totalorder %s81, %s82
    %p94 = scmp.eq.s32.totalorder %s16, 1
    %p95 = por %p93, %p94
    %p97 = scmp.ne.s32.totalorder %s82, %s96
    %p98 = scmp.eq.s32.totalorder %s16, 0
    %p99 = por %p97, %p98
    %s100 = ssub.s32 %s17, %s29
    %s101 = ssub.s32 %s18, %s25
    %s102 = sor.u32 %s100, %s101
    %p103 = scmp.eq.s32.totalorder %s102, 0
    %s105 = sadd.s32 %s104, 1
    %s106 = scalar_select %p103, %s104, %s105
    %p109 = pneg %p103
    %p110 = scmp.eq.s32.totalorder %s10, 1
    %p111 = por %p109, %p110
    %p112 = scmp.ne.s32.totalorder %s104, %s107
    %p113 = scmp.eq.s32.totalorder %s10, 0
    %p114 = por %p112, %p113
    %p115 = scmp.ne.s32.totalorder %s104, %s107
    %p116 = scmp.eq.s32.totalorder %s15, 1
    %p117 = por %p115, %p116
    %p118 = scmp.ne.s32.totalorder %s107, %s108
    %p119 = scmp.eq.s32.totalorder %s15, 0
    %p120 = por %p118, %p119
    %p121 = scmp.ne.s32.totalorder %s107, %s108
    %p122 = scmp.eq.s32.totalorder %s16, 1
    %p123 = por %p121, %p122
    %p125 = scmp.ne.s32.totalorder %s108, %s124
    %p126 = scmp.eq.s32.totalorder %s16, 0
    %p127 = por %p125, %p126
    %s128 = ssub.s32 %s17, %s29
    %s129 = ssub.s32 %s18, %s25
    %s130 = sor.u32 %s128, %s129
    %p131 = scmp.eq.s32.totalorder %s130, 0
    %s133 = sadd.s32 %s132, 1
    %s134 = scalar_select %p131, %s132, %s133
    %p137 = pneg %p131
    %p138 = scmp.eq.s32.totalorder %s10, 1
    %p139 = por %p137, %p138
    %p140 = scmp.ne.s32.totalorder %s132, %s135
    %p141 = scmp.eq.s32.totalorder %s10, 0
    %p142 = por %p140, %p141
    %p143 = scmp.ne.s32.totalorder %s132, %s135
    %p144 = scmp.eq.s32.totalorder %s15, 1
    %p145 = por %p143, %p144
    %p146 = scmp.ne.s32.totalorder %s135, %s136
    %p147 = scmp.eq.s32.totalorder %s15, 0
    %p148 = por %p146, %p147
    %p149 = scmp.ne.s32.totalorder %s135, %s136
    %p150 = scmp.eq.s32.totalorder %s16, 1
    %p151 = por %p149, %p150
    %p153 = scmp.ne.s32.totalorder %s136, %s152
    %p154 = scmp.eq.s32.totalorder %s16, 0
    %p155 = por %p153, %p154
    %p156 = scmp.le.s32.totalorder 1, %s10
    %p157 = scmp.lt.s32.totalorder %s10, 3
    %p158 = pnand %p156, %p157
    %p159 = pneg %p158
    // Predicated region
    $region9: #{_lambda_.15} parent=5 // pred_check
      _
    $region10: #{_lambda_.15} parent=5 // pred_check_branch
      %161 = sbr.rel (%p158) target = $region12
    $region11: #{_lambda_.15} parent=5 // pred_region
      %s162 = ssub.s32 %s10, 1
      // Predicated region
      $region13: #{_lambda_.15} parent=11 // pred_check
        %p163 = pneg %p71
      $region14: #{_lambda_.15} parent=11 // pred_check_branch
        %165 = sbr.rel (%p163) target = $region16
      $region15: #{_lambda_.15} parent=11 // pred_region
        _
      $region16: #{_lambda_.15} parent=11 // pred_fallthru
        _
      // Predicated region
      $region17: #{_lambda_.15} parent=11 // pred_check
        %p166 = pneg %p92
      $region18: #{_lambda_.15} parent=11 // pred_check_branch
        %168 = sbr.rel (%p166) target = $region20
      $region19: #{_lambda_.15} parent=11 // pred_region
        _
      $region20: #{_lambda_.15} parent=11 // pred_fallthru
        _
    $region12: #{_lambda_.15} parent=5 // pred_fallthru
      _
    %p169 = scmp.lt.s32.totalorder %s10, 2
    // Predicated region
    $region21: #{_lambda_.15} parent=5 // pred_check
      %p170 = pneg %p169
    $region22: #{_lambda_.15} parent=5 // pred_check_branch
      %172 = sbr.rel (%p170) target = $region24
    $region23: #{_lambda_.15} parent=5 // pred_region
      // Predicated region
      $region25: #{_lambda_.15} parent=23 // pred_check
        %p173 = pneg %p44
      $region26: #{_lambda_.15} parent=23 // pred_check_branch
        %175 = sbr.rel (%p173) target = $region28
      $region27: #{_lambda_.15} parent=23 // pred_region
        %p176 = scmp.lt.s32.totalorder %s17, 1
        %s177 = scalar_select %p176, %s17, 1
        %p178 = scmp.lt.s32.totalorder %s18, 0
        %s179 = scalar_select %p178, %s18, 0
        %s180 = smul.addr %s179, 8
        %s181 = smul.addr %s177, 8
        %s182 = sadd.s32 %s180, %s181
        %s183 = smul.addr %s182, 8
        %s184 = scalar_lea.vmem %s0, %s183
      $region28: #{_lambda_.15} parent=23 // pred_fallthru
        _
      // Predicated region
      $region29: #{_lambda_.15} parent=23 // pred_check
        %p185 = pneg %p114
      $region30: #{_lambda_.15} parent=23 // pred_check_branch
        %187 = sbr.rel (%p185) target = $region32
      $region31: #{_lambda_.15} parent=23 // pred_region
        %s188 = smul.u32 8, %s18
        %p189 = scmp.lt.s32.totalorder %s17, 1
        %s190 = scalar_select %p189, %s17, 1
        %p191 = scmp.lt.s32.totalorder %s188, 7
        %s192 = scalar_select %p191, %s188, 7
        %s193 = smul.addr %s190, 8
        %s194 = sadd.s32 %s192, %s193
        %s195 = smul.addr %s194, 8
        %s196 = scalar_lea.vmem %s3, %s195
        %s197 = smul.u32 8, %s18
      $region32: #{_lambda_.15} parent=23 // pred_fallthru
        _
    $region24: #{_lambda_.15} parent=5 // pred_fallthru
      _
    %p198 = scmp.le.s32.totalorder 1, %s10
    %p199 = scmp.lt.s32.totalorder %s10, 3
    %p200 = pnand %p198, %p199
    %p201 = pneg %p200
    // Predicated region
    $region33: #{_lambda_.15} parent=5 // pred_check
      _
    $region34: #{_lambda_.15} parent=5 // pred_check_branch
      %203 = sbr.rel (%p200) target = $region36
    $region35: #{_lambda_.15} parent=5 // pred_region
      %s204 = ssub.s32 %s10, 1
      %p205 = scmp.lt.s32.totalorder %s19, 1
      %s206 = scalar_select %p205, %s19, 1
      %p207 = scmp.lt.s32.totalorder %s20, 0
      %s208 = scalar_select %p207, %s20, 0
      %s209 = smul.addr %s208, 8
      %s210 = smul.addr %s206, 8
      %s211 = sadd.s32 %s209, %s210
      %s212 = smul.addr %s211, 8
      %s213 = scalar_lea.vmem %s0, %s212
      %p214 = pneg %p50
      %p215 = pneg %p47
      %p216 = pneg %p71
      %p217 = pneg %p68
      %p218 = pneg %p92
      %p219 = pneg %p89
      %s220 = smul.u32 8, %s20
      %p221 = scmp.lt.s32.totalorder %s19, 1
      %s222 = scalar_select %p221, %s19, 1
      %p223 = scmp.lt.s32.totalorder %s220, 7
      %s224 = scalar_select %p223, %s220, 7
      %s225 = smul.addr %s222, 8
      %s226 = sadd.s32 %s224, %s225
      %s227 = smul.addr %s226, 8
      %s228 = scalar_lea.vmem %s3, %s227
      %p229 = pneg %p120
      %p230 = pneg %p117
      %p231 = pneg %p148
      %p232 = pneg %p145
      %s233 = smul.u32 8, %s20
      %p234 = scmp.lt.s32.totalorder %s19, 1
      %s235 = scalar_select %p234, %s19, 1
      %p236 = scmp.lt.s32.totalorder %s233, 7
      %s237 = scalar_select %p236, %s233, 7
      %s238 = smul.addr %s235, 8
      %s239 = sadd.s32 %s237, %s238
      %s240 = smul.addr %s239, 8
      %s241 = scalar_lea.vmem %s4, %s240
      %p242 = scmp.lt.s32.totalorder %s19, 1
      %s243 = scalar_select %p242, %s19, 1
      %p244 = scmp.lt.s32.totalorder %s20, 0
      %s245 = scalar_select %p244, %s20, 0
      %s246 = smul.addr %s245, 8
      %s247 = smul.addr %s243, 8
      %s248 = sadd.s32 %s246, %s247
      %s249 = smul.addr %s248, 8
      %s250 = scalar_lea.vmem %s0, %s249
      %s251 = smul.u32 8, %s20
      %p252 = scmp.lt.s32.totalorder %s19, 1
      %s253 = scalar_select %p252, %s19, 1
      %p254 = scmp.lt.s32.totalorder %s251, 7
      %s255 = scalar_select %p254, %s251, 7
      %s256 = smul.addr %s253, 8
      %s257 = sadd.s32 %s255, %s256
      %s258 = smul.addr %s257, 8
      %s259 = scalar_lea.vmem %s3, %s258
      %s260 = smul.u32 8, %s20
      %s261 = smul.u32 8, %s20
      %p262 = scmp.lt.s32.totalorder %s19, 1
      %s263 = scalar_select %p262, %s19, 1
      %p264 = scmp.lt.s32.totalorder %s261, 7
      %s265 = scalar_select %p264, %s261, 7
      %s266 = smul.addr %s263, 8
      %s267 = sadd.s32 %s265, %s266
      %s268 = smul.addr %s267, 8
      %s269 = scalar_lea.vmem %s4, %s268
      %s270 = smul.u32 8, %s20
      %vm272 = vcmask 261120
      %273 = vst.msk [vmem:[#allocation2] sm:$0xff] %vm272, 0.0
      %274 = vst.msk [vmem:[#allocation2 + $0x8] sm:$0xff] %vm272, 0.0
      %275 = vst.msk [vmem:[#allocation2 + $0x10] sm:$0xff] %vm272, 0.0
      %276 = vst.msk [vmem:[#allocation2 + $0x18] sm:$0xff] %vm272, 0.0
      %277 = vst.msk [vmem:[#allocation2 + $0x20] sm:$0xff] %vm272, 0.0
      %278 = vst.msk [vmem:[#allocation2 + $0x28] sm:$0xff] %vm272, 0.0
      %279 = vst.msk [vmem:[#allocation2 + $0x30] sm:$0xff] %vm272, 0.0
      %280 = vst.msk [vmem:[#allocation2 + $0x38] sm:$0xff] %vm272, 0.0
      %v281 = vld [vmem:[%s250] sm:$0xff]
      %v282 = vld [vmem:[%s250 + $0x8] sm:$0xff]
      %v283 = vld [vmem:[%s250 + $0x10] sm:$0xff]
      %v284 = vld [vmem:[%s250 + $0x18] sm:$0xff]
      %v285 = vld [vmem:[%s250 + $0x20] sm:$0xff]
      %v286 = vld [vmem:[%s250 + $0x28] sm:$0xff]
      %v287 = vld [vmem:[%s250 + $0x30] sm:$0xff]
      %v288 = vld [vmem:[%s250 + $0x38] sm:$0xff]
      %v289 = vmax.f32 %v281, 0.0
      %v290 = vmax.f32 %v282, 0.0
      %v291 = vmax.f32 %v283, 0.0
      %v292 = vmax.f32 %v284, 0.0
      %v293 = vmax.f32 %v285, 0.0
      %v294 = vmax.f32 %v286, 0.0
      %v295 = vmax.f32 %v287, 0.0
      %v296 = vmax.f32 %v288, 0.0
      %v297 = vld [vmem:[#allocation2] sm:$0xff]
      %v298 = vld [vmem:[#allocation2 + $0x8] sm:$0xff]
      %v299 = vld [vmem:[#allocation2 + $0x10] sm:$0xff]
      %v300 = vld [vmem:[#allocation2 + $0x18] sm:$0xff]
      %v301 = vld [vmem:[#allocation2 + $0x20] sm:$0xff]
      %v302 = vld [vmem:[#allocation2 + $0x28] sm:$0xff]
      %v303 = vld [vmem:[#allocation2 + $0x30] sm:$0xff]
      %v304 = vld [vmem:[#allocation2 + $0x38] sm:$0xff]
      %v305 = vpack.c.bf16 %v290, %v289
      %v306 = vpack.c.bf16 %v292, %v291
      %v307 = vpack.c.bf16 %v294, %v293
      %v308 = vpack.c.bf16 %v296, %v295
      %v309 = vld [vmem:[%s1] sm:$0xf]
      %v310 = vld [vmem:[%s1 + $0x4] sm:$0xf]
      %v313 = vunpack.c.l.b16 %v309
      %v314 = vunpack.c.l.b16 %v310
      %v315 = vpack.c.b16 %v314, %v313
      %vm317 = vcmask 130048
      %v319 = vsel %vm317, %v305, 0
      %v322 = vsel %vm317, %v306, 0
      %v325 = vsel %vm317, %v307, 0
      %v328 = vsel %vm317, %v308, 0
      %330 = vmatprep.subr.bf16.mxu0 0
      %331 = vmatpush1.bf16.msra.mxu0 0
      %332 = vmatprep.subr.bf16.mxu0 0
      %333 = vmatpush1.bf16.msra.mxu0 0
      %334 = vmatprep.subr.bf16.mxu0 0
      %335 = vmatpush1.bf16.msra.mxu0 0
      %336 = vmatprep.subr.bf16.mxu0 0
      %337 = vmatpush1.bf16.msra.mxu0 0
      %338 = vmatprep.subr.bf16.mxu0 0
      %339 = vmatpush1.bf16.msra.mxu0 0
      %340 = vmatprep.subr.bf16.mxu0 0
      %341 = vmatpush1.bf16.msra.mxu0 0
      %342 = vmatprep.subr.bf16.mxu0 0
      %343 = vmatpush1.bf16.msra.mxu0 0
      %344 = vmatprep.subr.bf16.mxu0 0
      %345 = vmatpush1.bf16.msra.mxu0 %v315
      %346 = vmatprep.subr.bf16.mxu0 0
      %347 = vmatpush2.bf16.msra.mxu0 0
      %348 = vmatprep.subr.bf16.mxu0 0
      %349 = vmatpush2.bf16.msra.mxu0 0
      %350 = vmatprep.subr.bf16.mxu0 0
      %351 = vmatpush2.bf16.msra.mxu0 0
      %352 = vmatprep.subr.bf16.mxu0 0
      %353 = vmatpush2.bf16.msra.mxu0 0
      %354 = vmatprep.subr.bf16.mxu0 0
      %355 = vmatpush2.bf16.msra.mxu0 0
      %356 = vmatprep.subr.bf16.mxu0 0
      %357 = vmatpush2.bf16.msra.mxu0 0
      %358 = vmatprep.subr.bf16.mxu0 0
      %359 = vmatpush2.bf16.msra.mxu0 0
      %360 = vmatprep.subr.bf16.mxu0 0
      %361 = vmatpush2.bf16.msra.mxu0 0
      %362 = vmatprep.mubr.bf16.mxu0 0
      %363 = vmatmul.mubr.bf16.gmra.mxu0 %v319
      %v364 = vpop.f32.mrf.mxu0
      %v365 = vadd.f32 0.0, %v364
      %v366 = vpop.f32.mrf.mxu0
      %v367 = vpop.f32.mrf.mxu0
      %v368 = vadd.f32 0.0, %v367
      %v369 = vpop.f32.mrf.mxu0
      %370 = vmatprep.mubr.bf16.mxu0 0
      %371 = vmatmul.mubr.bf16.gmra.mxu0 %v322
      %v372 = vpop.f32.mrf.mxu0
      %v373 = vadd.f32 0.0, %v372
      %v374 = vpop.f32.mrf.mxu0
      %v375 = vpop.f32.mrf.mxu0
      %v376 = vadd.f32 0.0, %v375
      %v377 = vpop.f32.mrf.mxu0
      %378 = vmatprep.mubr.bf16.mxu0 0
      %379 = vmatmul.mubr.bf16.gmra.mxu0 %v325
      %v380 = vpop.f32.mrf.mxu0
      %v381 = vadd.f32 0.0, %v380
      %v382 = vpop.f32.mrf.mxu0
      %v383 = vpop.f32.mrf.mxu0
      %v384 = vadd.f32 0.0, %v383
      %v385 = vpop.f32.mrf.mxu0
      %386 = vmatprep.mubr.bf16.mxu0 0
      %387 = vmatmul.mubr.bf16.gmra.mxu0 %v328
      %v388 = vpop.f32.mrf.mxu0
      %v389 = vadd.f32 0.0, %v388
      %v390 = vpop.f32.mrf.mxu0
      %v391 = vpop.f32.mrf.mxu0
      %v392 = vadd.f32 0.0, %v391
      %v393 = vpop.f32.mrf.mxu0
      %394 = vdwg.mxu0
      %v395 = vadd.f32 %v297, %v365
      %v396 = vadd.f32 %v298, %v368
      %v397 = vadd.f32 %v299, %v373
      %v398 = vadd.f32 %v300, %v376
      %v399 = vadd.f32 %v301, %v381
      %v400 = vadd.f32 %v302, %v384
      %v401 = vadd.f32 %v303, %v389
      %v402 = vadd.f32 %v304, %v392
      %403 = vst.msk [vmem:[#allocation2] sm:$0xff] %vm272, %v395
      %404 = vst.msk [vmem:[#allocation2 + $0x8] sm:$0xff] %vm272, %v396
      %405 = vst.msk [vmem:[#allocation2 + $0x10] sm:$0xff] %vm272, %v397
      %406 = vst.msk [vmem:[#allocation2 + $0x18] sm:$0xff] %vm272, %v398
      %407 = vst.msk [vmem:[#allocation2 + $0x20] sm:$0xff] %vm272, %v399
      %408 = vst.msk [vmem:[#allocation2 + $0x28] sm:$0xff] %vm272, %v400
      %409 = vst.msk [vmem:[#allocation2 + $0x30] sm:$0xff] %vm272, %v401
      %410 = vst.msk [vmem:[#allocation2 + $0x38] sm:$0xff] %vm272, %v402
      %v411 = vld [vmem:[#allocation2] sm:$0xff]
      %v412 = vld [vmem:[#allocation2 + $0x8] sm:$0xff]
      %v413 = vld [vmem:[#allocation2 + $0x10] sm:$0xff]
      %v414 = vld [vmem:[#allocation2 + $0x18] sm:$0xff]
      %v415 = vld [vmem:[#allocation2 + $0x20] sm:$0xff]
      %v416 = vld [vmem:[#allocation2 + $0x28] sm:$0xff]
      %v417 = vld [vmem:[#allocation2 + $0x30] sm:$0xff]
      %v418 = vld [vmem:[#allocation2 + $0x38] sm:$0xff]
      %v419 = vld [vmem:[%s2] sm:$0x1]
      %v421 = vlaneseq
      %v422 = vshrl.u32 %v421, 7
      %v423 = vsub.s32 0, %v422
      %v424 = vrot.slane %v419, %v423
      %v426 = vadd.f32 %v411, %v424
      %v427 = vadd.f32 %v412, %v424
      %v428 = vadd.f32 %v413, %v424
      %v429 = vadd.f32 %v414, %v424
      %v430 = vadd.f32 %v415, %v424
      %v431 = vadd.f32 %v416, %v424
      %v432 = vadd.f32 %v417, %v424
      %v433 = vadd.f32 %v418, %v424
      %v434 = vld [vmem:[%s259] sm:$0xff]
      %v435 = vld [vmem:[%s259 + $0x8] sm:$0xff]
      %v436 = vld [vmem:[%s259 + $0x10] sm:$0xff]
      %v437 = vld [vmem:[%s259 + $0x18] sm:$0xff]
      %v438 = vld [vmem:[%s259 + $0x20] sm:$0xff]
      %v439 = vld [vmem:[%s259 + $0x28] sm:$0xff]
      %v440 = vld [vmem:[%s259 + $0x30] sm:$0xff]
      %v441 = vld [vmem:[%s259 + $0x38] sm:$0xff]
      %v442 = vadd.f32 %v426, %v434
      %v443 = vadd.f32 %v427, %v435
      %v444 = vadd.f32 %v428, %v436
      %v445 = vadd.f32 %v429, %v437
      %v446 = vadd.f32 %v430, %v438
      %v447 = vadd.f32 %v431, %v439
      %v448 = vadd.f32 %v432, %v440
      %v449 = vadd.f32 %v433, %v441
      %450 = vst.msk [vmem:[%s269] sm:$0xff] %vm272, %v442
      %451 = vst.msk [vmem:[%s269 + $0x8] sm:$0xff] %vm272, %v443
      %452 = vst.msk [vmem:[%s269 + $0x10] sm:$0xff] %vm272, %v444
      %453 = vst.msk [vmem:[%s269 + $0x18] sm:$0xff] %vm272, %v445
      %454 = vst.msk [vmem:[%s269 + $0x20] sm:$0xff] %vm272, %v446
      %455 = vst.msk [vmem:[%s269 + $0x28] sm:$0xff] %vm272, %v447
      %456 = vst.msk [vmem:[%s269 + $0x30] sm:$0xff] %vm272, %v448
      %457 = vst.msk [vmem:[%s269 + $0x38] sm:$0xff] %vm272, %v449
      %s458 = smul.u32 8, %s20
      %p459 = scmp.lt.s32.totalorder %s19, 1
      %s460 = scalar_select %p459, %s19, 1
      %p461 = scmp.lt.s32.totalorder %s458, 7
      %s462 = scalar_select %p461, %s458, 7
      %s463 = smul.addr %s460, 8
      %s464 = sadd.s32 %s462, %s463
      %s465 = smul.addr %s464, 8
      %s466 = scalar_lea.vmem %s4, %s465
      // Predicated region
      $region37: #{_lambda_.15} parent=35 // pred_check
        %p467 = pneg %p145
      $region38: #{_lambda_.15} parent=35 // pred_check_branch
        %469 = sbr.rel (%p467) target = $region40
      $region39: #{_lambda_.15} parent=35 // pred_region
        %s470 = smul.u32 8, %s20
      $region40: #{_lambda_.15} parent=35 // pred_fallthru
        _
    $region36: #{_lambda_.15} parent=5 // pred_fallthru
      _
    %p471 = scmp.le.s32.totalorder 2, %s10
    // Predicated region
    $region41: #{_lambda_.15} parent=5 // pred_check
      %p472 = pneg %p471
    $region42: #{_lambda_.15} parent=5 // pred_check_branch
      %474 = sbr.rel (%p472) target = $region44
    $region43: #{_lambda_.15} parent=5 // pred_region
      %s475 = ssub.s32 %s10, 2
      // Predicated region
      $region45: #{_lambda_.15} parent=43 // pred_check
        %p476 = pneg %p151
      $region46: #{_lambda_.15} parent=43 // pred_check_branch
        %478 = sbr.rel (%p476) target = $region48
      $region47: #{_lambda_.15} parent=43 // pred_region
        %s479 = smul.u32 8, %s22
        %p480 = scmp.lt.s32.totalorder %s21, 1
        %s481 = scalar_select %p480, %s21, 1
        %p482 = scmp.lt.s32.totalorder %s479, 7
        %s483 = scalar_select %p482, %s479, 7
        %s484 = smul.addr %s481, 8
        %s485 = sadd.s32 %s483, %s484
        %s486 = smul.addr %s485, 8
        %s487 = scalar_lea.vmem %s4, %s486
      $region48: #{_lambda_.15} parent=43 // pred_fallthru
        _
    $region44: #{_lambda_.15} parent=5 // pred_fallthru
      _
  $region6: #{_lambda_.15} parent=0 // loop_footer
    %s14 = sadd.s32 1, %s10
  $region7: #{_lambda_.15} parent=0 // loop_footer_branch
    %9 = sbr.rel target = $region3
  $region8: #{_lambda_.15} parent=0 // loop_exit
    _

// kernel: _lambda_.13
$region0: #{_lambda_.13}
  #allocation0 [shape = 'u32[]', space=smem, size = 0x4, offset = 0x4, fixed_abs, tag = 'smem constant byte address 0x4 - core index']
  #allocation1 [shape = 'u32[144,128]{1,0:T(1,128)}', space=vmem, size = 0x12000, scoped, tag = 'internal scratch']
  #allocation2 [shape = 'f32[80,32]{1,0:T(8,128)}', space=vmem, size = 0xa000, scoped, tag = 'scratch operand']
  %s0 = inlined_call_operand.vmem [shape: f32[2,1,102,4], index: 0, kind: input, shape index: {}]
  %s1 = inlined_call_operand.vmem [shape: bf16[9,4,32], index: 1, kind: input, shape index: {}]
  %s2 = inlined_call_operand.hbm [shape: f32[1,32], index: 2, kind: input, shape index: {}]
  %s3 = inlined_call_operand.vmem [shape: f32[2,80,32], index: 3, kind: output, shape index: {}]
  %s4 = sld [smem:[#allocation0]]
  $region49: #{_lambda_.13} parent=0
    _
  %s6 = ssub.s32 1, %s4
  %s7 = scalar_select 0, %s6, %s4
  $region1: #{_lambda_.13} parent=0
    #allocation3 [shape = 'u8[512]{0}', space=vmem, size = 0x400, scoped, tag = 'input window, operand 2, single buffered']
    #allocation4 [shape = 's32[2]{0}', space=sflag, size = 0x8, scoped, tag = 'scoped memory for _lambda_.13']
    %8 = vsyncpa [#allocation4], 0
    loop: start=0, step=1, limit=4
    $region2: #{_lambda_.13} parent=1 // loop_pre_header
      _
    $region3: #{_lambda_.13} parent=1 // loop_header
      %s10 = sphi 0, %s14
      %p11 = scmp.ge.s32.totalorder %s10, 4
      %s17 = sphi 0, %s29
      %s18 = sphi 0, %s25
      %s19 = sphi 0, %s17
      %s20 = sphi 0, %s18
      %s21 = sphi 0, %s19
      %s22 = sphi 0, %s20
      %s34 = sphi 0, %s36
      %s37 = sphi 0, %s34
      %s38 = sphi 0, %s37
      %s54 = sphi 0, %s38
      %s58 = sphi 0, %s58
      %s60 = sphi 0, %s58
      %s61 = sphi 0, %s60
      %s75 = sphi 0, %s61
      %s79 = sphi 0, %s79
      %s81 = sphi 0, %s79
      %s82 = sphi 0, %s81
      %s96 = sphi 0, %s82
      %s104 = sphi 0, %s106
      %s107 = sphi 0, %s104
      %s108 = sphi 0, %s107
      %s124 = sphi 0, %s108
    $region4: #{_lambda_.13} parent=1 // loop_header_branch
      %13 = sbr.rel (%p11) target = $region8
    $region5: #{_lambda_.13} parent=1 // loop_body
      %s15 = ssub.s32 %s10, 1
      %s16 = ssub.s32 %s10, 2
      %s23 = sadd.s32 1, %s18
      %p24 = scmp.ge.s32.totalorder %s23, 1
      %s25 = scalar_select %p24, 0, %s23
      %s26 = sadd.s32 1, %s17
      %s27 = scalar_select %p24, %s26, %s17
      %p28 = scmp.ge.s32.totalorder %s27, 2
      %s29 = scalar_select %p28, 0, %s27
      %s30 = ssub.s32 %s17, %s29
      %s31 = ssub.s32 %s18, %s25
      %s32 = sor.u32 %s30, %s31
      %p33 = scmp.eq.s32.totalorder %s32, 0
      %s35 = sadd.s32 %s34, 1
      %s36 = scalar_select %p33, %s34, %s35
      %p39 = pneg %p33
      %p40 = scmp.eq.s32.totalorder %s10, 1
      %p41 = por %p39, %p40
      %p42 = scmp.ne.s32.totalorder %s34, %s37
      %p43 = scmp.eq.s32.totalorder %s10, 0
      %p44 = por %p42, %p43
      %p45 = scmp.ne.s32.totalorder %s34, %s37
      %p46 = scmp.eq.s32.totalorder %s15, 1
      %p47 = por %p45, %p46
      %p48 = scmp.ne.s32.totalorder %s37, %s38
      %p49 = scmp.eq.s32.totalorder %s15, 0
      %p50 = por %p48, %p49
      %p51 = scmp.ne.s32.totalorder %s37, %s38
      %p52 = scmp.eq.s32.totalorder %s16, 1
      %p53 = por %p51, %p52
      %p55 = scmp.ne.s32.totalorder %s38, %s54
      %p56 = scmp.eq.s32.totalorder %s16, 0
      %p57 = por %p55, %p56
      %s59 = sadd.s32 %s58, 1
      %p62 = scmp.eq.s32.totalorder %s10, 1
      %p63 = scmp.ne.s32.totalorder %s58, %s60
      %p64 = scmp.eq.s32.totalorder %s10, 0
      %p65 = por %p63, %p64
      %p66 = scmp.ne.s32.totalorder %s58, %s60
      %p67 = scmp.eq.s32.totalorder %s15, 1
      %p68 = por %p66, %p67
      %p69 = scmp.ne.s32.totalorder %s60, %s61
      %p70 = scmp.eq.s32.totalorder %s15, 0
      %p71 = por %p69, %p70
      %p72 = scmp.ne.s32.totalorder %s60, %s61
      %p73 = scmp.eq.s32.totalorder %s16, 1
      %p74 = por %p72, %p73
      %p76 = scmp.ne.s32.totalorder %s61, %s75
      %p77 = scmp.eq.s32.totalorder %s16, 0
      %p78 = por %p76, %p77
      %s80 = sadd.s32 %s79, 1
      %p83 = scmp.eq.s32.totalorder %s10, 1
      %p84 = scmp.ne.s32.totalorder %s79, %s81
      %p85 = scmp.eq.s32.totalorder %s10, 0
      %p86 = por %p84, %p85
      %p87 = scmp.ne.s32.totalorder %s79, %s81
      %p88 = scmp.eq.s32.totalorder %s15, 1
      %p89 = por %p87, %p88
      %p90 = scmp.ne.s32.totalorder %s81, %s82
      %p91 = scmp.eq.s32.totalorder %s15, 0
      %p92 = por %p90, %p91
      %p93 = scmp.ne.s32.totalorder %s81, %s82
      %p94 = scmp.eq.s32.totalorder %s16, 1
      %p95 = por %p93, %p94
      %p97 = scmp.ne.s32.totalorder %s82, %s96
      %p98 = scmp.eq.s32.totalorder %s16, 0
      %p99 = por %p97, %p98
      %s100 = ssub.s32 %s17, %s29
      %s101 = ssub.s32 %s18, %s25
      %s102 = sor.u32 %s100, %s101
      %p103 = scmp.eq.s32.totalorder %s102, 0
      %s105 = sadd.s32 %s104, 1
      %s106 = scalar_select %p103, %s104, %s105
      %p109 = pneg %p103
      %p110 = scmp.eq.s32.totalorder %s10, 1
      %p111 = por %p109, %p110
      %p112 = scmp.ne.s32.totalorder %s104, %s107
      %p113 = scmp.eq.s32.totalorder %s10, 0
      %p114 = por %p112, %p113
      %p115 = scmp.ne.s32.totalorder %s104, %s107
      %p116 = scmp.eq.s32.totalorder %s15, 1
      %p117 = por %p115, %p116
      %p118 = scmp.ne.s32.totalorder %s107, %s108
      %p119 = scmp.eq.s32.totalorder %s15, 0
      %p120 = por %p118, %p119
      %p121 = scmp.ne.s32.totalorder %s107, %s108
      %p122 = scmp.eq.s32.totalorder %s16, 1
      %p123 = por %p121, %p122
      %p125 = scmp.ne.s32.totalorder %s108, %s124
      %p126 = scmp.eq.s32.totalorder %s16, 0
      %p127 = por %p125, %p126
      %p128 = scmp.le.s32.totalorder 1, %s10
      %p129 = scmp.lt.s32.totalorder %s10, 3
      %p130 = pnand %p128, %p129
      %p131 = pneg %p130
      // Predicated region
      $region9: #{_lambda_.13} parent=5 // pred_check
        _
      $region10: #{_lambda_.13} parent=5 // pred_check_branch
        %133 = sbr.rel (%p130) target = $region12
      $region11: #{_lambda_.13} parent=5 // pred_region
        %s134 = ssub.s32 %s10, 1
        // Predicated region
        $region13: #{_lambda_.13} parent=11 // pred_check
          %p135 = pneg %p71
        $region14: #{_lambda_.13} parent=11 // pred_check_branch
          %137 = sbr.rel (%p135) target = $region16
        $region15: #{_lambda_.13} parent=11 // pred_region
          _
        $region16: #{_lambda_.13} parent=11 // pred_fallthru
          _
        // Predicated region
        $region17: #{_lambda_.13} parent=11 // pred_check
          %p138 = pneg %p92
        $region18: #{_lambda_.13} parent=11 // pred_check_branch
          %140 = sbr.rel (%p138) target = $region20
        $region19: #{_lambda_.13} parent=11 // pred_region
          %s142 = ssub.s32 16, 16
          %143 = vsyncadd [#allocation4], %s142
          %s145 = sshll.u32 [#allocation3], 4
          %s146 = int_to_ptr.vmem [resolvable:$true] %s145
          %148 = dma.hbm_to_vmem [thread:$0]  %s2, 16, %s146, [#allocation4]
        $region20: #{_lambda_.13} parent=11 // pred_fallthru
          _
      $region12: #{_lambda_.13} parent=5 // pred_fallthru
        _
      %p149 = scmp.lt.s32.totalorder %s10, 2
      // Predicated region
      $region21: #{_lambda_.13} parent=5 // pred_check
        %p150 = pneg %p149
      $region22: #{_lambda_.13} parent=5 // pred_check_branch
        %152 = sbr.rel (%p150) target = $region24
      $region23: #{_lambda_.13} parent=5 // pred_region
        // Predicated region
        $region25: #{_lambda_.13} parent=23 // pred_check
          %p153 = pneg %p44
        $region26: #{_lambda_.13} parent=23 // pred_check_branch
          %155 = sbr.rel (%p153) target = $region28
        $region27: #{_lambda_.13} parent=23 // pred_region
          %p156 = scmp.lt.s32.totalorder %s17, 1
          %s157 = scalar_select %p156, %s17, 1
          %p158 = scmp.lt.s32.totalorder %s18, 0
          %s159 = scalar_select %p158, %s18, 0
          %s160 = smul.addr %s159, 13
          %s161 = smul.addr %s157, 13
          %s162 = sadd.s32 %s160, %s161
          %s163 = smul.addr %s162, 8
          %s164 = scalar_lea.vmem %s0, %s163
        $region28: #{_lambda_.13} parent=23 // pred_fallthru
          _
      $region24: #{_lambda_.13} parent=5 // pred_fallthru
        _
      %p165 = scmp.le.s32.totalorder 1, %s10
      %p166 = scmp.lt.s32.totalorder %s10, 3
      %p167 = pnand %p165, %p166
      %p168 = pneg %p167
      // Predicated region
      $region29: #{_lambda_.13} parent=5 // pred_check
        _
      $region30: #{_lambda_.13} parent=5 // pred_check_branch
        %170 = sbr.rel (%p167) target = $region32
      $region31: #{_lambda_.13} parent=5 // pred_region
        %s171 = ssub.s32 %s10, 1
        // Predicated region
        $region33: #{_lambda_.13} parent=31 // pred_check
          %p172 = pneg %p92
        $region34: #{_lambda_.13} parent=31 // pred_check_branch
          %174 = sbr.rel (%p172) target = $region36
        $region35: #{_lambda_.13} parent=31 // pred_region
          %175 = dma.done [#allocation4], 16
        $region36: #{_lambda_.13} parent=31 // pred_fallthru
          _
        %p176 = scmp.lt.s32.totalorder %s19, 1
        %s177 = scalar_select %p176, %s19, 1
        %p178 = scmp.lt.s32.totalorder %s20, 0
        %s179 = scalar_select %p178, %s20, 0
        %s180 = smul.addr %s179, 13
        %s181 = smul.addr %s177, 13
        %s182 = sadd.s32 %s180, %s181
        %s183 = smul.addr %s182, 8
        %s184 = scalar_lea.vmem %s0, %s183
        %p185 = pneg %p50
        %p186 = pneg %p47
        %p187 = pneg %p71
        %p188 = pneg %p68
        %p189 = pneg %p92
        %p190 = pneg %p89
        %p191 = pneg %p120
        %p192 = pneg %p117
        %s193 = smul.u32 10, %s20
        %p194 = scmp.lt.s32.totalorder %s19, 1
        %s195 = scalar_select %p194, %s19, 1
        %p196 = scmp.lt.s32.totalorder %s193, 9
        %s197 = scalar_select %p196, %s193, 9
        %s198 = smul.addr %s195, 10
        %s199 = sadd.s32 %s197, %s198
        %s200 = smul.addr %s199, 8
        %s201 = scalar_lea.vmem %s3, %s200
        %p202 = scmp.lt.s32.totalorder %s19, 1
        %s203 = scalar_select %p202, %s19, 1
        %p204 = scmp.lt.s32.totalorder %s20, 0
        %s205 = scalar_select %p204, %s20, 0
        %s206 = smul.addr %s205, 13
        %s207 = smul.addr %s203, 13
        %s208 = sadd.s32 %s206, %s207
        %s209 = smul.addr %s208, 8
        %s210 = scalar_lea.vmem %s0, %s209
        %s211 = smul.u32 10, %s20
        %p212 = scmp.lt.s32.totalorder %s19, 1
        %s213 = scalar_select %p212, %s19, 1
        %p214 = scmp.lt.s32.totalorder %s211, 9
        %s215 = scalar_select %p214, %s211, 9
        %s216 = smul.addr %s213, 10
        %s217 = sadd.s32 %s215, %s216
        %s218 = smul.addr %s217, 8
        %s219 = scalar_lea.vmem %s3, %s218
        %s220 = smul.u32 10, %s20
        %vm222 = vcmask 261120
        %223 = vst.msk [vmem:[#allocation2] sm:$0xff] %vm222, 0.0
        %224 = vst.msk [vmem:[#allocation2 + $0x8] sm:$0xff] %vm222, 0.0
        %225 = vst.msk [vmem:[#allocation2 + $0x10] sm:$0xff] %vm222, 0.0
        %226 = vst.msk [vmem:[#allocation2 + $0x18] sm:$0xff] %vm222, 0.0
        %227 = vst.msk [vmem:[#allocation2 + $0x20] sm:$0xff] %vm222, 0.0
        %228 = vst.msk [vmem:[#allocation2 + $0x28] sm:$0xff] %vm222, 0.0
        %229 = vst.msk [vmem:[#allocation2 + $0x30] sm:$0xff] %vm222, 0.0
        %230 = vst.msk [vmem:[#allocation2 + $0x38] sm:$0xff] %vm222, 0.0
        %231 = vst.msk [vmem:[#allocation2 + $0x40] sm:$0xff] %vm222, 0.0
        %232 = vst.msk [vmem:[#allocation2 + $0x48] sm:$0xff] %vm222, 0.0
        %v233 = vld [vmem:[%s210] sm:$0xff]
        %v234 = vld [vmem:[%s210 + $0x8] sm:$0xff]
        %v235 = vld [vmem:[%s210 + $0x10] sm:$0xff]
        %v236 = vld [vmem:[%s210 + $0x18] sm:$0xff]
        %v237 = vld [vmem:[%s210 + $0x20] sm:$0xff]
        %v238 = vld [vmem:[%s210 + $0x28] sm:$0xff]
        %v239 = vld [vmem:[%s210 + $0x30] sm:$0xff]
        %v240 = vld [vmem:[%s210 + $0x38] sm:$0xff]
        %v241 = vld [vmem:[%s210 + $0x40] sm:$0xff]
        %v242 = vld [vmem:[%s210 + $0x48] sm:$0xff]
        %v243 = vld [vmem:[#allocation2] sm:$0xff]
        %v244 = vld [vmem:[#allocation2 + $0x8] sm:$0xff]
        %v245 = vld [vmem:[#allocation2 + $0x10] sm:$0xff]
        %v246 = vld [vmem:[#allocation2 + $0x18] sm:$0xff]
        %v247 = vld [vmem:[#allocation2 + $0x20] sm:$0xff]
        %v248 = vld [vmem:[#allocation2 + $0x28] sm:$0xff]
        %v249 = vld [vmem:[#allocation2 + $0x30] sm:$0xff]
        %v250 = vld [vmem:[#allocation2 + $0x38] sm:$0xff]
        %v251 = vld [vmem:[#allocation2 + $0x40] sm:$0xff]
        %v252 = vld [vmem:[#allocation2 + $0x48] sm:$0xff]
        %v253 = vpack.c.bf16 %v234, %v233
        %v254 = vpack.c.bf16 %v236, %v235
        %v255 = vpack.c.bf16 %v238, %v237
        %v256 = vpack.c.bf16 %v240, %v239
        %v257 = vpack.c.bf16 %v242, %v241
        %v258 = vld [vmem:[%s1] sm:$0x3]
        %vm259 = vcmask 31744
        %v261 = vsel %vm259, %v253, 0
        %v264 = vsel %vm259, %v254, 0
        %v267 = vsel %vm259, %v255, 0
        %v270 = vsel %vm259, %v256, 0
        %v273 = vsel %vm259, %v257, 0
        %vm275 = vcmask 1041408
        %v277 = vsel %vm275, %v258, 0
        %279 = vmatprep.subr.bf16.mxu0 0
        %280 = vmatpush1.bf16.msra.mxu0 0
        %281 = vmatprep.subr.bf16.mxu0 0
        %282 = vmatpush1.bf16.msra.mxu0 0
        %283 = vmatprep.subr.bf16.mxu0 0
        %284 = vmatpush1.bf16.msra.mxu0 0
        %285 = vmatprep.subr.bf16.mxu0 0
        %286 = vmatpush1.bf16.msra.mxu0 0
        %287 = vmatprep.subr.bf16.mxu0 0
        %288 = vmatpush1.bf16.msra.mxu0 0
        %289 = vmatprep.subr.bf16.mxu0 0
        %290 = vmatpush1.bf16.msra.mxu0 0
        %291 = vmatprep.subr.bf16.mxu0 0
        %292 = vmatpush1.bf16.msra.mxu0 0
        %293 = vmatprep.subr.bf16.mxu0 0
        %294 = vmatpush1.bf16.msra.mxu0 %v277
        %295 = vmatprep.subr.bf16.mxu0 0
        %296 = vmatpush2.bf16.msra.mxu0 0
        %297 = vmatprep.subr.bf16.mxu0 0
        %298 = vmatpush2.bf16.msra.mxu0 0
        %299 = vmatprep.subr.bf16.mxu0 0
        %300 = vmatpush2.bf16.msra.mxu0 0
        %301 = vmatprep.subr.bf16.mxu0 0
        %302 = vmatpush2.bf16.msra.mxu0 0
        %303 = vmatprep.subr.bf16.mxu0 0
        %304 = vmatpush2.bf16.msra.mxu0 0
        %305 = vmatprep.subr.bf16.mxu0 0
        %306 = vmatpush2.bf16.msra.mxu0 0
        %307 = vmatprep.subr.bf16.mxu0 0
        %308 = vmatpush2.bf16.msra.mxu0 0
        %309 = vmatprep.subr.bf16.mxu0 0
        %310 = vmatpush2.bf16.msra.mxu0 0
        %311 = vmatprep.mubr.bf16.mxu0 0
        %312 = vmatmul.mubr.bf16.gmra.mxu0 %v261
        %v313 = vpop.f32.mrf.mxu0
        %v314 = vadd.f32 0.0, %v313
        %v315 = vpop.f32.mrf.mxu0
        %v316 = vpop.f32.mrf.mxu0
        %v317 = vadd.f32 0.0, %v316
        %v318 = vpop.f32.mrf.mxu0
        %319 = vmatprep.mubr.bf16.mxu0 0
        %320 = vmatmul.mubr.bf16.gmra.mxu0 %v264
        %v321 = vpop.f32.mrf.mxu0
        %v322 = vadd.f32 0.0, %v321
        %v323 = vpop.f32.mrf.mxu0
        %v324 = vpop.f32.mrf.mxu0
        %v325 = vadd.f32 0.0, %v324
        %v326 = vpop.f32.mrf.mxu0
        %327 = vmatprep.mubr.bf16.mxu0 0
        %328 = vmatmul.mubr.bf16.gmra.mxu0 %v267
        %v329 = vpop.f32.mrf.mxu0
        %v330 = vadd.f32 0.0, %v329
        %v331 = vpop.f32.mrf.mxu0
        %v332 = vpop.f32.mrf.mxu0
        %v333 = vadd.f32 0.0, %v332
        %v334 = vpop.f32.mrf.mxu0
        %335 = vmatprep.mubr.bf16.mxu0 0
        %336 = vmatmul.mubr.bf16.gmra.mxu0 %v270
        %v337 = vpop.f32.mrf.mxu0
        %v338 = vadd.f32 0.0, %v337
        %v339 = vpop.f32.mrf.mxu0
        %v340 = vpop.f32.mrf.mxu0
        %v341 = vadd.f32 0.0, %v340
        %v342 = vpop.f32.mrf.mxu0
        %343 = vmatprep.mubr.bf16.mxu0 0
        %344 = vmatmul.mubr.bf16.gmra.mxu0 %v273
        %v345 = vpop.f32.mrf.mxu0
        %v346 = vadd.f32 0.0, %v345
        %v347 = vpop.f32.mrf.mxu0
        %v348 = vpop.f32.mrf.mxu0
        %v349 = vadd.f32 0.0, %v348
        %v350 = vpop.f32.mrf.mxu0
        %351 = vdwg.mxu0
        %v352 = vadd.f32 %v243, %v314
        %v353 = vadd.f32 %v244, %v317
        %v354 = vadd.f32 %v245, %v322
        %v355 = vadd.f32 %v246, %v325
        %v356 = vadd.f32 %v247, %v330
        %v357 = vadd.f32 %v248, %v333
        %v358 = vadd.f32 %v249, %v338
        %v359 = vadd.f32 %v250, %v341
        %v360 = vadd.f32 %v251, %v346
        %v361 = vadd.f32 %v252, %v349
        %362 = vst.msk [vmem:[#allocation2] sm:$0xff] %vm222, %v352
        %363 = vst.msk [vmem:[#allocation2 + $0x8] sm:$0xff] %vm222, %v353
        %364 = vst.msk [vmem:[#allocation2 + $0x10] sm:$0xff] %vm222, %v354
        %365 = vst.msk [vmem:[#allocation2 + $0x18] sm:$0xff] %vm222, %v355
        %366 = vst.msk [vmem:[#allocation2 + $0x20] sm:$0xff] %vm222, %v356
        %367 = vst.msk [vmem:[#allocation2 + $0x28] sm:$0xff] %vm222, %v357
        %368 = vst.msk [vmem:[#allocation2 + $0x30] sm:$0xff] %vm222, %v358
        %369 = vst.msk [vmem:[#allocation2 + $0x38] sm:$0xff] %vm222, %v359
        %370 = vst.msk [vmem:[#allocation2 + $0x40] sm:$0xff] %vm222, %v360
        %371 = vst.msk [vmem:[#allocation2 + $0x48] sm:$0xff] %vm222, %v361
        %v372 = vld [vmem:[%s210 + $0x1] sm:$0xff]
        %v373 = vld [vmem:[%s210 + $0x9] sm:$0xff]
        %v374 = vld [vmem:[%s210 + $0x11] sm:$0xff]
        %v375 = vld [vmem:[%s210 + $0x19] sm:$0xff]
        %v376 = vld [vmem:[%s210 + $0x21] sm:$0xff]
        %v377 = vld [vmem:[%s210 + $0x29] sm:$0xff]
        %v378 = vld [vmem:[%s210 + $0x31] sm:$0xff]
        %v379 = vld [vmem:[%s210 + $0x39] sm:$0xff]
        %v380 = vld [vmem:[%s210 + $0x41] sm:$0xff]
        %v381 = vld [vmem:[%s210 + $0x49] sm:$0xff]
        %v382 = vld [vmem:[#allocation2] sm:$0xff]
        %v383 = vld [vmem:[#allocation2 + $0x8] sm:$0xff]
        %v384 = vld [vmem:[#allocation2 + $0x10] sm:$0xff]
        %v385 = vld [vmem:[#allocation2 + $0x18] sm:$0xff]
        %v386 = vld [vmem:[#allocation2 + $0x20] sm:$0xff]
        %v387 = vld [vmem:[#allocation2 + $0x28] sm:$0xff]
        %v388 = vld [vmem:[#allocation2 + $0x30] sm:$0xff]
        %v389 = vld [vmem:[#allocation2 + $0x38] sm:$0xff]
        %v390 = vld [vmem:[#allocation2 + $0x40] sm:$0xff]
        %v391 = vld [vmem:[#allocation2 + $0x48] sm:$0xff]
        %v392 = vpack.c.bf16 %v373, %v372
        %v393 = vpack.c.bf16 %v375, %v374
        %v394 = vpack.c.bf16 %v377, %v376
        %v395 = vpack.c.bf16 %v379, %v378
        %v396 = vpack.c.bf16 %v381, %v380
        %s397 = scalar_lea.vmem %s1, 2
        %v398 = vld [vmem:[%s397] sm:$0x3]
        %v400 = vsel %vm259, %v392, 0
        %v403 = vsel %vm259, %v393, 0
        %v406 = vsel %vm259, %v394, 0
        %v409 = vsel %vm259, %v395, 0
        %v412 = vsel %vm259, %v396, 0
        %v415 = vsel %vm275, %v398, 0
        %417 = vmatprep.subr.bf16.mxu0 0
        %418 = vmatpush1.bf16.msra.mxu0 0
        %419 = vmatprep.subr.bf16.mxu0 0
        %420 = vmatpush1.bf16.msra.mxu0 0
        %421 = vmatprep.subr.bf16.mxu0 0
        %422 = vmatpush1.bf16.msra.mxu0 0
        %423 = vmatprep.subr.bf16.mxu0 0
        %424 = vmatpush1.bf16.msra.mxu0 0
        %425 = vmatprep.subr.bf16.mxu0 0
        %426 = vmatpush1.bf16.msra.mxu0 0
        %427 = vmatprep.subr.bf16.mxu0 0
        %428 = vmatpush1.bf16.msra.mxu0 0
        %429 = vmatprep.subr.bf16.mxu0 0
        %430 = vmatpush1.bf16.msra.mxu0 0
        %431 = vmatprep.subr.bf16.mxu0 0
        %432 = vmatpush1.bf16.msra.mxu0 %v415
        %433 = vmatprep.subr.bf16.mxu0 0
        %434 = vmatpush2.bf16.msra.mxu0 0
        %435 = vmatprep.subr.bf16.mxu0 0
        %436 = vmatpush2.bf16.msra.mxu0 0
        %437 = vmatprep.subr.bf16.mxu0 0
        %438 = vmatpush2.bf16.msra.mxu0 0
        %439 = vmatprep.subr.bf16.mxu0 0
        %440 = vmatpush2.bf16.msra.mxu0 0
        %441 = vmatprep.subr.bf16.mxu0 0
        %442 = vmatpush2.bf16.msra.mxu0 0
        %443 = vmatprep.subr.bf16.mxu0 0
        %444 = vmatpush2.bf16.msra.mxu0 0
        %445 = vmatprep.subr.bf16.mxu0 0
        %446 = vmatpush2.bf16.msra.mxu0 0
        %447 = vmatprep.subr.bf16.mxu0 0
        %448 = vmatpush2.bf16.msra.mxu0 0
        %449 = vmatprep.mubr.bf16.mxu0 0
        %450 = vmatmul.mubr.bf16.gmra.mxu0 %v400
        %v451 = vpop.f32.mrf.mxu0
        %v452 = vadd.f32 0.0, %v451
        %v453 = vpop.f32.mrf.mxu0
        %v454 = vpop.f32.mrf.mxu0
        %v455 = vadd.f32 0.0, %v454
        %v456 = vpop.f32.mrf.mxu0
        %457 = vmatprep.mubr.bf16.mxu0 0
        %458 = vmatmul.mubr.bf16.gmra.mxu0 %v403
        %v459 = vpop.f32.mrf.mxu0
        %v460 = vadd.f32 0.0, %v459
        %v461 = vpop.f32.mrf.mxu0
        %v462 = vpop.f32.mrf.mxu0
        %v463 = vadd.f32 0.0, %v462
        %v464 = vpop.f32.mrf.mxu0
        %465 = vmatprep.mubr.bf16.mxu0 0
        %466 = vmatmul.mubr.bf16.gmra.mxu0 %v406
        %v467 = vpop.f32.mrf.mxu0
        %v468 = vadd.f32 0.0, %v467
        %v469 = vpop.f32.mrf.mxu0
        %v470 = vpop.f32.mrf.mxu0
        %v471 = vadd.f32 0.0, %v470
        %v472 = vpop.f32.mrf.mxu0
        %473 = vmatprep.mubr.bf16.mxu0 0
        %474 = vmatmul.mubr.bf16.gmra.mxu0 %v409
        %v475 = vpop.f32.mrf.mxu0
        %v476 = vadd.f32 0.0, %v475
        %v477 = vpop.f32.mrf.mxu0
        %v478 = vpop.f32.mrf.mxu0
        %v479 = vadd.f32 0.0, %v478
        %v480 = vpop.f32.mrf.mxu0
        %481 = vmatprep.mubr.bf16.mxu0 0
        %482 = vmatmul.mubr.bf16.gmra.mxu0 %v412
        %v483 = vpop.f32.mrf.mxu0
        %v484 = vadd.f32 0.0, %v483
        %v485 = vpop.f32.mrf.mxu0
        %v486 = vpop.f32.mrf.mxu0
        %v487 = vadd.f32 0.0, %v486
        %v488 = vpop.f32.mrf.mxu0
        %489 = vdwg.mxu0
        %v490 = vadd.f32 %v382, %v452
        %v491 = vadd.f32 %v383, %v455
        %v492 = vadd.f32 %v384, %v460
        %v493 = vadd.f32 %v385, %v463
        %v494 = vadd.f32 %v386, %v468
        %v495 = vadd.f32 %v387, %v471
        %v496 = vadd.f32 %v388, %v476
        %v497 = vadd.f32 %v389, %v479
        %v498 = vadd.f32 %v390, %v484
        %v499 = vadd.f32 %v391, %v487
        %500 = vst.msk [vmem:[#allocation2] sm:$0xff] %vm222, %v490
        %501 = vst.msk [vmem:[#allocation2 + $0x8] sm:$0xff] %vm222, %v491
        %502 = vst.msk [vmem:[#allocation2 + $0x10] sm:$0xff] %vm222, %v492
        %503 = vst.msk [vmem:[#allocation2 + $0x18] sm:$0xff] %vm222, %v493
        %504 = vst.msk [vmem:[#allocation2 + $0x20] sm:$0xff] %vm222, %v494
        %505 = vst.msk [vmem:[#allocation2 + $0x28] sm:$0xff] %vm222, %v495
        %506 = vst.msk [vmem:[#allocation2 + $0x30] sm:$0xff] %vm222, %v496
        %507 = vst.msk [vmem:[#allocation2 + $0x38] sm:$0xff] %vm222, %v497
        %508 = vst.msk [vmem:[#allocation2 + $0x40] sm:$0xff] %vm222, %v498
        %509 = vst.msk [vmem:[#allocation2 + $0x48] sm:$0xff] %vm222, %v499
        %v510 = vld [vmem:[%s210 + $0x2] sm:$0xff]
        %v511 = vld [vmem:[%s210 + $0xa] sm:$0xff]
        %v512 = vld [vmem:[%s210 + $0x12] sm:$0xff]
        %v513 = vld [vmem:[%s210 + $0x1a] sm:$0xff]
        %v514 = vld [vmem:[%s210 + $0x22] sm:$0xff]
        %v515 = vld [vmem:[%s210 + $0x2a] sm:$0xff]
        %v516 = vld [vmem:[%s210 + $0x32] sm:$0xff]
        %v517 = vld [vmem:[%s210 + $0x3a] sm:$0xff]
        %v518 = vld [vmem:[%s210 + $0x42] sm:$0xff]
        %v519 = vld [vmem:[%s210 + $0x4a] sm:$0xff]
        %v520 = vld [vmem:[#allocation2] sm:$0xff]
        %v521 = vld [vmem:[#allocation2 + $0x8] sm:$0xff]
        %v522 = vld [vmem:[#allocation2 + $0x10] sm:$0xff]
        %v523 = vld [vmem:[#allocation2 + $0x18] sm:$0xff]
        %v524 = vld [vmem:[#allocation2 + $0x20] sm:$0xff]
        %v525 = vld [vmem:[#allocation2 + $0x28] sm:$0xff]
        %v526 = vld [vmem:[#allocation2 + $0x30] sm:$0xff]
        %v527 = vld [vmem:[#allocation2 + $0x38] sm:$0xff]
        %v528 = vld [vmem:[#allocation2 + $0x40] sm:$0xff]
        %v529 = vld [vmem:[#allocation2 + $0x48] sm:$0xff]
        %v530 = vpack.c.bf16 %v511, %v510
        %v531 = vpack.c.bf16 %v513, %v512
        %v532 = vpack.c.bf16 %v515, %v514
        %v533 = vpack.c.bf16 %v517, %v516
        %v534 = vpack.c.bf16 %v519, %v518
        %s535 = scalar_lea.vmem %s1, 4
        %v536 = vld [vmem:[%s535] sm:$0x3]
        %v538 = vsel %vm259, %v530, 0
        %v541 = vsel %vm259, %v531, 0
        %v544 = vsel %vm259, %v532, 0
        %v547 = vsel %vm259, %v533, 0
        %v550 = vsel %vm259, %v534, 0
        %v553 = vsel %vm275, %v536, 0
        %555 = vmatprep.subr.bf16.mxu0 0
        %556 = vmatpush1.bf16.msra.mxu0 0
        %557 = vmatprep.subr.bf16.mxu0 0
        %558 = vmatpush1.bf16.msra.mxu0 0
        %559 = vmatprep.subr.bf16.mxu0 0
        %560 = vmatpush1.bf16.msra.mxu0 0
        %561 = vmatprep.subr.bf16.mxu0 0
        %562 = vmatpush1.bf16.msra.mxu0 0
        %563 = vmatprep.subr.bf16.mxu0 0
        %564 = vmatpush1.bf16.msra.mxu0 0
        %565 = vmatprep.subr.bf16.mxu0 0
        %566 = vmatpush1.bf16.msra.mxu0 0
        %567 = vmatprep.subr.bf16.mxu0 0
        %568 = vmatpush1.bf16.msra.mxu0 0
        %569 = vmatprep.subr.bf16.mxu0 0
        %570 = vmatpush1.bf16.msra.mxu0 %v553
        %571 = vmatprep.subr.bf16.mxu0 0
        %572 = vmatpush2.bf16.msra.mxu0 0
        %573 = vmatprep.subr.bf16.mxu0 0
        %574 = vmatpush2.bf16.msra.mxu0 0
        %575 = vmatprep.subr.bf16.mxu0 0
        %576 = vmatpush2.bf16.msra.mxu0 0
        %577 = vmatprep.subr.bf16.mxu0 0
        %578 = vmatpush2.bf16.msra.mxu0 0
        %579 = vmatprep.subr.bf16.mxu0 0
        %580 = vmatpush2.bf16.msra.mxu0 0
        %581 = vmatprep.subr.bf16.mxu0 0
        %582 = vmatpush2.bf16.msra.mxu0 0
        %583 = vmatprep.subr.bf16.mxu0 0
        %584 = vmatpush2.bf16.msra.mxu0 0
        %585 = vmatprep.subr.bf16.mxu0 0
        %586 = vmatpush2.bf16.msra.mxu0 0
        %587 = vmatprep.mubr.bf16.mxu0 0
        %588 = vmatmul.mubr.bf16.gmra.mxu0 %v538
        %v589 = vpop.f32.mrf.mxu0
        %v590 = vadd.f32 0.0, %v589
        %v591 = vpop.f32.mrf.mxu0
        %v592 = vpop.f32.mrf.mxu0
        %v593 = vadd.f32 0.0, %v592
        %v594 = vpop.f32.mrf.mxu0
        %595 = vmatprep.mubr.bf16.mxu0 0
        %596 = vmatmul.mubr.bf16.gmra.mxu0 %v541
        %v597 = vpop.f32.mrf.mxu0
        %v598 = vadd.f32 0.0, %v597
        %v599 = vpop.f32.mrf.mxu0
        %v600 = vpop.f32.mrf.mxu0
        %v601 = vadd.f32 0.0, %v600
        %v602 = vpop.f32.mrf.mxu0
        %603 = vmatprep.mubr.bf16.mxu0 0
        %604 = vmatmul.mubr.bf16.gmra.mxu0 %v544
        %v605 = vpop.f32.mrf.mxu0
        %v606 = vadd.f32 0.0, %v605
        %v607 = vpop.f32.mrf.mxu0
        %v608 = vpop.f32.mrf.mxu0
        %v609 = vadd.f32 0.0, %v608
        %v610 = vpop.f32.mrf.mxu0
        %611 = vmatprep.mubr.bf16.mxu0 0
        %612 = vmatmul.mubr.bf16.gmra.mxu0 %v547
        %v613 = vpop.f32.mrf.mxu0
        %v614 = vadd.f32 0.0, %v613
        %v615 = vpop.f32.mrf.mxu0
        %v616 = vpop.f32.mrf.mxu0
        %v617 = vadd.f32 0.0, %v616
        %v618 = vpop.f32.mrf.mxu0
        %619 = vmatprep.mubr.bf16.mxu0 0
        %620 = vmatmul.mubr.bf16.gmra.mxu0 %v550
        %v621 = vpop.f32.mrf.mxu0
        %v622 = vadd.f32 0.0, %v621
        %v623 = vpop.f32.mrf.mxu0
        %v624 = vpop.f32.mrf.mxu0
        %v625 = vadd.f32 0.0, %v624
        %v626 = vpop.f32.mrf.mxu0
        %627 = vdwg.mxu0
        %v628 = vadd.f32 %v520, %v590
        %v629 = vadd.f32 %v521, %v593
        %v630 = vadd.f32 %v522, %v598
        %v631 = vadd.f32 %v523, %v601
        %v632 = vadd.f32 %v524, %v606
        %v633 = vadd.f32 %v525, %v609
        %v634 = vadd.f32 %v526, %v614
        %v635 = vadd.f32 %v527, %v617
        %v636 = vadd.f32 %v528, %v622
        %v637 = vadd.f32 %v529, %v625
        %638 = vst.msk [vmem:[#allocation2] sm:$0xff] %vm222, %v628
        %639 = vst.msk [vmem:[#allocation2 + $0x8] sm:$0xff] %vm222, %v629
        %640 = vst.msk [vmem:[#allocation2 + $0x10] sm:$0xff] %vm222, %v630
        %641 = vst.msk [vmem:[#allocation2 + $0x18] sm:$0xff] %vm222, %v631
        %642 = vst.msk [vmem:[#allocation2 + $0x20] sm:$0xff] %vm222, %v632
        %643 = vst.msk [vmem:[#allocation2 + $0x28] sm:$0xff] %vm222, %v633
        %644 = vst.msk [vmem:[#allocation2 + $0x30] sm:$0xff] %vm222, %v634
        %645 = vst.msk [vmem:[#allocation2 + $0x38] sm:$0xff] %vm222, %v635
        %646 = vst.msk [vmem:[#allocation2 + $0x40] sm:$0xff] %vm222, %v636
        %647 = vst.msk [vmem:[#allocation2 + $0x48] sm:$0xff] %vm222, %v637
        %v648 = vld [vmem:[%s210 + $0xa] sm:$0xff]
        %v649 = vld [vmem:[%s210 + $0x12] sm:$0xff]
        %v650 = vld [vmem:[%s210 + $0x1a] sm:$0xff]
        %v651 = vld [vmem:[%s210 + $0x22] sm:$0xff]
        %v652 = vld [vmem:[%s210 + $0x2a] sm:$0xff]
        %v653 = vld [vmem:[%s210 + $0x32] sm:$0xff]
        %v654 = vld [vmem:[%s210 + $0x3a] sm:$0xff]
        %v655 = vld [vmem:[%s210 + $0x42] sm:$0xff]
        %v656 = vld [vmem:[%s210 + $0x4a] sm:$0xff]
        %v657 = vld [vmem:[%s210 + $0x52] sm:$0xff]
        %v658 = vld [vmem:[#allocation2] sm:$0xff]
        %v659 = vld [vmem:[#allocation2 + $0x8] sm:$0xff]
        %v660 = vld [vmem:[#allocation2 + $0x10] sm:$0xff]
        %v661 = vld [vmem:[#allocation2 + $0x18] sm:$0xff]
        %v662 = vld [vmem:[#allocation2 + $0x20] sm:$0xff]
        %v663 = vld [vmem:[#allocation2 + $0x28] sm:$0xff]
        %v664 = vld [vmem:[#allocation2 + $0x30] sm:$0xff]
        %v665 = vld [vmem:[#allocation2 + $0x38] sm:$0xff]
        %v666 = vld [vmem:[#allocation2 + $0x40] sm:$0xff]
        %v667 = vld [vmem:[#allocation2 + $0x48] sm:$0xff]
        %v668 = vpack.c.bf16 %v649, %v648
        %v669 = vpack.c.bf16 %v651, %v650
        %v670 = vpack.c.bf16 %v653, %v652
        %v671 = vpack.c.bf16 %v655, %v654
        %v672 = vpack.c.bf16 %v657, %v656
        %s673 = scalar_lea.vmem %s1, 6
        %v674 = vld [vmem:[%s673] sm:$0x3]
        %v676 = vsel %vm259, %v668, 0
        %v679 = vsel %vm259, %v669, 0
        %v682 = vsel %vm259, %v670, 0
        %v685 = vsel %vm259, %v671, 0
        %v688 = vsel %vm259, %v672, 0
        %v691 = vsel %vm275, %v674, 0
        %693 = vmatprep.subr.bf16.mxu0 0
        %694 = vmatpush1.bf16.msra.mxu0 0
        %695 = vmatprep.subr.bf16.mxu0 0
        %696 = vmatpush1.bf16.msra.mxu0 0
        %697 = vmatprep.subr.bf16.mxu0 0
        %698 = vmatpush1.bf16.msra.mxu0 0
        %699 = vmatprep.subr.bf16.mxu0 0
        %700 = vmatpush1.bf16.msra.mxu0 0
        %701 = vmatprep.subr.bf16.mxu0 0
        %702 = vmatpush1.bf16.msra.mxu0 0
        %703 = vmatprep.subr.bf16.mxu0 0
        %704 = vmatpush1.bf16.msra.mxu0 0
        %705 = vmatprep.subr.bf16.mxu0 0
        %706 = vmatpush1.bf16.msra.mxu0 0
        %707 = vmatprep.subr.bf16.mxu0 0
        %708 = vmatpush1.bf16.msra.mxu0 %v691
        %709 = vmatprep.subr.bf16.mxu0 0
        %710 = vmatpush2.bf16.msra.mxu0 0
        %711 = vmatprep.subr.bf16.mxu0 0
        %712 = vmatpush2.bf16.msra.mxu0 0
        %713 = vmatprep.subr.bf16.mxu0 0
        %714 = vmatpush2.bf16.msra.mxu0 0
        %715 = vmatprep.subr.bf16.mxu0 0
        %716 = vmatpush2.bf16.msra.mxu0 0
        %717 = vmatprep.subr.bf16.mxu0 0
        %718 = vmatpush2.bf16.msra.mxu0 0
        %719 = vmatprep.subr.bf16.mxu0 0
        %720 = vmatpush2.bf16.msra.mxu0 0
        %721 = vmatprep.subr.bf16.mxu0 0
        %722 = vmatpush2.bf16.msra.mxu0 0
        %723 = vmatprep.subr.bf16.mxu0 0
        %724 = vmatpush2.bf16.msra.mxu0 0
        %725 = vmatprep.mubr.bf16.mxu0 0
        %726 = vmatmul.mubr.bf16.gmra.mxu0 %v676
        %v727 = vpop.f32.mrf.mxu0
        %v728 = vadd.f32 0.0, %v727
        %v729 = vpop.f32.mrf.mxu0
        %v730 = vpop.f32.mrf.mxu0
        %v731 = vadd.f32 0.0, %v730
        %v732 = vpop.f32.mrf.mxu0
        %733 = vmatprep.mubr.bf16.mxu0 0
        %734 = vmatmul.mubr.bf16.gmra.mxu0 %v679
        %v735 = vpop.f32.mrf.mxu0
        %v736 = vadd.f32 0.0, %v735
        %v737 = vpop.f32.mrf.mxu0
        %v738 = vpop.f32.mrf.mxu0
        %v739 = vadd.f32 0.0, %v738
        %v740 = vpop.f32.mrf.mxu0
        %741 = vmatprep.mubr.bf16.mxu0 0
        %742 = vmatmul.mubr.bf16.gmra.mxu0 %v682
        %v743 = vpop.f32.mrf.mxu0
        %v744 = vadd.f32 0.0, %v743
        %v745 = vpop.f32.mrf.mxu0
        %v746 = vpop.f32.mrf.mxu0
        %v747 = vadd.f32 0.0, %v746
        %v748 = vpop.f32.mrf.mxu0
        %749 = vmatprep.mubr.bf16.mxu0 0
        %750 = vmatmul.mubr.bf16.gmra.mxu0 %v685
        %v751 = vpop.f32.mrf.mxu0
        %v752 = vadd.f32 0.0, %v751
        %v753 = vpop.f32.mrf.mxu0
        %v754 = vpop.f32.mrf.mxu0
        %v755 = vadd.f32 0.0, %v754
        %v756 = vpop.f32.mrf.mxu0
        %757 = vmatprep.mubr.bf16.mxu0 0
        %758 = vmatmul.mubr.bf16.gmra.mxu0 %v688
        %v759 = vpop.f32.mrf.mxu0
        %v760 = vadd.f32 0.0, %v759
        %v761 = vpop.f32.mrf.mxu0
        %v762 = vpop.f32.mrf.mxu0
        %v763 = vadd.f32 0.0, %v762
        %v764 = vpop.f32.mrf.mxu0
        %765 = vdwg.mxu0
        %v766 = vadd.f32 %v658, %v728
        %v767 = vadd.f32 %v659, %v731
        %v768 = vadd.f32 %v660, %v736
        %v769 = vadd.f32 %v661, %v739
        %v770 = vadd.f32 %v662, %v744
        %v771 = vadd.f32 %v663, %v747
        %v772 = vadd.f32 %v664, %v752
        %v773 = vadd.f32 %v665, %v755
        %v774 = vadd.f32 %v666, %v760
        %v775 = vadd.f32 %v667, %v763
        %776 = vst.msk [vmem:[#allocation2] sm:$0xff] %vm222, %v766
        %777 = vst.msk [vmem:[#allocation2 + $0x8] sm:$0xff] %vm222, %v767
        %778 = vst.msk [vmem:[#allocation2 + $0x10] sm:$0xff] %vm222, %v768
        %779 = vst.msk [vmem:[#allocation2 + $0x18] sm:$0xff] %vm222, %v769
        %780 = vst.msk [vmem:[#allocation2 + $0x20] sm:$0xff] %vm222, %v770
        %781 = vst.msk [vmem:[#allocation2 + $0x28] sm:$0xff] %vm222, %v771
        %782 = vst.msk [vmem:[#allocation2 + $0x30] sm:$0xff] %vm222, %v772
        %783 = vst.msk [vmem:[#allocation2 + $0x38] sm:$0xff] %vm222, %v773
        %784 = vst.msk [vmem:[#allocation2 + $0x40] sm:$0xff] %vm222, %v774
        %785 = vst.msk [vmem:[#allocation2 + $0x48] sm:$0xff] %vm222, %v775
        %v786 = vld [vmem:[%s210 + $0xb] sm:$0xff]
        %v787 = vld [vmem:[%s210 + $0x13] sm:$0xff]
        %v788 = vld [vmem:[%s210 + $0x1b] sm:$0xff]
        %v789 = vld [vmem:[%s210 + $0x23] sm:$0xff]
        %v790 = vld [vmem:[%s210 + $0x2b] sm:$0xff]
        %v791 = vld [vmem:[%s210 + $0x33] sm:$0xff]
        %v792 = vld [vmem:[%s210 + $0x3b] sm:$0xff]
        %v793 = vld [vmem:[%s210 + $0x43] sm:$0xff]
        %v794 = vld [vmem:[%s210 + $0x4b] sm:$0xff]
        %v795 = vld [vmem:[%s210 + $0x53] sm:$0xff]
        %v796 = vld [vmem:[#allocation2] sm:$0xff]
        %v797 = vld [vmem:[#allocation2 + $0x8] sm:$0xff]
        %v798 = vld [vmem:[#allocation2 + $0x10] sm:$0xff]
        %v799 = vld [vmem:[#allocation2 + $0x18] sm:$0xff]
        %v800 = vld [vmem:[#allocation2 + $0x20] sm:$0xff]
        %v801 = vld [vmem:[#allocation2 + $0x28] sm:$0xff]
        %v802 = vld [vmem:[#allocation2 + $0x30] sm:$0xff]
        %v803 = vld [vmem:[#allocation2 + $0x38] sm:$0xff]
        %v804 = vld [vmem:[#allocation2 + $0x40] sm:$0xff]
        %v805 = vld [vmem:[#allocation2 + $0x48] sm:$0xff]
        %v806 = vpack.c.bf16 %v787, %v786
        %v807 = vpack.c.bf16 %v789, %v788
        %v808 = vpack.c.bf16 %v791, %v790
        %v809 = vpack.c.bf16 %v793, %v792
        %v810 = vpack.c.bf16 %v795, %v794
        %s811 = scalar_lea.vmem %s1, 8
        %v812 = vld [vmem:[%s811] sm:$0x3]
        %v814 = vsel %vm259, %v806, 0
        %v817 = vsel %vm259, %v807, 0
        %v820 = vsel %vm259, %v808, 0
        %v823 = vsel %vm259, %v809, 0
        %v826 = vsel %vm259, %v810, 0
        %v829 = vsel %vm275, %v812, 0
        %831 = vmatprep.subr.bf16.mxu0 0
        %832 = vmatpush1.bf16.msra.mxu0 0
        %833 = vmatprep.subr.bf16.mxu0 0
        %834 = vmatpush1.bf16.msra.mxu0 0
        %835 = vmatprep.subr.bf16.mxu0 0
        %836 = vmatpush1.bf16.msra.mxu0 0
        %837 = vmatprep.subr.bf16.mxu0 0
        %838 = vmatpush1.bf16.msra.mxu0 0
        %839 = vmatprep.subr.bf16.mxu0 0
        %840 = vmatpush1.bf16.msra.mxu0 0
        %841 = vmatprep.subr.bf16.mxu0 0
        %842 = vmatpush1.bf16.msra.mxu0 0
        %843 = vmatprep.subr.bf16.mxu0 0
        %844 = vmatpush1.bf16.msra.mxu0 0
        %845 = vmatprep.subr.bf16.mxu0 0
        %846 = vmatpush1.bf16.msra.mxu0 %v829
        %847 = vmatprep.subr.bf16.mxu0 0
        %848 = vmatpush2.bf16.msra.mxu0 0
        %849 = vmatprep.subr.bf16.mxu0 0
        %850 = vmatpush2.bf16.msra.mxu0 0
        %851 = vmatprep.subr.bf16.mxu0 0
        %852 = vmatpush2.bf16.msra.mxu0 0
        %853 = vmatprep.subr.bf16.mxu0 0
        %854 = vmatpush2.bf16.msra.mxu0 0
        %855 = vmatprep.subr.bf16.mxu0 0
        %856 = vmatpush2.bf16.msra.mxu0 0
        %857 = vmatprep.subr.bf16.mxu0 0
        %858 = vmatpush2.bf16.msra.mxu0 0
        %859 = vmatprep.subr.bf16.mxu0 0
        %860 = vmatpush2.bf16.msra.mxu0 0
        %861 = vmatprep.subr.bf16.mxu0 0
        %862 = vmatpush2.bf16.msra.mxu0 0
        %863 = vmatprep.mubr.bf16.mxu0 0
        %864 = vmatmul.mubr.bf16.gmra.mxu0 %v814
        %v865 = vpop.f32.mrf.mxu0
        %v866 = vadd.f32 0.0, %v865
        %v867 = vpop.f32.mrf.mxu0
        %v868 = vpop.f32.mrf.mxu0
        %v869 = vadd.f32 0.0, %v868
        %v870 = vpop.f32.mrf.mxu0
        %871 = vmatprep.mubr.bf16.mxu0 0
        %872 = vmatmul.mubr.bf16.gmra.mxu0 %v817
        %v873 = vpop.f32.mrf.mxu0
        %v874 = vadd.f32 0.0, %v873
        %v875 = vpop.f32.mrf.mxu0
        %v876 = vpop.f32.mrf.mxu0
        %v877 = vadd.f32 0.0, %v876
        %v878 = vpop.f32.mrf.mxu0
        %879 = vmatprep.mubr.bf16.mxu0 0
        %880 = vmatmul.mubr.bf16.gmra.mxu0 %v820
        %v881 = vpop.f32.mrf.mxu0
        %v882 = vadd.f32 0.0, %v881
        %v883 = vpop.f32.mrf.mxu0
        %v884 = vpop.f32.mrf.mxu0
        %v885 = vadd.f32 0.0, %v884
        %v886 = vpop.f32.mrf.mxu0
        %887 = vmatprep.mubr.bf16.mxu0 0
        %888 = vmatmul.mubr.bf16.gmra.mxu0 %v823
        %v889 = vpop.f32.mrf.mxu0
        %v890 = vadd.f32 0.0, %v889
        %v891 = vpop.f32.mrf.mxu0
        %v892 = vpop.f32.mrf.mxu0
        %v893 = vadd.f32 0.0, %v892
        %v894 = vpop.f32.mrf.mxu0
        %895 = vmatprep.mubr.bf16.mxu0 0
        %896 = vmatmul.mubr.bf16.gmra.mxu0 %v826
        %v897 = vpop.f32.mrf.mxu0
        %v898 = vadd.f32 0.0, %v897
        %v899 = vpop.f32.mrf.mxu0
        %v900 = vpop.f32.mrf.mxu0
        %v901 = vadd.f32 0.0, %v900
        %v902 = vpop.f32.mrf.mxu0
        %903 = vdwg.mxu0
        %v904 = vadd.f32 %v796, %v866
        %v905 = vadd.f32 %v797, %v869
        %v906 = vadd.f32 %v798, %v874
        %v907 = vadd.f32 %v799, %v877
        %v908 = vadd.f32 %v800, %v882
        %v909 = vadd.f32 %v801, %v885
        %v910 = vadd.f32 %v802, %v890
        %v911 = vadd.f32 %v803, %v893
        %v912 = vadd.f32 %v804, %v898
        %v913 = vadd.f32 %v805, %v901
        %914 = vst.msk [vmem:[#allocation2] sm:$0xff] %vm222, %v904
        %915 = vst.msk [vmem:[#allocation2 + $0x8] sm:$0xff] %vm222, %v905
        %916 = vst.msk [vmem:[#allocation2 + $0x10] sm:$0xff] %vm222, %v906
        %917 = vst.msk [vmem:[#allocation2 + $0x18] sm:$0xff] %vm222, %v907
        %918 = vst.msk [vmem:[#allocation2 + $0x20] sm:$0xff] %vm222, %v908
        %919 = vst.msk [vmem:[#allocation2 + $0x28] sm:$0xff] %vm222, %v909
        %920 = vst.msk [vmem:[#allocation2 + $0x30] sm:$0xff] %vm222, %v910
        %921 = vst.msk [vmem:[#allocation2 + $0x38] sm:$0xff] %vm222, %v911
        %922 = vst.msk [vmem:[#allocation2 + $0x40] sm:$0xff] %vm222, %v912
        %923 = vst.msk [vmem:[#allocation2 + $0x48] sm:$0xff] %vm222, %v913
        %v924 = vld [vmem:[%s210 + $0xc] sm:$0xff]
        %v925 = vld [vmem:[%s210 + $0x14] sm:$0xff]
        %v926 = vld [vmem:[%s210 + $0x1c] sm:$0xff]
        %v927 = vld [vmem:[%s210 + $0x24] sm:$0xff]
        %v928 = vld [vmem:[%s210 + $0x2c] sm:$0xff]
        %v929 = vld [vmem:[%s210 + $0x34] sm:$0xff]
        %v930 = vld [vmem:[%s210 + $0x3c] sm:$0xff]
        %v931 = vld [vmem:[%s210 + $0x44] sm:$0xff]
        %v932 = vld [vmem:[%s210 + $0x4c] sm:$0xff]
        %v933 = vld [vmem:[%s210 + $0x54] sm:$0xff]
        %v934 = vld [vmem:[#allocation2] sm:$0xff]
        %v935 = vld [vmem:[#allocation2 + $0x8] sm:$0xff]
        %v936 = vld [vmem:[#allocation2 + $0x10] sm:$0xff]
        %v937 = vld [vmem:[#allocation2 + $0x18] sm:$0xff]
        %v938 = vld [vmem:[#allocation2 + $0x20] sm:$0xff]
        %v939 = vld [vmem:[#allocation2 + $0x28] sm:$0xff]
        %v940 = vld [vmem:[#allocation2 + $0x30] sm:$0xff]
        %v941 = vld [vmem:[#allocation2 + $0x38] sm:$0xff]
        %v942 = vld [vmem:[#allocation2 + $0x40] sm:$0xff]
        %v943 = vld [vmem:[#allocation2 + $0x48] sm:$0xff]
        %v944 = vpack.c.bf16 %v925, %v924
        %v945 = vpack.c.bf16 %v927, %v926
        %v946 = vpack.c.bf16 %v929, %v928
        %v947 = vpack.c.bf16 %v931, %v930
        %v948 = vpack.c.bf16 %v933, %v932
        %s949 = scalar_lea.vmem %s1, 10
        %v950 = vld [vmem:[%s949] sm:$0x3]
        %v952 = vsel %vm259, %v944, 0
        %v955 = vsel %vm259, %v945, 0
        %v958 = vsel %vm259, %v946, 0
        %v961 = vsel %vm259, %v947, 0
        %v964 = vsel %vm259, %v948, 0
        %v967 = vsel %vm275, %v950, 0
        %969 = vmatprep.subr.bf16.mxu0 0
        %970 = vmatpush1.bf16.msra.mxu0 0
        %971 = vmatprep.subr.bf16.mxu0 0
        %972 = vmatpush1.bf16.msra.mxu0 0
        %973 = vmatprep.subr.bf16.mxu0 0
        %974 = vmatpush1.bf16.msra.mxu0 0
        %975 = vmatprep.subr.bf16.mxu0 0
        %976 = vmatpush1.bf16.msra.mxu0 0
        %977 = vmatprep.subr.bf16.mxu0 0
        %978 = vmatpush1.bf16.msra.mxu0 0
        %979 = vmatprep.subr.bf16.mxu0 0
        %980 = vmatpush1.bf16.msra.mxu0 0
        %981 = vmatprep.subr.bf16.mxu0 0
        %982 = vmatpush1.bf16.msra.mxu0 0
        %983 = vmatprep.subr.bf16.mxu0 0
        %984 = vmatpush1.bf16.msra.mxu0 %v967
        %985 = vmatprep.subr.bf16.mxu0 0
        %986 = vmatpush2.bf16.msra.mxu0 0
        %987 = vmatprep.subr.bf16.mxu0 0
        %988 = vmatpush2.bf16.msra.mxu0 0
        %989 = vmatprep.subr.bf16.mxu0 0
        %990 = vmatpush2.bf16.msra.mxu0 0
        %991 = vmatprep.subr.bf16.mxu0 0
        %992 = vmatpush2.bf16.msra.mxu0 0
        %993 = vmatprep.subr.bf16.mxu0 0
        %994 = vmatpush2.bf16.msra.mxu0 0
        %995 = vmatprep.subr.bf16.mxu0 0
        %996 = vmatpush2.bf16.msra.mxu0 0
        %997 = vmatprep.subr.bf16.mxu0 0
        %998 = vmatpush2.bf16.msra.mxu0 0
        %999 = vmatprep.subr.bf16.mxu0 0
        %1000 = vmatpush2.bf16.msra.mxu0 0
        %1001 = vmatprep.mubr.bf16.mxu0 0
        %1002 = vmatmul.mubr.bf16.gmra.mxu0 %v952
        %v1003 = vpop.f32.mrf.mxu0
        %v1004 = vadd.f32 0.0, %v1003
        %v1005 = vpop.f32.mrf.mxu0
        %v1006 = vpop.f32.mrf.mxu0
        %v1007 = vadd.f32 0.0, %v1006
        %v1008 = vpop.f32.mrf.mxu0
        %1009 = vmatprep.mubr.bf16.mxu0 0
        %1010 = vmatmul.mubr.bf16.gmra.mxu0 %v955
        %v1011 = vpop.f32.mrf.mxu0
        %v1012 = vadd.f32 0.0, %v1011
        %v1013 = vpop.f32.mrf.mxu0
        %v1014 = vpop.f32.mrf.mxu0
        %v1015 = vadd.f32 0.0, %v1014
        %v1016 = vpop.f32.mrf.mxu0
        %1017 = vmatprep.mubr.bf16.mxu0 0
        %1018 = vmatmul.mubr.bf16.gmra.mxu0 %v958
        %v1019 = vpop.f32.mrf.mxu0
        %v1020 = vadd.f32 0.0, %v1019
        %v1021 = vpop.f32.mrf.mxu0
        %v1022 = vpop.f32.mrf.mxu0
        %v1023 = vadd.f32 0.0, %v1022
        %v1024 = vpop.f32.mrf.mxu0
        %1025 = vmatprep.mubr.bf16.mxu0 0
        %1026 = vmatmul.mubr.bf16.gmra.mxu0 %v961
        %v1027 = vpop.f32.mrf.mxu0
        %v1028 = vadd.f32 0.0, %v1027
        %v1029 = vpop.f32.mrf.mxu0
        %v1030 = vpop.f32.mrf.mxu0
        %v1031 = vadd.f32 0.0, %v1030
        %v1032 = vpop.f32.mrf.mxu0
        %1033 = vmatprep.mubr.bf16.mxu0 0
        %1034 = vmatmul.mubr.bf16.gmra.mxu0 %v964
        %v1035 = vpop.f32.mrf.mxu0
        %v1036 = vadd.f32 0.0, %v1035
        %v1037 = vpop.f32.mrf.mxu0
        %v1038 = vpop.f32.mrf.mxu0
        %v1039 = vadd.f32 0.0, %v1038
        %v1040 = vpop.f32.mrf.mxu0
        %1041 = vdwg.mxu0
        %v1042 = vadd.f32 %v934, %v1004
        %v1043 = vadd.f32 %v935, %v1007
        %v1044 = vadd.f32 %v936, %v1012
        %v1045 = vadd.f32 %v937, %v1015
        %v1046 = vadd.f32 %v938, %v1020
        %v1047 = vadd.f32 %v939, %v1023
        %v1048 = vadd.f32 %v940, %v1028
        %v1049 = vadd.f32 %v941, %v1031
        %v1050 = vadd.f32 %v942, %v1036
        %v1051 = vadd.f32 %v943, %v1039
        %1052 = vst.msk [vmem:[#allocation2] sm:$0xff] %vm222, %v1042
        %1053 = vst.msk [vmem:[#allocation2 + $0x8] sm:$0xff] %vm222, %v1043
        %1054 = vst.msk [vmem:[#allocation2 + $0x10] sm:$0xff] %vm222, %v1044
        %1055 = vst.msk [vmem:[#allocation2 + $0x18] sm:$0xff] %vm222, %v1045
        %1056 = vst.msk [vmem:[#allocation2 + $0x20] sm:$0xff] %vm222, %v1046
        %1057 = vst.msk [vmem:[#allocation2 + $0x28] sm:$0xff] %vm222, %v1047
        %1058 = vst.msk [vmem:[#allocation2 + $0x30] sm:$0xff] %vm222, %v1048
        %1059 = vst.msk [vmem:[#allocation2 + $0x38] sm:$0xff] %vm222, %v1049
        %1060 = vst.msk [vmem:[#allocation2 + $0x40] sm:$0xff] %vm222, %v1050
        %1061 = vst.msk [vmem:[#allocation2 + $0x48] sm:$0xff] %vm222, %v1051
        %v1062 = vld [vmem:[%s210 + $0x14] sm:$0xff]
        %v1063 = vld [vmem:[%s210 + $0x1c] sm:$0xff]
        %v1064 = vld [vmem:[%s210 + $0x24] sm:$0xff]
        %v1065 = vld [vmem:[%s210 + $0x2c] sm:$0xff]
        %v1066 = vld [vmem:[%s210 + $0x34] sm:$0xff]
        %v1067 = vld [vmem:[%s210 + $0x3c] sm:$0xff]
        %v1068 = vld [vmem:[%s210 + $0x44] sm:$0xff]
        %v1069 = vld [vmem:[%s210 + $0x4c] sm:$0xff]
        %v1070 = vld [vmem:[%s210 + $0x54] sm:$0xff]
        %v1071 = vld [vmem:[%s210 + $0x5c] sm:$0xff]
        %v1072 = vld [vmem:[#allocation2] sm:$0xff]
        %v1073 = vld [vmem:[#allocation2 + $0x8] sm:$0xff]
        %v1074 = vld [vmem:[#allocation2 + $0x10] sm:$0xff]
        %v1075 = vld [vmem:[#allocation2 + $0x18] sm:$0xff]
        %v1076 = vld [vmem:[#allocation2 + $0x20] sm:$0xff]
        %v1077 = vld [vmem:[#allocation2 + $0x28] sm:$0xff]
        %v1078 = vld [vmem:[#allocation2 + $0x30] sm:$0xff]
        %v1079 = vld [vmem:[#allocation2 + $0x38] sm:$0xff]
        %v1080 = vld [vmem:[#allocation2 + $0x40] sm:$0xff]
        %v1081 = vld [vmem:[#allocation2 + $0x48] sm:$0xff]
        %v1082 = vpack.c.bf16 %v1063, %v1062
        %v1083 = vpack.c.bf16 %v1065, %v1064
        %v1084 = vpack.c.bf16 %v1067, %v1066
        %v1085 = vpack.c.bf16 %v1069, %v1068
        %v1086 = vpack.c.bf16 %v1071, %v1070
        %s1087 = scalar_lea.vmem %s1, 12
        %v1088 = vld [vmem:[%s1087] sm:$0x3]
        %v1090 = vsel %vm259, %v1082, 0
        %v1093 = vsel %vm259, %v1083, 0
        %v1096 = vsel %vm259, %v1084, 0
        %v1099 = vsel %vm259, %v1085, 0
        %v1102 = vsel %vm259, %v1086, 0
        %v1105 = vsel %vm275, %v1088, 0
        %1107 = vmatprep.subr.bf16.mxu0 0
        %1108 = vmatpush1.bf16.msra.mxu0 0
        %1109 = vmatprep.subr.bf16.mxu0 0
        %1110 = vmatpush1.bf16.msra.mxu0 0
        %1111 = vmatprep.subr.bf16.mxu0 0
        %1112 = vmatpush1.bf16.msra.mxu0 0
        %1113 = vmatprep.subr.bf16.mxu0 0
        %1114 = vmatpush1.bf16.msra.mxu0 0
        %1115 = vmatprep.subr.bf16.mxu0 0
        %1116 = vmatpush1.bf16.msra.mxu0 0
        %1117 = vmatprep.subr.bf16.mxu0 0
        %1118 = vmatpush1.bf16.msra.mxu0 0
        %1119 = vmatprep.subr.bf16.mxu0 0
        %1120 = vmatpush1.bf16.msra.mxu0 0
        %1121 = vmatprep.subr.bf16.mxu0 0
        %1122 = vmatpush1.bf16.msra.mxu0 %v1105
        %1123 = vmatprep.subr.bf16.mxu0 0
        %1124 = vmatpush2.bf16.msra.mxu0 0
        %1125 = vmatprep.subr.bf16.mxu0 0
        %1126 = vmatpush2.bf16.msra.mxu0 0
        %1127 = vmatprep.subr.bf16.mxu0 0
        %1128 = vmatpush2.bf16.msra.mxu0 0
        %1129 = vmatprep.subr.bf16.mxu0 0
        %1130 = vmatpush2.bf16.msra.mxu0 0
        %1131 = vmatprep.subr.bf16.mxu0 0
        %1132 = vmatpush2.bf16.msra.mxu0 0
        %1133 = vmatprep.subr.bf16.mxu0 0
        %1134 = vmatpush2.bf16.msra.mxu0 0
        %1135 = vmatprep.subr.bf16.mxu0 0
        %1136 = vmatpush2.bf16.msra.mxu0 0
        %1137 = vmatprep.subr.bf16.mxu0 0
        %1138 = vmatpush2.bf16.msra.mxu0 0
        %1139 = vmatprep.mubr.bf16.mxu0 0
        %1140 = vmatmul.mubr.bf16.gmra.mxu0 %v1090
        %v1141 = vpop.f32.mrf.mxu0
        %v1142 = vadd.f32 0.0, %v1141
        %v1143 = vpop.f32.mrf.mxu0
        %v1144 = vpop.f32.mrf.mxu0
        %v1145 = vadd.f32 0.0, %v1144
        %v1146 = vpop.f32.mrf.mxu0
        %1147 = vmatprep.mubr.bf16.mxu0 0
        %1148 = vmatmul.mubr.bf16.gmra.mxu0 %v1093
        %v1149 = vpop.f32.mrf.mxu0
        %v1150 = vadd.f32 0.0, %v1149
        %v1151 = vpop.f32.mrf.mxu0
        %v1152 = vpop.f32.mrf.mxu0
        %v1153 = vadd.f32 0.0, %v1152
        %v1154 = vpop.f32.mrf.mxu0
        %1155 = vmatprep.mubr.bf16.mxu0 0
        %1156 = vmatmul.mubr.bf16.gmra.mxu0 %v1096
        %v1157 = vpop.f32.mrf.mxu0
        %v1158 = vadd.f32 0.0, %v1157
        %v1159 = vpop.f32.mrf.mxu0
        %v1160 = vpop.f32.mrf.mxu0
        %v1161 = vadd.f32 0.0, %v1160
        %v1162 = vpop.f32.mrf.mxu0
        %1163 = vmatprep.mubr.bf16.mxu0 0
        %1164 = vmatmul.mubr.bf16.gmra.mxu0 %v1099
        %v1165 = vpop.f32.mrf.mxu0
        %v1166 = vadd.f32 0.0, %v1165
        %v1167 = vpop.f32.mrf.mxu0
        %v1168 = vpop.f32.mrf.mxu0
        %v1169 = vadd.f32 0.0, %v1168
        %v1170 = vpop.f32.mrf.mxu0
        %1171 = vmatprep.mubr.bf16.mxu0 0
        %1172 = vmatmul.mubr.bf16.gmra.mxu0 %v1102
        %v1173 = vpop.f32.mrf.mxu0
        %v1174 = vadd.f32 0.0, %v1173
        %v1175 = vpop.f32.mrf.mxu0
        %v1176 = vpop.f32.mrf.mxu0
        %v1177 = vadd.f32 0.0, %v1176
        %v1178 = vpop.f32.mrf.mxu0
        %1179 = vdwg.mxu0
        %v1180 = vadd.f32 %v1072, %v1142
        %v1181 = vadd.f32 %v1073, %v1145
        %v1182 = vadd.f32 %v1074, %v1150
        %v1183 = vadd.f32 %v1075, %v1153
        %v1184 = vadd.f32 %v1076, %v1158
        %v1185 = vadd.f32 %v1077, %v1161
        %v1186 = vadd.f32 %v1078, %v1166
        %v1187 = vadd.f32 %v1079, %v1169
        %v1188 = vadd.f32 %v1080, %v1174
        %v1189 = vadd.f32 %v1081, %v1177
        %1190 = vst.msk [vmem:[#allocation2] sm:$0xff] %vm222, %v1180
        %1191 = vst.msk [vmem:[#allocation2 + $0x8] sm:$0xff] %vm222, %v1181
        %1192 = vst.msk [vmem:[#allocation2 + $0x10] sm:$0xff] %vm222, %v1182
        %1193 = vst.msk [vmem:[#allocation2 + $0x18] sm:$0xff] %vm222, %v1183
        %1194 = vst.msk [vmem:[#allocation2 + $0x20] sm:$0xff] %vm222, %v1184
        %1195 = vst.msk [vmem:[#allocation2 + $0x28] sm:$0xff] %vm222, %v1185
        %1196 = vst.msk [vmem:[#allocation2 + $0x30] sm:$0xff] %vm222, %v1186
        %1197 = vst.msk [vmem:[#allocation2 + $0x38] sm:$0xff] %vm222, %v1187
        %1198 = vst.msk [vmem:[#allocation2 + $0x40] sm:$0xff] %vm222, %v1188
        %1199 = vst.msk [vmem:[#allocation2 + $0x48] sm:$0xff] %vm222, %v1189
        %v1200 = vld [vmem:[%s210 + $0x15] sm:$0xff]
        %v1201 = vld [vmem:[%s210 + $0x1d] sm:$0xff]
        %v1202 = vld [vmem:[%s210 + $0x25] sm:$0xff]
        %v1203 = vld [vmem:[%s210 + $0x2d] sm:$0xff]
        %v1204 = vld [vmem:[%s210 + $0x35] sm:$0xff]
        %v1205 = vld [vmem:[%s210 + $0x3d] sm:$0xff]
        %v1206 = vld [vmem:[%s210 + $0x45] sm:$0xff]
        %v1207 = vld [vmem:[%s210 + $0x4d] sm:$0xff]
        %v1208 = vld [vmem:[%s210 + $0x55] sm:$0xff]
        %v1209 = vld [vmem:[%s210 + $0x5d] sm:$0xff]
        %v1210 = vld [vmem:[#allocation2] sm:$0xff]
        %v1211 = vld [vmem:[#allocation2 + $0x8] sm:$0xff]
        %v1212 = vld [vmem:[#allocation2 + $0x10] sm:$0xff]
        %v1213 = vld [vmem:[#allocation2 + $0x18] sm:$0xff]
        %v1214 = vld [vmem:[#allocation2 + $0x20] sm:$0xff]
        %v1215 = vld [vmem:[#allocation2 + $0x28] sm:$0xff]
        %v1216 = vld [vmem:[#allocation2 + $0x30] sm:$0xff]
        %v1217 = vld [vmem:[#allocation2 + $0x38] sm:$0xff]
        %v1218 = vld [vmem:[#allocation2 + $0x40] sm:$0xff]
        %v1219 = vld [vmem:[#allocation2 + $0x48] sm:$0xff]
        %v1220 = vpack.c.bf16 %v1201, %v1200
        %v1221 = vpack.c.bf16 %v1203, %v1202
        %v1222 = vpack.c.bf16 %v1205, %v1204
        %v1223 = vpack.c.bf16 %v1207, %v1206
        %v1224 = vpack.c.bf16 %v1209, %v1208
        %s1225 = scalar_lea.vmem %s1, 14
        %v1226 = vld [vmem:[%s1225] sm:$0x3]
        %v1228 = vsel %vm259, %v1220, 0
        %v1231 = vsel %vm259, %v1221, 0
        %v1234 = vsel %vm259, %v1222, 0
        %v1237 = vsel %vm259, %v1223, 0
        %v1240 = vsel %vm259, %v1224, 0
        %v1243 = vsel %vm275, %v1226, 0
        %1245 = vmatprep.subr.bf16.mxu0 0
        %1246 = vmatpush1.bf16.msra.mxu0 0
        %1247 = vmatprep.subr.bf16.mxu0 0
        %1248 = vmatpush1.bf16.msra.mxu0 0
        %1249 = vmatprep.subr.bf16.mxu0 0
        %1250 = vmatpush1.bf16.msra.mxu0 0
        %1251 = vmatprep.subr.bf16.mxu0 0
        %1252 = vmatpush1.bf16.msra.mxu0 0
        %1253 = vmatprep.subr.bf16.mxu0 0
        %1254 = vmatpush1.bf16.msra.mxu0 0
        %1255 = vmatprep.subr.bf16.mxu0 0
        %1256 = vmatpush1.bf16.msra.mxu0 0
        %1257 = vmatprep.subr.bf16.mxu0 0
        %1258 = vmatpush1.bf16.msra.mxu0 0
        %1259 = vmatprep.subr.bf16.mxu0 0
        %1260 = vmatpush1.bf16.msra.mxu0 %v1243
        %1261 = vmatprep.subr.bf16.mxu0 0
        %1262 = vmatpush2.bf16.msra.mxu0 0
        %1263 = vmatprep.subr.bf16.mxu0 0
        %1264 = vmatpush2.bf16.msra.mxu0 0
        %1265 = vmatprep.subr.bf16.mxu0 0
        %1266 = vmatpush2.bf16.msra.mxu0 0
        %1267 = vmatprep.subr.bf16.mxu0 0
        %1268 = vmatpush2.bf16.msra.mxu0 0
        %1269 = vmatprep.subr.bf16.mxu0 0
        %1270 = vmatpush2.bf16.msra.mxu0 0
        %1271 = vmatprep.subr.bf16.mxu0 0
        %1272 = vmatpush2.bf16.msra.mxu0 0
        %1273 = vmatprep.subr.bf16.mxu0 0
        %1274 = vmatpush2.bf16.msra.mxu0 0
        %1275 = vmatprep.subr.bf16.mxu0 0
        %1276 = vmatpush2.bf16.msra.mxu0 0
        %1277 = vmatprep.mubr.bf16.mxu0 0
        %1278 = vmatmul.mubr.bf16.gmra.mxu0 %v1228
        %v1279 = vpop.f32.mrf.mxu0
        %v1280 = vadd.f32 0.0, %v1279
        %v1281 = vpop.f32.mrf.mxu0
        %v1282 = vpop.f32.mrf.mxu0
        %v1283 = vadd.f32 0.0, %v1282
        %v1284 = vpop.f32.mrf.mxu0
        %1285 = vmatprep.mubr.bf16.mxu0 0
        %1286 = vmatmul.mubr.bf16.gmra.mxu0 %v1231
        %v1287 = vpop.f32.mrf.mxu0
        %v1288 = vadd.f32 0.0, %v1287
        %v1289 = vpop.f32.mrf.mxu0
        %v1290 = vpop.f32.mrf.mxu0
        %v1291 = vadd.f32 0.0, %v1290
        %v1292 = vpop.f32.mrf.mxu0
        %1293 = vmatprep.mubr.bf16.mxu0 0
        %1294 = vmatmul.mubr.bf16.gmra.mxu0 %v1234
        %v1295 = vpop.f32.mrf.mxu0
        %v1296 = vadd.f32 0.0, %v1295
        %v1297 = vpop.f32.mrf.mxu0
        %v1298 = vpop.f32.mrf.mxu0
        %v1299 = vadd.f32 0.0, %v1298
        %v1300 = vpop.f32.mrf.mxu0
        %1301 = vmatprep.mubr.bf16.mxu0 0
        %1302 = vmatmul.mubr.bf16.gmra.mxu0 %v1237
        %v1303 = vpop.f32.mrf.mxu0
        %v1304 = vadd.f32 0.0, %v1303
        %v1305 = vpop.f32.mrf.mxu0
        %v1306 = vpop.f32.mrf.mxu0
        %v1307 = vadd.f32 0.0, %v1306
        %v1308 = vpop.f32.mrf.mxu0
        %1309 = vmatprep.mubr.bf16.mxu0 0
        %1310 = vmatmul.mubr.bf16.gmra.mxu0 %v1240
        %v1311 = vpop.f32.mrf.mxu0
        %v1312 = vadd.f32 0.0, %v1311
        %v1313 = vpop.f32.mrf.mxu0
        %v1314 = vpop.f32.mrf.mxu0
        %v1315 = vadd.f32 0.0, %v1314
        %v1316 = vpop.f32.mrf.mxu0
        %1317 = vdwg.mxu0
        %v1318 = vadd.f32 %v1210, %v1280
        %v1319 = vadd.f32 %v1211, %v1283
        %v1320 = vadd.f32 %v1212, %v1288
        %v1321 = vadd.f32 %v1213, %v1291
        %v1322 = vadd.f32 %v1214, %v1296
        %v1323 = vadd.f32 %v1215, %v1299
        %v1324 = vadd.f32 %v1216, %v1304
        %v1325 = vadd.f32 %v1217, %v1307
        %v1326 = vadd.f32 %v1218, %v1312
        %v1327 = vadd.f32 %v1219, %v1315
        %1328 = vst.msk [vmem:[#allocation2] sm:$0xff] %vm222, %v1318
        %1329 = vst.msk [vmem:[#allocation2 + $0x8] sm:$0xff] %vm222, %v1319
        %1330 = vst.msk [vmem:[#allocation2 + $0x10] sm:$0xff] %vm222, %v1320
        %1331 = vst.msk [vmem:[#allocation2 + $0x18] sm:$0xff] %vm222, %v1321
        %1332 = vst.msk [vmem:[#allocation2 + $0x20] sm:$0xff] %vm222, %v1322
        %1333 = vst.msk [vmem:[#allocation2 + $0x28] sm:$0xff] %vm222, %v1323
        %1334 = vst.msk [vmem:[#allocation2 + $0x30] sm:$0xff] %vm222, %v1324
        %1335 = vst.msk [vmem:[#allocation2 + $0x38] sm:$0xff] %vm222, %v1325
        %1336 = vst.msk [vmem:[#allocation2 + $0x40] sm:$0xff] %vm222, %v1326
        %1337 = vst.msk [vmem:[#allocation2 + $0x48] sm:$0xff] %vm222, %v1327
        %v1338 = vld [vmem:[%s210 + $0x16] sm:$0xff]
        %v1339 = vld [vmem:[%s210 + $0x1e] sm:$0xff]
        %v1340 = vld [vmem:[%s210 + $0x26] sm:$0xff]
        %v1341 = vld [vmem:[%s210 + $0x2e] sm:$0xff]
        %v1342 = vld [vmem:[%s210 + $0x36] sm:$0xff]
        %v1343 = vld [vmem:[%s210 + $0x3e] sm:$0xff]
        %v1344 = vld [vmem:[%s210 + $0x46] sm:$0xff]
        %v1345 = vld [vmem:[%s210 + $0x4e] sm:$0xff]
        %v1346 = vld [vmem:[%s210 + $0x56] sm:$0xff]
        %v1347 = vld [vmem:[%s210 + $0x5e] sm:$0xff]
        %v1348 = vld [vmem:[#allocation2] sm:$0xff]
        %v1349 = vld [vmem:[#allocation2 + $0x8] sm:$0xff]
        %v1350 = vld [vmem:[#allocation2 + $0x10] sm:$0xff]
        %v1351 = vld [vmem:[#allocation2 + $0x18] sm:$0xff]
        %v1352 = vld [vmem:[#allocation2 + $0x20] sm:$0xff]
        %v1353 = vld [vmem:[#allocation2 + $0x28] sm:$0xff]
        %v1354 = vld [vmem:[#allocation2 + $0x30] sm:$0xff]
        %v1355 = vld [vmem:[#allocation2 + $0x38] sm:$0xff]
        %v1356 = vld [vmem:[#allocation2 + $0x40] sm:$0xff]
        %v1357 = vld [vmem:[#allocation2 + $0x48] sm:$0xff]
        %v1358 = vpack.c.bf16 %v1339, %v1338
        %v1359 = vpack.c.bf16 %v1341, %v1340
        %v1360 = vpack.c.bf16 %v1343, %v1342
        %v1361 = vpack.c.bf16 %v1345, %v1344
        %v1362 = vpack.c.bf16 %v1347, %v1346
        %s1363 = scalar_lea.vmem %s1, 16
        %v1364 = vld [vmem:[%s1363] sm:$0x3]
        %v1366 = vsel %vm259, %v1358, 0
        %v1369 = vsel %vm259, %v1359, 0
        %v1372 = vsel %vm259, %v1360, 0
        %v1375 = vsel %vm259, %v1361, 0
        %v1378 = vsel %vm259, %v1362, 0
        %v1381 = vsel %vm275, %v1364, 0
        %1383 = vmatprep.subr.bf16.mxu0 0
        %1384 = vmatpush1.bf16.msra.mxu0 0
        %1385 = vmatprep.subr.bf16.mxu0 0
        %1386 = vmatpush1.bf16.msra.mxu0 0
        %1387 = vmatprep.subr.bf16.mxu0 0
        %1388 = vmatpush1.bf16.msra.mxu0 0
        %1389 = vmatprep.subr.bf16.mxu0 0
        %1390 = vmatpush1.bf16.msra.mxu0 0
        %1391 = vmatprep.subr.bf16.mxu0 0
        %1392 = vmatpush1.bf16.msra.mxu0 0
        %1393 = vmatprep.subr.bf16.mxu0 0
        %1394 = vmatpush1.bf16.msra.mxu0 0
        %1395 = vmatprep.subr.bf16.mxu0 0
        %1396 = vmatpush1.bf16.msra.mxu0 0
        %1397 = vmatprep.subr.bf16.mxu0 0
        %1398 = vmatpush1.bf16.msra.mxu0 %v1381
        %1399 = vmatprep.subr.bf16.mxu0 0
        %1400 = vmatpush2.bf16.msra.mxu0 0
        %1401 = vmatprep.subr.bf16.mxu0 0
        %1402 = vmatpush2.bf16.msra.mxu0 0
        %1403 = vmatprep.subr.bf16.mxu0 0
        %1404 = vmatpush2.bf16.msra.mxu0 0
        %1405 = vmatprep.subr.bf16.mxu0 0
        %1406 = vmatpush2.bf16.msra.mxu0 0
        %1407 = vmatprep.subr.bf16.mxu0 0
        %1408 = vmatpush2.bf16.msra.mxu0 0
        %1409 = vmatprep.subr.bf16.mxu0 0
        %1410 = vmatpush2.bf16.msra.mxu0 0
        %1411 = vmatprep.subr.bf16.mxu0 0
        %1412 = vmatpush2.bf16.msra.mxu0 0
        %1413 = vmatprep.subr.bf16.mxu0 0
        %1414 = vmatpush2.bf16.msra.mxu0 0
        %1415 = vmatprep.mubr.bf16.mxu0 0
        %1416 = vmatmul.mubr.bf16.gmra.mxu0 %v1366
        %v1417 = vpop.f32.mrf.mxu0
        %v1418 = vadd.f32 0.0, %v1417
        %v1419 = vpop.f32.mrf.mxu0
        %v1420 = vpop.f32.mrf.mxu0
        %v1421 = vadd.f32 0.0, %v1420
        %v1422 = vpop.f32.mrf.mxu0
        %1423 = vmatprep.mubr.bf16.mxu0 0
        %1424 = vmatmul.mubr.bf16.gmra.mxu0 %v1369
        %v1425 = vpop.f32.mrf.mxu0
        %v1426 = vadd.f32 0.0, %v1425
        %v1427 = vpop.f32.mrf.mxu0
        %v1428 = vpop.f32.mrf.mxu0
        %v1429 = vadd.f32 0.0, %v1428
        %v1430 = vpop.f32.mrf.mxu0
        %1431 = vmatprep.mubr.bf16.mxu0 0
        %1432 = vmatmul.mubr.bf16.gmra.mxu0 %v1372
        %v1433 = vpop.f32.mrf.mxu0
        %v1434 = vadd.f32 0.0, %v1433
        %v1435 = vpop.f32.mrf.mxu0
        %v1436 = vpop.f32.mrf.mxu0
        %v1437 = vadd.f32 0.0, %v1436
        %v1438 = vpop.f32.mrf.mxu0
        %1439 = vmatprep.mubr.bf16.mxu0 0
        %1440 = vmatmul.mubr.bf16.gmra.mxu0 %v1375
        %v1441 = vpop.f32.mrf.mxu0
        %v1442 = vadd.f32 0.0, %v1441
        %v1443 = vpop.f32.mrf.mxu0
        %v1444 = vpop.f32.mrf.mxu0
        %v1445 = vadd.f32 0.0, %v1444
        %v1446 = vpop.f32.mrf.mxu0
        %1447 = vmatprep.mubr.bf16.mxu0 0
        %1448 = vmatmul.mubr.bf16.gmra.mxu0 %v1378
        %v1449 = vpop.f32.mrf.mxu0
        %v1450 = vadd.f32 0.0, %v1449
        %v1451 = vpop.f32.mrf.mxu0
        %v1452 = vpop.f32.mrf.mxu0
        %v1453 = vadd.f32 0.0, %v1452
        %v1454 = vpop.f32.mrf.mxu0
        %1455 = vdwg.mxu0
        %v1456 = vadd.f32 %v1348, %v1418
        %v1457 = vadd.f32 %v1349, %v1421
        %v1458 = vadd.f32 %v1350, %v1426
        %v1459 = vadd.f32 %v1351, %v1429
        %v1460 = vadd.f32 %v1352, %v1434
        %v1461 = vadd.f32 %v1353, %v1437
        %v1462 = vadd.f32 %v1354, %v1442
        %v1463 = vadd.f32 %v1355, %v1445
        %v1464 = vadd.f32 %v1356, %v1450
        %v1465 = vadd.f32 %v1357, %v1453
        %1466 = vst.msk [vmem:[#allocation2] sm:$0xff] %vm222, %v1456
        %1467 = vst.msk [vmem:[#allocation2 + $0x8] sm:$0xff] %vm222, %v1457
        %1468 = vst.msk [vmem:[#allocation2 + $0x10] sm:$0xff] %vm222, %v1458
        %1469 = vst.msk [vmem:[#allocation2 + $0x18] sm:$0xff] %vm222, %v1459
        %1470 = vst.msk [vmem:[#allocation2 + $0x20] sm:$0xff] %vm222, %v1460
        %1471 = vst.msk [vmem:[#allocation2 + $0x28] sm:$0xff] %vm222, %v1461
        %1472 = vst.msk [vmem:[#allocation2 + $0x30] sm:$0xff] %vm222, %v1462
        %1473 = vst.msk [vmem:[#allocation2 + $0x38] sm:$0xff] %vm222, %v1463
        %1474 = vst.msk [vmem:[#allocation2 + $0x40] sm:$0xff] %vm222, %v1464
        %1475 = vst.msk [vmem:[#allocation2 + $0x48] sm:$0xff] %vm222, %v1465
        %v1476 = vld [vmem:[#allocation2] sm:$0xff]
        %v1477 = vld [vmem:[#allocation2 + $0x8] sm:$0xff]
        %v1478 = vld [vmem:[#allocation2 + $0x10] sm:$0xff]
        %v1479 = vld [vmem:[#allocation2 + $0x18] sm:$0xff]
        %v1480 = vld [vmem:[#allocation2 + $0x20] sm:$0xff]
        %v1481 = vld [vmem:[#allocation2 + $0x28] sm:$0xff]
        %v1482 = vld [vmem:[#allocation2 + $0x30] sm:$0xff]
        %v1483 = vld [vmem:[#allocation2 + $0x38] sm:$0xff]
        %v1484 = vld [vmem:[#allocation2 + $0x40] sm:$0xff]
        %v1485 = vld [vmem:[#allocation2 + $0x48] sm:$0xff]
        %v1486 = vld [vmem:[#allocation3] sm:$0x1]
        %v1488 = vlaneseq
        %v1489 = vshrl.u32 %v1488, 7
        %v1490 = vsub.s32 0, %v1489
        %v1491 = vrot.slane %v1486, %v1490
        %v1493 = vadd.f32 %v1476, %v1491
        %v1494 = vadd.f32 %v1477, %v1491
        %v1495 = vadd.f32 %v1478, %v1491
        %v1496 = vadd.f32 %v1479, %v1491
        %v1497 = vadd.f32 %v1480, %v1491
        %v1498 = vadd.f32 %v1481, %v1491
        %v1499 = vadd.f32 %v1482, %v1491
        %v1500 = vadd.f32 %v1483, %v1491
        %v1501 = vadd.f32 %v1484, %v1491
        %v1502 = vadd.f32 %v1485, %v1491
        %1503 = vst.msk [vmem:[%s219] sm:$0xff] %vm222, %v1493
        %1504 = vst.msk [vmem:[%s219 + $0x8] sm:$0xff] %vm222, %v1494
        %1505 = vst.msk [vmem:[%s219 + $0x10] sm:$0xff] %vm222, %v1495
        %1506 = vst.msk [vmem:[%s219 + $0x18] sm:$0xff] %vm222, %v1496
        %1507 = vst.msk [vmem:[%s219 + $0x20] sm:$0xff] %vm222, %v1497
        %1508 = vst.msk [vmem:[%s219 + $0x28] sm:$0xff] %vm222, %v1498
        %1509 = vst.msk [vmem:[%s219 + $0x30] sm:$0xff] %vm222, %v1499
        %1510 = vst.msk [vmem:[%s219 + $0x38] sm:$0xff] %vm222, %v1500
        %1511 = vst.msk [vmem:[%s219 + $0x40] sm:$0xff] %vm222, %v1501
        %1512 = vst.msk [vmem:[%s219 + $0x48] sm:$0xff] %vm222, %v1502
        %s1513 = smul.u32 10, %s20
        %p1514 = scmp.lt.s32.totalorder %s19, 1
        %s1515 = scalar_select %p1514, %s19, 1
        %p1516 = scmp.lt.s32.totalorder %s1513, 9
        %s1517 = scalar_select %p1516, %s1513, 9
        %s1518 = smul.addr %s1515, 10
        %s1519 = sadd.s32 %s1517, %s1518
        %s1520 = smul.addr %s1519, 8
        %s1521 = scalar_lea.vmem %s3, %s1520
        // Predicated region
        $region37: #{_lambda_.13} parent=31 // pred_check
          %p1522 = pneg %p117
        $region38: #{_lambda_.13} parent=31 // pred_check_branch
          %1524 = sbr.rel (%p1522) target = $region40
        $region39: #{_lambda_.13} parent=31 // pred_region
          %s1525 = smul.u32 10, %s20
        $region40: #{_lambda_.13} parent=31 // pred_fallthru
          _
      $region32: #{_lambda_.13} parent=5 // pred_fallthru
        _
      %p1526 = scmp.le.s32.totalorder 2, %s10
      // Predicated region
      $region41: #{_lambda_.13} parent=5 // pred_check
        %p1527 = pneg %p1526
      $region42: #{_lambda_.13} parent=5 // pred_check_branch
        %1529 = sbr.rel (%p1527) target = $region44
      $region43: #{_lambda_.13} parent=5 // pred_region
        %s1530 = ssub.s32 %s10, 2
        // Predicated region
        $region45: #{_lambda_.13} parent=43 // pred_check
          %p1531 = pneg %p123
        $region46: #{_lambda_.13} parent=43 // pred_check_branch
          %1533 = sbr.rel (%p1531) target = $region48
        $region47: #{_lambda_.13} parent=43 // pred_region
          %s1534 = smul.u32 10, %s22
          %p1535 = scmp.lt.s32.totalorder %s21, 1
          %s1536 = scalar_select %p1535, %s21, 1
          %p1537 = scmp.lt.s32.totalorder %s1534, 9
          %s1538 = scalar_select %p1537, %s1534, 9
          %s1539 = smul.addr %s1536, 10
          %s1540 = sadd.s32 %s1538, %s1539
          %s1541 = smul.addr %s1540, 8
          %s1542 = scalar_lea.vmem %s3, %s1541
        $region48: #{_lambda_.13} parent=43 // pred_fallthru
          _
      $region44: #{_lambda_.13} parent=5 // pred_fallthru
        _
    $region6: #{_lambda_.13} parent=1 // loop_footer
      %s14 = sadd.s32 1, %s10
    $region7: #{_lambda_.13} parent=1 // loop_footer_branch
      %9 = sbr.rel target = $region3
    $region8: #{_lambda_.13} parent=1 // loop_exit
      _
    %1543 = vsyncpa [#allocation4], 1
    %s1544 = scalar_lea.sflag [#allocation4], 1
    %1545 = vsyncpa %s1544, 1

// kernel: _lambda_.14
$region0: #{_lambda_.14}
  #allocation0 [shape = 'u32[]', space=smem, size = 0x4, offset = 0x4, fixed_abs, tag = 'smem constant byte address 0x4 - core index']
  #allocation1 [shape = 'u32[144,128]{1,0:T(1,128)}', space=vmem, size = 0x12000, scoped, tag = 'internal scratch']
  #allocation2 [shape = 'f32[80,16]{1,0:T(8,128)}', space=vmem, size = 0xa000, scoped, tag = 'scratch operand']
  %s0 = inlined_call_operand.vmem [shape: f32[2,1,102,32], index: 0, kind: input, shape index: {}]
  %s1 = inlined_call_operand.vmem [shape: bf16[9,32,16], index: 1, kind: input, shape index: {}]
  %s2 = inlined_call_operand.vmem [shape: f32[1,16], index: 2, kind: input, shape index: {}]
  %s3 = inlined_call_operand.vmem [shape: f32[2,80,16], index: 3, kind: output, shape index: {}]
  %s4 = sld [smem:[#allocation0]]
  $region45: #{_lambda_.14} parent=0
    _
  %s6 = ssub.s32 1, %s4
  %s7 = scalar_select 0, %s6, %s4
  loop: start=0, step=1, limit=4
  $region2: #{_lambda_.14} parent=0 // loop_pre_header
    _
  $region3: #{_lambda_.14} parent=0 // loop_header
    %s9 = sphi 0, %s13
    %p10 = scmp.ge.s32.totalorder %s9, 4
    %s16 = sphi 0, %s28
    %s17 = sphi 0, %s24
    %s18 = sphi 0, %s16
    %s19 = sphi 0, %s17
    %s20 = sphi 0, %s18
    %s21 = sphi 0, %s19
    %s33 = sphi 0, %s35
    %s36 = sphi 0, %s33
    %s37 = sphi 0, %s36
    %s53 = sphi 0, %s37
    %s57 = sphi 0, %s57
    %s59 = sphi 0, %s57
    %s60 = sphi 0, %s59
    %s74 = sphi 0, %s60
    %s78 = sphi 0, %s78
    %s80 = sphi 0, %s78
    %s81 = sphi 0, %s80
    %s95 = sphi 0, %s81
    %s103 = sphi 0, %s105
    %s106 = sphi 0, %s103
    %s107 = sphi 0, %s106
    %s123 = sphi 0, %s107
  $region4: #{_lambda_.14} parent=0 // loop_header_branch
    %12 = sbr.rel (%p10) target = $region8
  $region5: #{_lambda_.14} parent=0 // loop_body
    %s14 = ssub.s32 %s9, 1
    %s15 = ssub.s32 %s9, 2
    %s22 = sadd.s32 1, %s17
    %p23 = scmp.ge.s32.totalorder %s22, 1
    %s24 = scalar_select %p23, 0, %s22
    %s25 = sadd.s32 1, %s16
    %s26 = scalar_select %p23, %s25, %s16
    %p27 = scmp.ge.s32.totalorder %s26, 2
    %s28 = scalar_select %p27, 0, %s26
    %s29 = ssub.s32 %s16, %s28
    %s30 = ssub.s32 %s17, %s24
    %s31 = sor.u32 %s29, %s30
    %p32 = scmp.eq.s32.totalorder %s31, 0
    %s34 = sadd.s32 %s33, 1
    %s35 = scalar_select %p32, %s33, %s34
    %p38 = pneg %p32
    %p39 = scmp.eq.s32.totalorder %s9, 1
    %p40 = por %p38, %p39
    %p41 = scmp.ne.s32.totalorder %s33, %s36
    %p42 = scmp.eq.s32.totalorder %s9, 0
    %p43 = por %p41, %p42
    %p44 = scmp.ne.s32.totalorder %s33, %s36
    %p45 = scmp.eq.s32.totalorder %s14, 1
    %p46 = por %p44, %p45
    %p47 = scmp.ne.s32.totalorder %s36, %s37
    %p48 = scmp.eq.s32.totalorder %s14, 0
    %p49 = por %p47, %p48
    %p50 = scmp.ne.s32.totalorder %s36, %s37
    %p51 = scmp.eq.s32.totalorder %s15, 1
    %p52 = por %p50, %p51
    %p54 = scmp.ne.s32.totalorder %s37, %s53
    %p55 = scmp.eq.s32.totalorder %s15, 0
    %p56 = por %p54, %p55
    %s58 = sadd.s32 %s57, 1
    %p61 = scmp.eq.s32.totalorder %s9, 1
    %p62 = scmp.ne.s32.totalorder %s57, %s59
    %p63 = scmp.eq.s32.totalorder %s9, 0
    %p64 = por %p62, %p63
    %p65 = scmp.ne.s32.totalorder %s57, %s59
    %p66 = scmp.eq.s32.totalorder %s14, 1
    %p67 = por %p65, %p66
    %p68 = scmp.ne.s32.totalorder %s59, %s60
    %p69 = scmp.eq.s32.totalorder %s14, 0
    %p70 = por %p68, %p69
    %p71 = scmp.ne.s32.totalorder %s59, %s60
    %p72 = scmp.eq.s32.totalorder %s15, 1
    %p73 = por %p71, %p72
    %p75 = scmp.ne.s32.totalorder %s60, %s74
    %p76 = scmp.eq.s32.totalorder %s15, 0
    %p77 = por %p75, %p76
    %s79 = sadd.s32 %s78, 1
    %p82 = scmp.eq.s32.totalorder %s9, 1
    %p83 = scmp.ne.s32.totalorder %s78, %s80
    %p84 = scmp.eq.s32.totalorder %s9, 0
    %p85 = por %p83, %p84
    %p86 = scmp.ne.s32.totalorder %s78, %s80
    %p87 = scmp.eq.s32.totalorder %s14, 1
    %p88 = por %p86, %p87
    %p89 = scmp.ne.s32.totalorder %s80, %s81
    %p90 = scmp.eq.s32.totalorder %s14, 0
    %p91 = por %p89, %p90
    %p92 = scmp.ne.s32.totalorder %s80, %s81
    %p93 = scmp.eq.s32.totalorder %s15, 1
    %p94 = por %p92, %p93
    %p96 = scmp.ne.s32.totalorder %s81, %s95
    %p97 = scmp.eq.s32.totalorder %s15, 0
    %p98 = por %p96, %p97
    %s99 = ssub.s32 %s16, %s28
    %s100 = ssub.s32 %s17, %s24
    %s101 = sor.u32 %s99, %s100
    %p102 = scmp.eq.s32.totalorder %s101, 0
    %s104 = sadd.s32 %s103, 1
    %s105 = scalar_select %p102, %s103, %s104
    %p108 = pneg %p102
    %p109 = scmp.eq.s32.totalorder %s9, 1
    %p110 = por %p108, %p109
    %p111 = scmp.ne.s32.totalorder %s103, %s106
    %p112 = scmp.eq.s32.totalorder %s9, 0
    %p113 = por %p111, %p112
    %p114 = scmp.ne.s32.totalorder %s103, %s106
    %p115 = scmp.eq.s32.totalorder %s14, 1
    %p116 = por %p114, %p115
    %p117 = scmp.ne.s32.totalorder %s106, %s107
    %p118 = scmp.eq.s32.totalorder %s14, 0
    %p119 = por %p117, %p118
    %p120 = scmp.ne.s32.totalorder %s106, %s107
    %p121 = scmp.eq.s32.totalorder %s15, 1
    %p122 = por %p120, %p121
    %p124 = scmp.ne.s32.totalorder %s107, %s123
    %p125 = scmp.eq.s32.totalorder %s15, 0
    %p126 = por %p124, %p125
    %p127 = scmp.le.s32.totalorder 1, %s9
    %p128 = scmp.lt.s32.totalorder %s9, 3
    %p129 = pnand %p127, %p128
    %p130 = pneg %p129
    // Predicated region
    $region9: #{_lambda_.14} parent=5 // pred_check
      _
    $region10: #{_lambda_.14} parent=5 // pred_check_branch
      %132 = sbr.rel (%p129) target = $region12
    $region11: #{_lambda_.14} parent=5 // pred_region
      %s133 = ssub.s32 %s9, 1
      // Predicated region
      $region13: #{_lambda_.14} parent=11 // pred_check
        %p134 = pneg %p70
      $region14: #{_lambda_.14} parent=11 // pred_check_branch
        %136 = sbr.rel (%p134) target = $region16
      $region15: #{_lambda_.14} parent=11 // pred_region
        _
      $region16: #{_lambda_.14} parent=11 // pred_fallthru
        _
      // Predicated region
      $region17: #{_lambda_.14} parent=11 // pred_check
        %p137 = pneg %p91
      $region18: #{_lambda_.14} parent=11 // pred_check_branch
        %139 = sbr.rel (%p137) target = $region20
      $region19: #{_lambda_.14} parent=11 // pred_region
        _
      $region20: #{_lambda_.14} parent=11 // pred_fallthru
        _
    $region12: #{_lambda_.14} parent=5 // pred_fallthru
      _
    %p140 = scmp.lt.s32.totalorder %s9, 2
    // Predicated region
    $region21: #{_lambda_.14} parent=5 // pred_check
      %p141 = pneg %p140
    $region22: #{_lambda_.14} parent=5 // pred_check_branch
      %143 = sbr.rel (%p141) target = $region24
    $region23: #{_lambda_.14} parent=5 // pred_region
      // Predicated region
      $region25: #{_lambda_.14} parent=23 // pred_check
        %p144 = pneg %p43
      $region26: #{_lambda_.14} parent=23 // pred_check_branch
        %146 = sbr.rel (%p144) target = $region28
      $region27: #{_lambda_.14} parent=23 // pred_region
        %p147 = scmp.lt.s32.totalorder %s16, 1
        %s148 = scalar_select %p147, %s16, 1
        %p149 = scmp.lt.s32.totalorder %s17, 0
        %s150 = scalar_select %p149, %s17, 0
        %s151 = smul.addr %s150, 13
        %s152 = smul.addr %s148, 13
        %s153 = sadd.s32 %s151, %s152
        %s154 = smul.addr %s153, 8
        %s155 = scalar_lea.vmem %s0, %s154
      $region28: #{_lambda_.14} parent=23 // pred_fallthru
        _
    $region24: #{_lambda_.14} parent=5 // pred_fallthru
      _
    %p156 = scmp.le.s32.totalorder 1, %s9
    %p157 = scmp.lt.s32.totalorder %s9, 3
    %p158 = pnand %p156, %p157
    %p159 = pneg %p158
    // Predicated region
    $region29: #{_lambda_.14} parent=5 // pred_check
      _
    $region30: #{_lambda_.14} parent=5 // pred_check_branch
      %161 = sbr.rel (%p158) target = $region32
    $region31: #{_lambda_.14} parent=5 // pred_region
      %s162 = ssub.s32 %s9, 1
      %p163 = scmp.lt.s32.totalorder %s18, 1
      %s164 = scalar_select %p163, %s18, 1
      %p165 = scmp.lt.s32.totalorder %s19, 0
      %s166 = scalar_select %p165, %s19, 0
      %s167 = smul.addr %s166, 13
      %s168 = smul.addr %s164, 13
      %s169 = sadd.s32 %s167, %s168
      %s170 = smul.addr %s169, 8
      %s171 = scalar_lea.vmem %s0, %s170
      %p172 = pneg %p49
      %p173 = pneg %p46
      %p174 = pneg %p70
      %p175 = pneg %p67
      %p176 = pneg %p91
      %p177 = pneg %p88
      %p178 = pneg %p119
      %p179 = pneg %p116
      %s180 = smul.u32 10, %s19
      %p181 = scmp.lt.s32.totalorder %s18, 1
      %s182 = scalar_select %p181, %s18, 1
      %p183 = scmp.lt.s32.totalorder %s180, 9
      %s184 = scalar_select %p183, %s180, 9
      %s185 = smul.addr %s182, 10
      %s186 = sadd.s32 %s184, %s185
      %s187 = smul.addr %s186, 8
      %s188 = scalar_lea.vmem %s3, %s187
      %p189 = scmp.lt.s32.totalorder %s18, 1
      %s190 = scalar_select %p189, %s18, 1
      %p191 = scmp.lt.s32.totalorder %s19, 0
      %s192 = scalar_select %p191, %s19, 0
      %s193 = smul.addr %s192, 13
      %s194 = smul.addr %s190, 13
      %s195 = sadd.s32 %s193, %s194
      %s196 = smul.addr %s195, 8
      %s197 = scalar_lea.vmem %s0, %s196
      %s198 = smul.u32 10, %s19
      %p199 = scmp.lt.s32.totalorder %s18, 1
      %s200 = scalar_select %p199, %s18, 1
      %p201 = scmp.lt.s32.totalorder %s198, 9
      %s202 = scalar_select %p201, %s198, 9
      %s203 = smul.addr %s200, 10
      %s204 = sadd.s32 %s202, %s203
      %s205 = smul.addr %s204, 8
      %s206 = scalar_lea.vmem %s3, %s205
      %s207 = smul.u32 10, %s19
      %vm209 = vcmask 130048
      %210 = vst.msk [vmem:[#allocation2] sm:$0xff] %vm209, 0.0
      %211 = vst.msk [vmem:[#allocation2 + $0x8] sm:$0xff] %vm209, 0.0
      %212 = vst.msk [vmem:[#allocation2 + $0x10] sm:$0xff] %vm209, 0.0
      %213 = vst.msk [vmem:[#allocation2 + $0x18] sm:$0xff] %vm209, 0.0
      %214 = vst.msk [vmem:[#allocation2 + $0x20] sm:$0xff] %vm209, 0.0
      %215 = vst.msk [vmem:[#allocation2 + $0x28] sm:$0xff] %vm209, 0.0
      %216 = vst.msk [vmem:[#allocation2 + $0x30] sm:$0xff] %vm209, 0.0
      %217 = vst.msk [vmem:[#allocation2 + $0x38] sm:$0xff] %vm209, 0.0
      %218 = vst.msk [vmem:[#allocation2 + $0x40] sm:$0xff] %vm209, 0.0
      %219 = vst.msk [vmem:[#allocation2 + $0x48] sm:$0xff] %vm209, 0.0
      %v220 = vld [vmem:[%s197] sm:$0xff]
      %v221 = vld [vmem:[%s197 + $0x8] sm:$0xff]
      %v222 = vld [vmem:[%s197 + $0x10] sm:$0xff]
      %v223 = vld [vmem:[%s197 + $0x18] sm:$0xff]
      %v224 = vld [vmem:[%s197 + $0x20] sm:$0xff]
      %v225 = vld [vmem:[%s197 + $0x28] sm:$0xff]
      %v226 = vld [vmem:[%s197 + $0x30] sm:$0xff]
      %v227 = vld [vmem:[%s197 + $0x38] sm:$0xff]
      %v228 = vld [vmem:[%s197 + $0x40] sm:$0xff]
      %v229 = vld [vmem:[%s197 + $0x48] sm:$0xff]
      %v230 = vmax.f32 %v220, 0.0
      %v231 = vmax.f32 %v221, 0.0
      %v232 = vmax.f32 %v222, 0.0
      %v233 = vmax.f32 %v223, 0.0
      %v234 = vmax.f32 %v224, 0.0
      %v235 = vmax.f32 %v225, 0.0
      %v236 = vmax.f32 %v226, 0.0
      %v237 = vmax.f32 %v227, 0.0
      %v238 = vmax.f32 %v228, 0.0
      %v239 = vmax.f32 %v229, 0.0
      %v240 = vld [vmem:[#allocation2] sm:$0xff]
      %v241 = vld [vmem:[#allocation2 + $0x8] sm:$0xff]
      %v242 = vld [vmem:[#allocation2 + $0x10] sm:$0xff]
      %v243 = vld [vmem:[#allocation2 + $0x18] sm:$0xff]
      %v244 = vld [vmem:[#allocation2 + $0x20] sm:$0xff]
      %v245 = vld [vmem:[#allocation2 + $0x28] sm:$0xff]
      %v246 = vld [vmem:[#allocation2 + $0x30] sm:$0xff]
      %v247 = vld [vmem:[#allocation2 + $0x38] sm:$0xff]
      %v248 = vld [vmem:[#allocation2 + $0x40] sm:$0xff]
      %v249 = vld [vmem:[#allocation2 + $0x48] sm:$0xff]
      %v250 = vpack.c.bf16 %v231, %v230
      %v251 = vpack.c.bf16 %v233, %v232
      %v252 = vpack.c.bf16 %v235, %v234
      %v253 = vpack.c.bf16 %v237, %v236
      %v254 = vpack.c.bf16 %v239, %v238
      %v255 = vld [vmem:[%s1] sm:$0xf]
      %v256 = vld [vmem:[%s1 + $0x4] sm:$0xf]
      %v257 = vld [vmem:[%s1 + $0x8] sm:$0xf]
      %v258 = vld [vmem:[%s1 + $0xc] sm:$0xf]
      %v263 = vunpack.c.l.b16 %v255
      %v264 = vunpack.c.l.b16 %v256
      %v265 = vunpack.c.l.b16 %v257
      %v266 = vunpack.c.l.b16 %v258
      %v267 = vpack.c.b16 %v264, %v263
      %v268 = vpack.c.b16 %v266, %v265
      %vm271 = vcmask 261120
      %v273 = vsel %vm271, %v250, 0
      %v276 = vsel %vm271, %v251, 0
      %v279 = vsel %vm271, %v252, 0
      %v282 = vsel %vm271, %v253, 0
      %v285 = vsel %vm271, %v254, 0
      %287 = vmatprep.subr.bf16.mxu0 0
      %288 = vmatpush1.bf16.msra.mxu0 0
      %289 = vmatprep.subr.bf16.mxu0 0
      %290 = vmatpush1.bf16.msra.mxu0 0
      %291 = vmatprep.subr.bf16.mxu0 0
      %292 = vmatpush1.bf16.msra.mxu0 0
      %293 = vmatprep.subr.bf16.mxu0 0
      %294 = vmatpush1.bf16.msra.mxu0 0
      %295 = vmatprep.subr.bf16.mxu0 0
      %296 = vmatpush1.bf16.msra.mxu0 0
      %297 = vmatprep.subr.bf16.mxu0 0
      %298 = vmatpush1.bf16.msra.mxu0 0
      %299 = vmatprep.subr.bf16.mxu0 0
      %300 = vmatpush1.bf16.msra.mxu0 %v268
      %301 = vmatprep.subr.bf16.mxu0 0
      %302 = vmatpush1.bf16.msra.mxu0 %v267
      %303 = vmatprep.subr.bf16.mxu0 0
      %304 = vmatpush2.bf16.msra.mxu0 0
      %305 = vmatprep.subr.bf16.mxu0 0
      %306 = vmatpush2.bf16.msra.mxu0 0
      %307 = vmatprep.subr.bf16.mxu0 0
      %308 = vmatpush2.bf16.msra.mxu0 0
      %309 = vmatprep.subr.bf16.mxu0 0
      %310 = vmatpush2.bf16.msra.mxu0 0
      %311 = vmatprep.subr.bf16.mxu0 0
      %312 = vmatpush2.bf16.msra.mxu0 0
      %313 = vmatprep.subr.bf16.mxu0 0
      %314 = vmatpush2.bf16.msra.mxu0 0
      %315 = vmatprep.subr.bf16.mxu0 0
      %316 = vmatpush2.bf16.msra.mxu0 0
      %317 = vmatprep.subr.bf16.mxu0 0
      %318 = vmatpush2.bf16.msra.mxu0 0
      %319 = vmatprep.mubr.bf16.mxu0 0
      %320 = vmatmul.mubr.bf16.gmra.mxu0 %v273
      %v321 = vpop.f32.mrf.mxu0
      %v322 = vadd.f32 0.0, %v321
      %v323 = vpop.f32.mrf.mxu0
      %v324 = vpop.f32.mrf.mxu0
      %v325 = vadd.f32 0.0, %v324
      %v326 = vpop.f32.mrf.mxu0
      %327 = vmatprep.mubr.bf16.mxu0 0
      %328 = vmatmul.mubr.bf16.gmra.mxu0 %v276
      %v329 = vpop.f32.mrf.mxu0
      %v330 = vadd.f32 0.0, %v329
      %v331 = vpop.f32.mrf.mxu0
      %v332 = vpop.f32.mrf.mxu0
      %v333 = vadd.f32 0.0, %v332
      %v334 = vpop.f32.mrf.mxu0
      %335 = vmatprep.mubr.bf16.mxu0 0
      %336 = vmatmul.mubr.bf16.gmra.mxu0 %v279
      %v337 = vpop.f32.mrf.mxu0
      %v338 = vadd.f32 0.0, %v337
      %v339 = vpop.f32.mrf.mxu0
      %v340 = vpop.f32.mrf.mxu0
      %v341 = vadd.f32 0.0, %v340
      %v342 = vpop.f32.mrf.mxu0
      %343 = vmatprep.mubr.bf16.mxu0 0
      %344 = vmatmul.mubr.bf16.gmra.mxu0 %v282
      %v345 = vpop.f32.mrf.mxu0
      %v346 = vadd.f32 0.0, %v345
      %v347 = vpop.f32.mrf.mxu0
      %v348 = vpop.f32.mrf.mxu0
      %v349 = vadd.f32 0.0, %v348
      %v350 = vpop.f32.mrf.mxu0
      %351 = vmatprep.mubr.bf16.mxu0 0
      %352 = vmatmul.mubr.bf16.gmra.mxu0 %v285
      %v353 = vpop.f32.mrf.mxu0
      %v354 = vadd.f32 0.0, %v353
      %v355 = vpop.f32.mrf.mxu0
      %v356 = vpop.f32.mrf.mxu0
      %v357 = vadd.f32 0.0, %v356
      %v358 = vpop.f32.mrf.mxu0
      %359 = vdwg.mxu0
      %v360 = vadd.f32 %v240, %v322
      %v361 = vadd.f32 %v241, %v325
      %v362 = vadd.f32 %v242, %v330
      %v363 = vadd.f32 %v243, %v333
      %v364 = vadd.f32 %v244, %v338
      %v365 = vadd.f32 %v245, %v341
      %v366 = vadd.f32 %v246, %v346
      %v367 = vadd.f32 %v247, %v349
      %v368 = vadd.f32 %v248, %v354
      %v369 = vadd.f32 %v249, %v357
      %370 = vst.msk [vmem:[#allocation2] sm:$0xff] %vm209, %v360
      %371 = vst.msk [vmem:[#allocation2 + $0x8] sm:$0xff] %vm209, %v361
      %372 = vst.msk [vmem:[#allocation2 + $0x10] sm:$0xff] %vm209, %v362
      %373 = vst.msk [vmem:[#allocation2 + $0x18] sm:$0xff] %vm209, %v363
      %374 = vst.msk [vmem:[#allocation2 + $0x20] sm:$0xff] %vm209, %v364
      %375 = vst.msk [vmem:[#allocation2 + $0x28] sm:$0xff] %vm209, %v365
      %376 = vst.msk [vmem:[#allocation2 + $0x30] sm:$0xff] %vm209, %v366
      %377 = vst.msk [vmem:[#allocation2 + $0x38] sm:$0xff] %vm209, %v367
      %378 = vst.msk [vmem:[#allocation2 + $0x40] sm:$0xff] %vm209, %v368
      %379 = vst.msk [vmem:[#allocation2 + $0x48] sm:$0xff] %vm209, %v369
      %v380 = vld [vmem:[%s197 + $0x1] sm:$0xff]
      %v381 = vld [vmem:[%s197 + $0x9] sm:$0xff]
      %v382 = vld [vmem:[%s197 + $0x11] sm:$0xff]
      %v383 = vld [vmem:[%s197 + $0x19] sm:$0xff]
      %v384 = vld [vmem:[%s197 + $0x21] sm:$0xff]
      %v385 = vld [vmem:[%s197 + $0x29] sm:$0xff]
      %v386 = vld [vmem:[%s197 + $0x31] sm:$0xff]
      %v387 = vld [vmem:[%s197 + $0x39] sm:$0xff]
      %v388 = vld [vmem:[%s197 + $0x41] sm:$0xff]
      %v389 = vld [vmem:[%s197 + $0x49] sm:$0xff]
      %v390 = vmax.f32 %v380, 0.0
      %v391 = vmax.f32 %v381, 0.0
      %v392 = vmax.f32 %v382, 0.0
      %v393 = vmax.f32 %v383, 0.0
      %v394 = vmax.f32 %v384, 0.0
      %v395 = vmax.f32 %v385, 0.0
      %v396 = vmax.f32 %v386, 0.0
      %v397 = vmax.f32 %v387, 0.0
      %v398 = vmax.f32 %v388, 0.0
      %v399 = vmax.f32 %v389, 0.0
      %v400 = vld [vmem:[#allocation2] sm:$0xff]
      %v401 = vld [vmem:[#allocation2 + $0x8] sm:$0xff]
      %v402 = vld [vmem:[#allocation2 + $0x10] sm:$0xff]
      %v403 = vld [vmem:[#allocation2 + $0x18] sm:$0xff]
      %v404 = vld [vmem:[#allocation2 + $0x20] sm:$0xff]
      %v405 = vld [vmem:[#allocation2 + $0x28] sm:$0xff]
      %v406 = vld [vmem:[#allocation2 + $0x30] sm:$0xff]
      %v407 = vld [vmem:[#allocation2 + $0x38] sm:$0xff]
      %v408 = vld [vmem:[#allocation2 + $0x40] sm:$0xff]
      %v409 = vld [vmem:[#allocation2 + $0x48] sm:$0xff]
      %v410 = vpack.c.bf16 %v391, %v390
      %v411 = vpack.c.bf16 %v393, %v392
      %v412 = vpack.c.bf16 %v395, %v394
      %v413 = vpack.c.bf16 %v397, %v396
      %v414 = vpack.c.bf16 %v399, %v398
      %s415 = scalar_lea.vmem %s1, 16
      %v416 = vld [vmem:[%s415] sm:$0xf]
      %v417 = vld [vmem:[%s415 + $0x4] sm:$0xf]
      %v418 = vld [vmem:[%s415 + $0x8] sm:$0xf]
      %v419 = vld [vmem:[%s415 + $0xc] sm:$0xf]
      %v424 = vunpack.c.l.b16 %v416
      %v425 = vunpack.c.l.b16 %v417
      %v426 = vunpack.c.l.b16 %v418
      %v427 = vunpack.c.l.b16 %v419
      %v428 = vpack.c.b16 %v425, %v424
      %v429 = vpack.c.b16 %v427, %v426
      %v433 = vsel %vm271, %v410, 0
      %v436 = vsel %vm271, %v411, 0
      %v439 = vsel %vm271, %v412, 0
      %v442 = vsel %vm271, %v413, 0
      %v445 = vsel %vm271, %v414, 0
      %447 = vmatprep.subr.bf16.mxu0 0
      %448 = vmatpush1.bf16.msra.mxu0 0
      %449 = vmatprep.subr.bf16.mxu0 0
      %450 = vmatpush1.bf16.msra.mxu0 0
      %451 = vmatprep.subr.bf16.mxu0 0
      %452 = vmatpush1.bf16.msra.mxu0 0
      %453 = vmatprep.subr.bf16.mxu0 0
      %454 = vmatpush1.bf16.msra.mxu0 0
      %455 = vmatprep.subr.bf16.mxu0 0
      %456 = vmatpush1.bf16.msra.mxu0 0
      %457 = vmatprep.subr.bf16.mxu0 0
      %458 = vmatpush1.bf16.msra.mxu0 0
      %459 = vmatprep.subr.bf16.mxu0 0
      %460 = vmatpush1.bf16.msra.mxu0 %v429
      %461 = vmatprep.subr.bf16.mxu0 0
      %462 = vmatpush1.bf16.msra.mxu0 %v428
      %463 = vmatprep.subr.bf16.mxu0 0
      %464 = vmatpush2.bf16.msra.mxu0 0
      %465 = vmatprep.subr.bf16.mxu0 0
      %466 = vmatpush2.bf16.msra.mxu0 0
      %467 = vmatprep.subr.bf16.mxu0 0
      %468 = vmatpush2.bf16.msra.mxu0 0
      %469 = vmatprep.subr.bf16.mxu0 0
      %470 = vmatpush2.bf16.msra.mxu0 0
      %471 = vmatprep.subr.bf16.mxu0 0
      %472 = vmatpush2.bf16.msra.mxu0 0
      %473 = vmatprep.subr.bf16.mxu0 0
      %474 = vmatpush2.bf16.msra.mxu0 0
      %475 = vmatprep.subr.bf16.mxu0 0
      %476 = vmatpush2.bf16.msra.mxu0 0
      %477 = vmatprep.subr.bf16.mxu0 0
      %478 = vmatpush2.bf16.msra.mxu0 0
      %479 = vmatprep.mubr.bf16.mxu0 0
      %480 = vmatmul.mubr.bf16.gmra.mxu0 %v433
      %v481 = vpop.f32.mrf.mxu0
      %v482 = vadd.f32 0.0, %v481
      %v483 = vpop.f32.mrf.mxu0
      %v484 = vpop.f32.mrf.mxu0
      %v485 = vadd.f32 0.0, %v484
      %v486 = vpop.f32.mrf.mxu0
      %487 = vmatprep.mubr.bf16.mxu0 0
      %488 = vmatmul.mubr.bf16.gmra.mxu0 %v436
      %v489 = vpop.f32.mrf.mxu0
      %v490 = vadd.f32 0.0, %v489
      %v491 = vpop.f32.mrf.mxu0
      %v492 = vpop.f32.mrf.mxu0
      %v493 = vadd.f32 0.0, %v492
      %v494 = vpop.f32.mrf.mxu0
      %495 = vmatprep.mubr.bf16.mxu0 0
      %496 = vmatmul.mubr.bf16.gmra.mxu0 %v439
      %v497 = vpop.f32.mrf.mxu0
      %v498 = vadd.f32 0.0, %v497
      %v499 = vpop.f32.mrf.mxu0
      %v500 = vpop.f32.mrf.mxu0
      %v501 = vadd.f32 0.0, %v500
      %v502 = vpop.f32.mrf.mxu0
      %503 = vmatprep.mubr.bf16.mxu0 0
      %504 = vmatmul.mubr.bf16.gmra.mxu0 %v442
      %v505 = vpop.f32.mrf.mxu0
      %v506 = vadd.f32 0.0, %v505
      %v507 = vpop.f32.mrf.mxu0
      %v508 = vpop.f32.mrf.mxu0
      %v509 = vadd.f32 0.0, %v508
      %v510 = vpop.f32.mrf.mxu0
      %511 = vmatprep.mubr.bf16.mxu0 0
      %512 = vmatmul.mubr.bf16.gmra.mxu0 %v445
      %v513 = vpop.f32.mrf.mxu0
      %v514 = vadd.f32 0.0, %v513
      %v515 = vpop.f32.mrf.mxu0
      %v516 = vpop.f32.mrf.mxu0
      %v517 = vadd.f32 0.0, %v516
      %v518 = vpop.f32.mrf.mxu0
      %519 = vdwg.mxu0
      %v520 = vadd.f32 %v400, %v482
      %v521 = vadd.f32 %v401, %v485
      %v522 = vadd.f32 %v402, %v490
      %v523 = vadd.f32 %v403, %v493
      %v524 = vadd.f32 %v404, %v498
      %v525 = vadd.f32 %v405, %v501
      %v526 = vadd.f32 %v406, %v506
      %v527 = vadd.f32 %v407, %v509
      %v528 = vadd.f32 %v408, %v514
      %v529 = vadd.f32 %v409, %v517
      %530 = vst.msk [vmem:[#allocation2] sm:$0xff] %vm209, %v520
      %531 = vst.msk [vmem:[#allocation2 + $0x8] sm:$0xff] %vm209, %v521
      %532 = vst.msk [vmem:[#allocation2 + $0x10] sm:$0xff] %vm209, %v522
      %533 = vst.msk [vmem:[#allocation2 + $0x18] sm:$0xff] %vm209, %v523
      %534 = vst.msk [vmem:[#allocation2 + $0x20] sm:$0xff] %vm209, %v524
      %535 = vst.msk [vmem:[#allocation2 + $0x28] sm:$0xff] %vm209, %v525
      %536 = vst.msk [vmem:[#allocation2 + $0x30] sm:$0xff] %vm209, %v526
      %537 = vst.msk [vmem:[#allocation2 + $0x38] sm:$0xff] %vm209, %v527
      %538 = vst.msk [vmem:[#allocation2 + $0x40] sm:$0xff] %vm209, %v528
      %539 = vst.msk [vmem:[#allocation2 + $0x48] sm:$0xff] %vm209, %v529
      %v540 = vld [vmem:[%s197 + $0x2] sm:$0xff]
      %v541 = vld [vmem:[%s197 + $0xa] sm:$0xff]
      %v542 = vld [vmem:[%s197 + $0x12] sm:$0xff]
      %v543 = vld [vmem:[%s197 + $0x1a] sm:$0xff]
      %v544 = vld [vmem:[%s197 + $0x22] sm:$0xff]
      %v545 = vld [vmem:[%s197 + $0x2a] sm:$0xff]
      %v546 = vld [vmem:[%s197 + $0x32] sm:$0xff]
      %v547 = vld [vmem:[%s197 + $0x3a] sm:$0xff]
      %v548 = vld [vmem:[%s197 + $0x42] sm:$0xff]
      %v549 = vld [vmem:[%s197 + $0x4a] sm:$0xff]
      %v550 = vmax.f32 %v540, 0.0
      %v551 = vmax.f32 %v541, 0.0
      %v552 = vmax.f32 %v542, 0.0
      %v553 = vmax.f32 %v543, 0.0
      %v554 = vmax.f32 %v544, 0.0
      %v555 = vmax.f32 %v545, 0.0
      %v556 = vmax.f32 %v546, 0.0
      %v557 = vmax.f32 %v547, 0.0
      %v558 = vmax.f32 %v548, 0.0
      %v559 = vmax.f32 %v549, 0.0
      %v560 = vld [vmem:[#allocation2] sm:$0xff]
      %v561 = vld [vmem:[#allocation2 + $0x8] sm:$0xff]
      %v562 = vld [vmem:[#allocation2 + $0x10] sm:$0xff]
      %v563 = vld [vmem:[#allocation2 + $0x18] sm:$0xff]
      %v564 = vld [vmem:[#allocation2 + $0x20] sm:$0xff]
      %v565 = vld [vmem:[#allocation2 + $0x28] sm:$0xff]
      %v566 = vld [vmem:[#allocation2 + $0x30] sm:$0xff]
      %v567 = vld [vmem:[#allocation2 + $0x38] sm:$0xff]
      %v568 = vld [vmem:[#allocation2 + $0x40] sm:$0xff]
      %v569 = vld [vmem:[#allocation2 + $0x48] sm:$0xff]
      %v570 = vpack.c.bf16 %v551, %v550
      %v571 = vpack.c.bf16 %v553, %v552
      %v572 = vpack.c.bf16 %v555, %v554
      %v573 = vpack.c.bf16 %v557, %v556
      %v574 = vpack.c.bf16 %v559, %v558
      %s575 = scalar_lea.vmem %s1, 32
      %v576 = vld [vmem:[%s575] sm:$0xf]
      %v577 = vld [vmem:[%s575 + $0x4] sm:$0xf]
      %v578 = vld [vmem:[%s575 + $0x8] sm:$0xf]
      %v579 = vld [vmem:[%s575 + $0xc] sm:$0xf]
      %v584 = vunpack.c.l.b16 %v576
      %v585 = vunpack.c.l.b16 %v577
      %v586 = vunpack.c.l.b16 %v578
      %v587 = vunpack.c.l.b16 %v579
      %v588 = vpack.c.b16 %v585, %v584
      %v589 = vpack.c.b16 %v587, %v586
      %v593 = vsel %vm271, %v570, 0
      %v596 = vsel %vm271, %v571, 0
      %v599 = vsel %vm271, %v572, 0
      %v602 = vsel %vm271, %v573, 0
      %v605 = vsel %vm271, %v574, 0
      %607 = vmatprep.subr.bf16.mxu0 0
      %608 = vmatpush1.bf16.msra.mxu0 0
      %609 = vmatprep.subr.bf16.mxu0 0
      %610 = vmatpush1.bf16.msra.mxu0 0
      %611 = vmatprep.subr.bf16.mxu0 0
      %612 = vmatpush1.bf16.msra.mxu0 0
      %613 = vmatprep.subr.bf16.mxu0 0
      %614 = vmatpush1.bf16.msra.mxu0 0
      %615 = vmatprep.subr.bf16.mxu0 0
      %616 = vmatpush1.bf16.msra.mxu0 0
      %617 = vmatprep.subr.bf16.mxu0 0
      %618 = vmatpush1.bf16.msra.mxu0 0
      %619 = vmatprep.subr.bf16.mxu0 0
      %620 = vmatpush1.bf16.msra.mxu0 %v589
      %621 = vmatprep.subr.bf16.mxu0 0
      %622 = vmatpush1.bf16.msra.mxu0 %v588
      %623 = vmatprep.subr.bf16.mxu0 0
      %624 = vmatpush2.bf16.msra.mxu0 0
      %625 = vmatprep.subr.bf16.mxu0 0
      %626 = vmatpush2.bf16.msra.mxu0 0
      %627 = vmatprep.subr.bf16.mxu0 0
      %628 = vmatpush2.bf16.msra.mxu0 0
      %629 = vmatprep.subr.bf16.mxu0 0
      %630 = vmatpush2.bf16.msra.mxu0 0
      %631 = vmatprep.subr.bf16.mxu0 0
      %632 = vmatpush2.bf16.msra.mxu0 0
      %633 = vmatprep.subr.bf16.mxu0 0
      %634 = vmatpush2.bf16.msra.mxu0 0
      %635 = vmatprep.subr.bf16.mxu0 0
      %636 = vmatpush2.bf16.msra.mxu0 0
      %637 = vmatprep.subr.bf16.mxu0 0
      %638 = vmatpush2.bf16.msra.mxu0 0
      %639 = vmatprep.mubr.bf16.mxu0 0
      %640 = vmatmul.mubr.bf16.gmra.mxu0 %v593
      %v641 = vpop.f32.mrf.mxu0
      %v642 = vadd.f32 0.0, %v641
      %v643 = vpop.f32.mrf.mxu0
      %v644 = vpop.f32.mrf.mxu0
      %v645 = vadd.f32 0.0, %v644
      %v646 = vpop.f32.mrf.mxu0
      %647 = vmatprep.mubr.bf16.mxu0 0
      %648 = vmatmul.mubr.bf16.gmra.mxu0 %v596
      %v649 = vpop.f32.mrf.mxu0
      %v650 = vadd.f32 0.0, %v649
      %v651 = vpop.f32.mrf.mxu0
      %v652 = vpop.f32.mrf.mxu0
      %v653 = vadd.f32 0.0, %v652
      %v654 = vpop.f32.mrf.mxu0
      %655 = vmatprep.mubr.bf16.mxu0 0
      %656 = vmatmul.mubr.bf16.gmra.mxu0 %v599
      %v657 = vpop.f32.mrf.mxu0
      %v658 = vadd.f32 0.0, %v657
      %v659 = vpop.f32.mrf.mxu0
      %v660 = vpop.f32.mrf.mxu0
      %v661 = vadd.f32 0.0, %v660
      %v662 = vpop.f32.mrf.mxu0
      %663 = vmatprep.mubr.bf16.mxu0 0
      %664 = vmatmul.mubr.bf16.gmra.mxu0 %v602
      %v665 = vpop.f32.mrf.mxu0
      %v666 = vadd.f32 0.0, %v665
      %v667 = vpop.f32.mrf.mxu0
      %v668 = vpop.f32.mrf.mxu0
      %v669 = vadd.f32 0.0, %v668
      %v670 = vpop.f32.mrf.mxu0
      %671 = vmatprep.mubr.bf16.mxu0 0
      %672 = vmatmul.mubr.bf16.gmra.mxu0 %v605
      %v673 = vpop.f32.mrf.mxu0
      %v674 = vadd.f32 0.0, %v673
      %v675 = vpop.f32.mrf.mxu0
      %v676 = vpop.f32.mrf.mxu0
      %v677 = vadd.f32 0.0, %v676
      %v678 = vpop.f32.mrf.mxu0
      %679 = vdwg.mxu0
      %v680 = vadd.f32 %v560, %v642
      %v681 = vadd.f32 %v561, %v645
      %v682 = vadd.f32 %v562, %v650
      %v683 = vadd.f32 %v563, %v653
      %v684 = vadd.f32 %v564, %v658
      %v685 = vadd.f32 %v565, %v661
      %v686 = vadd.f32 %v566, %v666
      %v687 = vadd.f32 %v567, %v669
      %v688 = vadd.f32 %v568, %v674
      %v689 = vadd.f32 %v569, %v677
      %690 = vst.msk [vmem:[#allocation2] sm:$0xff] %vm209, %v680
      %691 = vst.msk [vmem:[#allocation2 + $0x8] sm:$0xff] %vm209, %v681
      %692 = vst.msk [vmem:[#allocation2 + $0x10] sm:$0xff] %vm209, %v682
      %693 = vst.msk [vmem:[#allocation2 + $0x18] sm:$0xff] %vm209, %v683
      %694 = vst.msk [vmem:[#allocation2 + $0x20] sm:$0xff] %vm209, %v684
      %695 = vst.msk [vmem:[#allocation2 + $0x28] sm:$0xff] %vm209, %v685
      %696 = vst.msk [vmem:[#allocation2 + $0x30] sm:$0xff] %vm209, %v686
      %697 = vst.msk [vmem:[#allocation2 + $0x38] sm:$0xff] %vm209, %v687
      %698 = vst.msk [vmem:[#allocation2 + $0x40] sm:$0xff] %vm209, %v688
      %699 = vst.msk [vmem:[#allocation2 + $0x48] sm:$0xff] %vm209, %v689
      %v700 = vld [vmem:[%s197 + $0xa] sm:$0xff]
      %v701 = vld [vmem:[%s197 + $0x12] sm:$0xff]
      %v702 = vld [vmem:[%s197 + $0x1a] sm:$0xff]
      %v703 = vld [vmem:[%s197 + $0x22] sm:$0xff]
      %v704 = vld [vmem:[%s197 + $0x2a] sm:$0xff]
      %v705 = vld [vmem:[%s197 + $0x32] sm:$0xff]
      %v706 = vld [vmem:[%s197 + $0x3a] sm:$0xff]
      %v707 = vld [vmem:[%s197 + $0x42] sm:$0xff]
      %v708 = vld [vmem:[%s197 + $0x4a] sm:$0xff]
      %v709 = vld [vmem:[%s197 + $0x52] sm:$0xff]
      %v710 = vmax.f32 %v700, 0.0
      %v711 = vmax.f32 %v701, 0.0
      %v712 = vmax.f32 %v702, 0.0
      %v713 = vmax.f32 %v703, 0.0
      %v714 = vmax.f32 %v704, 0.0
      %v715 = vmax.f32 %v705, 0.0
      %v716 = vmax.f32 %v706, 0.0
      %v717 = vmax.f32 %v707, 0.0
      %v718 = vmax.f32 %v708, 0.0
      %v719 = vmax.f32 %v709, 0.0
      %v720 = vld [vmem:[#allocation2] sm:$0xff]
      %v721 = vld [vmem:[#allocation2 + $0x8] sm:$0xff]
      %v722 = vld [vmem:[#allocation2 + $0x10] sm:$0xff]
      %v723 = vld [vmem:[#allocation2 + $0x18] sm:$0xff]
      %v724 = vld [vmem:[#allocation2 + $0x20] sm:$0xff]
      %v725 = vld [vmem:[#allocation2 + $0x28] sm:$0xff]
      %v726 = vld [vmem:[#allocation2 + $0x30] sm:$0xff]
      %v727 = vld [vmem:[#allocation2 + $0x38] sm:$0xff]
      %v728 = vld [vmem:[#allocation2 + $0x40] sm:$0xff]
      %v729 = vld [vmem:[#allocation2 + $0x48] sm:$0xff]
      %v730 = vpack.c.bf16 %v711, %v710
      %v731 = vpack.c.bf16 %v713, %v712
      %v732 = vpack.c.bf16 %v715, %v714
      %v733 = vpack.c.bf16 %v717, %v716
      %v734 = vpack.c.bf16 %v719, %v718
      %s735 = scalar_lea.vmem %s1, 48
      %v736 = vld [vmem:[%s735] sm:$0xf]
      %v737 = vld [vmem:[%s735 + $0x4] sm:$0xf]
      %v738 = vld [vmem:[%s735 + $0x8] sm:$0xf]
      %v739 = vld [vmem:[%s735 + $0xc] sm:$0xf]
      %v744 = vunpack.c.l.b16 %v736
      %v745 = vunpack.c.l.b16 %v737
      %v746 = vunpack.c.l.b16 %v738
      %v747 = vunpack.c.l.b16 %v739
      %v748 = vpack.c.b16 %v745, %v744
      %v749 = vpack.c.b16 %v747, %v746
      %v753 = vsel %vm271, %v730, 0
      %v756 = vsel %vm271, %v731, 0
      %v759 = vsel %vm271, %v732, 0
      %v762 = vsel %vm271, %v733, 0
      %v765 = vsel %vm271, %v734, 0
      %767 = vmatprep.subr.bf16.mxu0 0
      %768 = vmatpush1.bf16.msra.mxu0 0
      %769 = vmatprep.subr.bf16.mxu0 0
      %770 = vmatpush1.bf16.msra.mxu0 0
      %771 = vmatprep.subr.bf16.mxu0 0
      %772 = vmatpush1.bf16.msra.mxu0 0
      %773 = vmatprep.subr.bf16.mxu0 0
      %774 = vmatpush1.bf16.msra.mxu0 0
      %775 = vmatprep.subr.bf16.mxu0 0
      %776 = vmatpush1.bf16.msra.mxu0 0
      %777 = vmatprep.subr.bf16.mxu0 0
      %778 = vmatpush1.bf16.msra.mxu0 0
      %779 = vmatprep.subr.bf16.mxu0 0
      %780 = vmatpush1.bf16.msra.mxu0 %v749
      %781 = vmatprep.subr.bf16.mxu0 0
      %782 = vmatpush1.bf16.msra.mxu0 %v748
      %783 = vmatprep.subr.bf16.mxu0 0
      %784 = vmatpush2.bf16.msra.mxu0 0
      %785 = vmatprep.subr.bf16.mxu0 0
      %786 = vmatpush2.bf16.msra.mxu0 0
      %787 = vmatprep.subr.bf16.mxu0 0
      %788 = vmatpush2.bf16.msra.mxu0 0
      %789 = vmatprep.subr.bf16.mxu0 0
      %790 = vmatpush2.bf16.msra.mxu0 0
      %791 = vmatprep.subr.bf16.mxu0 0
      %792 = vmatpush2.bf16.msra.mxu0 0
      %793 = vmatprep.subr.bf16.mxu0 0
      %794 = vmatpush2.bf16.msra.mxu0 0
      %795 = vmatprep.subr.bf16.mxu0 0
      %796 = vmatpush2.bf16.msra.mxu0 0
      %797 = vmatprep.subr.bf16.mxu0 0
      %798 = vmatpush2.bf16.msra.mxu0 0
      %799 = vmatprep.mubr.bf16.mxu0 0
      %800 = vmatmul.mubr.bf16.gmra.mxu0 %v753
      %v801 = vpop.f32.mrf.mxu0
      %v802 = vadd.f32 0.0, %v801
      %v803 = vpop.f32.mrf.mxu0
      %v804 = vpop.f32.mrf.mxu0
      %v805 = vadd.f32 0.0, %v804
      %v806 = vpop.f32.mrf.mxu0
      %807 = vmatprep.mubr.bf16.mxu0 0
      %808 = vmatmul.mubr.bf16.gmra.mxu0 %v756
      %v809 = vpop.f32.mrf.mxu0
      %v810 = vadd.f32 0.0, %v809
      %v811 = vpop.f32.mrf.mxu0
      %v812 = vpop.f32.mrf.mxu0
      %v813 = vadd.f32 0.0, %v812
      %v814 = vpop.f32.mrf.mxu0
      %815 = vmatprep.mubr.bf16.mxu0 0
      %816 = vmatmul.mubr.bf16.gmra.mxu0 %v759
      %v817 = vpop.f32.mrf.mxu0
      %v818 = vadd.f32 0.0, %v817
      %v819 = vpop.f32.mrf.mxu0
      %v820 = vpop.f32.mrf.mxu0
      %v821 = vadd.f32 0.0, %v820
      %v822 = vpop.f32.mrf.mxu0
      %823 = vmatprep.mubr.bf16.mxu0 0
      %824 = vmatmul.mubr.bf16.gmra.mxu0 %v762
      %v825 = vpop.f32.mrf.mxu0
      %v826 = vadd.f32 0.0, %v825
      %v827 = vpop.f32.mrf.mxu0
      %v828 = vpop.f32.mrf.mxu0
      %v829 = vadd.f32 0.0, %v828
      %v830 = vpop.f32.mrf.mxu0
      %831 = vmatprep.mubr.bf16.mxu0 0
      %832 = vmatmul.mubr.bf16.gmra.mxu0 %v765
      %v833 = vpop.f32.mrf.mxu0
      %v834 = vadd.f32 0.0, %v833
      %v835 = vpop.f32.mrf.mxu0
      %v836 = vpop.f32.mrf.mxu0
      %v837 = vadd.f32 0.0, %v836
      %v838 = vpop.f32.mrf.mxu0
      %839 = vdwg.mxu0
      %v840 = vadd.f32 %v720, %v802
      %v841 = vadd.f32 %v721, %v805
      %v842 = vadd.f32 %v722, %v810
      %v843 = vadd.f32 %v723, %v813
      %v844 = vadd.f32 %v724, %v818
      %v845 = vadd.f32 %v725, %v821
      %v846 = vadd.f32 %v726, %v826
      %v847 = vadd.f32 %v727, %v829
      %v848 = vadd.f32 %v728, %v834
      %v849 = vadd.f32 %v729, %v837
      %850 = vst.msk [vmem:[#allocation2] sm:$0xff] %vm209, %v840
      %851 = vst.msk [vmem:[#allocation2 + $0x8] sm:$0xff] %vm209, %v841
      %852 = vst.msk [vmem:[#allocation2 + $0x10] sm:$0xff] %vm209, %v842
      %853 = vst.msk [vmem:[#allocation2 + $0x18] sm:$0xff] %vm209, %v843
      %854 = vst.msk [vmem:[#allocation2 + $0x20] sm:$0xff] %vm209, %v844
      %855 = vst.msk [vmem:[#allocation2 + $0x28] sm:$0xff] %vm209, %v845
      %856 = vst.msk [vmem:[#allocation2 + $0x30] sm:$0xff] %vm209, %v846
      %857 = vst.msk [vmem:[#allocation2 + $0x38] sm:$0xff] %vm209, %v847
      %858 = vst.msk [vmem:[#allocation2 + $0x40] sm:$0xff] %vm209, %v848
      %859 = vst.msk [vmem:[#allocation2 + $0x48] sm:$0xff] %vm209, %v849
      %v860 = vld [vmem:[%s197 + $0xb] sm:$0xff]
      %v861 = vld [vmem:[%s197 + $0x13] sm:$0xff]
      %v862 = vld [vmem:[%s197 + $0x1b] sm:$0xff]
      %v863 = vld [vmem:[%s197 + $0x23] sm:$0xff]
      %v864 = vld [vmem:[%s197 + $0x2b] sm:$0xff]
      %v865 = vld [vmem:[%s197 + $0x33] sm:$0xff]
      %v866 = vld [vmem:[%s197 + $0x3b] sm:$0xff]
      %v867 = vld [vmem:[%s197 + $0x43] sm:$0xff]
      %v868 = vld [vmem:[%s197 + $0x4b] sm:$0xff]
      %v869 = vld [vmem:[%s197 + $0x53] sm:$0xff]
      %v870 = vmax.f32 %v860, 0.0
      %v871 = vmax.f32 %v861, 0.0
      %v872 = vmax.f32 %v862, 0.0
      %v873 = vmax.f32 %v863, 0.0
      %v874 = vmax.f32 %v864, 0.0
      %v875 = vmax.f32 %v865, 0.0
      %v876 = vmax.f32 %v866, 0.0
      %v877 = vmax.f32 %v867, 0.0
      %v878 = vmax.f32 %v868, 0.0
      %v879 = vmax.f32 %v869, 0.0
      %v880 = vld [vmem:[#allocation2] sm:$0xff]
      %v881 = vld [vmem:[#allocation2 + $0x8] sm:$0xff]
      %v882 = vld [vmem:[#allocation2 + $0x10] sm:$0xff]
      %v883 = vld [vmem:[#allocation2 + $0x18] sm:$0xff]
      %v884 = vld [vmem:[#allocation2 + $0x20] sm:$0xff]
      %v885 = vld [vmem:[#allocation2 + $0x28] sm:$0xff]
      %v886 = vld [vmem:[#allocation2 + $0x30] sm:$0xff]
      %v887 = vld [vmem:[#allocation2 + $0x38] sm:$0xff]
      %v888 = vld [vmem:[#allocation2 + $0x40] sm:$0xff]
      %v889 = vld [vmem:[#allocation2 + $0x48] sm:$0xff]
      %v890 = vpack.c.bf16 %v871, %v870
      %v891 = vpack.c.bf16 %v873, %v872
      %v892 = vpack.c.bf16 %v875, %v874
      %v893 = vpack.c.bf16 %v877, %v876
      %v894 = vpack.c.bf16 %v879, %v878
      %s895 = scalar_lea.vmem %s1, 64
      %v896 = vld [vmem:[%s895] sm:$0xf]
      %v897 = vld [vmem:[%s895 + $0x4] sm:$0xf]
      %v898 = vld [vmem:[%s895 + $0x8] sm:$0xf]
      %v899 = vld [vmem:[%s895 + $0xc] sm:$0xf]
      %v904 = vunpack.c.l.b16 %v896
      %v905 = vunpack.c.l.b16 %v897
      %v906 = vunpack.c.l.b16 %v898
      %v907 = vunpack.c.l.b16 %v899
      %v908 = vpack.c.b16 %v905, %v904
      %v909 = vpack.c.b16 %v907, %v906
      %v913 = vsel %vm271, %v890, 0
      %v916 = vsel %vm271, %v891, 0
      %v919 = vsel %vm271, %v892, 0
      %v922 = vsel %vm271, %v893, 0
      %v925 = vsel %vm271, %v894, 0
      %927 = vmatprep.subr.bf16.mxu0 0
      %928 = vmatpush1.bf16.msra.mxu0 0
      %929 = vmatprep.subr.bf16.mxu0 0
      %930 = vmatpush1.bf16.msra.mxu0 0
      %931 = vmatprep.subr.bf16.mxu0 0
      %932 = vmatpush1.bf16.msra.mxu0 0
      %933 = vmatprep.subr.bf16.mxu0 0
      %934 = vmatpush1.bf16.msra.mxu0 0
      %935 = vmatprep.subr.bf16.mxu0 0
      %936 = vmatpush1.bf16.msra.mxu0 0
      %937 = vmatprep.subr.bf16.mxu0 0
      %938 = vmatpush1.bf16.msra.mxu0 0
      %939 = vmatprep.subr.bf16.mxu0 0
      %940 = vmatpush1.bf16.msra.mxu0 %v909
      %941 = vmatprep.subr.bf16.mxu0 0
      %942 = vmatpush1.bf16.msra.mxu0 %v908
      %943 = vmatprep.subr.bf16.mxu0 0
      %944 = vmatpush2.bf16.msra.mxu0 0
      %945 = vmatprep.subr.bf16.mxu0 0
      %946 = vmatpush2.bf16.msra.mxu0 0
      %947 = vmatprep.subr.bf16.mxu0 0
      %948 = vmatpush2.bf16.msra.mxu0 0
      %949 = vmatprep.subr.bf16.mxu0 0
      %950 = vmatpush2.bf16.msra.mxu0 0
      %951 = vmatprep.subr.bf16.mxu0 0
      %952 = vmatpush2.bf16.msra.mxu0 0
      %953 = vmatprep.subr.bf16.mxu0 0
      %954 = vmatpush2.bf16.msra.mxu0 0
      %955 = vmatprep.subr.bf16.mxu0 0
      %956 = vmatpush2.bf16.msra.mxu0 0
      %957 = vmatprep.subr.bf16.mxu0 0
      %958 = vmatpush2.bf16.msra.mxu0 0
      %959 = vmatprep.mubr.bf16.mxu0 0
      %960 = vmatmul.mubr.bf16.gmra.mxu0 %v913
      %v961 = vpop.f32.mrf.mxu0
      %v962 = vadd.f32 0.0, %v961
      %v963 = vpop.f32.mrf.mxu0
      %v964 = vpop.f32.mrf.mxu0
      %v965 = vadd.f32 0.0, %v964
      %v966 = vpop.f32.mrf.mxu0
      %967 = vmatprep.mubr.bf16.mxu0 0
      %968 = vmatmul.mubr.bf16.gmra.mxu0 %v916
      %v969 = vpop.f32.mrf.mxu0
      %v970 = vadd.f32 0.0, %v969
      %v971 = vpop.f32.mrf.mxu0
      %v972 = vpop.f32.mrf.mxu0
      %v973 = vadd.f32 0.0, %v972
      %v974 = vpop.f32.mrf.mxu0
      %975 = vmatprep.mubr.bf16.mxu0 0
      %976 = vmatmul.mubr.bf16.gmra.mxu0 %v919
      %v977 = vpop.f32.mrf.mxu0
      %v978 = vadd.f32 0.0, %v977
      %v979 = vpop.f32.mrf.mxu0
      %v980 = vpop.f32.mrf.mxu0
      %v981 = vadd.f32 0.0, %v980
      %v982 = vpop.f32.mrf.mxu0
      %983 = vmatprep.mubr.bf16.mxu0 0
      %984 = vmatmul.mubr.bf16.gmra.mxu0 %v922
      %v985 = vpop.f32.mrf.mxu0
      %v986 = vadd.f32 0.0, %v985
      %v987 = vpop.f32.mrf.mxu0
      %v988 = vpop.f32.mrf.mxu0
      %v989 = vadd.f32 0.0, %v988
      %v990 = vpop.f32.mrf.mxu0
      %991 = vmatprep.mubr.bf16.mxu0 0
      %992 = vmatmul.mubr.bf16.gmra.mxu0 %v925
      %v993 = vpop.f32.mrf.mxu0
      %v994 = vadd.f32 0.0, %v993
      %v995 = vpop.f32.mrf.mxu0
      %v996 = vpop.f32.mrf.mxu0
      %v997 = vadd.f32 0.0, %v996
      %v998 = vpop.f32.mrf.mxu0
      %999 = vdwg.mxu0
      %v1000 = vadd.f32 %v880, %v962
      %v1001 = vadd.f32 %v881, %v965
      %v1002 = vadd.f32 %v882, %v970
      %v1003 = vadd.f32 %v883, %v973
      %v1004 = vadd.f32 %v884, %v978
      %v1005 = vadd.f32 %v885, %v981
      %v1006 = vadd.f32 %v886, %v986
      %v1007 = vadd.f32 %v887, %v989
      %v1008 = vadd.f32 %v888, %v994
      %v1009 = vadd.f32 %v889, %v997
      %1010 = vst.msk [vmem:[#allocation2] sm:$0xff] %vm209, %v1000
      %1011 = vst.msk [vmem:[#allocation2 + $0x8] sm:$0xff] %vm209, %v1001
      %1012 = vst.msk [vmem:[#allocation2 + $0x10] sm:$0xff] %vm209, %v1002
      %1013 = vst.msk [vmem:[#allocation2 + $0x18] sm:$0xff] %vm209, %v1003
      %1014 = vst.msk [vmem:[#allocation2 + $0x20] sm:$0xff] %vm209, %v1004
      %1015 = vst.msk [vmem:[#allocation2 + $0x28] sm:$0xff] %vm209, %v1005
      %1016 = vst.msk [vmem:[#allocation2 + $0x30] sm:$0xff] %vm209, %v1006
      %1017 = vst.msk [vmem:[#allocation2 + $0x38] sm:$0xff] %vm209, %v1007
      %1018 = vst.msk [vmem:[#allocation2 + $0x40] sm:$0xff] %vm209, %v1008
      %1019 = vst.msk [vmem:[#allocation2 + $0x48] sm:$0xff] %vm209, %v1009
      %v1020 = vld [vmem:[%s197 + $0xc] sm:$0xff]
      %v1021 = vld [vmem:[%s197 + $0x14] sm:$0xff]
      %v1022 = vld [vmem:[%s197 + $0x1c] sm:$0xff]
      %v1023 = vld [vmem:[%s197 + $0x24] sm:$0xff]
      %v1024 = vld [vmem:[%s197 + $0x2c] sm:$0xff]
      %v1025 = vld [vmem:[%s197 + $0x34] sm:$0xff]
      %v1026 = vld [vmem:[%s197 + $0x3c] sm:$0xff]
      %v1027 = vld [vmem:[%s197 + $0x44] sm:$0xff]
      %v1028 = vld [vmem:[%s197 + $0x4c] sm:$0xff]
      %v1029 = vld [vmem:[%s197 + $0x54] sm:$0xff]
      %v1030 = vmax.f32 %v1020, 0.0
      %v1031 = vmax.f32 %v1021, 0.0
      %v1032 = vmax.f32 %v1022, 0.0
      %v1033 = vmax.f32 %v1023, 0.0
      %v1034 = vmax.f32 %v1024, 0.0
      %v1035 = vmax.f32 %v1025, 0.0
      %v1036 = vmax.f32 %v1026, 0.0
      %v1037 = vmax.f32 %v1027, 0.0
      %v1038 = vmax.f32 %v1028, 0.0
      %v1039 = vmax.f32 %v1029, 0.0
      %v1040 = vld [vmem:[#allocation2] sm:$0xff]
      %v1041 = vld [vmem:[#allocation2 + $0x8] sm:$0xff]
      %v1042 = vld [vmem:[#allocation2 + $0x10] sm:$0xff]
      %v1043 = vld [vmem:[#allocation2 + $0x18] sm:$0xff]
      %v1044 = vld [vmem:[#allocation2 + $0x20] sm:$0xff]
      %v1045 = vld [vmem:[#allocation2 + $0x28] sm:$0xff]
      %v1046 = vld [vmem:[#allocation2 + $0x30] sm:$0xff]
      %v1047 = vld [vmem:[#allocation2 + $0x38] sm:$0xff]
      %v1048 = vld [vmem:[#allocation2 + $0x40] sm:$0xff]
      %v1049 = vld [vmem:[#allocation2 + $0x48] sm:$0xff]
      %v1050 = vpack.c.bf16 %v1031, %v1030
      %v1051 = vpack.c.bf16 %v1033, %v1032
      %v1052 = vpack.c.bf16 %v1035, %v1034
      %v1053 = vpack.c.bf16 %v1037, %v1036
      %v1054 = vpack.c.bf16 %v1039, %v1038
      %s1055 = scalar_lea.vmem %s1, 80
      %v1056 = vld [vmem:[%s1055] sm:$0xf]
      %v1057 = vld [vmem:[%s1055 + $0x4] sm:$0xf]
      %v1058 = vld [vmem:[%s1055 + $0x8] sm:$0xf]
      %v1059 = vld [vmem:[%s1055 + $0xc] sm:$0xf]
      %v1064 = vunpack.c.l.b16 %v1056
      %v1065 = vunpack.c.l.b16 %v1057
      %v1066 = vunpack.c.l.b16 %v1058
      %v1067 = vunpack.c.l.b16 %v1059
      %v1068 = vpack.c.b16 %v1065, %v1064
      %v1069 = vpack.c.b16 %v1067, %v1066
      %v1073 = vsel %vm271, %v1050, 0
      %v1076 = vsel %vm271, %v1051, 0
      %v1079 = vsel %vm271, %v1052, 0
      %v1082 = vsel %vm271, %v1053, 0
      %v1085 = vsel %vm271, %v1054, 0
      %1087 = vmatprep.subr.bf16.mxu0 0
      %1088 = vmatpush1.bf16.msra.mxu0 0
      %1089 = vmatprep.subr.bf16.mxu0 0
      %1090 = vmatpush1.bf16.msra.mxu0 0
      %1091 = vmatprep.subr.bf16.mxu0 0
      %1092 = vmatpush1.bf16.msra.mxu0 0
      %1093 = vmatprep.subr.bf16.mxu0 0
      %1094 = vmatpush1.bf16.msra.mxu0 0
      %1095 = vmatprep.subr.bf16.mxu0 0
      %1096 = vmatpush1.bf16.msra.mxu0 0
      %1097 = vmatprep.subr.bf16.mxu0 0
      %1098 = vmatpush1.bf16.msra.mxu0 0
      %1099 = vmatprep.subr.bf16.mxu0 0
      %1100 = vmatpush1.bf16.msra.mxu0 %v1069
      %1101 = vmatprep.subr.bf16.mxu0 0
      %1102 = vmatpush1.bf16.msra.mxu0 %v1068
      %1103 = vmatprep.subr.bf16.mxu0 0
      %1104 = vmatpush2.bf16.msra.mxu0 0
      %1105 = vmatprep.subr.bf16.mxu0 0
      %1106 = vmatpush2.bf16.msra.mxu0 0
      %1107 = vmatprep.subr.bf16.mxu0 0
      %1108 = vmatpush2.bf16.msra.mxu0 0
      %1109 = vmatprep.subr.bf16.mxu0 0
      %1110 = vmatpush2.bf16.msra.mxu0 0
      %1111 = vmatprep.subr.bf16.mxu0 0
      %1112 = vmatpush2.bf16.msra.mxu0 0
      %1113 = vmatprep.subr.bf16.mxu0 0
      %1114 = vmatpush2.bf16.msra.mxu0 0
      %1115 = vmatprep.subr.bf16.mxu0 0
      %1116 = vmatpush2.bf16.msra.mxu0 0
      %1117 = vmatprep.subr.bf16.mxu0 0
      %1118 = vmatpush2.bf16.msra.mxu0 0
      %1119 = vmatprep.mubr.bf16.mxu0 0
      %1120 = vmatmul.mubr.bf16.gmra.mxu0 %v1073
      %v1121 = vpop.f32.mrf.mxu0
      %v1122 = vadd.f32 0.0, %v1121
      %v1123 = vpop.f32.mrf.mxu0
      %v1124 = vpop.f32.mrf.mxu0
      %v1125 = vadd.f32 0.0, %v1124
      %v1126 = vpop.f32.mrf.mxu0
      %1127 = vmatprep.mubr.bf16.mxu0 0
      %1128 = vmatmul.mubr.bf16.gmra.mxu0 %v1076
      %v1129 = vpop.f32.mrf.mxu0
      %v1130 = vadd.f32 0.0, %v1129
      %v1131 = vpop.f32.mrf.mxu0
      %v1132 = vpop.f32.mrf.mxu0
      %v1133 = vadd.f32 0.0, %v1132
      %v1134 = vpop.f32.mrf.mxu0
      %1135 = vmatprep.mubr.bf16.mxu0 0
      %1136 = vmatmul.mubr.bf16.gmra.mxu0 %v1079
      %v1137 = vpop.f32.mrf.mxu0
      %v1138 = vadd.f32 0.0, %v1137
      %v1139 = vpop.f32.mrf.mxu0
      %v1140 = vpop.f32.mrf.mxu0
      %v1141 = vadd.f32 0.0, %v1140
      %v1142 = vpop.f32.mrf.mxu0
      %1143 = vmatprep.mubr.bf16.mxu0 0
      %1144 = vmatmul.mubr.bf16.gmra.mxu0 %v1082
      %v1145 = vpop.f32.mrf.mxu0
      %v1146 = vadd.f32 0.0, %v1145
      %v1147 = vpop.f32.mrf.mxu0
      %v1148 = vpop.f32.mrf.mxu0
      %v1149 = vadd.f32 0.0, %v1148
      %v1150 = vpop.f32.mrf.mxu0
      %1151 = vmatprep.mubr.bf16.mxu0 0
      %1152 = vmatmul.mubr.bf16.gmra.mxu0 %v1085
      %v1153 = vpop.f32.mrf.mxu0
      %v1154 = vadd.f32 0.0, %v1153
      %v1155 = vpop.f32.mrf.mxu0
      %v1156 = vpop.f32.mrf.mxu0
      %v1157 = vadd.f32 0.0, %v1156
      %v1158 = vpop.f32.mrf.mxu0
      %1159 = vdwg.mxu0
      %v1160 = vadd.f32 %v1040, %v1122
      %v1161 = vadd.f32 %v1041, %v1125
      %v1162 = vadd.f32 %v1042, %v1130
      %v1163 = vadd.f32 %v1043, %v1133
      %v1164 = vadd.f32 %v1044, %v1138
      %v1165 = vadd.f32 %v1045, %v1141
      %v1166 = vadd.f32 %v1046, %v1146
      %v1167 = vadd.f32 %v1047, %v1149
      %v1168 = vadd.f32 %v1048, %v1154
      %v1169 = vadd.f32 %v1049, %v1157
      %1170 = vst.msk [vmem:[#allocation2] sm:$0xff] %vm209, %v1160
      %1171 = vst.msk [vmem:[#allocation2 + $0x8] sm:$0xff] %vm209, %v1161
      %1172 = vst.msk [vmem:[#allocation2 + $0x10] sm:$0xff] %vm209, %v1162
      %1173 = vst.msk [vmem:[#allocation2 + $0x18] sm:$0xff] %vm209, %v1163
      %1174 = vst.msk [vmem:[#allocation2 + $0x20] sm:$0xff] %vm209, %v1164
      %1175 = vst.msk [vmem:[#allocation2 + $0x28] sm:$0xff] %vm209, %v1165
      %1176 = vst.msk [vmem:[#allocation2 + $0x30] sm:$0xff] %vm209, %v1166
      %1177 = vst.msk [vmem:[#allocation2 + $0x38] sm:$0xff] %vm209, %v1167
      %1178 = vst.msk [vmem:[#allocation2 + $0x40] sm:$0xff] %vm209, %v1168
      %1179 = vst.msk [vmem:[#allocation2 + $0x48] sm:$0xff] %vm209, %v1169
      %v1180 = vld [vmem:[%s197 + $0x14] sm:$0xff]
      %v1181 = vld [vmem:[%s197 + $0x1c] sm:$0xff]
      %v1182 = vld [vmem:[%s197 + $0x24] sm:$0xff]
      %v1183 = vld [vmem:[%s197 + $0x2c] sm:$0xff]
      %v1184 = vld [vmem:[%s197 + $0x34] sm:$0xff]
      %v1185 = vld [vmem:[%s197 + $0x3c] sm:$0xff]
      %v1186 = vld [vmem:[%s197 + $0x44] sm:$0xff]
      %v1187 = vld [vmem:[%s197 + $0x4c] sm:$0xff]
      %v1188 = vld [vmem:[%s197 + $0x54] sm:$0xff]
      %v1189 = vld [vmem:[%s197 + $0x5c] sm:$0xff]
      %v1190 = vmax.f32 %v1180, 0.0
      %v1191 = vmax.f32 %v1181, 0.0
      %v1192 = vmax.f32 %v1182, 0.0
      %v1193 = vmax.f32 %v1183, 0.0
      %v1194 = vmax.f32 %v1184, 0.0
      %v1195 = vmax.f32 %v1185, 0.0
      %v1196 = vmax.f32 %v1186, 0.0
      %v1197 = vmax.f32 %v1187, 0.0
      %v1198 = vmax.f32 %v1188, 0.0
      %v1199 = vmax.f32 %v1189, 0.0
      %v1200 = vld [vmem:[#allocation2] sm:$0xff]
      %v1201 = vld [vmem:[#allocation2 + $0x8] sm:$0xff]
      %v1202 = vld [vmem:[#allocation2 + $0x10] sm:$0xff]
      %v1203 = vld [vmem:[#allocation2 + $0x18] sm:$0xff]
      %v1204 = vld [vmem:[#allocation2 + $0x20] sm:$0xff]
      %v1205 = vld [vmem:[#allocation2 + $0x28] sm:$0xff]
      %v1206 = vld [vmem:[#allocation2 + $0x30] sm:$0xff]
      %v1207 = vld [vmem:[#allocation2 + $0x38] sm:$0xff]
      %v1208 = vld [vmem:[#allocation2 + $0x40] sm:$0xff]
      %v1209 = vld [vmem:[#allocation2 + $0x48] sm:$0xff]
      %v1210 = vpack.c.bf16 %v1191, %v1190
      %v1211 = vpack.c.bf16 %v1193, %v1192
      %v1212 = vpack.c.bf16 %v1195, %v1194
      %v1213 = vpack.c.bf16 %v1197, %v1196
      %v1214 = vpack.c.bf16 %v1199, %v1198
      %s1215 = scalar_lea.vmem %s1, 96
      %v1216 = vld [vmem:[%s1215] sm:$0xf]
      %v1217 = vld [vmem:[%s1215 + $0x4] sm:$0xf]
      %v1218 = vld [vmem:[%s1215 + $0x8] sm:$0xf]
      %v1219 = vld [vmem:[%s1215 + $0xc] sm:$0xf]
      %v1224 = vunpack.c.l.b16 %v1216
      %v1225 = vunpack.c.l.b16 %v1217
      %v1226 = vunpack.c.l.b16 %v1218
      %v1227 = vunpack.c.l.b16 %v1219
      %v1228 = vpack.c.b16 %v1225, %v1224
      %v1229 = vpack.c.b16 %v1227, %v1226
      %v1233 = vsel %vm271, %v1210, 0
      %v1236 = vsel %vm271, %v1211, 0
      %v1239 = vsel %vm271, %v1212, 0
      %v1242 = vsel %vm271, %v1213, 0
      %v1245 = vsel %vm271, %v1214, 0
      %1247 = vmatprep.subr.bf16.mxu0 0
      %1248 = vmatpush1.bf16.msra.mxu0 0
      %1249 = vmatprep.subr.bf16.mxu0 0
      %1250 = vmatpush1.bf16.msra.mxu0 0
      %1251 = vmatprep.subr.bf16.mxu0 0
      %1252 = vmatpush1.bf16.msra.mxu0 0
      %1253 = vmatprep.subr.bf16.mxu0 0
      %1254 = vmatpush1.bf16.msra.mxu0 0
      %1255 = vmatprep.subr.bf16.mxu0 0
      %1256 = vmatpush1.bf16.msra.mxu0 0
      %1257 = vmatprep.subr.bf16.mxu0 0
      %1258 = vmatpush1.bf16.msra.mxu0 0
      %1259 = vmatprep.subr.bf16.mxu0 0
      %1260 = vmatpush1.bf16.msra.mxu0 %v1229
      %1261 = vmatprep.subr.bf16.mxu0 0
      %1262 = vmatpush1.bf16.msra.mxu0 %v1228
      %1263 = vmatprep.subr.bf16.mxu0 0
      %1264 = vmatpush2.bf16.msra.mxu0 0
      %1265 = vmatprep.subr.bf16.mxu0 0
      %1266 = vmatpush2.bf16.msra.mxu0 0
      %1267 = vmatprep.subr.bf16.mxu0 0
      %1268 = vmatpush2.bf16.msra.mxu0 0
      %1269 = vmatprep.subr.bf16.mxu0 0
      %1270 = vmatpush2.bf16.msra.mxu0 0
      %1271 = vmatprep.subr.bf16.mxu0 0
      %1272 = vmatpush2.bf16.msra.mxu0 0
      %1273 = vmatprep.subr.bf16.mxu0 0
      %1274 = vmatpush2.bf16.msra.mxu0 0
      %1275 = vmatprep.subr.bf16.mxu0 0
      %1276 = vmatpush2.bf16.msra.mxu0 0
      %1277 = vmatprep.subr.bf16.mxu0 0
      %1278 = vmatpush2.bf16.msra.mxu0 0
      %1279 = vmatprep.mubr.bf16.mxu0 0
      %1280 = vmatmul.mubr.bf16.gmra.mxu0 %v1233
      %v1281 = vpop.f32.mrf.mxu0
      %v1282 = vadd.f32 0.0, %v1281
      %v1283 = vpop.f32.mrf.mxu0
      %v1284 = vpop.f32.mrf.mxu0
      %v1285 = vadd.f32 0.0, %v1284
      %v1286 = vpop.f32.mrf.mxu0
      %1287 = vmatprep.mubr.bf16.mxu0 0
      %1288 = vmatmul.mubr.bf16.gmra.mxu0 %v1236
      %v1289 = vpop.f32.mrf.mxu0
      %v1290 = vadd.f32 0.0, %v1289
      %v1291 = vpop.f32.mrf.mxu0
      %v1292 = vpop.f32.mrf.mxu0
      %v1293 = vadd.f32 0.0, %v1292
      %v1294 = vpop.f32.mrf.mxu0
      %1295 = vmatprep.mubr.bf16.mxu0 0
      %1296 = vmatmul.mubr.bf16.gmra.mxu0 %v1239
      %v1297 = vpop.f32.mrf.mxu0
      %v1298 = vadd.f32 0.0, %v1297
      %v1299 = vpop.f32.mrf.mxu0
      %v1300 = vpop.f32.mrf.mxu0
      %v1301 = vadd.f32 0.0, %v1300
      %v1302 = vpop.f32.mrf.mxu0
      %1303 = vmatprep.mubr.bf16.mxu0 0
      %1304 = vmatmul.mubr.bf16.gmra.mxu0 %v1242
      %v1305 = vpop.f32.mrf.mxu0
      %v1306 = vadd.f32 0.0, %v1305
      %v1307 = vpop.f32.mrf.mxu0
      %v1308 = vpop.f32.mrf.mxu0
      %v1309 = vadd.f32 0.0, %v1308
      %v1310 = vpop.f32.mrf.mxu0
      %1311 = vmatprep.mubr.bf16.mxu0 0
      %1312 = vmatmul.mubr.bf16.gmra.mxu0 %v1245
      %v1313 = vpop.f32.mrf.mxu0
      %v1314 = vadd.f32 0.0, %v1313
      %v1315 = vpop.f32.mrf.mxu0
      %v1316 = vpop.f32.mrf.mxu0
      %v1317 = vadd.f32 0.0, %v1316
      %v1318 = vpop.f32.mrf.mxu0
      %1319 = vdwg.mxu0
      %v1320 = vadd.f32 %v1200, %v1282
      %v1321 = vadd.f32 %v1201, %v1285
      %v1322 = vadd.f32 %v1202, %v1290
      %v1323 = vadd.f32 %v1203, %v1293
      %v1324 = vadd.f32 %v1204, %v1298
      %v1325 = vadd.f32 %v1205, %v1301
      %v1326 = vadd.f32 %v1206, %v1306
      %v1327 = vadd.f32 %v1207, %v1309
      %v1328 = vadd.f32 %v1208, %v1314
      %v1329 = vadd.f32 %v1209, %v1317
      %1330 = vst.msk [vmem:[#allocation2] sm:$0xff] %vm209, %v1320
      %1331 = vst.msk [vmem:[#allocation2 + $0x8] sm:$0xff] %vm209, %v1321
      %1332 = vst.msk [vmem:[#allocation2 + $0x10] sm:$0xff] %vm209, %v1322
      %1333 = vst.msk [vmem:[#allocation2 + $0x18] sm:$0xff] %vm209, %v1323
      %1334 = vst.msk [vmem:[#allocation2 + $0x20] sm:$0xff] %vm209, %v1324
      %1335 = vst.msk [vmem:[#allocation2 + $0x28] sm:$0xff] %vm209, %v1325
      %1336 = vst.msk [vmem:[#allocation2 + $0x30] sm:$0xff] %vm209, %v1326
      %1337 = vst.msk [vmem:[#allocation2 + $0x38] sm:$0xff] %vm209, %v1327
      %1338 = vst.msk [vmem:[#allocation2 + $0x40] sm:$0xff] %vm209, %v1328
      %1339 = vst.msk [vmem:[#allocation2 + $0x48] sm:$0xff] %vm209, %v1329
      %v1340 = vld [vmem:[%s197 + $0x15] sm:$0xff]
      %v1341 = vld [vmem:[%s197 + $0x1d] sm:$0xff]
      %v1342 = vld [vmem:[%s197 + $0x25] sm:$0xff]
      %v1343 = vld [vmem:[%s197 + $0x2d] sm:$0xff]
      %v1344 = vld [vmem:[%s197 + $0x35] sm:$0xff]
      %v1345 = vld [vmem:[%s197 + $0x3d] sm:$0xff]
      %v1346 = vld [vmem:[%s197 + $0x45] sm:$0xff]
      %v1347 = vld [vmem:[%s197 + $0x4d] sm:$0xff]
      %v1348 = vld [vmem:[%s197 + $0x55] sm:$0xff]
      %v1349 = vld [vmem:[%s197 + $0x5d] sm:$0xff]
      %v1350 = vmax.f32 %v1340, 0.0
      %v1351 = vmax.f32 %v1341, 0.0
      %v1352 = vmax.f32 %v1342, 0.0
      %v1353 = vmax.f32 %v1343, 0.0
      %v1354 = vmax.f32 %v1344, 0.0
      %v1355 = vmax.f32 %v1345, 0.0
      %v1356 = vmax.f32 %v1346, 0.0
      %v1357 = vmax.f32 %v1347, 0.0
      %v1358 = vmax.f32 %v1348, 0.0
      %v1359 = vmax.f32 %v1349, 0.0
      %v1360 = vld [vmem:[#allocation2] sm:$0xff]
      %v1361 = vld [vmem:[#allocation2 + $0x8] sm:$0xff]
      %v1362 = vld [vmem:[#allocation2 + $0x10] sm:$0xff]
      %v1363 = vld [vmem:[#allocation2 + $0x18] sm:$0xff]
      %v1364 = vld [vmem:[#allocation2 + $0x20] sm:$0xff]
      %v1365 = vld [vmem:[#allocation2 + $0x28] sm:$0xff]
      %v1366 = vld [vmem:[#allocation2 + $0x30] sm:$0xff]
      %v1367 = vld [vmem:[#allocation2 + $0x38] sm:$0xff]
      %v1368 = vld [vmem:[#allocation2 + $0x40] sm:$0xff]
      %v1369 = vld [vmem:[#allocation2 + $0x48] sm:$0xff]
      %v1370 = vpack.c.bf16 %v1351, %v1350
      %v1371 = vpack.c.bf16 %v1353, %v1352
      %v1372 = vpack.c.bf16 %v1355, %v1354
      %v1373 = vpack.c.bf16 %v1357, %v1356
      %v1374 = vpack.c.bf16 %v1359, %v1358
      %s1375 = scalar_lea.vmem %s1, 112
      %v1376 = vld [vmem:[%s1375] sm:$0xf]
      %v1377 = vld [vmem:[%s1375 + $0x4] sm:$0xf]
      %v1378 = vld [vmem:[%s1375 + $0x8] sm:$0xf]
      %v1379 = vld [vmem:[%s1375 + $0xc] sm:$0xf]
      %v1384 = vunpack.c.l.b16 %v1376
      %v1385 = vunpack.c.l.b16 %v1377
      %v1386 = vunpack.c.l.b16 %v1378
      %v1387 = vunpack.c.l.b16 %v1379
      %v1388 = vpack.c.b16 %v1385, %v1384
      %v1389 = vpack.c.b16 %v1387, %v1386
      %v1393 = vsel %vm271, %v1370, 0
      %v1396 = vsel %vm271, %v1371, 0
      %v1399 = vsel %vm271, %v1372, 0
      %v1402 = vsel %vm271, %v1373, 0
      %v1405 = vsel %vm271, %v1374, 0
      %1407 = vmatprep.subr.bf16.mxu0 0
      %1408 = vmatpush1.bf16.msra.mxu0 0
      %1409 = vmatprep.subr.bf16.mxu0 0
      %1410 = vmatpush1.bf16.msra.mxu0 0
      %1411 = vmatprep.subr.bf16.mxu0 0
      %1412 = vmatpush1.bf16.msra.mxu0 0
      %1413 = vmatprep.subr.bf16.mxu0 0
      %1414 = vmatpush1.bf16.msra.mxu0 0
      %1415 = vmatprep.subr.bf16.mxu0 0
      %1416 = vmatpush1.bf16.msra.mxu0 0
      %1417 = vmatprep.subr.bf16.mxu0 0
      %1418 = vmatpush1.bf16.msra.mxu0 0
      %1419 = vmatprep.subr.bf16.mxu0 0
      %1420 = vmatpush1.bf16.msra.mxu0 %v1389
      %1421 = vmatprep.subr.bf16.mxu0 0
      %1422 = vmatpush1.bf16.msra.mxu0 %v1388
      %1423 = vmatprep.subr.bf16.mxu0 0
      %1424 = vmatpush2.bf16.msra.mxu0 0
      %1425 = vmatprep.subr.bf16.mxu0 0
      %1426 = vmatpush2.bf16.msra.mxu0 0
      %1427 = vmatprep.subr.bf16.mxu0 0
      %1428 = vmatpush2.bf16.msra.mxu0 0
      %1429 = vmatprep.subr.bf16.mxu0 0
      %1430 = vmatpush2.bf16.msra.mxu0 0
      %1431 = vmatprep.subr.bf16.mxu0 0
      %1432 = vmatpush2.bf16.msra.mxu0 0
      %1433 = vmatprep.subr.bf16.mxu0 0
      %1434 = vmatpush2.bf16.msra.mxu0 0
      %1435 = vmatprep.subr.bf16.mxu0 0
      %1436 = vmatpush2.bf16.msra.mxu0 0
      %1437 = vmatprep.subr.bf16.mxu0 0
      %1438 = vmatpush2.bf16.msra.mxu0 0
      %1439 = vmatprep.mubr.bf16.mxu0 0
      %1440 = vmatmul.mubr.bf16.gmra.mxu0 %v1393
      %v1441 = vpop.f32.mrf.mxu0
      %v1442 = vadd.f32 0.0, %v1441
      %v1443 = vpop.f32.mrf.mxu0
      %v1444 = vpop.f32.mrf.mxu0
      %v1445 = vadd.f32 0.0, %v1444
      %v1446 = vpop.f32.mrf.mxu0
      %1447 = vmatprep.mubr.bf16.mxu0 0
      %1448 = vmatmul.mubr.bf16.gmra.mxu0 %v1396
      %v1449 = vpop.f32.mrf.mxu0
      %v1450 = vadd.f32 0.0, %v1449
      %v1451 = vpop.f32.mrf.mxu0
      %v1452 = vpop.f32.mrf.mxu0
      %v1453 = vadd.f32 0.0, %v1452
      %v1454 = vpop.f32.mrf.mxu0
      %1455 = vmatprep.mubr.bf16.mxu0 0
      %1456 = vmatmul.mubr.bf16.gmra.mxu0 %v1399
      %v1457 = vpop.f32.mrf.mxu0
      %v1458 = vadd.f32 0.0, %v1457
      %v1459 = vpop.f32.mrf.mxu0
      %v1460 = vpop.f32.mrf.mxu0
      %v1461 = vadd.f32 0.0, %v1460
      %v1462 = vpop.f32.mrf.mxu0
      %1463 = vmatprep.mubr.bf16.mxu0 0
      %1464 = vmatmul.mubr.bf16.gmra.mxu0 %v1402
      %v1465 = vpop.f32.mrf.mxu0
      %v1466 = vadd.f32 0.0, %v1465
      %v1467 = vpop.f32.mrf.mxu0
      %v1468 = vpop.f32.mrf.mxu0
      %v1469 = vadd.f32 0.0, %v1468
      %v1470 = vpop.f32.mrf.mxu0
      %1471 = vmatprep.mubr.bf16.mxu0 0
      %1472 = vmatmul.mubr.bf16.gmra.mxu0 %v1405
      %v1473 = vpop.f32.mrf.mxu0
      %v1474 = vadd.f32 0.0, %v1473
      %v1475 = vpop.f32.mrf.mxu0
      %v1476 = vpop.f32.mrf.mxu0
      %v1477 = vadd.f32 0.0, %v1476
      %v1478 = vpop.f32.mrf.mxu0
      %1479 = vdwg.mxu0
      %v1480 = vadd.f32 %v1360, %v1442
      %v1481 = vadd.f32 %v1361, %v1445
      %v1482 = vadd.f32 %v1362, %v1450
      %v1483 = vadd.f32 %v1363, %v1453
      %v1484 = vadd.f32 %v1364, %v1458
      %v1485 = vadd.f32 %v1365, %v1461
      %v1486 = vadd.f32 %v1366, %v1466
      %v1487 = vadd.f32 %v1367, %v1469
      %v1488 = vadd.f32 %v1368, %v1474
      %v1489 = vadd.f32 %v1369, %v1477
      %1490 = vst.msk [vmem:[#allocation2] sm:$0xff] %vm209, %v1480
      %1491 = vst.msk [vmem:[#allocation2 + $0x8] sm:$0xff] %vm209, %v1481
      %1492 = vst.msk [vmem:[#allocation2 + $0x10] sm:$0xff] %vm209, %v1482
      %1493 = vst.msk [vmem:[#allocation2 + $0x18] sm:$0xff] %vm209, %v1483
      %1494 = vst.msk [vmem:[#allocation2 + $0x20] sm:$0xff] %vm209, %v1484
      %1495 = vst.msk [vmem:[#allocation2 + $0x28] sm:$0xff] %vm209, %v1485
      %1496 = vst.msk [vmem:[#allocation2 + $0x30] sm:$0xff] %vm209, %v1486
      %1497 = vst.msk [vmem:[#allocation2 + $0x38] sm:$0xff] %vm209, %v1487
      %1498 = vst.msk [vmem:[#allocation2 + $0x40] sm:$0xff] %vm209, %v1488
      %1499 = vst.msk [vmem:[#allocation2 + $0x48] sm:$0xff] %vm209, %v1489
      %v1500 = vld [vmem:[%s197 + $0x16] sm:$0xff]
      %v1501 = vld [vmem:[%s197 + $0x1e] sm:$0xff]
      %v1502 = vld [vmem:[%s197 + $0x26] sm:$0xff]
      %v1503 = vld [vmem:[%s197 + $0x2e] sm:$0xff]
      %v1504 = vld [vmem:[%s197 + $0x36] sm:$0xff]
      %v1505 = vld [vmem:[%s197 + $0x3e] sm:$0xff]
      %v1506 = vld [vmem:[%s197 + $0x46] sm:$0xff]
      %v1507 = vld [vmem:[%s197 + $0x4e] sm:$0xff]
      %v1508 = vld [vmem:[%s197 + $0x56] sm:$0xff]
      %v1509 = vld [vmem:[%s197 + $0x5e] sm:$0xff]
      %v1510 = vmax.f32 %v1500, 0.0
      %v1511 = vmax.f32 %v1501, 0.0
      %v1512 = vmax.f32 %v1502, 0.0
      %v1513 = vmax.f32 %v1503, 0.0
      %v1514 = vmax.f32 %v1504, 0.0
      %v1515 = vmax.f32 %v1505, 0.0
      %v1516 = vmax.f32 %v1506, 0.0
      %v1517 = vmax.f32 %v1507, 0.0
      %v1518 = vmax.f32 %v1508, 0.0
      %v1519 = vmax.f32 %v1509, 0.0
      %v1520 = vld [vmem:[#allocation2] sm:$0xff]
      %v1521 = vld [vmem:[#allocation2 + $0x8] sm:$0xff]
      %v1522 = vld [vmem:[#allocation2 + $0x10] sm:$0xff]
      %v1523 = vld [vmem:[#allocation2 + $0x18] sm:$0xff]
      %v1524 = vld [vmem:[#allocation2 + $0x20] sm:$0xff]
      %v1525 = vld [vmem:[#allocation2 + $0x28] sm:$0xff]
      %v1526 = vld [vmem:[#allocation2 + $0x30] sm:$0xff]
      %v1527 = vld [vmem:[#allocation2 + $0x38] sm:$0xff]
      %v1528 = vld [vmem:[#allocation2 + $0x40] sm:$0xff]
      %v1529 = vld [vmem:[#allocation2 + $0x48] sm:$0xff]
      %v1530 = vpack.c.bf16 %v1511, %v1510
      %v1531 = vpack.c.bf16 %v1513, %v1512
      %v1532 = vpack.c.bf16 %v1515, %v1514
      %v1533 = vpack.c.bf16 %v1517, %v1516
      %v1534 = vpack.c.bf16 %v1519, %v1518
      %s1535 = scalar_lea.vmem %s1, 128
      %v1536 = vld [vmem:[%s1535] sm:$0xf]
      %v1537 = vld [vmem:[%s1535 + $0x4] sm:$0xf]
      %v1538 = vld [vmem:[%s1535 + $0x8] sm:$0xf]
      %v1539 = vld [vmem:[%s1535 + $0xc] sm:$0xf]
      %v1544 = vunpack.c.l.b16 %v1536
      %v1545 = vunpack.c.l.b16 %v1537
      %v1546 = vunpack.c.l.b16 %v1538
      %v1547 = vunpack.c.l.b16 %v1539
      %v1548 = vpack.c.b16 %v1545, %v1544
      %v1549 = vpack.c.b16 %v1547, %v1546
      %v1553 = vsel %vm271, %v1530, 0
      %v1556 = vsel %vm271, %v1531, 0
      %v1559 = vsel %vm271, %v1532, 0
      %v1562 = vsel %vm271, %v1533, 0
      %v1565 = vsel %vm271, %v1534, 0
      %1567 = vmatprep.subr.bf16.mxu0 0
      %1568 = vmatpush1.bf16.msra.mxu0 0
      %1569 = vmatprep.subr.bf16.mxu0 0
      %1570 = vmatpush1.bf16.msra.mxu0 0
      %1571 = vmatprep.subr.bf16.mxu0 0
      %1572 = vmatpush1.bf16.msra.mxu0 0
      %1573 = vmatprep.subr.bf16.mxu0 0
      %1574 = vmatpush1.bf16.msra.mxu0 0
      %1575 = vmatprep.subr.bf16.mxu0 0
      %1576 = vmatpush1.bf16.msra.mxu0 0
      %1577 = vmatprep.subr.bf16.mxu0 0
      %1578 = vmatpush1.bf16.msra.mxu0 0
      %1579 = vmatprep.subr.bf16.mxu0 0
      %1580 = vmatpush1.bf16.msra.mxu0 %v1549
      %1581 = vmatprep.subr.bf16.mxu0 0
      %1582 = vmatpush1.bf16.msra.mxu0 %v1548
      %1583 = vmatprep.subr.bf16.mxu0 0
      %1584 = vmatpush2.bf16.msra.mxu0 0
      %1585 = vmatprep.subr.bf16.mxu0 0
      %1586 = vmatpush2.bf16.msra.mxu0 0
      %1587 = vmatprep.subr.bf16.mxu0 0
      %1588 = vmatpush2.bf16.msra.mxu0 0
      %1589 = vmatprep.subr.bf16.mxu0 0
      %1590 = vmatpush2.bf16.msra.mxu0 0
      %1591 = vmatprep.subr.bf16.mxu0 0
      %1592 = vmatpush2.bf16.msra.mxu0 0
      %1593 = vmatprep.subr.bf16.mxu0 0
      %1594 = vmatpush2.bf16.msra.mxu0 0
      %1595 = vmatprep.subr.bf16.mxu0 0
      %1596 = vmatpush2.bf16.msra.mxu0 0
      %1597 = vmatprep.subr.bf16.mxu0 0
      %1598 = vmatpush2.bf16.msra.mxu0 0
      %1599 = vmatprep.mubr.bf16.mxu0 0
      %1600 = vmatmul.mubr.bf16.gmra.mxu0 %v1553
      %v1601 = vpop.f32.mrf.mxu0
      %v1602 = vadd.f32 0.0, %v1601
      %v1603 = vpop.f32.mrf.mxu0
      %v1604 = vpop.f32.mrf.mxu0
      %v1605 = vadd.f32 0.0, %v1604
      %v1606 = vpop.f32.mrf.mxu0
      %1607 = vmatprep.mubr.bf16.mxu0 0
      %1608 = vmatmul.mubr.bf16.gmra.mxu0 %v1556
      %v1609 = vpop.f32.mrf.mxu0
      %v1610 = vadd.f32 0.0, %v1609
      %v1611 = vpop.f32.mrf.mxu0
      %v1612 = vpop.f32.mrf.mxu0
      %v1613 = vadd.f32 0.0, %v1612
      %v1614 = vpop.f32.mrf.mxu0
      %1615 = vmatprep.mubr.bf16.mxu0 0
      %1616 = vmatmul.mubr.bf16.gmra.mxu0 %v1559
      %v1617 = vpop.f32.mrf.mxu0
      %v1618 = vadd.f32 0.0, %v1617
      %v1619 = vpop.f32.mrf.mxu0
      %v1620 = vpop.f32.mrf.mxu0
      %v1621 = vadd.f32 0.0, %v1620
      %v1622 = vpop.f32.mrf.mxu0
      %1623 = vmatprep.mubr.bf16.mxu0 0
      %1624 = vmatmul.mubr.bf16.gmra.mxu0 %v1562
      %v1625 = vpop.f32.mrf.mxu0
      %v1626 = vadd.f32 0.0, %v1625
      %v1627 = vpop.f32.mrf.mxu0
      %v1628 = vpop.f32.mrf.mxu0
      %v1629 = vadd.f32 0.0, %v1628
      %v1630 = vpop.f32.mrf.mxu0
      %1631 = vmatprep.mubr.bf16.mxu0 0
      %1632 = vmatmul.mubr.bf16.gmra.mxu0 %v1565
      %v1633 = vpop.f32.mrf.mxu0
      %v1634 = vadd.f32 0.0, %v1633
      %v1635 = vpop.f32.mrf.mxu0
      %v1636 = vpop.f32.mrf.mxu0
      %v1637 = vadd.f32 0.0, %v1636
      %v1638 = vpop.f32.mrf.mxu0
      %1639 = vdwg.mxu0
      %v1640 = vadd.f32 %v1520, %v1602
      %v1641 = vadd.f32 %v1521, %v1605
      %v1642 = vadd.f32 %v1522, %v1610
      %v1643 = vadd.f32 %v1523, %v1613
      %v1644 = vadd.f32 %v1524, %v1618
      %v1645 = vadd.f32 %v1525, %v1621
      %v1646 = vadd.f32 %v1526, %v1626
      %v1647 = vadd.f32 %v1527, %v1629
      %v1648 = vadd.f32 %v1528, %v1634
      %v1649 = vadd.f32 %v1529, %v1637
      %1650 = vst.msk [vmem:[#allocation2] sm:$0xff] %vm209, %v1640
      %1651 = vst.msk [vmem:[#allocation2 + $0x8] sm:$0xff] %vm209, %v1641
      %1652 = vst.msk [vmem:[#allocation2 + $0x10] sm:$0xff] %vm209, %v1642
      %1653 = vst.msk [vmem:[#allocation2 + $0x18] sm:$0xff] %vm209, %v1643
      %1654 = vst.msk [vmem:[#allocation2 + $0x20] sm:$0xff] %vm209, %v1644
      %1655 = vst.msk [vmem:[#allocation2 + $0x28] sm:$0xff] %vm209, %v1645
      %1656 = vst.msk [vmem:[#allocation2 + $0x30] sm:$0xff] %vm209, %v1646
      %1657 = vst.msk [vmem:[#allocation2 + $0x38] sm:$0xff] %vm209, %v1647
      %1658 = vst.msk [vmem:[#allocation2 + $0x40] sm:$0xff] %vm209, %v1648
      %1659 = vst.msk [vmem:[#allocation2 + $0x48] sm:$0xff] %vm209, %v1649
      %v1660 = vld [vmem:[#allocation2] sm:$0xff]
      %v1661 = vld [vmem:[#allocation2 + $0x8] sm:$0xff]
      %v1662 = vld [vmem:[#allocation2 + $0x10] sm:$0xff]
      %v1663 = vld [vmem:[#allocation2 + $0x18] sm:$0xff]
      %v1664 = vld [vmem:[#allocation2 + $0x20] sm:$0xff]
      %v1665 = vld [vmem:[#allocation2 + $0x28] sm:$0xff]
      %v1666 = vld [vmem:[#allocation2 + $0x30] sm:$0xff]
      %v1667 = vld [vmem:[#allocation2 + $0x38] sm:$0xff]
      %v1668 = vld [vmem:[#allocation2 + $0x40] sm:$0xff]
      %v1669 = vld [vmem:[#allocation2 + $0x48] sm:$0xff]
      %v1670 = vld [vmem:[%s2] sm:$0x1]
      %v1672 = vlaneseq
      %v1673 = vshrl.u32 %v1672, 7
      %v1674 = vsub.s32 0, %v1673
      %v1675 = vrot.slane %v1670, %v1674
      %v1677 = vadd.f32 %v1660, %v1675
      %v1678 = vadd.f32 %v1661, %v1675
      %v1679 = vadd.f32 %v1662, %v1675
      %v1680 = vadd.f32 %v1663, %v1675
      %v1681 = vadd.f32 %v1664, %v1675
      %v1682 = vadd.f32 %v1665, %v1675
      %v1683 = vadd.f32 %v1666, %v1675
      %v1684 = vadd.f32 %v1667, %v1675
      %v1685 = vadd.f32 %v1668, %v1675
      %v1686 = vadd.f32 %v1669, %v1675
      %1687 = vst.msk [vmem:[%s206] sm:$0xff] %vm209, %v1677
      %1688 = vst.msk [vmem:[%s206 + $0x8] sm:$0xff] %vm209, %v1678
      %1689 = vst.msk [vmem:[%s206 + $0x10] sm:$0xff] %vm209, %v1679
      %1690 = vst.msk [vmem:[%s206 + $0x18] sm:$0xff] %vm209, %v1680
      %1691 = vst.msk [vmem:[%s206 + $0x20] sm:$0xff] %vm209, %v1681
      %1692 = vst.msk [vmem:[%s206 + $0x28] sm:$0xff] %vm209, %v1682
      %1693 = vst.msk [vmem:[%s206 + $0x30] sm:$0xff] %vm209, %v1683
      %1694 = vst.msk [vmem:[%s206 + $0x38] sm:$0xff] %vm209, %v1684
      %1695 = vst.msk [vmem:[%s206 + $0x40] sm:$0xff] %vm209, %v1685
      %1696 = vst.msk [vmem:[%s206 + $0x48] sm:$0xff] %vm209, %v1686
      %s1697 = smul.u32 10, %s19
      %p1698 = scmp.lt.s32.totalorder %s18, 1
      %s1699 = scalar_select %p1698, %s18, 1
      %p1700 = scmp.lt.s32.totalorder %s1697, 9
      %s1701 = scalar_select %p1700, %s1697, 9
      %s1702 = smul.addr %s1699, 10
      %s1703 = sadd.s32 %s1701, %s1702
      %s1704 = smul.addr %s1703, 8
      %s1705 = scalar_lea.vmem %s3, %s1704
      // Predicated region
      $region33: #{_lambda_.14} parent=31 // pred_check
        %p1706 = pneg %p116
      $region34: #{_lambda_.14} parent=31 // pred_check_branch
        %1708 = sbr.rel (%p1706) target = $region36
      $region35: #{_lambda_.14} parent=31 // pred_region
        %s1709 = smul.u32 10, %s19
      $region36: #{_lambda_.14} parent=31 // pred_fallthru
        _
    $region32: #{_lambda_.14} parent=5 // pred_fallthru
      _
    %p1710 = scmp.le.s32.totalorder 2, %s9
    // Predicated region
    $region37: #{_lambda_.14} parent=5 // pred_check
      %p1711 = pneg %p1710
    $region38: #{_lambda_.14} parent=5 // pred_check_branch
      %1713 = sbr.rel (%p1711) target = $region40
    $region39: #{_lambda_.14} parent=5 // pred_region
      %s1714 = ssub.s32 %s9, 2
      // Predicated region
      $region41: #{_lambda_.14} parent=39 // pred_check
        %p1715 = pneg %p122
      $region42: #{_lambda_.14} parent=39 // pred_check_branch
        %1717 = sbr.rel (%p1715) target = $region44
      $region43: #{_lambda_.14} parent=39 // pred_region
        %s1718 = smul.u32 10, %s21
        %p1719 = scmp.lt.s32.totalorder %s20, 1
        %s1720 = scalar_select %p1719, %s20, 1
        %p1721 = scmp.lt.s32.totalorder %s1718, 9
        %s1722 = scalar_select %p1721, %s1718, 9
        %s1723 = smul.addr %s1720, 10
        %s1724 = sadd.s32 %s1722, %s1723
        %s1725 = smul.addr %s1724, 8
        %s1726 = scalar_lea.vmem %s3, %s1725
      $region44: #{_lambda_.14} parent=39 // pred_fallthru
        _
    $region40: #{_lambda_.14} parent=5 // pred_fallthru
      _
  $region6: #{_lambda_.14} parent=0 // loop_footer
    %s13 = sadd.s32 1, %s9
  $region7: #{_lambda_.14} parent=0 // loop_footer_branch
    %8 = sbr.rel target = $region3
  $region8: #{_lambda_.14} parent=0 // loop_exit
    _

// kernel: _lambda_.18
$region0: #{_lambda_.18}
  #allocation0 [shape = 'u32[]', space=smem, size = 0x4, offset = 0x4, fixed_abs, tag = 'smem constant byte address 0x4 - core index']
  #allocation1 [shape = 'u32[144,128]{1,0:T(1,128)}', space=vmem, size = 0x12000, scoped, tag = 'internal scratch']
  #allocation2 [shape = 'f32[72,16]{1,0:T(8,128)}', space=vmem, size = 0x9000, scoped, tag = 'scratch operand']
  %s0 = inlined_call_operand.vmem [shape: f32[2,1,82,32], index: 0, kind: input, shape index: {}]
  %s1 = inlined_call_operand.vmem [shape: bf16[4,32,16], index: 1, kind: input, shape index: {}]
  %s2 = inlined_call_operand.vmem [shape: f32[1,16], index: 2, kind: input, shape index: {}]
  %s3 = inlined_call_operand.vmem [shape: f32[2,72,16], index: 3, kind: output, shape index: {}]
  %s4 = sld [smem:[#allocation0]]
  $region45: #{_lambda_.18} parent=0
    _
  %s6 = ssub.s32 1, %s4
  %s7 = scalar_select 0, %s6, %s4
  loop: start=0, step=1, limit=4
  $region2: #{_lambda_.18} parent=0 // loop_pre_header
    _
  $region3: #{_lambda_.18} parent=0 // loop_header
    %s9 = sphi 0, %s13
    %p10 = scmp.ge.s32.totalorder %s9, 4
    %s16 = sphi 0, %s28
    %s17 = sphi 0, %s24
    %s18 = sphi 0, %s16
    %s19 = sphi 0, %s17
    %s20 = sphi 0, %s18
    %s21 = sphi 0, %s19
    %s33 = sphi 0, %s35
    %s36 = sphi 0, %s33
    %s37 = sphi 0, %s36
    %s53 = sphi 0, %s37
    %s57 = sphi 0, %s57
    %s59 = sphi 0, %s57
    %s60 = sphi 0, %s59
    %s74 = sphi 0, %s60
    %s78 = sphi 0, %s78
    %s80 = sphi 0, %s78
    %s81 = sphi 0, %s80
    %s95 = sphi 0, %s81
    %s103 = sphi 0, %s105
    %s106 = sphi 0, %s103
    %s107 = sphi 0, %s106
    %s123 = sphi 0, %s107
  $region4: #{_lambda_.18} parent=0 // loop_header_branch
    %12 = sbr.rel (%p10) target = $region8
  $region5: #{_lambda_.18} parent=0 // loop_body
    %s14 = ssub.s32 %s9, 1
    %s15 = ssub.s32 %s9, 2
    %s22 = sadd.s32 1, %s17
    %p23 = scmp.ge.s32.totalorder %s22, 1
    %s24 = scalar_select %p23, 0, %s22
    %s25 = sadd.s32 1, %s16
    %s26 = scalar_select %p23, %s25, %s16
    %p27 = scmp.ge.s32.totalorder %s26, 2
    %s28 = scalar_select %p27, 0, %s26
    %s29 = ssub.s32 %s16, %s28
    %s30 = ssub.s32 %s17, %s24
    %s31 = sor.u32 %s29, %s30
    %p32 = scmp.eq.s32.totalorder %s31, 0
    %s34 = sadd.s32 %s33, 1
    %s35 = scalar_select %p32, %s33, %s34
    %p38 = pneg %p32
    %p39 = scmp.eq.s32.totalorder %s9, 1
    %p40 = por %p38, %p39
    %p41 = scmp.ne.s32.totalorder %s33, %s36
    %p42 = scmp.eq.s32.totalorder %s9, 0
    %p43 = por %p41, %p42
    %p44 = scmp.ne.s32.totalorder %s33, %s36
    %p45 = scmp.eq.s32.totalorder %s14, 1
    %p46 = por %p44, %p45
    %p47 = scmp.ne.s32.totalorder %s36, %s37
    %p48 = scmp.eq.s32.totalorder %s14, 0
    %p49 = por %p47, %p48
    %p50 = scmp.ne.s32.totalorder %s36, %s37
    %p51 = scmp.eq.s32.totalorder %s15, 1
    %p52 = por %p50, %p51
    %p54 = scmp.ne.s32.totalorder %s37, %s53
    %p55 = scmp.eq.s32.totalorder %s15, 0
    %p56 = por %p54, %p55
    %s58 = sadd.s32 %s57, 1
    %p61 = scmp.eq.s32.totalorder %s9, 1
    %p62 = scmp.ne.s32.totalorder %s57, %s59
    %p63 = scmp.eq.s32.totalorder %s9, 0
    %p64 = por %p62, %p63
    %p65 = scmp.ne.s32.totalorder %s57, %s59
    %p66 = scmp.eq.s32.totalorder %s14, 1
    %p67 = por %p65, %p66
    %p68 = scmp.ne.s32.totalorder %s59, %s60
    %p69 = scmp.eq.s32.totalorder %s14, 0
    %p70 = por %p68, %p69
    %p71 = scmp.ne.s32.totalorder %s59, %s60
    %p72 = scmp.eq.s32.totalorder %s15, 1
    %p73 = por %p71, %p72
    %p75 = scmp.ne.s32.totalorder %s60, %s74
    %p76 = scmp.eq.s32.totalorder %s15, 0
    %p77 = por %p75, %p76
    %s79 = sadd.s32 %s78, 1
    %p82 = scmp.eq.s32.totalorder %s9, 1
    %p83 = scmp.ne.s32.totalorder %s78, %s80
    %p84 = scmp.eq.s32.totalorder %s9, 0
    %p85 = por %p83, %p84
    %p86 = scmp.ne.s32.totalorder %s78, %s80
    %p87 = scmp.eq.s32.totalorder %s14, 1
    %p88 = por %p86, %p87
    %p89 = scmp.ne.s32.totalorder %s80, %s81
    %p90 = scmp.eq.s32.totalorder %s14, 0
    %p91 = por %p89, %p90
    %p92 = scmp.ne.s32.totalorder %s80, %s81
    %p93 = scmp.eq.s32.totalorder %s15, 1
    %p94 = por %p92, %p93
    %p96 = scmp.ne.s32.totalorder %s81, %s95
    %p97 = scmp.eq.s32.totalorder %s15, 0
    %p98 = por %p96, %p97
    %s99 = ssub.s32 %s16, %s28
    %s100 = ssub.s32 %s17, %s24
    %s101 = sor.u32 %s99, %s100
    %p102 = scmp.eq.s32.totalorder %s101, 0
    %s104 = sadd.s32 %s103, 1
    %s105 = scalar_select %p102, %s103, %s104
    %p108 = pneg %p102
    %p109 = scmp.eq.s32.totalorder %s9, 1
    %p110 = por %p108, %p109
    %p111 = scmp.ne.s32.totalorder %s103, %s106
    %p112 = scmp.eq.s32.totalorder %s9, 0
    %p113 = por %p111, %p112
    %p114 = scmp.ne.s32.totalorder %s103, %s106
    %p115 = scmp.eq.s32.totalorder %s14, 1
    %p116 = por %p114, %p115
    %p117 = scmp.ne.s32.totalorder %s106, %s107
    %p118 = scmp.eq.s32.totalorder %s14, 0
    %p119 = por %p117, %p118
    %p120 = scmp.ne.s32.totalorder %s106, %s107
    %p121 = scmp.eq.s32.totalorder %s15, 1
    %p122 = por %p120, %p121
    %p124 = scmp.ne.s32.totalorder %s107, %s123
    %p125 = scmp.eq.s32.totalorder %s15, 0
    %p126 = por %p124, %p125
    %p127 = scmp.le.s32.totalorder 1, %s9
    %p128 = scmp.lt.s32.totalorder %s9, 3
    %p129 = pnand %p127, %p128
    %p130 = pneg %p129
    // Predicated region
    $region9: #{_lambda_.18} parent=5 // pred_check
      _
    $region10: #{_lambda_.18} parent=5 // pred_check_branch
      %132 = sbr.rel (%p129) target = $region12
    $region11: #{_lambda_.18} parent=5 // pred_region
      %s133 = ssub.s32 %s9, 1
      // Predicated region
      $region13: #{_lambda_.18} parent=11 // pred_check
        %p134 = pneg %p70
      $region14: #{_lambda_.18} parent=11 // pred_check_branch
        %136 = sbr.rel (%p134) target = $region16
      $region15: #{_lambda_.18} parent=11 // pred_region
        _
      $region16: #{_lambda_.18} parent=11 // pred_fallthru
        _
      // Predicated region
      $region17: #{_lambda_.18} parent=11 // pred_check
        %p137 = pneg %p91
      $region18: #{_lambda_.18} parent=11 // pred_check_branch
        %139 = sbr.rel (%p137) target = $region20
      $region19: #{_lambda_.18} parent=11 // pred_region
        _
      $region20: #{_lambda_.18} parent=11 // pred_fallthru
        _
    $region12: #{_lambda_.18} parent=5 // pred_fallthru
      _
    %p140 = scmp.lt.s32.totalorder %s9, 2
    // Predicated region
    $region21: #{_lambda_.18} parent=5 // pred_check
      %p141 = pneg %p140
    $region22: #{_lambda_.18} parent=5 // pred_check_branch
      %143 = sbr.rel (%p141) target = $region24
    $region23: #{_lambda_.18} parent=5 // pred_region
      // Predicated region
      $region25: #{_lambda_.18} parent=23 // pred_check
        %p144 = pneg %p43
      $region26: #{_lambda_.18} parent=23 // pred_check_branch
        %146 = sbr.rel (%p144) target = $region28
      $region27: #{_lambda_.18} parent=23 // pred_region
        %p147 = scmp.lt.s32.totalorder %s16, 1
        %s148 = scalar_select %p147, %s16, 1
        %p149 = scmp.lt.s32.totalorder %s17, 0
        %s150 = scalar_select %p149, %s17, 0
        %s151 = smul.addr %s150, 11
        %s152 = smul.addr %s148, 11
        %s153 = sadd.s32 %s151, %s152
        %s154 = smul.addr %s153, 8
        %s155 = scalar_lea.vmem %s0, %s154
      $region28: #{_lambda_.18} parent=23 // pred_fallthru
        _
    $region24: #{_lambda_.18} parent=5 // pred_fallthru
      _
    %p156 = scmp.le.s32.totalorder 1, %s9
    %p157 = scmp.lt.s32.totalorder %s9, 3
    %p158 = pnand %p156, %p157
    %p159 = pneg %p158
    // Predicated region
    $region29: #{_lambda_.18} parent=5 // pred_check
      _
    $region30: #{_lambda_.18} parent=5 // pred_check_branch
      %161 = sbr.rel (%p158) target = $region32
    $region31: #{_lambda_.18} parent=5 // pred_region
      %s162 = ssub.s32 %s9, 1
      %p163 = scmp.lt.s32.totalorder %s18, 1
      %s164 = scalar_select %p163, %s18, 1
      %p165 = scmp.lt.s32.totalorder %s19, 0
      %s166 = scalar_select %p165, %s19, 0
      %s167 = smul.addr %s166, 11
      %s168 = smul.addr %s164, 11
      %s169 = sadd.s32 %s167, %s168
      %s170 = smul.addr %s169, 8
      %s171 = scalar_lea.vmem %s0, %s170
      %p172 = pneg %p49
      %p173 = pneg %p46
      %p174 = pneg %p70
      %p175 = pneg %p67
      %p176 = pneg %p91
      %p177 = pneg %p88
      %p178 = pneg %p119
      %p179 = pneg %p116
      %s180 = smul.u32 9, %s19
      %p181 = scmp.lt.s32.totalorder %s18, 1
      %s182 = scalar_select %p181, %s18, 1
      %p183 = scmp.lt.s32.totalorder %s180, 8
      %s184 = scalar_select %p183, %s180, 8
      %s185 = smul.addr %s182, 9
      %s186 = sadd.s32 %s184, %s185
      %s187 = smul.addr %s186, 8
      %s188 = scalar_lea.vmem %s3, %s187
      %p189 = scmp.lt.s32.totalorder %s18, 1
      %s190 = scalar_select %p189, %s18, 1
      %p191 = scmp.lt.s32.totalorder %s19, 0
      %s192 = scalar_select %p191, %s19, 0
      %s193 = smul.addr %s192, 11
      %s194 = smul.addr %s190, 11
      %s195 = sadd.s32 %s193, %s194
      %s196 = smul.addr %s195, 8
      %s197 = scalar_lea.vmem %s0, %s196
      %s198 = smul.u32 9, %s19
      %p199 = scmp.lt.s32.totalorder %s18, 1
      %s200 = scalar_select %p199, %s18, 1
      %p201 = scmp.lt.s32.totalorder %s198, 8
      %s202 = scalar_select %p201, %s198, 8
      %s203 = smul.addr %s200, 9
      %s204 = sadd.s32 %s202, %s203
      %s205 = smul.addr %s204, 8
      %s206 = scalar_lea.vmem %s3, %s205
      %s207 = smul.u32 9, %s19
      %vm209 = vcmask 130048
      %210 = vst.msk [vmem:[#allocation2] sm:$0xff] %vm209, 0.0
      %211 = vst.msk [vmem:[#allocation2 + $0x8] sm:$0xff] %vm209, 0.0
      %212 = vst.msk [vmem:[#allocation2 + $0x10] sm:$0xff] %vm209, 0.0
      %213 = vst.msk [vmem:[#allocation2 + $0x18] sm:$0xff] %vm209, 0.0
      %214 = vst.msk [vmem:[#allocation2 + $0x20] sm:$0xff] %vm209, 0.0
      %215 = vst.msk [vmem:[#allocation2 + $0x28] sm:$0xff] %vm209, 0.0
      %216 = vst.msk [vmem:[#allocation2 + $0x30] sm:$0xff] %vm209, 0.0
      %217 = vst.msk [vmem:[#allocation2 + $0x38] sm:$0xff] %vm209, 0.0
      %218 = vst.msk [vmem:[#allocation2 + $0x40] sm:$0xff] %vm209, 0.0
      %v219 = vld [vmem:[%s197] sm:$0xff]
      %v220 = vld [vmem:[%s197 + $0x8] sm:$0xff]
      %v221 = vld [vmem:[%s197 + $0x10] sm:$0xff]
      %v222 = vld [vmem:[%s197 + $0x18] sm:$0xff]
      %v223 = vld [vmem:[%s197 + $0x20] sm:$0xff]
      %v224 = vld [vmem:[%s197 + $0x28] sm:$0xff]
      %v225 = vld [vmem:[%s197 + $0x30] sm:$0xff]
      %v226 = vld [vmem:[%s197 + $0x38] sm:$0xff]
      %v227 = vld [vmem:[%s197 + $0x40] sm:$0xff]
      %v228 = vmax.f32 %v219, 0.0
      %v229 = vmax.f32 %v220, 0.0
      %v230 = vmax.f32 %v221, 0.0
      %v231 = vmax.f32 %v222, 0.0
      %v232 = vmax.f32 %v223, 0.0
      %v233 = vmax.f32 %v224, 0.0
      %v234 = vmax.f32 %v225, 0.0
      %v235 = vmax.f32 %v226, 0.0
      %v236 = vmax.f32 %v227, 0.0
      %v237 = vld [vmem:[#allocation2] sm:$0xff]
      %v238 = vld [vmem:[#allocation2 + $0x8] sm:$0xff]
      %v239 = vld [vmem:[#allocation2 + $0x10] sm:$0xff]
      %v240 = vld [vmem:[#allocation2 + $0x18] sm:$0xff]
      %v241 = vld [vmem:[#allocation2 + $0x20] sm:$0xff]
      %v242 = vld [vmem:[#allocation2 + $0x28] sm:$0xff]
      %v243 = vld [vmem:[#allocation2 + $0x30] sm:$0xff]
      %v244 = vld [vmem:[#allocation2 + $0x38] sm:$0xff]
      %v245 = vld [vmem:[#allocation2 + $0x40] sm:$0xff]
      %v246 = vpack.c.bf16 %v229, %v228
      %v247 = vpack.c.bf16 %v231, %v230
      %v248 = vpack.c.bf16 %v233, %v232
      %v249 = vpack.c.bf16 %v235, %v234
      %v250 = vpack.c.bf16 %v236, %v236
      %v251 = vld [vmem:[%s1] sm:$0xf]
      %v252 = vld [vmem:[%s1 + $0x4] sm:$0xf]
      %v253 = vld [vmem:[%s1 + $0x8] sm:$0xf]
      %v254 = vld [vmem:[%s1 + $0xc] sm:$0xf]
      %v259 = vunpack.c.l.b16 %v251
      %v260 = vunpack.c.l.b16 %v252
      %v261 = vunpack.c.l.b16 %v253
      %v262 = vunpack.c.l.b16 %v254
      %v263 = vpack.c.b16 %v260, %v259
      %v264 = vpack.c.b16 %v262, %v261
      %vm267 = vcmask 261120
      %v269 = vsel %vm267, %v246, 0
      %v272 = vsel %vm267, %v247, 0
      %v275 = vsel %vm267, %v248, 0
      %v278 = vsel %vm267, %v249, 0
      %v281 = vsel %vm267, %v250, 0
      %283 = vmatprep.subr.bf16.mxu0 0
      %284 = vmatpush1.bf16.msra.mxu0 0
      %285 = vmatprep.subr.bf16.mxu0 0
      %286 = vmatpush1.bf16.msra.mxu0 0
      %287 = vmatprep.subr.bf16.mxu0 0
      %288 = vmatpush1.bf16.msra.mxu0 0
      %289 = vmatprep.subr.bf16.mxu0 0
      %290 = vmatpush1.bf16.msra.mxu0 0
      %291 = vmatprep.subr.bf16.mxu0 0
      %292 = vmatpush1.bf16.msra.mxu0 0
      %293 = vmatprep.subr.bf16.mxu0 0
      %294 = vmatpush1.bf16.msra.mxu0 0
      %295 = vmatprep.subr.bf16.mxu0 0
      %296 = vmatpush1.bf16.msra.mxu0 %v264
      %297 = vmatprep.subr.bf16.mxu0 0
      %298 = vmatpush1.bf16.msra.mxu0 %v263
      %299 = vmatprep.subr.bf16.mxu0 0
      %300 = vmatpush2.bf16.msra.mxu0 0
      %301 = vmatprep.subr.bf16.mxu0 0
      %302 = vmatpush2.bf16.msra.mxu0 0
      %303 = vmatprep.subr.bf16.mxu0 0
      %304 = vmatpush2.bf16.msra.mxu0 0
      %305 = vmatprep.subr.bf16.mxu0 0
      %306 = vmatpush2.bf16.msra.mxu0 0
      %307 = vmatprep.subr.bf16.mxu0 0
      %308 = vmatpush2.bf16.msra.mxu0 0
      %309 = vmatprep.subr.bf16.mxu0 0
      %310 = vmatpush2.bf16.msra.mxu0 0
      %311 = vmatprep.subr.bf16.mxu0 0
      %312 = vmatpush2.bf16.msra.mxu0 0
      %313 = vmatprep.subr.bf16.mxu0 0
      %314 = vmatpush2.bf16.msra.mxu0 0
      %315 = vmatprep.mubr.bf16.mxu0 0
      %316 = vmatmul.mubr.bf16.gmra.mxu0 %v269
      %v317 = vpop.f32.mrf.mxu0
      %v318 = vadd.f32 0.0, %v317
      %v319 = vpop.f32.mrf.mxu0
      %v320 = vpop.f32.mrf.mxu0
      %v321 = vadd.f32 0.0, %v320
      %v322 = vpop.f32.mrf.mxu0
      %323 = vmatprep.mubr.bf16.mxu0 0
      %324 = vmatmul.mubr.bf16.gmra.mxu0 %v272
      %v325 = vpop.f32.mrf.mxu0
      %v326 = vadd.f32 0.0, %v325
      %v327 = vpop.f32.mrf.mxu0
      %v328 = vpop.f32.mrf.mxu0
      %v329 = vadd.f32 0.0, %v328
      %v330 = vpop.f32.mrf.mxu0
      %331 = vmatprep.mubr.bf16.mxu0 0
      %332 = vmatmul.mubr.bf16.gmra.mxu0 %v275
      %v333 = vpop.f32.mrf.mxu0
      %v334 = vadd.f32 0.0, %v333
      %v335 = vpop.f32.mrf.mxu0
      %v336 = vpop.f32.mrf.mxu0
      %v337 = vadd.f32 0.0, %v336
      %v338 = vpop.f32.mrf.mxu0
      %339 = vmatprep.mubr.bf16.mxu0 0
      %340 = vmatmul.mubr.bf16.gmra.mxu0 %v278
      %v341 = vpop.f32.mrf.mxu0
      %v342 = vadd.f32 0.0, %v341
      %v343 = vpop.f32.mrf.mxu0
      %v344 = vpop.f32.mrf.mxu0
      %v345 = vadd.f32 0.0, %v344
      %v346 = vpop.f32.mrf.mxu0
      %347 = vmatprep.mubr.bf16.mxu0 0
      %348 = vmatmul.mubr.bf16.gmra.mxu0 %v281
      %v349 = vpop.f32.mrf.mxu0
      %v350 = vadd.f32 0.0, %v349
      %v351 = vpop.f32.mrf.mxu0
      %v352 = vpop.f32.mrf.mxu0
      %v353 = vpop.f32.mrf.mxu0
      %354 = vdwg.mxu0
      %v355 = vadd.f32 %v237, %v318
      %v356 = vadd.f32 %v238, %v321
      %v357 = vadd.f32 %v239, %v326
      %v358 = vadd.f32 %v240, %v329
      %v359 = vadd.f32 %v241, %v334
      %v360 = vadd.f32 %v242, %v337
      %v361 = vadd.f32 %v243, %v342
      %v362 = vadd.f32 %v244, %v345
      %v363 = vadd.f32 %v245, %v350
      %364 = vst.msk [vmem:[#allocation2] sm:$0xff] %vm209, %v355
      %365 = vst.msk [vmem:[#allocation2 + $0x8] sm:$0xff] %vm209, %v356
      %366 = vst.msk [vmem:[#allocation2 + $0x10] sm:$0xff] %vm209, %v357
      %367 = vst.msk [vmem:[#allocation2 + $0x18] sm:$0xff] %vm209, %v358
      %368 = vst.msk [vmem:[#allocation2 + $0x20] sm:$0xff] %vm209, %v359
      %369 = vst.msk [vmem:[#allocation2 + $0x28] sm:$0xff] %vm209, %v360
      %370 = vst.msk [vmem:[#allocation2 + $0x30] sm:$0xff] %vm209, %v361
      %371 = vst.msk [vmem:[#allocation2 + $0x38] sm:$0xff] %vm209, %v362
      %372 = vst.msk [vmem:[#allocation2 + $0x40] sm:$0xff] %vm209, %v363
      %v373 = vld [vmem:[%s197 + $0x1] sm:$0xff]
      %v374 = vld [vmem:[%s197 + $0x9] sm:$0xff]
      %v375 = vld [vmem:[%s197 + $0x11] sm:$0xff]
      %v376 = vld [vmem:[%s197 + $0x19] sm:$0xff]
      %v377 = vld [vmem:[%s197 + $0x21] sm:$0xff]
      %v378 = vld [vmem:[%s197 + $0x29] sm:$0xff]
      %v379 = vld [vmem:[%s197 + $0x31] sm:$0xff]
      %v380 = vld [vmem:[%s197 + $0x39] sm:$0xff]
      %v381 = vld [vmem:[%s197 + $0x41] sm:$0xff]
      %v382 = vmax.f32 %v373, 0.0
      %v383 = vmax.f32 %v374, 0.0
      %v384 = vmax.f32 %v375, 0.0
      %v385 = vmax.f32 %v376, 0.0
      %v386 = vmax.f32 %v377, 0.0
      %v387 = vmax.f32 %v378, 0.0
      %v388 = vmax.f32 %v379, 0.0
      %v389 = vmax.f32 %v380, 0.0
      %v390 = vmax.f32 %v381, 0.0
      %v391 = vld [vmem:[#allocation2] sm:$0xff]
      %v392 = vld [vmem:[#allocation2 + $0x8] sm:$0xff]
      %v393 = vld [vmem:[#allocation2 + $0x10] sm:$0xff]
      %v394 = vld [vmem:[#allocation2 + $0x18] sm:$0xff]
      %v395 = vld [vmem:[#allocation2 + $0x20] sm:$0xff]
      %v396 = vld [vmem:[#allocation2 + $0x28] sm:$0xff]
      %v397 = vld [vmem:[#allocation2 + $0x30] sm:$0xff]
      %v398 = vld [vmem:[#allocation2 + $0x38] sm:$0xff]
      %v399 = vld [vmem:[#allocation2 + $0x40] sm:$0xff]
      %v400 = vpack.c.bf16 %v383, %v382
      %v401 = vpack.c.bf16 %v385, %v384
      %v402 = vpack.c.bf16 %v387, %v386
      %v403 = vpack.c.bf16 %v389, %v388
      %v404 = vpack.c.bf16 %v390, %v390
      %s405 = scalar_lea.vmem %s1, 16
      %v406 = vld [vmem:[%s405] sm:$0xf]
      %v407 = vld [vmem:[%s405 + $0x4] sm:$0xf]
      %v408 = vld [vmem:[%s405 + $0x8] sm:$0xf]
      %v409 = vld [vmem:[%s405 + $0xc] sm:$0xf]
      %v414 = vunpack.c.l.b16 %v406
      %v415 = vunpack.c.l.b16 %v407
      %v416 = vunpack.c.l.b16 %v408
      %v417 = vunpack.c.l.b16 %v409
      %v418 = vpack.c.b16 %v415, %v414
      %v419 = vpack.c.b16 %v417, %v416
      %v423 = vsel %vm267, %v400, 0
      %v426 = vsel %vm267, %v401, 0
      %v429 = vsel %vm267, %v402, 0
      %v432 = vsel %vm267, %v403, 0
      %v435 = vsel %vm267, %v404, 0
      %437 = vmatprep.subr.bf16.mxu0 0
      %438 = vmatpush1.bf16.msra.mxu0 0
      %439 = vmatprep.subr.bf16.mxu0 0
      %440 = vmatpush1.bf16.msra.mxu0 0
      %441 = vmatprep.subr.bf16.mxu0 0
      %442 = vmatpush1.bf16.msra.mxu0 0
      %443 = vmatprep.subr.bf16.mxu0 0
      %444 = vmatpush1.bf16.msra.mxu0 0
      %445 = vmatprep.subr.bf16.mxu0 0
      %446 = vmatpush1.bf16.msra.mxu0 0
      %447 = vmatprep.subr.bf16.mxu0 0
      %448 = vmatpush1.bf16.msra.mxu0 0
      %449 = vmatprep.subr.bf16.mxu0 0
      %450 = vmatpush1.bf16.msra.mxu0 %v419
      %451 = vmatprep.subr.bf16.mxu0 0
      %452 = vmatpush1.bf16.msra.mxu0 %v418
      %453 = vmatprep.subr.bf16.mxu0 0
      %454 = vmatpush2.bf16.msra.mxu0 0
      %455 = vmatprep.subr.bf16.mxu0 0
      %456 = vmatpush2.bf16.msra.mxu0 0
      %457 = vmatprep.subr.bf16.mxu0 0
      %458 = vmatpush2.bf16.msra.mxu0 0
      %459 = vmatprep.subr.bf16.mxu0 0
      %460 = vmatpush2.bf16.msra.mxu0 0
      %461 = vmatprep.subr.bf16.mxu0 0
      %462 = vmatpush2.bf16.msra.mxu0 0
      %463 = vmatprep.subr.bf16.mxu0 0
      %464 = vmatpush2.bf16.msra.mxu0 0
      %465 = vmatprep.subr.bf16.mxu0 0
      %466 = vmatpush2.bf16.msra.mxu0 0
      %467 = vmatprep.subr.bf16.mxu0 0
      %468 = vmatpush2.bf16.msra.mxu0 0
      %469 = vmatprep.mubr.bf16.mxu0 0
      %470 = vmatmul.mubr.bf16.gmra.mxu0 %v423
      %v471 = vpop.f32.mrf.mxu0
      %v472 = vadd.f32 0.0, %v471
      %v473 = vpop.f32.mrf.mxu0
      %v474 = vpop.f32.mrf.mxu0
      %v475 = vadd.f32 0.0, %v474
      %v476 = vpop.f32.mrf.mxu0
      %477 = vmatprep.mubr.bf16.mxu0 0
      %478 = vmatmul.mubr.bf16.gmra.mxu0 %v426
      %v479 = vpop.f32.mrf.mxu0
      %v480 = vadd.f32 0.0, %v479
      %v481 = vpop.f32.mrf.mxu0
      %v482 = vpop.f32.mrf.mxu0
      %v483 = vadd.f32 0.0, %v482
      %v484 = vpop.f32.mrf.mxu0
      %485 = vmatprep.mubr.bf16.mxu0 0
      %486 = vmatmul.mubr.bf16.gmra.mxu0 %v429
      %v487 = vpop.f32.mrf.mxu0
      %v488 = vadd.f32 0.0, %v487
      %v489 = vpop.f32.mrf.mxu0
      %v490 = vpop.f32.mrf.mxu0
      %v491 = vadd.f32 0.0, %v490
      %v492 = vpop.f32.mrf.mxu0
      %493 = vmatprep.mubr.bf16.mxu0 0
      %494 = vmatmul.mubr.bf16.gmra.mxu0 %v432
      %v495 = vpop.f32.mrf.mxu0
      %v496 = vadd.f32 0.0, %v495
      %v497 = vpop.f32.mrf.mxu0
      %v498 = vpop.f32.mrf.mxu0
      %v499 = vadd.f32 0.0, %v498
      %v500 = vpop.f32.mrf.mxu0
      %501 = vmatprep.mubr.bf16.mxu0 0
      %502 = vmatmul.mubr.bf16.gmra.mxu0 %v435
      %v503 = vpop.f32.mrf.mxu0
      %v504 = vadd.f32 0.0, %v503
      %v505 = vpop.f32.mrf.mxu0
      %v506 = vpop.f32.mrf.mxu0
      %v507 = vpop.f32.mrf.mxu0
      %508 = vdwg.mxu0
      %v509 = vadd.f32 %v391, %v472
      %v510 = vadd.f32 %v392, %v475
      %v511 = vadd.f32 %v393, %v480
      %v512 = vadd.f32 %v394, %v483
      %v513 = vadd.f32 %v395, %v488
      %v514 = vadd.f32 %v396, %v491
      %v515 = vadd.f32 %v397, %v496
      %v516 = vadd.f32 %v398, %v499
      %v517 = vadd.f32 %v399, %v504
      %518 = vst.msk [vmem:[#allocation2] sm:$0xff] %vm209, %v509
      %519 = vst.msk [vmem:[#allocation2 + $0x8] sm:$0xff] %vm209, %v510
      %520 = vst.msk [vmem:[#allocation2 + $0x10] sm:$0xff] %vm209, %v511
      %521 = vst.msk [vmem:[#allocation2 + $0x18] sm:$0xff] %vm209, %v512
      %522 = vst.msk [vmem:[#allocation2 + $0x20] sm:$0xff] %vm209, %v513
      %523 = vst.msk [vmem:[#allocation2 + $0x28] sm:$0xff] %vm209, %v514
      %524 = vst.msk [vmem:[#allocation2 + $0x30] sm:$0xff] %vm209, %v515
      %525 = vst.msk [vmem:[#allocation2 + $0x38] sm:$0xff] %vm209, %v516
      %526 = vst.msk [vmem:[#allocation2 + $0x40] sm:$0xff] %vm209, %v517
      %v527 = vld [vmem:[%s197 + $0x9] sm:$0xff]
      %v528 = vld [vmem:[%s197 + $0x11] sm:$0xff]
      %v529 = vld [vmem:[%s197 + $0x19] sm:$0xff]
      %v530 = vld [vmem:[%s197 + $0x21] sm:$0xff]
      %v531 = vld [vmem:[%s197 + $0x29] sm:$0xff]
      %v532 = vld [vmem:[%s197 + $0x31] sm:$0xff]
      %v533 = vld [vmem:[%s197 + $0x39] sm:$0xff]
      %v534 = vld [vmem:[%s197 + $0x41] sm:$0xff]
      %v535 = vld [vmem:[%s197 + $0x49] sm:$0xff]
      %v536 = vmax.f32 %v527, 0.0
      %v537 = vmax.f32 %v528, 0.0
      %v538 = vmax.f32 %v529, 0.0
      %v539 = vmax.f32 %v530, 0.0
      %v540 = vmax.f32 %v531, 0.0
      %v541 = vmax.f32 %v532, 0.0
      %v542 = vmax.f32 %v533, 0.0
      %v543 = vmax.f32 %v534, 0.0
      %v544 = vmax.f32 %v535, 0.0
      %v545 = vld [vmem:[#allocation2] sm:$0xff]
      %v546 = vld [vmem:[#allocation2 + $0x8] sm:$0xff]
      %v547 = vld [vmem:[#allocation2 + $0x10] sm:$0xff]
      %v548 = vld [vmem:[#allocation2 + $0x18] sm:$0xff]
      %v549 = vld [vmem:[#allocation2 + $0x20] sm:$0xff]
      %v550 = vld [vmem:[#allocation2 + $0x28] sm:$0xff]
      %v551 = vld [vmem:[#allocation2 + $0x30] sm:$0xff]
      %v552 = vld [vmem:[#allocation2 + $0x38] sm:$0xff]
      %v553 = vld [vmem:[#allocation2 + $0x40] sm:$0xff]
      %v554 = vpack.c.bf16 %v537, %v536
      %v555 = vpack.c.bf16 %v539, %v538
      %v556 = vpack.c.bf16 %v541, %v540
      %v557 = vpack.c.bf16 %v543, %v542
      %v558 = vpack.c.bf16 %v544, %v544
      %s559 = scalar_lea.vmem %s1, 32
      %v560 = vld [vmem:[%s559] sm:$0xf]
      %v561 = vld [vmem:[%s559 + $0x4] sm:$0xf]
      %v562 = vld [vmem:[%s559 + $0x8] sm:$0xf]
      %v563 = vld [vmem:[%s559 + $0xc] sm:$0xf]
      %v568 = vunpack.c.l.b16 %v560
      %v569 = vunpack.c.l.b16 %v561
      %v570 = vunpack.c.l.b16 %v562
      %v571 = vunpack.c.l.b16 %v563
      %v572 = vpack.c.b16 %v569, %v568
      %v573 = vpack.c.b16 %v571, %v570
      %v577 = vsel %vm267, %v554, 0
      %v580 = vsel %vm267, %v555, 0
      %v583 = vsel %vm267, %v556, 0
      %v586 = vsel %vm267, %v557, 0
      %v589 = vsel %vm267, %v558, 0
      %591 = vmatprep.subr.bf16.mxu0 0
      %592 = vmatpush1.bf16.msra.mxu0 0
      %593 = vmatprep.subr.bf16.mxu0 0
      %594 = vmatpush1.bf16.msra.mxu0 0
      %595 = vmatprep.subr.bf16.mxu0 0
      %596 = vmatpush1.bf16.msra.mxu0 0
      %597 = vmatprep.subr.bf16.mxu0 0
      %598 = vmatpush1.bf16.msra.mxu0 0
      %599 = vmatprep.subr.bf16.mxu0 0
      %600 = vmatpush1.bf16.msra.mxu0 0
      %601 = vmatprep.subr.bf16.mxu0 0
      %602 = vmatpush1.bf16.msra.mxu0 0
      %603 = vmatprep.subr.bf16.mxu0 0
      %604 = vmatpush1.bf16.msra.mxu0 %v573
      %605 = vmatprep.subr.bf16.mxu0 0
      %606 = vmatpush1.bf16.msra.mxu0 %v572
      %607 = vmatprep.subr.bf16.mxu0 0
      %608 = vmatpush2.bf16.msra.mxu0 0
      %609 = vmatprep.subr.bf16.mxu0 0
      %610 = vmatpush2.bf16.msra.mxu0 0
      %611 = vmatprep.subr.bf16.mxu0 0
      %612 = vmatpush2.bf16.msra.mxu0 0
      %613 = vmatprep.subr.bf16.mxu0 0
      %614 = vmatpush2.bf16.msra.mxu0 0
      %615 = vmatprep.subr.bf16.mxu0 0
      %616 = vmatpush2.bf16.msra.mxu0 0
      %617 = vmatprep.subr.bf16.mxu0 0
      %618 = vmatpush2.bf16.msra.mxu0 0
      %619 = vmatprep.subr.bf16.mxu0 0
      %620 = vmatpush2.bf16.msra.mxu0 0
      %621 = vmatprep.subr.bf16.mxu0 0
      %622 = vmatpush2.bf16.msra.mxu0 0
      %623 = vmatprep.mubr.bf16.mxu0 0
      %624 = vmatmul.mubr.bf16.gmra.mxu0 %v577
      %v625 = vpop.f32.mrf.mxu0
      %v626 = vadd.f32 0.0, %v625
      %v627 = vpop.f32.mrf.mxu0
      %v628 = vpop.f32.mrf.mxu0
      %v629 = vadd.f32 0.0, %v628
      %v630 = vpop.f32.mrf.mxu0
      %631 = vmatprep.mubr.bf16.mxu0 0
      %632 = vmatmul.mubr.bf16.gmra.mxu0 %v580
      %v633 = vpop.f32.mrf.mxu0
      %v634 = vadd.f32 0.0, %v633
      %v635 = vpop.f32.mrf.mxu0
      %v636 = vpop.f32.mrf.mxu0
      %v637 = vadd.f32 0.0, %v636
      %v638 = vpop.f32.mrf.mxu0
      %639 = vmatprep.mubr.bf16.mxu0 0
      %640 = vmatmul.mubr.bf16.gmra.mxu0 %v583
      %v641 = vpop.f32.mrf.mxu0
      %v642 = vadd.f32 0.0, %v641
      %v643 = vpop.f32.mrf.mxu0
      %v644 = vpop.f32.mrf.mxu0
      %v645 = vadd.f32 0.0, %v644
      %v646 = vpop.f32.mrf.mxu0
      %647 = vmatprep.mubr.bf16.mxu0 0
      %648 = vmatmul.mubr.bf16.gmra.mxu0 %v586
      %v649 = vpop.f32.mrf.mxu0
      %v650 = vadd.f32 0.0, %v649
      %v651 = vpop.f32.mrf.mxu0
      %v652 = vpop.f32.mrf.mxu0
      %v653 = vadd.f32 0.0, %v652
      %v654 = vpop.f32.mrf.mxu0
      %655 = vmatprep.mubr.bf16.mxu0 0
      %656 = vmatmul.mubr.bf16.gmra.mxu0 %v589
      %v657 = vpop.f32.mrf.mxu0
      %v658 = vadd.f32 0.0, %v657
      %v659 = vpop.f32.mrf.mxu0
      %v660 = vpop.f32.mrf.mxu0
      %v661 = vpop.f32.mrf.mxu0
      %662 = vdwg.mxu0
      %v663 = vadd.f32 %v545, %v626
      %v664 = vadd.f32 %v546, %v629
      %v665 = vadd.f32 %v547, %v634
      %v666 = vadd.f32 %v548, %v637
      %v667 = vadd.f32 %v549, %v642
      %v668 = vadd.f32 %v550, %v645
      %v669 = vadd.f32 %v551, %v650
      %v670 = vadd.f32 %v552, %v653
      %v671 = vadd.f32 %v553, %v658
      %672 = vst.msk [vmem:[#allocation2] sm:$0xff] %vm209, %v663
      %673 = vst.msk [vmem:[#allocation2 + $0x8] sm:$0xff] %vm209, %v664
      %674 = vst.msk [vmem:[#allocation2 + $0x10] sm:$0xff] %vm209, %v665
      %675 = vst.msk [vmem:[#allocation2 + $0x18] sm:$0xff] %vm209, %v666
      %676 = vst.msk [vmem:[#allocation2 + $0x20] sm:$0xff] %vm209, %v667
      %677 = vst.msk [vmem:[#allocation2 + $0x28] sm:$0xff] %vm209, %v668
      %678 = vst.msk [vmem:[#allocation2 + $0x30] sm:$0xff] %vm209, %v669
      %679 = vst.msk [vmem:[#allocation2 + $0x38] sm:$0xff] %vm209, %v670
      %680 = vst.msk [vmem:[#allocation2 + $0x40] sm:$0xff] %vm209, %v671
      %v681 = vld [vmem:[%s197 + $0xa] sm:$0xff]
      %v682 = vld [vmem:[%s197 + $0x12] sm:$0xff]
      %v683 = vld [vmem:[%s197 + $0x1a] sm:$0xff]
      %v684 = vld [vmem:[%s197 + $0x22] sm:$0xff]
      %v685 = vld [vmem:[%s197 + $0x2a] sm:$0xff]
      %v686 = vld [vmem:[%s197 + $0x32] sm:$0xff]
      %v687 = vld [vmem:[%s197 + $0x3a] sm:$0xff]
      %v688 = vld [vmem:[%s197 + $0x42] sm:$0xff]
      %v689 = vld [vmem:[%s197 + $0x4a] sm:$0xff]
      %v690 = vmax.f32 %v681, 0.0
      %v691 = vmax.f32 %v682, 0.0
      %v692 = vmax.f32 %v683, 0.0
      %v693 = vmax.f32 %v684, 0.0
      %v694 = vmax.f32 %v685, 0.0
      %v695 = vmax.f32 %v686, 0.0
      %v696 = vmax.f32 %v687, 0.0
      %v697 = vmax.f32 %v688, 0.0
      %v698 = vmax.f32 %v689, 0.0
      %v699 = vld [vmem:[#allocation2] sm:$0xff]
      %v700 = vld [vmem:[#allocation2 + $0x8] sm:$0xff]
      %v701 = vld [vmem:[#allocation2 + $0x10] sm:$0xff]
      %v702 = vld [vmem:[#allocation2 + $0x18] sm:$0xff]
      %v703 = vld [vmem:[#allocation2 + $0x20] sm:$0xff]
      %v704 = vld [vmem:[#allocation2 + $0x28] sm:$0xff]
      %v705 = vld [vmem:[#allocation2 + $0x30] sm:$0xff]
      %v706 = vld [vmem:[#allocation2 + $0x38] sm:$0xff]
      %v707 = vld [vmem:[#allocation2 + $0x40] sm:$0xff]
      %v708 = vpack.c.bf16 %v691, %v690
      %v709 = vpack.c.bf16 %v693, %v692
      %v710 = vpack.c.bf16 %v695, %v694
      %v711 = vpack.c.bf16 %v697, %v696
      %v712 = vpack.c.bf16 %v698, %v698
      %s713 = scalar_lea.vmem %s1, 48
      %v714 = vld [vmem:[%s713] sm:$0xf]
      %v715 = vld [vmem:[%s713 + $0x4] sm:$0xf]
      %v716 = vld [vmem:[%s713 + $0x8] sm:$0xf]
      %v717 = vld [vmem:[%s713 + $0xc] sm:$0xf]
      %v722 = vunpack.c.l.b16 %v714
      %v723 = vunpack.c.l.b16 %v715
      %v724 = vunpack.c.l.b16 %v716
      %v725 = vunpack.c.l.b16 %v717
      %v726 = vpack.c.b16 %v723, %v722
      %v727 = vpack.c.b16 %v725, %v724
      %v731 = vsel %vm267, %v708, 0
      %v734 = vsel %vm267, %v709, 0
      %v737 = vsel %vm267, %v710, 0
      %v740 = vsel %vm267, %v711, 0
      %v743 = vsel %vm267, %v712, 0
      %745 = vmatprep.subr.bf16.mxu0 0
      %746 = vmatpush1.bf16.msra.mxu0 0
      %747 = vmatprep.subr.bf16.mxu0 0
      %748 = vmatpush1.bf16.msra.mxu0 0
      %749 = vmatprep.subr.bf16.mxu0 0
      %750 = vmatpush1.bf16.msra.mxu0 0
      %751 = vmatprep.subr.bf16.mxu0 0
      %752 = vmatpush1.bf16.msra.mxu0 0
      %753 = vmatprep.subr.bf16.mxu0 0
      %754 = vmatpush1.bf16.msra.mxu0 0
      %755 = vmatprep.subr.bf16.mxu0 0
      %756 = vmatpush1.bf16.msra.mxu0 0
      %757 = vmatprep.subr.bf16.mxu0 0
      %758 = vmatpush1.bf16.msra.mxu0 %v727
      %759 = vmatprep.subr.bf16.mxu0 0
      %760 = vmatpush1.bf16.msra.mxu0 %v726
      %761 = vmatprep.subr.bf16.mxu0 0
      %762 = vmatpush2.bf16.msra.mxu0 0
      %763 = vmatprep.subr.bf16.mxu0 0
      %764 = vmatpush2.bf16.msra.mxu0 0
      %765 = vmatprep.subr.bf16.mxu0 0
      %766 = vmatpush2.bf16.msra.mxu0 0
      %767 = vmatprep.subr.bf16.mxu0 0
      %768 = vmatpush2.bf16.msra.mxu0 0
      %769 = vmatprep.subr.bf16.mxu0 0
      %770 = vmatpush2.bf16.msra.mxu0 0
      %771 = vmatprep.subr.bf16.mxu0 0
      %772 = vmatpush2.bf16.msra.mxu0 0
      %773 = vmatprep.subr.bf16.mxu0 0
      %774 = vmatpush2.bf16.msra.mxu0 0
      %775 = vmatprep.subr.bf16.mxu0 0
      %776 = vmatpush2.bf16.msra.mxu0 0
      %777 = vmatprep.mubr.bf16.mxu0 0
      %778 = vmatmul.mubr.bf16.gmra.mxu0 %v731
      %v779 = vpop.f32.mrf.mxu0
      %v780 = vadd.f32 0.0, %v779
      %v781 = vpop.f32.mrf.mxu0
      %v782 = vpop.f32.mrf.mxu0
      %v783 = vadd.f32 0.0, %v782
      %v784 = vpop.f32.mrf.mxu0
      %785 = vmatprep.mubr.bf16.mxu0 0
      %786 = vmatmul.mubr.bf16.gmra.mxu0 %v734
      %v787 = vpop.f32.mrf.mxu0
      %v788 = vadd.f32 0.0, %v787
      %v789 = vpop.f32.mrf.mxu0
      %v790 = vpop.f32.mrf.mxu0
      %v791 = vadd.f32 0.0, %v790
      %v792 = vpop.f32.mrf.mxu0
      %793 = vmatprep.mubr.bf16.mxu0 0
      %794 = vmatmul.mubr.bf16.gmra.mxu0 %v737
      %v795 = vpop.f32.mrf.mxu0
      %v796 = vadd.f32 0.0, %v795
      %v797 = vpop.f32.mrf.mxu0
      %v798 = vpop.f32.mrf.mxu0
      %v799 = vadd.f32 0.0, %v798
      %v800 = vpop.f32.mrf.mxu0
      %801 = vmatprep.mubr.bf16.mxu0 0
      %802 = vmatmul.mubr.bf16.gmra.mxu0 %v740
      %v803 = vpop.f32.mrf.mxu0
      %v804 = vadd.f32 0.0, %v803
      %v805 = vpop.f32.mrf.mxu0
      %v806 = vpop.f32.mrf.mxu0
      %v807 = vadd.f32 0.0, %v806
      %v808 = vpop.f32.mrf.mxu0
      %809 = vmatprep.mubr.bf16.mxu0 0
      %810 = vmatmul.mubr.bf16.gmra.mxu0 %v743
      %v811 = vpop.f32.mrf.mxu0
      %v812 = vadd.f32 0.0, %v811
      %v813 = vpop.f32.mrf.mxu0
      %v814 = vpop.f32.mrf.mxu0
      %v815 = vpop.f32.mrf.mxu0
      %816 = vdwg.mxu0
      %v817 = vadd.f32 %v699, %v780
      %v818 = vadd.f32 %v700, %v783
      %v819 = vadd.f32 %v701, %v788
      %v820 = vadd.f32 %v702, %v791
      %v821 = vadd.f32 %v703, %v796
      %v822 = vadd.f32 %v704, %v799
      %v823 = vadd.f32 %v705, %v804
      %v824 = vadd.f32 %v706, %v807
      %v825 = vadd.f32 %v707, %v812
      %826 = vst.msk [vmem:[#allocation2] sm:$0xff] %vm209, %v817
      %827 = vst.msk [vmem:[#allocation2 + $0x8] sm:$0xff] %vm209, %v818
      %828 = vst.msk [vmem:[#allocation2 + $0x10] sm:$0xff] %vm209, %v819
      %829 = vst.msk [vmem:[#allocation2 + $0x18] sm:$0xff] %vm209, %v820
      %830 = vst.msk [vmem:[#allocation2 + $0x20] sm:$0xff] %vm209, %v821
      %831 = vst.msk [vmem:[#allocation2 + $0x28] sm:$0xff] %vm209, %v822
      %832 = vst.msk [vmem:[#allocation2 + $0x30] sm:$0xff] %vm209, %v823
      %833 = vst.msk [vmem:[#allocation2 + $0x38] sm:$0xff] %vm209, %v824
      %834 = vst.msk [vmem:[#allocation2 + $0x40] sm:$0xff] %vm209, %v825
      %v835 = vld [vmem:[#allocation2] sm:$0xff]
      %v836 = vld [vmem:[#allocation2 + $0x8] sm:$0xff]
      %v837 = vld [vmem:[#allocation2 + $0x10] sm:$0xff]
      %v838 = vld [vmem:[#allocation2 + $0x18] sm:$0xff]
      %v839 = vld [vmem:[#allocation2 + $0x20] sm:$0xff]
      %v840 = vld [vmem:[#allocation2 + $0x28] sm:$0xff]
      %v841 = vld [vmem:[#allocation2 + $0x30] sm:$0xff]
      %v842 = vld [vmem:[#allocation2 + $0x38] sm:$0xff]
      %v843 = vld [vmem:[#allocation2 + $0x40] sm:$0xff]
      %v844 = vld [vmem:[%s2] sm:$0x1]
      %v846 = vlaneseq
      %v847 = vshrl.u32 %v846, 7
      %v848 = vsub.s32 0, %v847
      %v849 = vrot.slane %v844, %v848
      %v851 = vadd.f32 %v835, %v849
      %v852 = vadd.f32 %v836, %v849
      %v853 = vadd.f32 %v837, %v849
      %v854 = vadd.f32 %v838, %v849
      %v855 = vadd.f32 %v839, %v849
      %v856 = vadd.f32 %v840, %v849
      %v857 = vadd.f32 %v841, %v849
      %v858 = vadd.f32 %v842, %v849
      %v859 = vadd.f32 %v843, %v849
      %860 = vst.msk [vmem:[%s206] sm:$0xff] %vm209, %v851
      %861 = vst.msk [vmem:[%s206 + $0x8] sm:$0xff] %vm209, %v852
      %862 = vst.msk [vmem:[%s206 + $0x10] sm:$0xff] %vm209, %v853
      %863 = vst.msk [vmem:[%s206 + $0x18] sm:$0xff] %vm209, %v854
      %864 = vst.msk [vmem:[%s206 + $0x20] sm:$0xff] %vm209, %v855
      %865 = vst.msk [vmem:[%s206 + $0x28] sm:$0xff] %vm209, %v856
      %866 = vst.msk [vmem:[%s206 + $0x30] sm:$0xff] %vm209, %v857
      %867 = vst.msk [vmem:[%s206 + $0x38] sm:$0xff] %vm209, %v858
      %868 = vst.msk [vmem:[%s206 + $0x40] sm:$0xff] %vm209, %v859
      %s869 = smul.u32 9, %s19
      %p870 = scmp.lt.s32.totalorder %s18, 1
      %s871 = scalar_select %p870, %s18, 1
      %p872 = scmp.lt.s32.totalorder %s869, 8
      %s873 = scalar_select %p872, %s869, 8
      %s874 = smul.addr %s871, 9
      %s875 = sadd.s32 %s873, %s874
      %s876 = smul.addr %s875, 8
      %s877 = scalar_lea.vmem %s3, %s876
      // Predicated region
      $region33: #{_lambda_.18} parent=31 // pred_check
        %p878 = pneg %p116
      $region34: #{_lambda_.18} parent=31 // pred_check_branch
        %880 = sbr.rel (%p878) target = $region36
      $region35: #{_lambda_.18} parent=31 // pred_region
        %s881 = smul.u32 9, %s19
      $region36: #{_lambda_.18} parent=31 // pred_fallthru
        _
    $region32: #{_lambda_.18} parent=5 // pred_fallthru
      _
    %p882 = scmp.le.s32.totalorder 2, %s9
    // Predicated region
    $region37: #{_lambda_.18} parent=5 // pred_check
      %p883 = pneg %p882
    $region38: #{_lambda_.18} parent=5 // pred_check_branch
      %885 = sbr.rel (%p883) target = $region40
    $region39: #{_lambda_.18} parent=5 // pred_region
      %s886 = ssub.s32 %s9, 2
      // Predicated region
      $region41: #{_lambda_.18} parent=39 // pred_check
        %p887 = pneg %p122
      $region42: #{_lambda_.18} parent=39 // pred_check_branch
        %889 = sbr.rel (%p887) target = $region44
      $region43: #{_lambda_.18} parent=39 // pred_region
        %s890 = smul.u32 9, %s21
        %p891 = scmp.lt.s32.totalorder %s20, 1
        %s892 = scalar_select %p891, %s20, 1
        %p893 = scmp.lt.s32.totalorder %s890, 8
        %s894 = scalar_select %p893, %s890, 8
        %s895 = smul.addr %s892, 9
        %s896 = sadd.s32 %s894, %s895
        %s897 = smul.addr %s896, 8
        %s898 = scalar_lea.vmem %s3, %s897
      $region44: #{_lambda_.18} parent=39 // pred_fallthru
        _
    $region40: #{_lambda_.18} parent=5 // pred_fallthru
      _
  $region6: #{_lambda_.18} parent=0 // loop_footer
    %s13 = sadd.s32 1, %s9
  $region7: #{_lambda_.18} parent=0 // loop_footer_branch
    %8 = sbr.rel target = $region3
  $region8: #{_lambda_.18} parent=0 // loop_exit
    _

// kernel: _lambda_.25
$region0: #{_lambda_.25}
  #allocation0 [shape = 'u32[]', space=smem, size = 0x4, offset = 0x4, fixed_abs, tag = 'smem constant byte address 0x4 - core index']
  #allocation1 [shape = 'u32[144,128]{1,0:T(1,128)}', space=vmem, size = 0x12000, scoped, tag = 'internal scratch']
  #allocation2 [shape = 'f32[272,3]{1,0:T(8,128)}', space=vmem, size = 0x22000, scoped, tag = 'scratch operand']
  %s0 = inlined_call_operand.vmem [shape: f32[2,1,290,16], index: 0, kind: input, shape index: {}]
  %s1 = inlined_call_operand.vmem [shape: bf16[4,16,3], index: 1, kind: input, shape index: {}]
  %s2 = inlined_call_operand.vmem [shape: f32[1,3], index: 2, kind: input, shape index: {}]
  %s3 = inlined_call_operand.vmem [shape: f32[2,272,3], index: 3, kind: output, shape index: {}]
  %s4 = sld [smem:[#allocation0]]
  $region45: #{_lambda_.25} parent=0
    _
  %s6 = ssub.s32 1, %s4
  %s7 = scalar_select 0, %s6, %s4
  loop: start=0, step=1, limit=4
  $region2: #{_lambda_.25} parent=0 // loop_pre_header
    _
  $region3: #{_lambda_.25} parent=0 // loop_header
    %s9 = sphi 0, %s13
    %p10 = scmp.ge.s32.totalorder %s9, 4
    %s16 = sphi 0, %s28
    %s17 = sphi 0, %s24
    %s18 = sphi 0, %s16
    %s19 = sphi 0, %s17
    %s20 = sphi 0, %s18
    %s21 = sphi 0, %s19
    %s33 = sphi 0, %s35
    %s36 = sphi 0, %s33
    %s37 = sphi 0, %s36
    %s53 = sphi 0, %s37
    %s57 = sphi 0, %s57
    %s59 = sphi 0, %s57
    %s60 = sphi 0, %s59
    %s74 = sphi 0, %s60
    %s78 = sphi 0, %s78
    %s80 = sphi 0, %s78
    %s81 = sphi 0, %s80
    %s95 = sphi 0, %s81
    %s103 = sphi 0, %s105
    %s106 = sphi 0, %s103
    %s107 = sphi 0, %s106
    %s123 = sphi 0, %s107
  $region4: #{_lambda_.25} parent=0 // loop_header_branch
    %12 = sbr.rel (%p10) target = $region8
  $region5: #{_lambda_.25} parent=0 // loop_body
    %s14 = ssub.s32 %s9, 1
    %s15 = ssub.s32 %s9, 2
    %s22 = sadd.s32 1, %s17
    %p23 = scmp.ge.s32.totalorder %s22, 1
    %s24 = scalar_select %p23, 0, %s22
    %s25 = sadd.s32 1, %s16
    %s26 = scalar_select %p23, %s25, %s16
    %p27 = scmp.ge.s32.totalorder %s26, 2
    %s28 = scalar_select %p27, 0, %s26
    %s29 = ssub.s32 %s16, %s28
    %s30 = ssub.s32 %s17, %s24
    %s31 = sor.u32 %s29, %s30
    %p32 = scmp.eq.s32.totalorder %s31, 0
    %s34 = sadd.s32 %s33, 1
    %s35 = scalar_select %p32, %s33, %s34
    %p38 = pneg %p32
    %p39 = scmp.eq.s32.totalorder %s9, 1
    %p40 = por %p38, %p39
    %p41 = scmp.ne.s32.totalorder %s33, %s36
    %p42 = scmp.eq.s32.totalorder %s9, 0
    %p43 = por %p41, %p42
    %p44 = scmp.ne.s32.totalorder %s33, %s36
    %p45 = scmp.eq.s32.totalorder %s14, 1
    %p46 = por %p44, %p45
    %p47 = scmp.ne.s32.totalorder %s36, %s37
    %p48 = scmp.eq.s32.totalorder %s14, 0
    %p49 = por %p47, %p48
    %p50 = scmp.ne.s32.totalorder %s36, %s37
    %p51 = scmp.eq.s32.totalorder %s15, 1
    %p52 = por %p50, %p51
    %p54 = scmp.ne.s32.totalorder %s37, %s53
    %p55 = scmp.eq.s32.totalorder %s15, 0
    %p56 = por %p54, %p55
    %s58 = sadd.s32 %s57, 1
    %p61 = scmp.eq.s32.totalorder %s9, 1
    %p62 = scmp.ne.s32.totalorder %s57, %s59
    %p63 = scmp.eq.s32.totalorder %s9, 0
    %p64 = por %p62, %p63
    %p65 = scmp.ne.s32.totalorder %s57, %s59
    %p66 = scmp.eq.s32.totalorder %s14, 1
    %p67 = por %p65, %p66
    %p68 = scmp.ne.s32.totalorder %s59, %s60
    %p69 = scmp.eq.s32.totalorder %s14, 0
    %p70 = por %p68, %p69
    %p71 = scmp.ne.s32.totalorder %s59, %s60
    %p72 = scmp.eq.s32.totalorder %s15, 1
    %p73 = por %p71, %p72
    %p75 = scmp.ne.s32.totalorder %s60, %s74
    %p76 = scmp.eq.s32.totalorder %s15, 0
    %p77 = por %p75, %p76
    %s79 = sadd.s32 %s78, 1
    %p82 = scmp.eq.s32.totalorder %s9, 1
    %p83 = scmp.ne.s32.totalorder %s78, %s80
    %p84 = scmp.eq.s32.totalorder %s9, 0
    %p85 = por %p83, %p84
    %p86 = scmp.ne.s32.totalorder %s78, %s80
    %p87 = scmp.eq.s32.totalorder %s14, 1
    %p88 = por %p86, %p87
    %p89 = scmp.ne.s32.totalorder %s80, %s81
    %p90 = scmp.eq.s32.totalorder %s14, 0
    %p91 = por %p89, %p90
    %p92 = scmp.ne.s32.totalorder %s80, %s81
    %p93 = scmp.eq.s32.totalorder %s15, 1
    %p94 = por %p92, %p93
    %p96 = scmp.ne.s32.totalorder %s81, %s95
    %p97 = scmp.eq.s32.totalorder %s15, 0
    %p98 = por %p96, %p97
    %s99 = ssub.s32 %s16, %s28
    %s100 = ssub.s32 %s17, %s24
    %s101 = sor.u32 %s99, %s100
    %p102 = scmp.eq.s32.totalorder %s101, 0
    %s104 = sadd.s32 %s103, 1
    %s105 = scalar_select %p102, %s103, %s104
    %p108 = pneg %p102
    %p109 = scmp.eq.s32.totalorder %s9, 1
    %p110 = por %p108, %p109
    %p111 = scmp.ne.s32.totalorder %s103, %s106
    %p112 = scmp.eq.s32.totalorder %s9, 0
    %p113 = por %p111, %p112
    %p114 = scmp.ne.s32.totalorder %s103, %s106
    %p115 = scmp.eq.s32.totalorder %s14, 1
    %p116 = por %p114, %p115
    %p117 = scmp.ne.s32.totalorder %s106, %s107
    %p118 = scmp.eq.s32.totalorder %s14, 0
    %p119 = por %p117, %p118
    %p120 = scmp.ne.s32.totalorder %s106, %s107
    %p121 = scmp.eq.s32.totalorder %s15, 1
    %p122 = por %p120, %p121
    %p124 = scmp.ne.s32.totalorder %s107, %s123
    %p125 = scmp.eq.s32.totalorder %s15, 0
    %p126 = por %p124, %p125
    %p127 = scmp.le.s32.totalorder 1, %s9
    %p128 = scmp.lt.s32.totalorder %s9, 3
    %p129 = pnand %p127, %p128
    %p130 = pneg %p129
    // Predicated region
    $region9: #{_lambda_.25} parent=5 // pred_check
      _
    $region10: #{_lambda_.25} parent=5 // pred_check_branch
      %132 = sbr.rel (%p129) target = $region12
    $region11: #{_lambda_.25} parent=5 // pred_region
      %s133 = ssub.s32 %s9, 1
      // Predicated region
      $region13: #{_lambda_.25} parent=11 // pred_check
        %p134 = pneg %p70
      $region14: #{_lambda_.25} parent=11 // pred_check_branch
        %136 = sbr.rel (%p134) target = $region16
      $region15: #{_lambda_.25} parent=11 // pred_region
        _
      $region16: #{_lambda_.25} parent=11 // pred_fallthru
        _
      // Predicated region
      $region17: #{_lambda_.25} parent=11 // pred_check
        %p137 = pneg %p91
      $region18: #{_lambda_.25} parent=11 // pred_check_branch
        %139 = sbr.rel (%p137) target = $region20
      $region19: #{_lambda_.25} parent=11 // pred_region
        _
      $region20: #{_lambda_.25} parent=11 // pred_fallthru
        _
    $region12: #{_lambda_.25} parent=5 // pred_fallthru
      _
    %p140 = scmp.lt.s32.totalorder %s9, 2
    // Predicated region
    $region21: #{_lambda_.25} parent=5 // pred_check
      %p141 = pneg %p140
    $region22: #{_lambda_.25} parent=5 // pred_check_branch
      %143 = sbr.rel (%p141) target = $region24
    $region23: #{_lambda_.25} parent=5 // pred_region
      // Predicated region
      $region25: #{_lambda_.25} parent=23 // pred_check
        %p144 = pneg %p43
      $region26: #{_lambda_.25} parent=23 // pred_check_branch
        %146 = sbr.rel (%p144) target = $region28
      $region27: #{_lambda_.25} parent=23 // pred_region
        %p147 = scmp.lt.s32.totalorder %s16, 1
        %s148 = scalar_select %p147, %s16, 1
        %p149 = scmp.lt.s32.totalorder %s17, 0
        %s150 = scalar_select %p149, %s17, 0
        %s151 = smul.addr %s150, 37
        %s152 = smul.addr %s148, 37
        %s153 = sadd.s32 %s151, %s152
        %s154 = smul.addr %s153, 8
        %s155 = scalar_lea.vmem %s0, %s154
      $region28: #{_lambda_.25} parent=23 // pred_fallthru
        _
    $region24: #{_lambda_.25} parent=5 // pred_fallthru
      _
    %p156 = scmp.le.s32.totalorder 1, %s9
    %p157 = scmp.lt.s32.totalorder %s9, 3
    %p158 = pnand %p156, %p157
    %p159 = pneg %p158
    // Predicated region
    $region29: #{_lambda_.25} parent=5 // pred_check
      _
    $region30: #{_lambda_.25} parent=5 // pred_check_branch
      %161 = sbr.rel (%p158) target = $region32
    $region31: #{_lambda_.25} parent=5 // pred_region
      %s162 = ssub.s32 %s9, 1
      %p163 = scmp.lt.s32.totalorder %s18, 1
      %s164 = scalar_select %p163, %s18, 1
      %p165 = scmp.lt.s32.totalorder %s19, 0
      %s166 = scalar_select %p165, %s19, 0
      %s167 = smul.addr %s166, 37
      %s168 = smul.addr %s164, 37
      %s169 = sadd.s32 %s167, %s168
      %s170 = smul.addr %s169, 8
      %s171 = scalar_lea.vmem %s0, %s170
      %p172 = pneg %p49
      %p173 = pneg %p46
      %p174 = pneg %p70
      %p175 = pneg %p67
      %p176 = pneg %p91
      %p177 = pneg %p88
      %p178 = pneg %p119
      %p179 = pneg %p116
      %s180 = smul.u32 34, %s19
      %p181 = scmp.lt.s32.totalorder %s18, 1
      %s182 = scalar_select %p181, %s18, 1
      %p183 = scmp.lt.s32.totalorder %s180, 33
      %s184 = scalar_select %p183, %s180, 33
      %s185 = smul.addr %s182, 34
      %s186 = sadd.s32 %s184, %s185
      %s187 = smul.addr %s186, 8
      %s188 = scalar_lea.vmem %s3, %s187
      %p189 = scmp.lt.s32.totalorder %s18, 1
      %s190 = scalar_select %p189, %s18, 1
      %p191 = scmp.lt.s32.totalorder %s19, 0
      %s192 = scalar_select %p191, %s19, 0
      %s193 = smul.addr %s192, 37
      %s194 = smul.addr %s190, 37
      %s195 = sadd.s32 %s193, %s194
      %s196 = smul.addr %s195, 8
      %s197 = scalar_lea.vmem %s0, %s196
      %s198 = smul.u32 34, %s19
      %p199 = scmp.lt.s32.totalorder %s18, 1
      %s200 = scalar_select %p199, %s18, 1
      %p201 = scmp.lt.s32.totalorder %s198, 33
      %s202 = scalar_select %p201, %s198, 33
      %s203 = smul.addr %s200, 34
      %s204 = sadd.s32 %s202, %s203
      %s205 = smul.addr %s204, 8
      %s206 = scalar_lea.vmem %s3, %s205
      %s207 = smul.u32 34, %s19
      %vm209 = vcmask 23552
      %210 = vst.msk [vmem:[#allocation2] sm:$0xff] %vm209, 0.0
      %211 = vst.msk [vmem:[#allocation2 + $0x8] sm:$0xff] %vm209, 0.0
      %212 = vst.msk [vmem:[#allocation2 + $0x10] sm:$0xff] %vm209, 0.0
      %213 = vst.msk [vmem:[#allocation2 + $0x18] sm:$0xff] %vm209, 0.0
      %214 = vst.msk [vmem:[#allocation2 + $0x20] sm:$0xff] %vm209, 0.0
      %215 = vst.msk [vmem:[#allocation2 + $0x28] sm:$0xff] %vm209, 0.0
      %216 = vst.msk [vmem:[#allocation2 + $0x30] sm:$0xff] %vm209, 0.0
      %217 = vst.msk [vmem:[#allocation2 + $0x38] sm:$0xff] %vm209, 0.0
      %218 = vst.msk [vmem:[#allocation2 + $0x40] sm:$0xff] %vm209, 0.0
      %219 = vst.msk [vmem:[#allocation2 + $0x48] sm:$0xff] %vm209, 0.0
      %220 = vst.msk [vmem:[#allocation2 + $0x50] sm:$0xff] %vm209, 0.0
      %221 = vst.msk [vmem:[#allocation2 + $0x58] sm:$0xff] %vm209, 0.0
      %222 = vst.msk [vmem:[#allocation2 + $0x60] sm:$0xff] %vm209, 0.0
      %223 = vst.msk [vmem:[#allocation2 + $0x68] sm:$0xff] %vm209, 0.0
      %224 = vst.msk [vmem:[#allocation2 + $0x70] sm:$0xff] %vm209, 0.0
      %225 = vst.msk [vmem:[#allocation2 + $0x78] sm:$0xff] %vm209, 0.0
      %226 = vst.msk [vmem:[#allocation2 + $0x80] sm:$0xff] %vm209, 0.0
      %227 = vst.msk [vmem:[#allocation2 + $0x88] sm:$0xff] %vm209, 0.0
      %228 = vst.msk [vmem:[#allocation2 + $0x90] sm:$0xff] %vm209, 0.0
      %229 = vst.msk [vmem:[#allocation2 + $0x98] sm:$0xff] %vm209, 0.0
      %230 = vst.msk [vmem:[#allocation2 + $0xa0] sm:$0xff] %vm209, 0.0
      %231 = vst.msk [vmem:[#allocation2 + $0xa8] sm:$0xff] %vm209, 0.0
      %232 = vst.msk [vmem:[#allocation2 + $0xb0] sm:$0xff] %vm209, 0.0
      %233 = vst.msk [vmem:[#allocation2 + $0xb8] sm:$0xff] %vm209, 0.0
      %234 = vst.msk [vmem:[#allocation2 + $0xc0] sm:$0xff] %vm209, 0.0
      %235 = vst.msk [vmem:[#allocation2 + $0xc8] sm:$0xff] %vm209, 0.0
      %236 = vst.msk [vmem:[#allocation2 + $0xd0] sm:$0xff] %vm209, 0.0
      %237 = vst.msk [vmem:[#allocation2 + $0xd8] sm:$0xff] %vm209, 0.0
      %238 = vst.msk [vmem:[#allocation2 + $0xe0] sm:$0xff] %vm209, 0.0
      %239 = vst.msk [vmem:[#allocation2 + $0xe8] sm:$0xff] %vm209, 0.0
      %240 = vst.msk [vmem:[#allocation2 + $0xf0] sm:$0xff] %vm209, 0.0
      %241 = vst.msk [vmem:[#allocation2 + $0xf8] sm:$0xff] %vm209, 0.0
      %242 = vst.msk [vmem:[#allocation2 + $0x100] sm:$0xff] %vm209, 0.0
      %243 = vst.msk [vmem:[#allocation2 + $0x108] sm:$0xff] %vm209, 0.0
      %v244 = vld [vmem:[%s197] sm:$0xff]
      %v245 = vld [vmem:[%s197 + $0x8] sm:$0xff]
      %v246 = vld [vmem:[%s197 + $0x10] sm:$0xff]
      %v247 = vld [vmem:[%s197 + $0x18] sm:$0xff]
      %v248 = vld [vmem:[%s197 + $0x20] sm:$0xff]
      %v249 = vld [vmem:[%s197 + $0x28] sm:$0xff]
      %v250 = vld [vmem:[%s197 + $0x30] sm:$0xff]
      %v251 = vld [vmem:[%s197 + $0x38] sm:$0xff]
      %v252 = vld [vmem:[%s197 + $0x40] sm:$0xff]
      %v253 = vld [vmem:[%s197 + $0x48] sm:$0xff]
      %v254 = vld [vmem:[%s197 + $0x50] sm:$0xff]
      %v255 = vld [vmem:[%s197 + $0x58] sm:$0xff]
      %v256 = vld [vmem:[%s197 + $0x60] sm:$0xff]
      %v257 = vld [vmem:[%s197 + $0x68] sm:$0xff]
      %v258 = vld [vmem:[%s197 + $0x70] sm:$0xff]
      %v259 = vld [vmem:[%s197 + $0x78] sm:$0xff]
      %v260 = vld [vmem:[%s197 + $0x80] sm:$0xff]
      %v261 = vld [vmem:[%s197 + $0x88] sm:$0xff]
      %v262 = vld [vmem:[%s197 + $0x90] sm:$0xff]
      %v263 = vld [vmem:[%s197 + $0x98] sm:$0xff]
      %v264 = vld [vmem:[%s197 + $0xa0] sm:$0xff]
      %v265 = vld [vmem:[%s197 + $0xa8] sm:$0xff]
      %v266 = vld [vmem:[%s197 + $0xb0] sm:$0xff]
      %v267 = vld [vmem:[%s197 + $0xb8] sm:$0xff]
      %v268 = vld [vmem:[%s197 + $0xc0] sm:$0xff]
      %v269 = vld [vmem:[%s197 + $0xc8] sm:$0xff]
      %v270 = vld [vmem:[%s197 + $0xd0] sm:$0xff]
      %v271 = vld [vmem:[%s197 + $0xd8] sm:$0xff]
      %v272 = vld [vmem:[%s197 + $0xe0] sm:$0xff]
      %v273 = vld [vmem:[%s197 + $0xe8] sm:$0xff]
      %v274 = vld [vmem:[%s197 + $0xf0] sm:$0xff]
      %v275 = vld [vmem:[%s197 + $0xf8] sm:$0xff]
      %v276 = vld [vmem:[%s197 + $0x100] sm:$0xff]
      %v277 = vld [vmem:[%s197 + $0x108] sm:$0xff]
      %v278 = vmax.f32 %v244, 0.0
      %v279 = vmax.f32 %v245, 0.0
      %v280 = vmax.f32 %v246, 0.0
      %v281 = vmax.f32 %v247, 0.0
      %v282 = vmax.f32 %v248, 0.0
      %v283 = vmax.f32 %v249, 0.0
      %v284 = vmax.f32 %v250, 0.0
      %v285 = vmax.f32 %v251, 0.0
      %v286 = vmax.f32 %v252, 0.0
      %v287 = vmax.f32 %v253, 0.0
      %v288 = vmax.f32 %v254, 0.0
      %v289 = vmax.f32 %v255, 0.0
      %v290 = vmax.f32 %v256, 0.0
      %v291 = vmax.f32 %v257, 0.0
      %v292 = vmax.f32 %v258, 0.0
      %v293 = vmax.f32 %v259, 0.0
      %v294 = vmax.f32 %v260, 0.0
      %v295 = vmax.f32 %v261, 0.0
      %v296 = vmax.f32 %v262, 0.0
      %v297 = vmax.f32 %v263, 0.0
      %v298 = vmax.f32 %v264, 0.0
      %v299 = vmax.f32 %v265, 0.0
      %v300 = vmax.f32 %v266, 0.0
      %v301 = vmax.f32 %v267, 0.0
      %v302 = vmax.f32 %v268, 0.0
      %v303 = vmax.f32 %v269, 0.0
      %v304 = vmax.f32 %v270, 0.0
      %v305 = vmax.f32 %v271, 0.0
      %v306 = vmax.f32 %v272, 0.0
      %v307 = vmax.f32 %v273, 0.0
      %v308 = vmax.f32 %v274, 0.0
      %v309 = vmax.f32 %v275, 0.0
      %v310 = vmax.f32 %v276, 0.0
      %v311 = vmax.f32 %v277, 0.0
      %v312 = vld [vmem:[#allocation2] sm:$0xff]
      %v313 = vld [vmem:[#allocation2 + $0x8] sm:$0xff]
      %v314 = vld [vmem:[#allocation2 + $0x10] sm:$0xff]
      %v315 = vld [vmem:[#allocation2 + $0x18] sm:$0xff]
      %v316 = vld [vmem:[#allocation2 + $0x20] sm:$0xff]
      %v317 = vld [vmem:[#allocation2 + $0x28] sm:$0xff]
      %v318 = vld [vmem:[#allocation2 + $0x30] sm:$0xff]
      %v319 = vld [vmem:[#allocation2 + $0x38] sm:$0xff]
      %v320 = vld [vmem:[#allocation2 + $0x40] sm:$0xff]
      %v321 = vld [vmem:[#allocation2 + $0x48] sm:$0xff]
      %v322 = vld [vmem:[#allocation2 + $0x50] sm:$0xff]
      %v323 = vld [vmem:[#allocation2 + $0x58] sm:$0xff]
      %v324 = vld [vmem:[#allocation2 + $0x60] sm:$0xff]
      %v325 = vld [vmem:[#allocation2 + $0x68] sm:$0xff]
      %v326 = vld [vmem:[#allocation2 + $0x70] sm:$0xff]
      %v327 = vld [vmem:[#allocation2 + $0x78] sm:$0xff]
      %v328 = vld [vmem:[#allocation2 + $0x80] sm:$0xff]
      %v329 = vld [vmem:[#allocation2 + $0x88] sm:$0xff]
      %v330 = vld [vmem:[#allocation2 + $0x90] sm:$0xff]
      %v331 = vld [vmem:[#allocation2 + $0x98] sm:$0xff]
      %v332 = vld [vmem:[#allocation2 + $0xa0] sm:$0xff]
      %v333 = vld [vmem:[#allocation2 + $0xa8] sm:$0xff]
      %v334 = vld [vmem:[#allocation2 + $0xb0] sm:$0xff]
      %v335 = vld [vmem:[#allocation2 + $0xb8] sm:$0xff]
      %v336 = vld [vmem:[#allocation2 + $0xc0] sm:$0xff]
      %v337 = vld [vmem:[#allocation2 + $0xc8] sm:$0xff]
      %v338 = vld [vmem:[#allocation2 + $0xd0] sm:$0xff]
      %v339 = vld [vmem:[#allocation2 + $0xd8] sm:$0xff]
      %v340 = vld [vmem:[#allocation2 + $0xe0] sm:$0xff]
      %v341 = vld [vmem:[#allocation2 + $0xe8] sm:$0xff]
      %v342 = vld [vmem:[#allocation2 + $0xf0] sm:$0xff]
      %v343 = vld [vmem:[#allocation2 + $0xf8] sm:$0xff]
      %v344 = vld [vmem:[#allocation2 + $0x100] sm:$0xff]
      %v345 = vld [vmem:[#allocation2 + $0x108] sm:$0xff]
      %v346 = vpack.c.bf16 %v279, %v278
      %v347 = vpack.c.bf16 %v281, %v280
      %v348 = vpack.c.bf16 %v283, %v282
      %v349 = vpack.c.bf16 %v285, %v284
      %v350 = vpack.c.bf16 %v287, %v286
      %v351 = vpack.c.bf16 %v289, %v288
      %v352 = vpack.c.bf16 %v291, %v290
      %v353 = vpack.c.bf16 %v293, %v292
      %v354 = vpack.c.bf16 %v295, %v294
      %v355 = vpack.c.bf16 %v297, %v296
      %v356 = vpack.c.bf16 %v299, %v298
      %v357 = vpack.c.bf16 %v301, %v300
      %v358 = vpack.c.bf16 %v303, %v302
      %v359 = vpack.c.bf16 %v305, %v304
      %v360 = vpack.c.bf16 %v307, %v306
      %v361 = vpack.c.bf16 %v309, %v308
      %v362 = vpack.c.bf16 %v311, %v310
      %v363 = vld [vmem:[%s1] sm:$0xf]
      %v364 = vld [vmem:[%s1 + $0x4] sm:$0xf]
      %v367 = vunpack.c.l.b16 %v363
      %v368 = vunpack.c.l.b16 %v364
      %v369 = vpack.c.b16 %v368, %v367
      %vm371 = vcmask 130048
      %v373 = vsel %vm371, %v346, 0
      %v376 = vsel %vm371, %v347, 0
      %v379 = vsel %vm371, %v348, 0
      %v382 = vsel %vm371, %v349, 0
      %v385 = vsel %vm371, %v350, 0
      %v388 = vsel %vm371, %v351, 0
      %v391 = vsel %vm371, %v352, 0
      %v394 = vsel %vm371, %v353, 0
      %v397 = vsel %vm371, %v354, 0
      %v400 = vsel %vm371, %v355, 0
      %v403 = vsel %vm371, %v356, 0
      %v406 = vsel %vm371, %v357, 0
      %v409 = vsel %vm371, %v358, 0
      %v412 = vsel %vm371, %v359, 0
      %v415 = vsel %vm371, %v360, 0
      %v418 = vsel %vm371, %v361, 0
      %v421 = vsel %vm371, %v362, 0
      %423 = vmatprep.subr.bf16.mxu0 0
      %424 = vmatpush1.bf16.msra.mxu0 0
      %425 = vmatprep.subr.bf16.mxu0 0
      %426 = vmatpush1.bf16.msra.mxu0 0
      %427 = vmatprep.subr.bf16.mxu0 0
      %428 = vmatpush1.bf16.msra.mxu0 0
      %429 = vmatprep.subr.bf16.mxu0 0
      %430 = vmatpush1.bf16.msra.mxu0 0
      %431 = vmatprep.subr.bf16.mxu0 0
      %432 = vmatpush1.bf16.msra.mxu0 0
      %433 = vmatprep.subr.bf16.mxu0 0
      %434 = vmatpush1.bf16.msra.mxu0 0
      %435 = vmatprep.subr.bf16.mxu0 0
      %436 = vmatpush1.bf16.msra.mxu0 0
      %437 = vmatprep.subr.bf16.mxu0 0
      %438 = vmatpush1.bf16.msra.mxu0 %v369
      %439 = vmatprep.subr.bf16.mxu0 0
      %440 = vmatpush2.bf16.msra.mxu0 0
      %441 = vmatprep.subr.bf16.mxu0 0
      %442 = vmatpush2.bf16.msra.mxu0 0
      %443 = vmatprep.subr.bf16.mxu0 0
      %444 = vmatpush2.bf16.msra.mxu0 0
      %445 = vmatprep.subr.bf16.mxu0 0
      %446 = vmatpush2.bf16.msra.mxu0 0
      %447 = vmatprep.subr.bf16.mxu0 0
      %448 = vmatpush2.bf16.msra.mxu0 0
      %449 = vmatprep.subr.bf16.mxu0 0
      %450 = vmatpush2.bf16.msra.mxu0 0
      %451 = vmatprep.subr.bf16.mxu0 0
      %452 = vmatpush2.bf16.msra.mxu0 0
      %453 = vmatprep.subr.bf16.mxu0 0
      %454 = vmatpush2.bf16.msra.mxu0 0
      %455 = vmatprep.mubr.bf16.mxu0 0
      %456 = vmatmul.mubr.bf16.gmra.mxu0 %v373
      %v457 = vpop.f32.mrf.mxu0
      %v458 = vadd.f32 0.0, %v457
      %v459 = vpop.f32.mrf.mxu0
      %v460 = vpop.f32.mrf.mxu0
      %v461 = vadd.f32 0.0, %v460
      %v462 = vpop.f32.mrf.mxu0
      %463 = vmatprep.mubr.bf16.mxu0 0
      %464 = vmatmul.mubr.bf16.gmra.mxu0 %v376
      %v465 = vpop.f32.mrf.mxu0
      %v466 = vadd.f32 0.0, %v465
      %v467 = vpop.f32.mrf.mxu0
      %v468 = vpop.f32.mrf.mxu0
      %v469 = vadd.f32 0.0, %v468
      %v470 = vpop.f32.mrf.mxu0
      %471 = vmatprep.mubr.bf16.mxu0 0
      %472 = vmatmul.mubr.bf16.gmra.mxu0 %v379
      %v473 = vpop.f32.mrf.mxu0
      %v474 = vadd.f32 0.0, %v473
      %v475 = vpop.f32.mrf.mxu0
      %v476 = vpop.f32.mrf.mxu0
      %v477 = vadd.f32 0.0, %v476
      %v478 = vpop.f32.mrf.mxu0
      %479 = vmatprep.mubr.bf16.mxu0 0
      %480 = vmatmul.mubr.bf16.gmra.mxu0 %v382
      %v481 = vpop.f32.mrf.mxu0
      %v482 = vadd.f32 0.0, %v481
      %v483 = vpop.f32.mrf.mxu0
      %v484 = vpop.f32.mrf.mxu0
      %v485 = vadd.f32 0.0, %v484
      %v486 = vpop.f32.mrf.mxu0
      %487 = vmatprep.mubr.bf16.mxu0 0
      %488 = vmatmul.mubr.bf16.gmra.mxu0 %v385
      %v489 = vpop.f32.mrf.mxu0
      %v490 = vadd.f32 0.0, %v489
      %v491 = vpop.f32.mrf.mxu0
      %v492 = vpop.f32.mrf.mxu0
      %v493 = vadd.f32 0.0, %v492
      %v494 = vpop.f32.mrf.mxu0
      %495 = vmatprep.mubr.bf16.mxu0 0
      %496 = vmatmul.mubr.bf16.gmra.mxu0 %v388
      %v497 = vpop.f32.mrf.mxu0
      %v498 = vadd.f32 0.0, %v497
      %v499 = vpop.f32.mrf.mxu0
      %v500 = vpop.f32.mrf.mxu0
      %v501 = vadd.f32 0.0, %v500
      %v502 = vpop.f32.mrf.mxu0
      %503 = vmatprep.mubr.bf16.mxu0 0
      %504 = vmatmul.mubr.bf16.gmra.mxu0 %v391
      %v505 = vpop.f32.mrf.mxu0
      %v506 = vadd.f32 0.0, %v505
      %v507 = vpop.f32.mrf.mxu0
      %v508 = vpop.f32.mrf.mxu0
      %v509 = vadd.f32 0.0, %v508
      %v510 = vpop.f32.mrf.mxu0
      %511 = vmatprep.mubr.bf16.mxu0 0
      %512 = vmatmul.mubr.bf16.gmra.mxu0 %v394
      %v513 = vpop.f32.mrf.mxu0
      %v514 = vadd.f32 0.0, %v513
      %v515 = vpop.f32.mrf.mxu0
      %v516 = vpop.f32.mrf.mxu0
      %v517 = vadd.f32 0.0, %v516
      %v518 = vpop.f32.mrf.mxu0
      %519 = vmatprep.mubr.bf16.mxu0 0
      %520 = vmatmul.mubr.bf16.gmra.mxu0 %v397
      %v521 = vpop.f32.mrf.mxu0
      %v522 = vadd.f32 0.0, %v521
      %v523 = vpop.f32.mrf.mxu0
      %v524 = vpop.f32.mrf.mxu0
      %v525 = vadd.f32 0.0, %v524
      %v526 = vpop.f32.mrf.mxu0
      %527 = vmatprep.mubr.bf16.mxu0 0
      %528 = vmatmul.mubr.bf16.gmra.mxu0 %v400
      %v529 = vpop.f32.mrf.mxu0
      %v530 = vadd.f32 0.0, %v529
      %v531 = vpop.f32.mrf.mxu0
      %v532 = vpop.f32.mrf.mxu0
      %v533 = vadd.f32 0.0, %v532
      %v534 = vpop.f32.mrf.mxu0
      %535 = vmatprep.mubr.bf16.mxu0 0
      %536 = vmatmul.mubr.bf16.gmra.mxu0 %v403
      %v537 = vpop.f32.mrf.mxu0
      %v538 = vadd.f32 0.0, %v537
      %v539 = vpop.f32.mrf.mxu0
      %v540 = vpop.f32.mrf.mxu0
      %v541 = vadd.f32 0.0, %v540
      %v542 = vpop.f32.mrf.mxu0
      %543 = vmatprep.mubr.bf16.mxu0 0
      %544 = vmatmul.mubr.bf16.gmra.mxu0 %v406
      %v545 = vpop.f32.mrf.mxu0
      %v546 = vadd.f32 0.0, %v545
      %v547 = vpop.f32.mrf.mxu0
      %v548 = vpop.f32.mrf.mxu0
      %v549 = vadd.f32 0.0, %v548
      %v550 = vpop.f32.mrf.mxu0
      %551 = vmatprep.mubr.bf16.mxu0 0
      %552 = vmatmul.mubr.bf16.gmra.mxu0 %v409
      %v553 = vpop.f32.mrf.mxu0
      %v554 = vadd.f32 0.0, %v553
      %v555 = vpop.f32.mrf.mxu0
      %v556 = vpop.f32.mrf.mxu0
      %v557 = vadd.f32 0.0, %v556
      %v558 = vpop.f32.mrf.mxu0
      %559 = vmatprep.mubr.bf16.mxu0 0
      %560 = vmatmul.mubr.bf16.gmra.mxu0 %v412
      %v561 = vpop.f32.mrf.mxu0
      %v562 = vadd.f32 0.0, %v561
      %v563 = vpop.f32.mrf.mxu0
      %v564 = vpop.f32.mrf.mxu0
      %v565 = vadd.f32 0.0, %v564
      %v566 = vpop.f32.mrf.mxu0
      %567 = vmatprep.mubr.bf16.mxu0 0
      %568 = vmatmul.mubr.bf16.gmra.mxu0 %v415
      %v569 = vpop.f32.mrf.mxu0
      %v570 = vadd.f32 0.0, %v569
      %v571 = vpop.f32.mrf.mxu0
      %v572 = vpop.f32.mrf.mxu0
      %v573 = vadd.f32 0.0, %v572
      %v574 = vpop.f32.mrf.mxu0
      %575 = vmatprep.mubr.bf16.mxu0 0
      %576 = vmatmul.mubr.bf16.gmra.mxu0 %v418
      %v577 = vpop.f32.mrf.mxu0
      %v578 = vadd.f32 0.0, %v577
      %v579 = vpop.f32.mrf.mxu0
      %v580 = vpop.f32.mrf.mxu0
      %v581 = vadd.f32 0.0, %v580
      %v582 = vpop.f32.mrf.mxu0
      %583 = vmatprep.mubr.bf16.mxu0 0
      %584 = vmatmul.mubr.bf16.gmra.mxu0 %v421
      %v585 = vpop.f32.mrf.mxu0
      %v586 = vadd.f32 0.0, %v585
      %v587 = vpop.f32.mrf.mxu0
      %v588 = vpop.f32.mrf.mxu0
      %v589 = vadd.f32 0.0, %v588
      %v590 = vpop.f32.mrf.mxu0
      %591 = vdwg.mxu0
      %v592 = vadd.f32 %v312, %v458
      %v593 = vadd.f32 %v313, %v461
      %v594 = vadd.f32 %v314, %v466
      %v595 = vadd.f32 %v315, %v469
      %v596 = vadd.f32 %v316, %v474
      %v597 = vadd.f32 %v317, %v477
      %v598 = vadd.f32 %v318, %v482
      %v599 = vadd.f32 %v319, %v485
      %v600 = vadd.f32 %v320, %v490
      %v601 = vadd.f32 %v321, %v493
      %v602 = vadd.f32 %v322, %v498
      %v603 = vadd.f32 %v323, %v501
      %v604 = vadd.f32 %v324, %v506
      %v605 = vadd.f32 %v325, %v509
      %v606 = vadd.f32 %v326, %v514
      %v607 = vadd.f32 %v327, %v517
      %v608 = vadd.f32 %v328, %v522
      %v609 = vadd.f32 %v329, %v525
      %v610 = vadd.f32 %v330, %v530
      %v611 = vadd.f32 %v331, %v533
      %v612 = vadd.f32 %v332, %v538
      %v613 = vadd.f32 %v333, %v541
      %v614 = vadd.f32 %v334, %v546
      %v615 = vadd.f32 %v335, %v549
      %v616 = vadd.f32 %v336, %v554
      %v617 = vadd.f32 %v337, %v557
      %v618 = vadd.f32 %v338, %v562
      %v619 = vadd.f32 %v339, %v565
      %v620 = vadd.f32 %v340, %v570
      %v621 = vadd.f32 %v341, %v573
      %v622 = vadd.f32 %v342, %v578
      %v623 = vadd.f32 %v343, %v581
      %v624 = vadd.f32 %v344, %v586
      %v625 = vadd.f32 %v345, %v589
      %626 = vst.msk [vmem:[#allocation2] sm:$0xff] %vm209, %v592
      %627 = vst.msk [vmem:[#allocation2 + $0x8] sm:$0xff] %vm209, %v593
      %628 = vst.msk [vmem:[#allocation2 + $0x10] sm:$0xff] %vm209, %v594
      %629 = vst.msk [vmem:[#allocation2 + $0x18] sm:$0xff] %vm209, %v595
      %630 = vst.msk [vmem:[#allocation2 + $0x20] sm:$0xff] %vm209, %v596
      %631 = vst.msk [vmem:[#allocation2 + $0x28] sm:$0xff] %vm209, %v597
      %632 = vst.msk [vmem:[#allocation2 + $0x30] sm:$0xff] %vm209, %v598
      %633 = vst.msk [vmem:[#allocation2 + $0x38] sm:$0xff] %vm209, %v599
      %634 = vst.msk [vmem:[#allocation2 + $0x40] sm:$0xff] %vm209, %v600
      %635 = vst.msk [vmem:[#allocation2 + $0x48] sm:$0xff] %vm209, %v601
      %636 = vst.msk [vmem:[#allocation2 + $0x50] sm:$0xff] %vm209, %v602
      %637 = vst.msk [vmem:[#allocation2 + $0x58] sm:$0xff] %vm209, %v603
      %638 = vst.msk [vmem:[#allocation2 + $0x60] sm:$0xff] %vm209, %v604
      %639 = vst.msk [vmem:[#allocation2 + $0x68] sm:$0xff] %vm209, %v605
      %640 = vst.msk [vmem:[#allocation2 + $0x70] sm:$0xff] %vm209, %v606
      %641 = vst.msk [vmem:[#allocation2 + $0x78] sm:$0xff] %vm209, %v607
      %642 = vst.msk [vmem:[#allocation2 + $0x80] sm:$0xff] %vm209, %v608
      %643 = vst.msk [vmem:[#allocation2 + $0x88] sm:$0xff] %vm209, %v609
      %644 = vst.msk [vmem:[#allocation2 + $0x90] sm:$0xff] %vm209, %v610
      %645 = vst.msk [vmem:[#allocation2 + $0x98] sm:$0xff] %vm209, %v611
      %646 = vst.msk [vmem:[#allocation2 + $0xa0] sm:$0xff] %vm209, %v612
      %647 = vst.msk [vmem:[#allocation2 + $0xa8] sm:$0xff] %vm209, %v613
      %648 = vst.msk [vmem:[#allocation2 + $0xb0] sm:$0xff] %vm209, %v614
      %649 = vst.msk [vmem:[#allocation2 + $0xb8] sm:$0xff] %vm209, %v615
      %650 = vst.msk [vmem:[#allocation2 + $0xc0] sm:$0xff] %vm209, %v616
      %651 = vst.msk [vmem:[#allocation2 + $0xc8] sm:$0xff] %vm209, %v617
      %652 = vst.msk [vmem:[#allocation2 + $0xd0] sm:$0xff] %vm209, %v618
      %653 = vst.msk [vmem:[#allocation2 + $0xd8] sm:$0xff] %vm209, %v619
      %654 = vst.msk [vmem:[#allocation2 + $0xe0] sm:$0xff] %vm209, %v620
      %655 = vst.msk [vmem:[#allocation2 + $0xe8] sm:$0xff] %vm209, %v621
      %656 = vst.msk [vmem:[#allocation2 + $0xf0] sm:$0xff] %vm209, %v622
      %657 = vst.msk [vmem:[#allocation2 + $0xf8] sm:$0xff] %vm209, %v623
      %658 = vst.msk [vmem:[#allocation2 + $0x100] sm:$0xff] %vm209, %v624
      %659 = vst.msk [vmem:[#allocation2 + $0x108] sm:$0xff] %vm209, %v625
      %v660 = vld [vmem:[%s197 + $0x1] sm:$0xff]
      %v661 = vld [vmem:[%s197 + $0x9] sm:$0xff]
      %v662 = vld [vmem:[%s197 + $0x11] sm:$0xff]
      %v663 = vld [vmem:[%s197 + $0x19] sm:$0xff]
      %v664 = vld [vmem:[%s197 + $0x21] sm:$0xff]
      %v665 = vld [vmem:[%s197 + $0x29] sm:$0xff]
      %v666 = vld [vmem:[%s197 + $0x31] sm:$0xff]
      %v667 = vld [vmem:[%s197 + $0x39] sm:$0xff]
      %v668 = vld [vmem:[%s197 + $0x41] sm:$0xff]
      %v669 = vld [vmem:[%s197 + $0x49] sm:$0xff]
      %v670 = vld [vmem:[%s197 + $0x51] sm:$0xff]
      %v671 = vld [vmem:[%s197 + $0x59] sm:$0xff]
      %v672 = vld [vmem:[%s197 + $0x61] sm:$0xff]
      %v673 = vld [vmem:[%s197 + $0x69] sm:$0xff]
      %v674 = vld [vmem:[%s197 + $0x71] sm:$0xff]
      %v675 = vld [vmem:[%s197 + $0x79] sm:$0xff]
      %v676 = vld [vmem:[%s197 + $0x81] sm:$0xff]
      %v677 = vld [vmem:[%s197 + $0x89] sm:$0xff]
      %v678 = vld [vmem:[%s197 + $0x91] sm:$0xff]
      %v679 = vld [vmem:[%s197 + $0x99] sm:$0xff]
      %v680 = vld [vmem:[%s197 + $0xa1] sm:$0xff]
      %v681 = vld [vmem:[%s197 + $0xa9] sm:$0xff]
      %v682 = vld [vmem:[%s197 + $0xb1] sm:$0xff]
      %v683 = vld [vmem:[%s197 + $0xb9] sm:$0xff]
      %v684 = vld [vmem:[%s197 + $0xc1] sm:$0xff]
      %v685 = vld [vmem:[%s197 + $0xc9] sm:$0xff]
      %v686 = vld [vmem:[%s197 + $0xd1] sm:$0xff]
      %v687 = vld [vmem:[%s197 + $0xd9] sm:$0xff]
      %v688 = vld [vmem:[%s197 + $0xe1] sm:$0xff]
      %v689 = vld [vmem:[%s197 + $0xe9] sm:$0xff]
      %v690 = vld [vmem:[%s197 + $0xf1] sm:$0xff]
      %v691 = vld [vmem:[%s197 + $0xf9] sm:$0xff]
      %v692 = vld [vmem:[%s197 + $0x101] sm:$0xff]
      %v693 = vld [vmem:[%s197 + $0x109] sm:$0xff]
      %v694 = vmax.f32 %v660, 0.0
      %v695 = vmax.f32 %v661, 0.0
      %v696 = vmax.f32 %v662, 0.0
      %v697 = vmax.f32 %v663, 0.0
      %v698 = vmax.f32 %v664, 0.0
      %v699 = vmax.f32 %v665, 0.0
      %v700 = vmax.f32 %v666, 0.0
      %v701 = vmax.f32 %v667, 0.0
      %v702 = vmax.f32 %v668, 0.0
      %v703 = vmax.f32 %v669, 0.0
      %v704 = vmax.f32 %v670, 0.0
      %v705 = vmax.f32 %v671, 0.0
      %v706 = vmax.f32 %v672, 0.0
      %v707 = vmax.f32 %v673, 0.0
      %v708 = vmax.f32 %v674, 0.0
      %v709 = vmax.f32 %v675, 0.0
      %v710 = vmax.f32 %v676, 0.0
      %v711 = vmax.f32 %v677, 0.0
      %v712 = vmax.f32 %v678, 0.0
      %v713 = vmax.f32 %v679, 0.0
      %v714 = vmax.f32 %v680, 0.0
      %v715 = vmax.f32 %v681, 0.0
      %v716 = vmax.f32 %v682, 0.0
      %v717 = vmax.f32 %v683, 0.0
      %v718 = vmax.f32 %v684, 0.0
      %v719 = vmax.f32 %v685, 0.0
      %v720 = vmax.f32 %v686, 0.0
      %v721 = vmax.f32 %v687, 0.0
      %v722 = vmax.f32 %v688, 0.0
      %v723 = vmax.f32 %v689, 0.0
      %v724 = vmax.f32 %v690, 0.0
      %v725 = vmax.f32 %v691, 0.0
      %v726 = vmax.f32 %v692, 0.0
      %v727 = vmax.f32 %v693, 0.0
      %v728 = vld [vmem:[#allocation2] sm:$0xff]
      %v729 = vld [vmem:[#allocation2 + $0x8] sm:$0xff]
      %v730 = vld [vmem:[#allocation2 + $0x10] sm:$0xff]
      %v731 = vld [vmem:[#allocation2 + $0x18] sm:$0xff]
      %v732 = vld [vmem:[#allocation2 + $0x20] sm:$0xff]
      %v733 = vld [vmem:[#allocation2 + $0x28] sm:$0xff]
      %v734 = vld [vmem:[#allocation2 + $0x30] sm:$0xff]
      %v735 = vld [vmem:[#allocation2 + $0x38] sm:$0xff]
      %v736 = vld [vmem:[#allocation2 + $0x40] sm:$0xff]
      %v737 = vld [vmem:[#allocation2 + $0x48] sm:$0xff]
      %v738 = vld [vmem:[#allocation2 + $0x50] sm:$0xff]
      %v739 = vld [vmem:[#allocation2 + $0x58] sm:$0xff]
      %v740 = vld [vmem:[#allocation2 + $0x60] sm:$0xff]
      %v741 = vld [vmem:[#allocation2 + $0x68] sm:$0xff]
      %v742 = vld [vmem:[#allocation2 + $0x70] sm:$0xff]
      %v743 = vld [vmem:[#allocation2 + $0x78] sm:$0xff]
      %v744 = vld [vmem:[#allocation2 + $0x80] sm:$0xff]
      %v745 = vld [vmem:[#allocation2 + $0x88] sm:$0xff]
      %v746 = vld [vmem:[#allocation2 + $0x90] sm:$0xff]
      %v747 = vld [vmem:[#allocation2 + $0x98] sm:$0xff]
      %v748 = vld [vmem:[#allocation2 + $0xa0] sm:$0xff]
      %v749 = vld [vmem:[#allocation2 + $0xa8] sm:$0xff]
      %v750 = vld [vmem:[#allocation2 + $0xb0] sm:$0xff]
      %v751 = vld [vmem:[#allocation2 + $0xb8] sm:$0xff]
      %v752 = vld [vmem:[#allocation2 + $0xc0] sm:$0xff]
      %v753 = vld [vmem:[#allocation2 + $0xc8] sm:$0xff]
      %v754 = vld [vmem:[#allocation2 + $0xd0] sm:$0xff]
      %v755 = vld [vmem:[#allocation2 + $0xd8] sm:$0xff]
      %v756 = vld [vmem:[#allocation2 + $0xe0] sm:$0xff]
      %v757 = vld [vmem:[#allocation2 + $0xe8] sm:$0xff]
      %v758 = vld [vmem:[#allocation2 + $0xf0] sm:$0xff]
      %v759 = vld [vmem:[#allocation2 + $0xf8] sm:$0xff]
      %v760 = vld [vmem:[#allocation2 + $0x100] sm:$0xff]
      %v761 = vld [vmem:[#allocation2 + $0x108] sm:$0xff]
      %v762 = vpack.c.bf16 %v695, %v694
      %v763 = vpack.c.bf16 %v697, %v696
      %v764 = vpack.c.bf16 %v699, %v698
      %v765 = vpack.c.bf16 %v701, %v700
      %v766 = vpack.c.bf16 %v703, %v702
      %v767 = vpack.c.bf16 %v705, %v704
      %v768 = vpack.c.bf16 %v707, %v706
      %v769 = vpack.c.bf16 %v709, %v708
      %v770 = vpack.c.bf16 %v711, %v710
      %v771 = vpack.c.bf16 %v713, %v712
      %v772 = vpack.c.bf16 %v715, %v714
      %v773 = vpack.c.bf16 %v717, %v716
      %v774 = vpack.c.bf16 %v719, %v718
      %v775 = vpack.c.bf16 %v721, %v720
      %v776 = vpack.c.bf16 %v723, %v722
      %v777 = vpack.c.bf16 %v725, %v724
      %v778 = vpack.c.bf16 %v727, %v726
      %s779 = scalar_lea.vmem %s1, 8
      %v780 = vld [vmem:[%s779] sm:$0xf]
      %v781 = vld [vmem:[%s779 + $0x4] sm:$0xf]
      %v784 = vunpack.c.l.b16 %v780
      %v785 = vunpack.c.l.b16 %v781
      %v786 = vpack.c.b16 %v785, %v784
      %v789 = vsel %vm371, %v762, 0
      %v792 = vsel %vm371, %v763, 0
      %v795 = vsel %vm371, %v764, 0
      %v798 = vsel %vm371, %v765, 0
      %v801 = vsel %vm371, %v766, 0
      %v804 = vsel %vm371, %v767, 0
      %v807 = vsel %vm371, %v768, 0
      %v810 = vsel %vm371, %v769, 0
      %v813 = vsel %vm371, %v770, 0
      %v816 = vsel %vm371, %v771, 0
      %v819 = vsel %vm371, %v772, 0
      %v822 = vsel %vm371, %v773, 0
      %v825 = vsel %vm371, %v774, 0
      %v828 = vsel %vm371, %v775, 0
      %v831 = vsel %vm371, %v776, 0
      %v834 = vsel %vm371, %v777, 0
      %v837 = vsel %vm371, %v778, 0
      %839 = vmatprep.subr.bf16.mxu0 0
      %840 = vmatpush1.bf16.msra.mxu0 0
      %841 = vmatprep.subr.bf16.mxu0 0
      %842 = vmatpush1.bf16.msra.mxu0 0
      %843 = vmatprep.subr.bf16.mxu0 0
      %844 = vmatpush1.bf16.msra.mxu0 0
      %845 = vmatprep.subr.bf16.mxu0 0
      %846 = vmatpush1.bf16.msra.mxu0 0
      %847 = vmatprep.subr.bf16.mxu0 0
      %848 = vmatpush1.bf16.msra.mxu0 0
      %849 = vmatprep.subr.bf16.mxu0 0
      %850 = vmatpush1.bf16.msra.mxu0 0
      %851 = vmatprep.subr.bf16.mxu0 0
      %852 = vmatpush1.bf16.msra.mxu0 0
      %853 = vmatprep.subr.bf16.mxu0 0
      %854 = vmatpush1.bf16.msra.mxu0 %v786
      %855 = vmatprep.subr.bf16.mxu0 0
      %856 = vmatpush2.bf16.msra.mxu0 0
      %857 = vmatprep.subr.bf16.mxu0 0
      %858 = vmatpush2.bf16.msra.mxu0 0
      %859 = vmatprep.subr.bf16.mxu0 0
      %860 = vmatpush2.bf16.msra.mxu0 0
      %861 = vmatprep.subr.bf16.mxu0 0
      %862 = vmatpush2.bf16.msra.mxu0 0
      %863 = vmatprep.subr.bf16.mxu0 0
      %864 = vmatpush2.bf16.msra.mxu0 0
      %865 = vmatprep.subr.bf16.mxu0 0
      %866 = vmatpush2.bf16.msra.mxu0 0
      %867 = vmatprep.subr.bf16.mxu0 0
      %868 = vmatpush2.bf16.msra.mxu0 0
      %869 = vmatprep.subr.bf16.mxu0 0
      %870 = vmatpush2.bf16.msra.mxu0 0
      %871 = vmatprep.mubr.bf16.mxu0 0
      %872 = vmatmul.mubr.bf16.gmra.mxu0 %v789
      %v873 = vpop.f32.mrf.mxu0
      %v874 = vadd.f32 0.0, %v873
      %v875 = vpop.f32.mrf.mxu0
      %v876 = vpop.f32.mrf.mxu0
      %v877 = vadd.f32 0.0, %v876
      %v878 = vpop.f32.mrf.mxu0
      %879 = vmatprep.mubr.bf16.mxu0 0
      %880 = vmatmul.mubr.bf16.gmra.mxu0 %v792
      %v881 = vpop.f32.mrf.mxu0
      %v882 = vadd.f32 0.0, %v881
      %v883 = vpop.f32.mrf.mxu0
      %v884 = vpop.f32.mrf.mxu0
      %v885 = vadd.f32 0.0, %v884
      %v886 = vpop.f32.mrf.mxu0
      %887 = vmatprep.mubr.bf16.mxu0 0
      %888 = vmatmul.mubr.bf16.gmra.mxu0 %v795
      %v889 = vpop.f32.mrf.mxu0
      %v890 = vadd.f32 0.0, %v889
      %v891 = vpop.f32.mrf.mxu0
      %v892 = vpop.f32.mrf.mxu0
      %v893 = vadd.f32 0.0, %v892
      %v894 = vpop.f32.mrf.mxu0
      %895 = vmatprep.mubr.bf16.mxu0 0
      %896 = vmatmul.mubr.bf16.gmra.mxu0 %v798
      %v897 = vpop.f32.mrf.mxu0
      %v898 = vadd.f32 0.0, %v897
      %v899 = vpop.f32.mrf.mxu0
      %v900 = vpop.f32.mrf.mxu0
      %v901 = vadd.f32 0.0, %v900
      %v902 = vpop.f32.mrf.mxu0
      %903 = vmatprep.mubr.bf16.mxu0 0
      %904 = vmatmul.mubr.bf16.gmra.mxu0 %v801
      %v905 = vpop.f32.mrf.mxu0
      %v906 = vadd.f32 0.0, %v905
      %v907 = vpop.f32.mrf.mxu0
      %v908 = vpop.f32.mrf.mxu0
      %v909 = vadd.f32 0.0, %v908
      %v910 = vpop.f32.mrf.mxu0
      %911 = vmatprep.mubr.bf16.mxu0 0
      %912 = vmatmul.mubr.bf16.gmra.mxu0 %v804
      %v913 = vpop.f32.mrf.mxu0
      %v914 = vadd.f32 0.0, %v913
      %v915 = vpop.f32.mrf.mxu0
      %v916 = vpop.f32.mrf.mxu0
      %v917 = vadd.f32 0.0, %v916
      %v918 = vpop.f32.mrf.mxu0
      %919 = vmatprep.mubr.bf16.mxu0 0
      %920 = vmatmul.mubr.bf16.gmra.mxu0 %v807
      %v921 = vpop.f32.mrf.mxu0
      %v922 = vadd.f32 0.0, %v921
      %v923 = vpop.f32.mrf.mxu0
      %v924 = vpop.f32.mrf.mxu0
      %v925 = vadd.f32 0.0, %v924
      %v926 = vpop.f32.mrf.mxu0
      %927 = vmatprep.mubr.bf16.mxu0 0
      %928 = vmatmul.mubr.bf16.gmra.mxu0 %v810
      %v929 = vpop.f32.mrf.mxu0
      %v930 = vadd.f32 0.0, %v929
      %v931 = vpop.f32.mrf.mxu0
      %v932 = vpop.f32.mrf.mxu0
      %v933 = vadd.f32 0.0, %v932
      %v934 = vpop.f32.mrf.mxu0
      %935 = vmatprep.mubr.bf16.mxu0 0
      %936 = vmatmul.mubr.bf16.gmra.mxu0 %v813
      %v937 = vpop.f32.mrf.mxu0
      %v938 = vadd.f32 0.0, %v937
      %v939 = vpop.f32.mrf.mxu0
      %v940 = vpop.f32.mrf.mxu0
      %v941 = vadd.f32 0.0, %v940
      %v942 = vpop.f32.mrf.mxu0
      %943 = vmatprep.mubr.bf16.mxu0 0
      %944 = vmatmul.mubr.bf16.gmra.mxu0 %v816
      %v945 = vpop.f32.mrf.mxu0
      %v946 = vadd.f32 0.0, %v945
      %v947 = vpop.f32.mrf.mxu0
      %v948 = vpop.f32.mrf.mxu0
      %v949 = vadd.f32 0.0, %v948
      %v950 = vpop.f32.mrf.mxu0
      %951 = vmatprep.mubr.bf16.mxu0 0
      %952 = vmatmul.mubr.bf16.gmra.mxu0 %v819
      %v953 = vpop.f32.mrf.mxu0
      %v954 = vadd.f32 0.0, %v953
      %v955 = vpop.f32.mrf.mxu0
      %v956 = vpop.f32.mrf.mxu0
      %v957 = vadd.f32 0.0, %v956
      %v958 = vpop.f32.mrf.mxu0
      %959 = vmatprep.mubr.bf16.mxu0 0
      %960 = vmatmul.mubr.bf16.gmra.mxu0 %v822
      %v961 = vpop.f32.mrf.mxu0
      %v962 = vadd.f32 0.0, %v961
      %v963 = vpop.f32.mrf.mxu0
      %v964 = vpop.f32.mrf.mxu0
      %v965 = vadd.f32 0.0, %v964
      %v966 = vpop.f32.mrf.mxu0
      %967 = vmatprep.mubr.bf16.mxu0 0
      %968 = vmatmul.mubr.bf16.gmra.mxu0 %v825
      %v969 = vpop.f32.mrf.mxu0
      %v970 = vadd.f32 0.0, %v969
      %v971 = vpop.f32.mrf.mxu0
      %v972 = vpop.f32.mrf.mxu0
      %v973 = vadd.f32 0.0, %v972
      %v974 = vpop.f32.mrf.mxu0
      %975 = vmatprep.mubr.bf16.mxu0 0
      %976 = vmatmul.mubr.bf16.gmra.mxu0 %v828
      %v977 = vpop.f32.mrf.mxu0
      %v978 = vadd.f32 0.0, %v977
      %v979 = vpop.f32.mrf.mxu0
      %v980 = vpop.f32.mrf.mxu0
      %v981 = vadd.f32 0.0, %v980
      %v982 = vpop.f32.mrf.mxu0
      %983 = vmatprep.mubr.bf16.mxu0 0
      %984 = vmatmul.mubr.bf16.gmra.mxu0 %v831
      %v985 = vpop.f32.mrf.mxu0
      %v986 = vadd.f32 0.0, %v985
      %v987 = vpop.f32.mrf.mxu0
      %v988 = vpop.f32.mrf.mxu0
      %v989 = vadd.f32 0.0, %v988
      %v990 = vpop.f32.mrf.mxu0
      %991 = vmatprep.mubr.bf16.mxu0 0
      %992 = vmatmul.mubr.bf16.gmra.mxu0 %v834
      %v993 = vpop.f32.mrf.mxu0
      %v994 = vadd.f32 0.0, %v993
      %v995 = vpop.f32.mrf.mxu0
      %v996 = vpop.f32.mrf.mxu0
      %v997 = vadd.f32 0.0, %v996
      %v998 = vpop.f32.mrf.mxu0
      %999 = vmatprep.mubr.bf16.mxu0 0
      %1000 = vmatmul.mubr.bf16.gmra.mxu0 %v837
      %v1001 = vpop.f32.mrf.mxu0
      %v1002 = vadd.f32 0.0, %v1001
      %v1003 = vpop.f32.mrf.mxu0
      %v1004 = vpop.f32.mrf.mxu0
      %v1005 = vadd.f32 0.0, %v1004
      %v1006 = vpop.f32.mrf.mxu0
      %1007 = vdwg.mxu0
      %v1008 = vadd.f32 %v728, %v874
      %v1009 = vadd.f32 %v729, %v877
      %v1010 = vadd.f32 %v730, %v882
      %v1011 = vadd.f32 %v731, %v885
      %v1012 = vadd.f32 %v732, %v890
      %v1013 = vadd.f32 %v733, %v893
      %v1014 = vadd.f32 %v734, %v898
      %v1015 = vadd.f32 %v735, %v901
      %v1016 = vadd.f32 %v736, %v906
      %v1017 = vadd.f32 %v737, %v909
      %v1018 = vadd.f32 %v738, %v914
      %v1019 = vadd.f32 %v739, %v917
      %v1020 = vadd.f32 %v740, %v922
      %v1021 = vadd.f32 %v741, %v925
      %v1022 = vadd.f32 %v742, %v930
      %v1023 = vadd.f32 %v743, %v933
      %v1024 = vadd.f32 %v744, %v938
      %v1025 = vadd.f32 %v745, %v941
      %v1026 = vadd.f32 %v746, %v946
      %v1027 = vadd.f32 %v747, %v949
      %v1028 = vadd.f32 %v748, %v954
      %v1029 = vadd.f32 %v749, %v957
      %v1030 = vadd.f32 %v750, %v962
      %v1031 = vadd.f32 %v751, %v965
      %v1032 = vadd.f32 %v752, %v970
      %v1033 = vadd.f32 %v753, %v973
      %v1034 = vadd.f32 %v754, %v978
      %v1035 = vadd.f32 %v755, %v981
      %v1036 = vadd.f32 %v756, %v986
      %v1037 = vadd.f32 %v757, %v989
      %v1038 = vadd.f32 %v758, %v994
      %v1039 = vadd.f32 %v759, %v997
      %v1040 = vadd.f32 %v760, %v1002
      %v1041 = vadd.f32 %v761, %v1005
      %1042 = vst.msk [vmem:[#allocation2] sm:$0xff] %vm209, %v1008
      %1043 = vst.msk [vmem:[#allocation2 + $0x8] sm:$0xff] %vm209, %v1009
      %1044 = vst.msk [vmem:[#allocation2 + $0x10] sm:$0xff] %vm209, %v1010
      %1045 = vst.msk [vmem:[#allocation2 + $0x18] sm:$0xff] %vm209, %v1011
      %1046 = vst.msk [vmem:[#allocation2 + $0x20] sm:$0xff] %vm209, %v1012
      %1047 = vst.msk [vmem:[#allocation2 + $0x28] sm:$0xff] %vm209, %v1013
      %1048 = vst.msk [vmem:[#allocation2 + $0x30] sm:$0xff] %vm209, %v1014
      %1049 = vst.msk [vmem:[#allocation2 + $0x38] sm:$0xff] %vm209, %v1015
      %1050 = vst.msk [vmem:[#allocation2 + $0x40] sm:$0xff] %vm209, %v1016
      %1051 = vst.msk [vmem:[#allocation2 + $0x48] sm:$0xff] %vm209, %v1017
      %1052 = vst.msk [vmem:[#allocation2 + $0x50] sm:$0xff] %vm209, %v1018
      %1053 = vst.msk [vmem:[#allocation2 + $0x58] sm:$0xff] %vm209, %v1019
      %1054 = vst.msk [vmem:[#allocation2 + $0x60] sm:$0xff] %vm209, %v1020
      %1055 = vst.msk [vmem:[#allocation2 + $0x68] sm:$0xff] %vm209, %v1021
      %1056 = vst.msk [vmem:[#allocation2 + $0x70] sm:$0xff] %vm209, %v1022
      %1057 = vst.msk [vmem:[#allocation2 + $0x78] sm:$0xff] %vm209, %v1023
      %1058 = vst.msk [vmem:[#allocation2 + $0x80] sm:$0xff] %vm209, %v1024
      %1059 = vst.msk [vmem:[#allocation2 + $0x88] sm:$0xff] %vm209, %v1025
      %1060 = vst.msk [vmem:[#allocation2 + $0x90] sm:$0xff] %vm209, %v1026
      %1061 = vst.msk [vmem:[#allocation2 + $0x98] sm:$0xff] %vm209, %v1027
      %1062 = vst.msk [vmem:[#allocation2 + $0xa0] sm:$0xff] %vm209, %v1028
      %1063 = vst.msk [vmem:[#allocation2 + $0xa8] sm:$0xff] %vm209, %v1029
      %1064 = vst.msk [vmem:[#allocation2 + $0xb0] sm:$0xff] %vm209, %v1030
      %1065 = vst.msk [vmem:[#allocation2 + $0xb8] sm:$0xff] %vm209, %v1031
      %1066 = vst.msk [vmem:[#allocation2 + $0xc0] sm:$0xff] %vm209, %v1032
      %1067 = vst.msk [vmem:[#allocation2 + $0xc8] sm:$0xff] %vm209, %v1033
      %1068 = vst.msk [vmem:[#allocation2 + $0xd0] sm:$0xff] %vm209, %v1034
      %1069 = vst.msk [vmem:[#allocation2 + $0xd8] sm:$0xff] %vm209, %v1035
      %1070 = vst.msk [vmem:[#allocation2 + $0xe0] sm:$0xff] %vm209, %v1036
      %1071 = vst.msk [vmem:[#allocation2 + $0xe8] sm:$0xff] %vm209, %v1037
      %1072 = vst.msk [vmem:[#allocation2 + $0xf0] sm:$0xff] %vm209, %v1038
      %1073 = vst.msk [vmem:[#allocation2 + $0xf8] sm:$0xff] %vm209, %v1039
      %1074 = vst.msk [vmem:[#allocation2 + $0x100] sm:$0xff] %vm209, %v1040
      %1075 = vst.msk [vmem:[#allocation2 + $0x108] sm:$0xff] %vm209, %v1041
      %v1076 = vld [vmem:[%s197 + $0x11] sm:$0xff]
      %v1077 = vld [vmem:[%s197 + $0x19] sm:$0xff]
      %v1078 = vld [vmem:[%s197 + $0x21] sm:$0xff]
      %v1079 = vld [vmem:[%s197 + $0x29] sm:$0xff]
      %v1080 = vld [vmem:[%s197 + $0x31] sm:$0xff]
      %v1081 = vld [vmem:[%s197 + $0x39] sm:$0xff]
      %v1082 = vld [vmem:[%s197 + $0x41] sm:$0xff]
      %v1083 = vld [vmem:[%s197 + $0x49] sm:$0xff]
      %v1084 = vld [vmem:[%s197 + $0x51] sm:$0xff]
      %v1085 = vld [vmem:[%s197 + $0x59] sm:$0xff]
      %v1086 = vld [vmem:[%s197 + $0x61] sm:$0xff]
      %v1087 = vld [vmem:[%s197 + $0x69] sm:$0xff]
      %v1088 = vld [vmem:[%s197 + $0x71] sm:$0xff]
      %v1089 = vld [vmem:[%s197 + $0x79] sm:$0xff]
      %v1090 = vld [vmem:[%s197 + $0x81] sm:$0xff]
      %v1091 = vld [vmem:[%s197 + $0x89] sm:$0xff]
      %v1092 = vld [vmem:[%s197 + $0x91] sm:$0xff]
      %v1093 = vld [vmem:[%s197 + $0x99] sm:$0xff]
      %v1094 = vld [vmem:[%s197 + $0xa1] sm:$0xff]
      %v1095 = vld [vmem:[%s197 + $0xa9] sm:$0xff]
      %v1096 = vld [vmem:[%s197 + $0xb1] sm:$0xff]
      %v1097 = vld [vmem:[%s197 + $0xb9] sm:$0xff]
      %v1098 = vld [vmem:[%s197 + $0xc1] sm:$0xff]
      %v1099 = vld [vmem:[%s197 + $0xc9] sm:$0xff]
      %v1100 = vld [vmem:[%s197 + $0xd1] sm:$0xff]
      %v1101 = vld [vmem:[%s197 + $0xd9] sm:$0xff]
      %v1102 = vld [vmem:[%s197 + $0xe1] sm:$0xff]
      %v1103 = vld [vmem:[%s197 + $0xe9] sm:$0xff]
      %v1104 = vld [vmem:[%s197 + $0xf1] sm:$0xff]
      %v1105 = vld [vmem:[%s197 + $0xf9] sm:$0xff]
      %v1106 = vld [vmem:[%s197 + $0x101] sm:$0xff]
      %v1107 = vld [vmem:[%s197 + $0x109] sm:$0xff]
      %v1108 = vld [vmem:[%s197 + $0x111] sm:$0xff]
      %v1109 = vld [vmem:[%s197 + $0x119] sm:$0xff]
      %v1110 = vmax.f32 %v1076, 0.0
      %v1111 = vmax.f32 %v1077, 0.0
      %v1112 = vmax.f32 %v1078, 0.0
      %v1113 = vmax.f32 %v1079, 0.0
      %v1114 = vmax.f32 %v1080, 0.0
      %v1115 = vmax.f32 %v1081, 0.0
      %v1116 = vmax.f32 %v1082, 0.0
      %v1117 = vmax.f32 %v1083, 0.0
      %v1118 = vmax.f32 %v1084, 0.0
      %v1119 = vmax.f32 %v1085, 0.0
      %v1120 = vmax.f32 %v1086, 0.0
      %v1121 = vmax.f32 %v1087, 0.0
      %v1122 = vmax.f32 %v1088, 0.0
      %v1123 = vmax.f32 %v1089, 0.0
      %v1124 = vmax.f32 %v1090, 0.0
      %v1125 = vmax.f32 %v1091, 0.0
      %v1126 = vmax.f32 %v1092, 0.0
      %v1127 = vmax.f32 %v1093, 0.0
      %v1128 = vmax.f32 %v1094, 0.0
      %v1129 = vmax.f32 %v1095, 0.0
      %v1130 = vmax.f32 %v1096, 0.0
      %v1131 = vmax.f32 %v1097, 0.0
      %v1132 = vmax.f32 %v1098, 0.0
      %v1133 = vmax.f32 %v1099, 0.0
      %v1134 = vmax.f32 %v1100, 0.0
      %v1135 = vmax.f32 %v1101, 0.0
      %v1136 = vmax.f32 %v1102, 0.0
      %v1137 = vmax.f32 %v1103, 0.0
      %v1138 = vmax.f32 %v1104, 0.0
      %v1139 = vmax.f32 %v1105, 0.0
      %v1140 = vmax.f32 %v1106, 0.0
      %v1141 = vmax.f32 %v1107, 0.0
      %v1142 = vmax.f32 %v1108, 0.0
      %v1143 = vmax.f32 %v1109, 0.0
      %v1144 = vld [vmem:[#allocation2] sm:$0xff]
      %v1145 = vld [vmem:[#allocation2 + $0x8] sm:$0xff]
      %v1146 = vld [vmem:[#allocation2 + $0x10] sm:$0xff]
      %v1147 = vld [vmem:[#allocation2 + $0x18] sm:$0xff]
      %v1148 = vld [vmem:[#allocation2 + $0x20] sm:$0xff]
      %v1149 = vld [vmem:[#allocation2 + $0x28] sm:$0xff]
      %v1150 = vld [vmem:[#allocation2 + $0x30] sm:$0xff]
      %v1151 = vld [vmem:[#allocation2 + $0x38] sm:$0xff]
      %v1152 = vld [vmem:[#allocation2 + $0x40] sm:$0xff]
      %v1153 = vld [vmem:[#allocation2 + $0x48] sm:$0xff]
      %v1154 = vld [vmem:[#allocation2 + $0x50] sm:$0xff]
      %v1155 = vld [vmem:[#allocation2 + $0x58] sm:$0xff]
      %v1156 = vld [vmem:[#allocation2 + $0x60] sm:$0xff]
      %v1157 = vld [vmem:[#allocation2 + $0x68] sm:$0xff]
      %v1158 = vld [vmem:[#allocation2 + $0x70] sm:$0xff]
      %v1159 = vld [vmem:[#allocation2 + $0x78] sm:$0xff]
      %v1160 = vld [vmem:[#allocation2 + $0x80] sm:$0xff]
      %v1161 = vld [vmem:[#allocation2 + $0x88] sm:$0xff]
      %v1162 = vld [vmem:[#allocation2 + $0x90] sm:$0xff]
      %v1163 = vld [vmem:[#allocation2 + $0x98] sm:$0xff]
      %v1164 = vld [vmem:[#allocation2 + $0xa0] sm:$0xff]
      %v1165 = vld [vmem:[#allocation2 + $0xa8] sm:$0xff]
      %v1166 = vld [vmem:[#allocation2 + $0xb0] sm:$0xff]
      %v1167 = vld [vmem:[#allocation2 + $0xb8] sm:$0xff]
      %v1168 = vld [vmem:[#allocation2 + $0xc0] sm:$0xff]
      %v1169 = vld [vmem:[#allocation2 + $0xc8] sm:$0xff]
      %v1170 = vld [vmem:[#allocation2 + $0xd0] sm:$0xff]
      %v1171 = vld [vmem:[#allocation2 + $0xd8] sm:$0xff]
      %v1172 = vld [vmem:[#allocation2 + $0xe0] sm:$0xff]
      %v1173 = vld [vmem:[#allocation2 + $0xe8] sm:$0xff]
      %v1174 = vld [vmem:[#allocation2 + $0xf0] sm:$0xff]
      %v1175 = vld [vmem:[#allocation2 + $0xf8] sm:$0xff]
      %v1176 = vld [vmem:[#allocation2 + $0x100] sm:$0xff]
      %v1177 = vld [vmem:[#allocation2 + $0x108] sm:$0xff]
      %v1178 = vpack.c.bf16 %v1111, %v1110
      %v1179 = vpack.c.bf16 %v1113, %v1112
      %v1180 = vpack.c.bf16 %v1115, %v1114
      %v1181 = vpack.c.bf16 %v1117, %v1116
      %v1182 = vpack.c.bf16 %v1119, %v1118
      %v1183 = vpack.c.bf16 %v1121, %v1120
      %v1184 = vpack.c.bf16 %v1123, %v1122
      %v1185 = vpack.c.bf16 %v1125, %v1124
      %v1186 = vpack.c.bf16 %v1127, %v1126
      %v1187 = vpack.c.bf16 %v1129, %v1128
      %v1188 = vpack.c.bf16 %v1131, %v1130
      %v1189 = vpack.c.bf16 %v1133, %v1132
      %v1190 = vpack.c.bf16 %v1135, %v1134
      %v1191 = vpack.c.bf16 %v1137, %v1136
      %v1192 = vpack.c.bf16 %v1139, %v1138
      %v1193 = vpack.c.bf16 %v1141, %v1140
      %v1194 = vpack.c.bf16 %v1143, %v1142
      %s1195 = scalar_lea.vmem %s1, 16
      %v1196 = vld [vmem:[%s1195] sm:$0xf]
      %v1197 = vld [vmem:[%s1195 + $0x4] sm:$0xf]
      %v1200 = vunpack.c.l.b16 %v1196
      %v1201 = vunpack.c.l.b16 %v1197
      %v1202 = vpack.c.b16 %v1201, %v1200
      %v1205 = vsel %vm371, %v1178, 0
      %v1208 = vsel %vm371, %v1179, 0
      %v1211 = vsel %vm371, %v1180, 0
      %v1214 = vsel %vm371, %v1181, 0
      %v1217 = vsel %vm371, %v1182, 0
      %v1220 = vsel %vm371, %v1183, 0
      %v1223 = vsel %vm371, %v1184, 0
      %v1226 = vsel %vm371, %v1185, 0
      %v1229 = vsel %vm371, %v1186, 0
      %v1232 = vsel %vm371, %v1187, 0
      %v1235 = vsel %vm371, %v1188, 0
      %v1238 = vsel %vm371, %v1189, 0
      %v1241 = vsel %vm371, %v1190, 0
      %v1244 = vsel %vm371, %v1191, 0
      %v1247 = vsel %vm371, %v1192, 0
      %v1250 = vsel %vm371, %v1193, 0
      %v1253 = vsel %vm371, %v1194, 0
      %1255 = vmatprep.subr.bf16.mxu0 0
      %1256 = vmatpush1.bf16.msra.mxu0 0
      %1257 = vmatprep.subr.bf16.mxu0 0
      %1258 = vmatpush1.bf16.msra.mxu0 0
      %1259 = vmatprep.subr.bf16.mxu0 0
      %1260 = vmatpush1.bf16.msra.mxu0 0
      %1261 = vmatprep.subr.bf16.mxu0 0
      %1262 = vmatpush1.bf16.msra.mxu0 0
      %1263 = vmatprep.subr.bf16.mxu0 0
      %1264 = vmatpush1.bf16.msra.mxu0 0
      %1265 = vmatprep.subr.bf16.mxu0 0
      %1266 = vmatpush1.bf16.msra.mxu0 0
      %1267 = vmatprep.subr.bf16.mxu0 0
      %1268 = vmatpush1.bf16.msra.mxu0 0
      %1269 = vmatprep.subr.bf16.mxu0 0
      %1270 = vmatpush1.bf16.msra.mxu0 %v1202
      %1271 = vmatprep.subr.bf16.mxu0 0
      %1272 = vmatpush2.bf16.msra.mxu0 0
      %1273 = vmatprep.subr.bf16.mxu0 0
      %1274 = vmatpush2.bf16.msra.mxu0 0
      %1275 = vmatprep.subr.bf16.mxu0 0
      %1276 = vmatpush2.bf16.msra.mxu0 0
      %1277 = vmatprep.subr.bf16.mxu0 0
      %1278 = vmatpush2.bf16.msra.mxu0 0
      %1279 = vmatprep.subr.bf16.mxu0 0
      %1280 = vmatpush2.bf16.msra.mxu0 0
      %1281 = vmatprep.subr.bf16.mxu0 0
      %1282 = vmatpush2.bf16.msra.mxu0 0
      %1283 = vmatprep.subr.bf16.mxu0 0
      %1284 = vmatpush2.bf16.msra.mxu0 0
      %1285 = vmatprep.subr.bf16.mxu0 0
      %1286 = vmatpush2.bf16.msra.mxu0 0
      %1287 = vmatprep.mubr.bf16.mxu0 0
      %1288 = vmatmul.mubr.bf16.gmra.mxu0 %v1205
      %v1289 = vpop.f32.mrf.mxu0
      %v1290 = vadd.f32 0.0, %v1289
      %v1291 = vpop.f32.mrf.mxu0
      %v1292 = vpop.f32.mrf.mxu0
      %v1293 = vadd.f32 0.0, %v1292
      %v1294 = vpop.f32.mrf.mxu0
      %1295 = vmatprep.mubr.bf16.mxu0 0
      %1296 = vmatmul.mubr.bf16.gmra.mxu0 %v1208
      %v1297 = vpop.f32.mrf.mxu0
      %v1298 = vadd.f32 0.0, %v1297
      %v1299 = vpop.f32.mrf.mxu0
      %v1300 = vpop.f32.mrf.mxu0
      %v1301 = vadd.f32 0.0, %v1300
      %v1302 = vpop.f32.mrf.mxu0
      %1303 = vmatprep.mubr.bf16.mxu0 0
      %1304 = vmatmul.mubr.bf16.gmra.mxu0 %v1211
      %v1305 = vpop.f32.mrf.mxu0
      %v1306 = vadd.f32 0.0, %v1305
      %v1307 = vpop.f32.mrf.mxu0
      %v1308 = vpop.f32.mrf.mxu0
      %v1309 = vadd.f32 0.0, %v1308
      %v1310 = vpop.f32.mrf.mxu0
      %1311 = vmatprep.mubr.bf16.mxu0 0
      %1312 = vmatmul.mubr.bf16.gmra.mxu0 %v1214
      %v1313 = vpop.f32.mrf.mxu0
      %v1314 = vadd.f32 0.0, %v1313
      %v1315 = vpop.f32.mrf.mxu0
      %v1316 = vpop.f32.mrf.mxu0
      %v1317 = vadd.f32 0.0, %v1316
      %v1318 = vpop.f32.mrf.mxu0
      %1319 = vmatprep.mubr.bf16.mxu0 0
      %1320 = vmatmul.mubr.bf16.gmra.mxu0 %v1217
      %v1321 = vpop.f32.mrf.mxu0
      %v1322 = vadd.f32 0.0, %v1321
      %v1323 = vpop.f32.mrf.mxu0
      %v1324 = vpop.f32.mrf.mxu0
      %v1325 = vadd.f32 0.0, %v1324
      %v1326 = vpop.f32.mrf.mxu0
      %1327 = vmatprep.mubr.bf16.mxu0 0
      %1328 = vmatmul.mubr.bf16.gmra.mxu0 %v1220
      %v1329 = vpop.f32.mrf.mxu0
      %v1330 = vadd.f32 0.0, %v1329
      %v1331 = vpop.f32.mrf.mxu0
      %v1332 = vpop.f32.mrf.mxu0
      %v1333 = vadd.f32 0.0, %v1332
      %v1334 = vpop.f32.mrf.mxu0
      %1335 = vmatprep.mubr.bf16.mxu0 0
      %1336 = vmatmul.mubr.bf16.gmra.mxu0 %v1223
      %v1337 = vpop.f32.mrf.mxu0
      %v1338 = vadd.f32 0.0, %v1337
      %v1339 = vpop.f32.mrf.mxu0
      %v1340 = vpop.f32.mrf.mxu0
      %v1341 = vadd.f32 0.0, %v1340
      %v1342 = vpop.f32.mrf.mxu0
      %1343 = vmatprep.mubr.bf16.mxu0 0
      %1344 = vmatmul.mubr.bf16.gmra.mxu0 %v1226
      %v1345 = vpop.f32.mrf.mxu0
      %v1346 = vadd.f32 0.0, %v1345
      %v1347 = vpop.f32.mrf.mxu0
      %v1348 = vpop.f32.mrf.mxu0
      %v1349 = vadd.f32 0.0, %v1348
      %v1350 = vpop.f32.mrf.mxu0
      %1351 = vmatprep.mubr.bf16.mxu0 0
      %1352 = vmatmul.mubr.bf16.gmra.mxu0 %v1229
      %v1353 = vpop.f32.mrf.mxu0
      %v1354 = vadd.f32 0.0, %v1353
      %v1355 = vpop.f32.mrf.mxu0
      %v1356 = vpop.f32.mrf.mxu0
      %v1357 = vadd.f32 0.0, %v1356
      %v1358 = vpop.f32.mrf.mxu0
      %1359 = vmatprep.mubr.bf16.mxu0 0
      %1360 = vmatmul.mubr.bf16.gmra.mxu0 %v1232
      %v1361 = vpop.f32.mrf.mxu0
      %v1362 = vadd.f32 0.0, %v1361
      %v1363 = vpop.f32.mrf.mxu0
      %v1364 = vpop.f32.mrf.mxu0
      %v1365 = vadd.f32 0.0, %v1364
      %v1366 = vpop.f32.mrf.mxu0
      %1367 = vmatprep.mubr.bf16.mxu0 0
      %1368 = vmatmul.mubr.bf16.gmra.mxu0 %v1235
      %v1369 = vpop.f32.mrf.mxu0
      %v1370 = vadd.f32 0.0, %v1369
      %v1371 = vpop.f32.mrf.mxu0
      %v1372 = vpop.f32.mrf.mxu0
      %v1373 = vadd.f32 0.0, %v1372
      %v1374 = vpop.f32.mrf.mxu0
      %1375 = vmatprep.mubr.bf16.mxu0 0
      %1376 = vmatmul.mubr.bf16.gmra.mxu0 %v1238
      %v1377 = vpop.f32.mrf.mxu0
      %v1378 = vadd.f32 0.0, %v1377
      %v1379 = vpop.f32.mrf.mxu0
      %v1380 = vpop.f32.mrf.mxu0
      %v1381 = vadd.f32 0.0, %v1380
      %v1382 = vpop.f32.mrf.mxu0
      %1383 = vmatprep.mubr.bf16.mxu0 0
      %1384 = vmatmul.mubr.bf16.gmra.mxu0 %v1241
      %v1385 = vpop.f32.mrf.mxu0
      %v1386 = vadd.f32 0.0, %v1385
      %v1387 = vpop.f32.mrf.mxu0
      %v1388 = vpop.f32.mrf.mxu0
      %v1389 = vadd.f32 0.0, %v1388
      %v1390 = vpop.f32.mrf.mxu0
      %1391 = vmatprep.mubr.bf16.mxu0 0
      %1392 = vmatmul.mubr.bf16.gmra.mxu0 %v1244
      %v1393 = vpop.f32.mrf.mxu0
      %v1394 = vadd.f32 0.0, %v1393
      %v1395 = vpop.f32.mrf.mxu0
      %v1396 = vpop.f32.mrf.mxu0
      %v1397 = vadd.f32 0.0, %v1396
      %v1398 = vpop.f32.mrf.mxu0
      %1399 = vmatprep.mubr.bf16.mxu0 0
      %1400 = vmatmul.mubr.bf16.gmra.mxu0 %v1247
      %v1401 = vpop.f32.mrf.mxu0
      %v1402 = vadd.f32 0.0, %v1401
      %v1403 = vpop.f32.mrf.mxu0
      %v1404 = vpop.f32.mrf.mxu0
      %v1405 = vadd.f32 0.0, %v1404
      %v1406 = vpop.f32.mrf.mxu0
      %1407 = vmatprep.mubr.bf16.mxu0 0
      %1408 = vmatmul.mubr.bf16.gmra.mxu0 %v1250
      %v1409 = vpop.f32.mrf.mxu0
      %v1410 = vadd.f32 0.0, %v1409
      %v1411 = vpop.f32.mrf.mxu0
      %v1412 = vpop.f32.mrf.mxu0
      %v1413 = vadd.f32 0.0, %v1412
      %v1414 = vpop.f32.mrf.mxu0
      %1415 = vmatprep.mubr.bf16.mxu0 0
      %1416 = vmatmul.mubr.bf16.gmra.mxu0 %v1253
      %v1417 = vpop.f32.mrf.mxu0
      %v1418 = vadd.f32 0.0, %v1417
      %v1419 = vpop.f32.mrf.mxu0
      %v1420 = vpop.f32.mrf.mxu0
      %v1421 = vadd.f32 0.0, %v1420
      %v1422 = vpop.f32.mrf.mxu0
      %1423 = vdwg.mxu0
      %v1424 = vadd.f32 %v1144, %v1290
      %v1425 = vadd.f32 %v1145, %v1293
      %v1426 = vadd.f32 %v1146, %v1298
      %v1427 = vadd.f32 %v1147, %v1301
      %v1428 = vadd.f32 %v1148, %v1306
      %v1429 = vadd.f32 %v1149, %v1309
      %v1430 = vadd.f32 %v1150, %v1314
      %v1431 = vadd.f32 %v1151, %v1317
      %v1432 = vadd.f32 %v1152, %v1322
      %v1433 = vadd.f32 %v1153, %v1325
      %v1434 = vadd.f32 %v1154, %v1330
      %v1435 = vadd.f32 %v1155, %v1333
      %v1436 = vadd.f32 %v1156, %v1338
      %v1437 = vadd.f32 %v1157, %v1341
      %v1438 = vadd.f32 %v1158, %v1346
      %v1439 = vadd.f32 %v1159, %v1349
      %v1440 = vadd.f32 %v1160, %v1354
      %v1441 = vadd.f32 %v1161, %v1357
      %v1442 = vadd.f32 %v1162, %v1362
      %v1443 = vadd.f32 %v1163, %v1365
      %v1444 = vadd.f32 %v1164, %v1370
      %v1445 = vadd.f32 %v1165, %v1373
      %v1446 = vadd.f32 %v1166, %v1378
      %v1447 = vadd.f32 %v1167, %v1381
      %v1448 = vadd.f32 %v1168, %v1386
      %v1449 = vadd.f32 %v1169, %v1389
      %v1450 = vadd.f32 %v1170, %v1394
      %v1451 = vadd.f32 %v1171, %v1397
      %v1452 = vadd.f32 %v1172, %v1402
      %v1453 = vadd.f32 %v1173, %v1405
      %v1454 = vadd.f32 %v1174, %v1410
      %v1455 = vadd.f32 %v1175, %v1413
      %v1456 = vadd.f32 %v1176, %v1418
      %v1457 = vadd.f32 %v1177, %v1421
      %1458 = vst.msk [vmem:[#allocation2] sm:$0xff] %vm209, %v1424
      %1459 = vst.msk [vmem:[#allocation2 + $0x8] sm:$0xff] %vm209, %v1425
      %1460 = vst.msk [vmem:[#allocation2 + $0x10] sm:$0xff] %vm209, %v1426
      %1461 = vst.msk [vmem:[#allocation2 + $0x18] sm:$0xff] %vm209, %v1427
      %1462 = vst.msk [vmem:[#allocation2 + $0x20] sm:$0xff] %vm209, %v1428
      %1463 = vst.msk [vmem:[#allocation2 + $0x28] sm:$0xff] %vm209, %v1429
      %1464 = vst.msk [vmem:[#allocation2 + $0x30] sm:$0xff] %vm209, %v1430
      %1465 = vst.msk [vmem:[#allocation2 + $0x38] sm:$0xff] %vm209, %v1431
      %1466 = vst.msk [vmem:[#allocation2 + $0x40] sm:$0xff] %vm209, %v1432
      %1467 = vst.msk [vmem:[#allocation2 + $0x48] sm:$0xff] %vm209, %v1433
      %1468 = vst.msk [vmem:[#allocation2 + $0x50] sm:$0xff] %vm209, %v1434
      %1469 = vst.msk [vmem:[#allocation2 + $0x58] sm:$0xff] %vm209, %v1435
      %1470 = vst.msk [vmem:[#allocation2 + $0x60] sm:$0xff] %vm209, %v1436
      %1471 = vst.msk [vmem:[#allocation2 + $0x68] sm:$0xff] %vm209, %v1437
      %1472 = vst.msk [vmem:[#allocation2 + $0x70] sm:$0xff] %vm209, %v1438
      %1473 = vst.msk [vmem:[#allocation2 + $0x78] sm:$0xff] %vm209, %v1439
      %1474 = vst.msk [vmem:[#allocation2 + $0x80] sm:$0xff] %vm209, %v1440
      %1475 = vst.msk [vmem:[#allocation2 + $0x88] sm:$0xff] %vm209, %v1441
      %1476 = vst.msk [vmem:[#allocation2 + $0x90] sm:$0xff] %vm209, %v1442
      %1477 = vst.msk [vmem:[#allocation2 + $0x98] sm:$0xff] %vm209, %v1443
      %1478 = vst.msk [vmem:[#allocation2 + $0xa0] sm:$0xff] %vm209, %v1444
      %1479 = vst.msk [vmem:[#allocation2 + $0xa8] sm:$0xff] %vm209, %v1445
      %1480 = vst.msk [vmem:[#allocation2 + $0xb0] sm:$0xff] %vm209, %v1446
      %1481 = vst.msk [vmem:[#allocation2 + $0xb8] sm:$0xff] %vm209, %v1447
      %1482 = vst.msk [vmem:[#allocation2 + $0xc0] sm:$0xff] %vm209, %v1448
      %1483 = vst.msk [vmem:[#allocation2 + $0xc8] sm:$0xff] %vm209, %v1449
      %1484 = vst.msk [vmem:[#allocation2 + $0xd0] sm:$0xff] %vm209, %v1450
      %1485 = vst.msk [vmem:[#allocation2 + $0xd8] sm:$0xff] %vm209, %v1451
      %1486 = vst.msk [vmem:[#allocation2 + $0xe0] sm:$0xff] %vm209, %v1452
      %1487 = vst.msk [vmem:[#allocation2 + $0xe8] sm:$0xff] %vm209, %v1453
      %1488 = vst.msk [vmem:[#allocation2 + $0xf0] sm:$0xff] %vm209, %v1454
      %1489 = vst.msk [vmem:[#allocation2 + $0xf8] sm:$0xff] %vm209, %v1455
      %1490 = vst.msk [vmem:[#allocation2 + $0x100] sm:$0xff] %vm209, %v1456
      %1491 = vst.msk [vmem:[#allocation2 + $0x108] sm:$0xff] %vm209, %v1457
      %v1492 = vld [vmem:[%s197 + $0x12] sm:$0xff]
      %v1493 = vld [vmem:[%s197 + $0x1a] sm:$0xff]
      %v1494 = vld [vmem:[%s197 + $0x22] sm:$0xff]
      %v1495 = vld [vmem:[%s197 + $0x2a] sm:$0xff]
      %v1496 = vld [vmem:[%s197 + $0x32] sm:$0xff]
      %v1497 = vld [vmem:[%s197 + $0x3a] sm:$0xff]
      %v1498 = vld [vmem:[%s197 + $0x42] sm:$0xff]
      %v1499 = vld [vmem:[%s197 + $0x4a] sm:$0xff]
      %v1500 = vld [vmem:[%s197 + $0x52] sm:$0xff]
      %v1501 = vld [vmem:[%s197 + $0x5a] sm:$0xff]
      %v1502 = vld [vmem:[%s197 + $0x62] sm:$0xff]
      %v1503 = vld [vmem:[%s197 + $0x6a] sm:$0xff]
      %v1504 = vld [vmem:[%s197 + $0x72] sm:$0xff]
      %v1505 = vld [vmem:[%s197 + $0x7a] sm:$0xff]
      %v1506 = vld [vmem:[%s197 + $0x82] sm:$0xff]
      %v1507 = vld [vmem:[%s197 + $0x8a] sm:$0xff]
      %v1508 = vld [vmem:[%s197 + $0x92] sm:$0xff]
      %v1509 = vld [vmem:[%s197 + $0x9a] sm:$0xff]
      %v1510 = vld [vmem:[%s197 + $0xa2] sm:$0xff]
      %v1511 = vld [vmem:[%s197 + $0xaa] sm:$0xff]
      %v1512 = vld [vmem:[%s197 + $0xb2] sm:$0xff]
      %v1513 = vld [vmem:[%s197 + $0xba] sm:$0xff]
      %v1514 = vld [vmem:[%s197 + $0xc2] sm:$0xff]
      %v1515 = vld [vmem:[%s197 + $0xca] sm:$0xff]
      %v1516 = vld [vmem:[%s197 + $0xd2] sm:$0xff]
      %v1517 = vld [vmem:[%s197 + $0xda] sm:$0xff]
      %v1518 = vld [vmem:[%s197 + $0xe2] sm:$0xff]
      %v1519 = vld [vmem:[%s197 + $0xea] sm:$0xff]
      %v1520 = vld [vmem:[%s197 + $0xf2] sm:$0xff]
      %v1521 = vld [vmem:[%s197 + $0xfa] sm:$0xff]
      %v1522 = vld [vmem:[%s197 + $0x102] sm:$0xff]
      %v1523 = vld [vmem:[%s197 + $0x10a] sm:$0xff]
      %v1524 = vld [vmem:[%s197 + $0x112] sm:$0xff]
      %v1525 = vld [vmem:[%s197 + $0x11a] sm:$0xff]
      %v1526 = vmax.f32 %v1492, 0.0
      %v1527 = vmax.f32 %v1493, 0.0
      %v1528 = vmax.f32 %v1494, 0.0
      %v1529 = vmax.f32 %v1495, 0.0
      %v1530 = vmax.f32 %v1496, 0.0
      %v1531 = vmax.f32 %v1497, 0.0
      %v1532 = vmax.f32 %v1498, 0.0
      %v1533 = vmax.f32 %v1499, 0.0
      %v1534 = vmax.f32 %v1500, 0.0
      %v1535 = vmax.f32 %v1501, 0.0
      %v1536 = vmax.f32 %v1502, 0.0
      %v1537 = vmax.f32 %v1503, 0.0
      %v1538 = vmax.f32 %v1504, 0.0
      %v1539 = vmax.f32 %v1505, 0.0
      %v1540 = vmax.f32 %v1506, 0.0
      %v1541 = vmax.f32 %v1507, 0.0
      %v1542 = vmax.f32 %v1508, 0.0
      %v1543 = vmax.f32 %v1509, 0.0
      %v1544 = vmax.f32 %v1510, 0.0
      %v1545 = vmax.f32 %v1511, 0.0
      %v1546 = vmax.f32 %v1512, 0.0
      %v1547 = vmax.f32 %v1513, 0.0
      %v1548 = vmax.f32 %v1514, 0.0
      %v1549 = vmax.f32 %v1515, 0.0
      %v1550 = vmax.f32 %v1516, 0.0
      %v1551 = vmax.f32 %v1517, 0.0
      %v1552 = vmax.f32 %v1518, 0.0
      %v1553 = vmax.f32 %v1519, 0.0
      %v1554 = vmax.f32 %v1520, 0.0
      %v1555 = vmax.f32 %v1521, 0.0
      %v1556 = vmax.f32 %v1522, 0.0
      %v1557 = vmax.f32 %v1523, 0.0
      %v1558 = vmax.f32 %v1524, 0.0
      %v1559 = vmax.f32 %v1525, 0.0
      %v1560 = vld [vmem:[#allocation2] sm:$0xff]
      %v1561 = vld [vmem:[#allocation2 + $0x8] sm:$0xff]
      %v1562 = vld [vmem:[#allocation2 + $0x10] sm:$0xff]
      %v1563 = vld [vmem:[#allocation2 + $0x18] sm:$0xff]
      %v1564 = vld [vmem:[#allocation2 + $0x20] sm:$0xff]
      %v1565 = vld [vmem:[#allocation2 + $0x28] sm:$0xff]
      %v1566 = vld [vmem:[#allocation2 + $0x30] sm:$0xff]
      %v1567 = vld [vmem:[#allocation2 + $0x38] sm:$0xff]
      %v1568 = vld [vmem:[#allocation2 + $0x40] sm:$0xff]
      %v1569 = vld [vmem:[#allocation2 + $0x48] sm:$0xff]
      %v1570 = vld [vmem:[#allocation2 + $0x50] sm:$0xff]
      %v1571 = vld [vmem:[#allocation2 + $0x58] sm:$0xff]
      %v1572 = vld [vmem:[#allocation2 + $0x60] sm:$0xff]
      %v1573 = vld [vmem:[#allocation2 + $0x68] sm:$0xff]
      %v1574 = vld [vmem:[#allocation2 + $0x70] sm:$0xff]
      %v1575 = vld [vmem:[#allocation2 + $0x78] sm:$0xff]
      %v1576 = vld [vmem:[#allocation2 + $0x80] sm:$0xff]
      %v1577 = vld [vmem:[#allocation2 + $0x88] sm:$0xff]
      %v1578 = vld [vmem:[#allocation2 + $0x90] sm:$0xff]
      %v1579 = vld [vmem:[#allocation2 + $0x98] sm:$0xff]
      %v1580 = vld [vmem:[#allocation2 + $0xa0] sm:$0xff]
      %v1581 = vld [vmem:[#allocation2 + $0xa8] sm:$0xff]
      %v1582 = vld [vmem:[#allocation2 + $0xb0] sm:$0xff]
      %v1583 = vld [vmem:[#allocation2 + $0xb8] sm:$0xff]
      %v1584 = vld [vmem:[#allocation2 + $0xc0] sm:$0xff]
      %v1585 = vld [vmem:[#allocation2 + $0xc8] sm:$0xff]
      %v1586 = vld [vmem:[#allocation2 + $0xd0] sm:$0xff]
      %v1587 = vld [vmem:[#allocation2 + $0xd8] sm:$0xff]
      %v1588 = vld [vmem:[#allocation2 + $0xe0] sm:$0xff]
      %v1589 = vld [vmem:[#allocation2 + $0xe8] sm:$0xff]
      %v1590 = vld [vmem:[#allocation2 + $0xf0] sm:$0xff]
      %v1591 = vld [vmem:[#allocation2 + $0xf8] sm:$0xff]
      %v1592 = vld [vmem:[#allocation2 + $0x100] sm:$0xff]
      %v1593 = vld [vmem:[#allocation2 + $0x108] sm:$0xff]
      %v1594 = vpack.c.bf16 %v1527, %v1526
      %v1595 = vpack.c.bf16 %v1529, %v1528
      %v1596 = vpack.c.bf16 %v1531, %v1530
      %v1597 = vpack.c.bf16 %v1533, %v1532
      %v1598 = vpack.c.bf16 %v1535, %v1534
      %v1599 = vpack.c.bf16 %v1537, %v1536
      %v1600 = vpack.c.bf16 %v1539, %v1538
      %v1601 = vpack.c.bf16 %v1541, %v1540
      %v1602 = vpack.c.bf16 %v1543, %v1542
      %v1603 = vpack.c.bf16 %v1545, %v1544
      %v1604 = vpack.c.bf16 %v1547, %v1546
      %v1605 = vpack.c.bf16 %v1549, %v1548
      %v1606 = vpack.c.bf16 %v1551, %v1550
      %v1607 = vpack.c.bf16 %v1553, %v1552
      %v1608 = vpack.c.bf16 %v1555, %v1554
      %v1609 = vpack.c.bf16 %v1557, %v1556
      %v1610 = vpack.c.bf16 %v1559, %v1558
      %s1611 = scalar_lea.vmem %s1, 24
      %v1612 = vld [vmem:[%s1611] sm:$0xf]
      %v1613 = vld [vmem:[%s1611 + $0x4] sm:$0xf]
      %v1616 = vunpack.c.l.b16 %v1612
      %v1617 = vunpack.c.l.b16 %v1613
      %v1618 = vpack.c.b16 %v1617, %v1616
      %v1621 = vsel %vm371, %v1594, 0
      %v1624 = vsel %vm371, %v1595, 0
      %v1627 = vsel %vm371, %v1596, 0
      %v1630 = vsel %vm371, %v1597, 0
      %v1633 = vsel %vm371, %v1598, 0
      %v1636 = vsel %vm371, %v1599, 0
      %v1639 = vsel %vm371, %v1600, 0
      %v1642 = vsel %vm371, %v1601, 0
      %v1645 = vsel %vm371, %v1602, 0
      %v1648 = vsel %vm371, %v1603, 0
      %v1651 = vsel %vm371, %v1604, 0
      %v1654 = vsel %vm371, %v1605, 0
      %v1657 = vsel %vm371, %v1606, 0
      %v1660 = vsel %vm371, %v1607, 0
      %v1663 = vsel %vm371, %v1608, 0
      %v1666 = vsel %vm371, %v1609, 0
      %v1669 = vsel %vm371, %v1610, 0
      %1671 = vmatprep.subr.bf16.mxu0 0
      %1672 = vmatpush1.bf16.msra.mxu0 0
      %1673 = vmatprep.subr.bf16.mxu0 0
      %1674 = vmatpush1.bf16.msra.mxu0 0
      %1675 = vmatprep.subr.bf16.mxu0 0
      %1676 = vmatpush1.bf16.msra.mxu0 0
      %1677 = vmatprep.subr.bf16.mxu0 0
      %1678 = vmatpush1.bf16.msra.mxu0 0
      %1679 = vmatprep.subr.bf16.mxu0 0
      %1680 = vmatpush1.bf16.msra.mxu0 0
      %1681 = vmatprep.subr.bf16.mxu0 0
      %1682 = vmatpush1.bf16.msra.mxu0 0
      %1683 = vmatprep.subr.bf16.mxu0 0
      %1684 = vmatpush1.bf16.msra.mxu0 0
      %1685 = vmatprep.subr.bf16.mxu0 0
      %1686 = vmatpush1.bf16.msra.mxu0 %v1618
      %1687 = vmatprep.subr.bf16.mxu0 0
      %1688 = vmatpush2.bf16.msra.mxu0 0
      %1689 = vmatprep.subr.bf16.mxu0 0
      %1690 = vmatpush2.bf16.msra.mxu0 0
      %1691 = vmatprep.subr.bf16.mxu0 0
      %1692 = vmatpush2.bf16.msra.mxu0 0
      %1693 = vmatprep.subr.bf16.mxu0 0
      %1694 = vmatpush2.bf16.msra.mxu0 0
      %1695 = vmatprep.subr.bf16.mxu0 0
      %1696 = vmatpush2.bf16.msra.mxu0 0
      %1697 = vmatprep.subr.bf16.mxu0 0
      %1698 = vmatpush2.bf16.msra.mxu0 0
      %1699 = vmatprep.subr.bf16.mxu0 0
      %1700 = vmatpush2.bf16.msra.mxu0 0
      %1701 = vmatprep.subr.bf16.mxu0 0
      %1702 = vmatpush2.bf16.msra.mxu0 0
      %1703 = vmatprep.mubr.bf16.mxu0 0
      %1704 = vmatmul.mubr.bf16.gmra.mxu0 %v1621
      %v1705 = vpop.f32.mrf.mxu0
      %v1706 = vadd.f32 0.0, %v1705
      %v1707 = vpop.f32.mrf.mxu0
      %v1708 = vpop.f32.mrf.mxu0
      %v1709 = vadd.f32 0.0, %v1708
      %v1710 = vpop.f32.mrf.mxu0
      %1711 = vmatprep.mubr.bf16.mxu0 0
      %1712 = vmatmul.mubr.bf16.gmra.mxu0 %v1624
      %v1713 = vpop.f32.mrf.mxu0
      %v1714 = vadd.f32 0.0, %v1713
      %v1715 = vpop.f32.mrf.mxu0
      %v1716 = vpop.f32.mrf.mxu0
      %v1717 = vadd.f32 0.0, %v1716
      %v1718 = vpop.f32.mrf.mxu0
      %1719 = vmatprep.mubr.bf16.mxu0 0
      %1720 = vmatmul.mubr.bf16.gmra.mxu0 %v1627
      %v1721 = vpop.f32.mrf.mxu0
      %v1722 = vadd.f32 0.0, %v1721
      %v1723 = vpop.f32.mrf.mxu0
      %v1724 = vpop.f32.mrf.mxu0
      %v1725 = vadd.f32 0.0, %v1724
      %v1726 = vpop.f32.mrf.mxu0
      %1727 = vmatprep.mubr.bf16.mxu0 0
      %1728 = vmatmul.mubr.bf16.gmra.mxu0 %v1630
      %v1729 = vpop.f32.mrf.mxu0
      %v1730 = vadd.f32 0.0, %v1729
      %v1731 = vpop.f32.mrf.mxu0
      %v1732 = vpop.f32.mrf.mxu0
      %v1733 = vadd.f32 0.0, %v1732
      %v1734 = vpop.f32.mrf.mxu0
      %1735 = vmatprep.mubr.bf16.mxu0 0
      %1736 = vmatmul.mubr.bf16.gmra.mxu0 %v1633
      %v1737 = vpop.f32.mrf.mxu0
      %v1738 = vadd.f32 0.0, %v1737
      %v1739 = vpop.f32.mrf.mxu0
      %v1740 = vpop.f32.mrf.mxu0
      %v1741 = vadd.f32 0.0, %v1740
      %v1742 = vpop.f32.mrf.mxu0
      %1743 = vmatprep.mubr.bf16.mxu0 0
      %1744 = vmatmul.mubr.bf16.gmra.mxu0 %v1636
      %v1745 = vpop.f32.mrf.mxu0
      %v1746 = vadd.f32 0.0, %v1745
      %v1747 = vpop.f32.mrf.mxu0
      %v1748 = vpop.f32.mrf.mxu0
      %v1749 = vadd.f32 0.0, %v1748
      %v1750 = vpop.f32.mrf.mxu0
      %1751 = vmatprep.mubr.bf16.mxu0 0
      %1752 = vmatmul.mubr.bf16.gmra.mxu0 %v1639
      %v1753 = vpop.f32.mrf.mxu0
      %v1754 = vadd.f32 0.0, %v1753
      %v1755 = vpop.f32.mrf.mxu0
      %v1756 = vpop.f32.mrf.mxu0
      %v1757 = vadd.f32 0.0, %v1756
      %v1758 = vpop.f32.mrf.mxu0
      %1759 = vmatprep.mubr.bf16.mxu0 0
      %1760 = vmatmul.mubr.bf16.gmra.mxu0 %v1642
      %v1761 = vpop.f32.mrf.mxu0
      %v1762 = vadd.f32 0.0, %v1761
      %v1763 = vpop.f32.mrf.mxu0
      %v1764 = vpop.f32.mrf.mxu0
      %v1765 = vadd.f32 0.0, %v1764
      %v1766 = vpop.f32.mrf.mxu0
      %1767 = vmatprep.mubr.bf16.mxu0 0
      %1768 = vmatmul.mubr.bf16.gmra.mxu0 %v1645
      %v1769 = vpop.f32.mrf.mxu0
      %v1770 = vadd.f32 0.0, %v1769
      %v1771 = vpop.f32.mrf.mxu0
      %v1772 = vpop.f32.mrf.mxu0
      %v1773 = vadd.f32 0.0, %v1772
      %v1774 = vpop.f32.mrf.mxu0
      %1775 = vmatprep.mubr.bf16.mxu0 0
      %1776 = vmatmul.mubr.bf16.gmra.mxu0 %v1648
      %v1777 = vpop.f32.mrf.mxu0
      %v1778 = vadd.f32 0.0, %v1777
      %v1779 = vpop.f32.mrf.mxu0
      %v1780 = vpop.f32.mrf.mxu0
      %v1781 = vadd.f32 0.0, %v1780
      %v1782 = vpop.f32.mrf.mxu0
      %1783 = vmatprep.mubr.bf16.mxu0 0
      %1784 = vmatmul.mubr.bf16.gmra.mxu0 %v1651
      %v1785 = vpop.f32.mrf.mxu0
      %v1786 = vadd.f32 0.0, %v1785
      %v1787 = vpop.f32.mrf.mxu0
      %v1788 = vpop.f32.mrf.mxu0
      %v1789 = vadd.f32 0.0, %v1788
      %v1790 = vpop.f32.mrf.mxu0
      %1791 = vmatprep.mubr.bf16.mxu0 0
      %1792 = vmatmul.mubr.bf16.gmra.mxu0 %v1654
      %v1793 = vpop.f32.mrf.mxu0
      %v1794 = vadd.f32 0.0, %v1793
      %v1795 = vpop.f32.mrf.mxu0
      %v1796 = vpop.f32.mrf.mxu0
      %v1797 = vadd.f32 0.0, %v1796
      %v1798 = vpop.f32.mrf.mxu0
      %1799 = vmatprep.mubr.bf16.mxu0 0
      %1800 = vmatmul.mubr.bf16.gmra.mxu0 %v1657
      %v1801 = vpop.f32.mrf.mxu0
      %v1802 = vadd.f32 0.0, %v1801
      %v1803 = vpop.f32.mrf.mxu0
      %v1804 = vpop.f32.mrf.mxu0
      %v1805 = vadd.f32 0.0, %v1804
      %v1806 = vpop.f32.mrf.mxu0
      %1807 = vmatprep.mubr.bf16.mxu0 0
      %1808 = vmatmul.mubr.bf16.gmra.mxu0 %v1660
      %v1809 = vpop.f32.mrf.mxu0
      %v1810 = vadd.f32 0.0, %v1809
      %v1811 = vpop.f32.mrf.mxu0
      %v1812 = vpop.f32.mrf.mxu0
      %v1813 = vadd.f32 0.0, %v1812
      %v1814 = vpop.f32.mrf.mxu0
      %1815 = vmatprep.mubr.bf16.mxu0 0
      %1816 = vmatmul.mubr.bf16.gmra.mxu0 %v1663
      %v1817 = vpop.f32.mrf.mxu0
      %v1818 = vadd.f32 0.0, %v1817
      %v1819 = vpop.f32.mrf.mxu0
      %v1820 = vpop.f32.mrf.mxu0
      %v1821 = vadd.f32 0.0, %v1820
      %v1822 = vpop.f32.mrf.mxu0
      %1823 = vmatprep.mubr.bf16.mxu0 0
      %1824 = vmatmul.mubr.bf16.gmra.mxu0 %v1666
      %v1825 = vpop.f32.mrf.mxu0
      %v1826 = vadd.f32 0.0, %v1825
      %v1827 = vpop.f32.mrf.mxu0
      %v1828 = vpop.f32.mrf.mxu0
      %v1829 = vadd.f32 0.0, %v1828
      %v1830 = vpop.f32.mrf.mxu0
      %1831 = vmatprep.mubr.bf16.mxu0 0
      %1832 = vmatmul.mubr.bf16.gmra.mxu0 %v1669
      %v1833 = vpop.f32.mrf.mxu0
      %v1834 = vadd.f32 0.0, %v1833
      %v1835 = vpop.f32.mrf.mxu0
      %v1836 = vpop.f32.mrf.mxu0
      %v1837 = vadd.f32 0.0, %v1836
      %v1838 = vpop.f32.mrf.mxu0
      %1839 = vdwg.mxu0
      %v1840 = vadd.f32 %v1560, %v1706
      %v1841 = vadd.f32 %v1561, %v1709
      %v1842 = vadd.f32 %v1562, %v1714
      %v1843 = vadd.f32 %v1563, %v1717
      %v1844 = vadd.f32 %v1564, %v1722
      %v1845 = vadd.f32 %v1565, %v1725
      %v1846 = vadd.f32 %v1566, %v1730
      %v1847 = vadd.f32 %v1567, %v1733
      %v1848 = vadd.f32 %v1568, %v1738
      %v1849 = vadd.f32 %v1569, %v1741
      %v1850 = vadd.f32 %v1570, %v1746
      %v1851 = vadd.f32 %v1571, %v1749
      %v1852 = vadd.f32 %v1572, %v1754
      %v1853 = vadd.f32 %v1573, %v1757
      %v1854 = vadd.f32 %v1574, %v1762
      %v1855 = vadd.f32 %v1575, %v1765
      %v1856 = vadd.f32 %v1576, %v1770
      %v1857 = vadd.f32 %v1577, %v1773
      %v1858 = vadd.f32 %v1578, %v1778
      %v1859 = vadd.f32 %v1579, %v1781
      %v1860 = vadd.f32 %v1580, %v1786
      %v1861 = vadd.f32 %v1581, %v1789
      %v1862 = vadd.f32 %v1582, %v1794
      %v1863 = vadd.f32 %v1583, %v1797
      %v1864 = vadd.f32 %v1584, %v1802
      %v1865 = vadd.f32 %v1585, %v1805
      %v1866 = vadd.f32 %v1586, %v1810
      %v1867 = vadd.f32 %v1587, %v1813
      %v1868 = vadd.f32 %v1588, %v1818
      %v1869 = vadd.f32 %v1589, %v1821
      %v1870 = vadd.f32 %v1590, %v1826
      %v1871 = vadd.f32 %v1591, %v1829
      %v1872 = vadd.f32 %v1592, %v1834
      %v1873 = vadd.f32 %v1593, %v1837
      %1874 = vst.msk [vmem:[#allocation2] sm:$0xff] %vm209, %v1840
      %1875 = vst.msk [vmem:[#allocation2 + $0x8] sm:$0xff] %vm209, %v1841
      %1876 = vst.msk [vmem:[#allocation2 + $0x10] sm:$0xff] %vm209, %v1842
      %1877 = vst.msk [vmem:[#allocation2 + $0x18] sm:$0xff] %vm209, %v1843
      %1878 = vst.msk [vmem:[#allocation2 + $0x20] sm:$0xff] %vm209, %v1844
      %1879 = vst.msk [vmem:[#allocation2 + $0x28] sm:$0xff] %vm209, %v1845
      %1880 = vst.msk [vmem:[#allocation2 + $0x30] sm:$0xff] %vm209, %v1846
      %1881 = vst.msk [vmem:[#allocation2 + $0x38] sm:$0xff] %vm209, %v1847
      %1882 = vst.msk [vmem:[#allocation2 + $0x40] sm:$0xff] %vm209, %v1848
      %1883 = vst.msk [vmem:[#allocation2 + $0x48] sm:$0xff] %vm209, %v1849
      %1884 = vst.msk [vmem:[#allocation2 + $0x50] sm:$0xff] %vm209, %v1850
      %1885 = vst.msk [vmem:[#allocation2 + $0x58] sm:$0xff] %vm209, %v1851
      %1886 = vst.msk [vmem:[#allocation2 + $0x60] sm:$0xff] %vm209, %v1852
      %1887 = vst.msk [vmem:[#allocation2 + $0x68] sm:$0xff] %vm209, %v1853
      %1888 = vst.msk [vmem:[#allocation2 + $0x70] sm:$0xff] %vm209, %v1854
      %1889 = vst.msk [vmem:[#allocation2 + $0x78] sm:$0xff] %vm209, %v1855
      %1890 = vst.msk [vmem:[#allocation2 + $0x80] sm:$0xff] %vm209, %v1856
      %1891 = vst.msk [vmem:[#allocation2 + $0x88] sm:$0xff] %vm209, %v1857
      %1892 = vst.msk [vmem:[#allocation2 + $0x90] sm:$0xff] %vm209, %v1858
      %1893 = vst.msk [vmem:[#allocation2 + $0x98] sm:$0xff] %vm209, %v1859
      %1894 = vst.msk [vmem:[#allocation2 + $0xa0] sm:$0xff] %vm209, %v1860
      %1895 = vst.msk [vmem:[#allocation2 + $0xa8] sm:$0xff] %vm209, %v1861
      %1896 = vst.msk [vmem:[#allocation2 + $0xb0] sm:$0xff] %vm209, %v1862
      %1897 = vst.msk [vmem:[#allocation2 + $0xb8] sm:$0xff] %vm209, %v1863
      %1898 = vst.msk [vmem:[#allocation2 + $0xc0] sm:$0xff] %vm209, %v1864
      %1899 = vst.msk [vmem:[#allocation2 + $0xc8] sm:$0xff] %vm209, %v1865
      %1900 = vst.msk [vmem:[#allocation2 + $0xd0] sm:$0xff] %vm209, %v1866
      %1901 = vst.msk [vmem:[#allocation2 + $0xd8] sm:$0xff] %vm209, %v1867
      %1902 = vst.msk [vmem:[#allocation2 + $0xe0] sm:$0xff] %vm209, %v1868
      %1903 = vst.msk [vmem:[#allocation2 + $0xe8] sm:$0xff] %vm209, %v1869
      %1904 = vst.msk [vmem:[#allocation2 + $0xf0] sm:$0xff] %vm209, %v1870
      %1905 = vst.msk [vmem:[#allocation2 + $0xf8] sm:$0xff] %vm209, %v1871
      %1906 = vst.msk [vmem:[#allocation2 + $0x100] sm:$0xff] %vm209, %v1872
      %1907 = vst.msk [vmem:[#allocation2 + $0x108] sm:$0xff] %vm209, %v1873
      %v1908 = vld [vmem:[#allocation2] sm:$0xff]
      %v1909 = vld [vmem:[#allocation2 + $0x8] sm:$0xff]
      %v1910 = vld [vmem:[#allocation2 + $0x10] sm:$0xff]
      %v1911 = vld [vmem:[#allocation2 + $0x18] sm:$0xff]
      %v1912 = vld [vmem:[#allocation2 + $0x20] sm:$0xff]
      %v1913 = vld [vmem:[#allocation2 + $0x28] sm:$0xff]
      %v1914 = vld [vmem:[#allocation2 + $0x30] sm:$0xff]
      %v1915 = vld [vmem:[#allocation2 + $0x38] sm:$0xff]
      %v1916 = vld [vmem:[#allocation2 + $0x40] sm:$0xff]
      %v1917 = vld [vmem:[#allocation2 + $0x48] sm:$0xff]
      %v1918 = vld [vmem:[#allocation2 + $0x50] sm:$0xff]
      %v1919 = vld [vmem:[#allocation2 + $0x58] sm:$0xff]
      %v1920 = vld [vmem:[#allocation2 + $0x60] sm:$0xff]
      %v1921 = vld [vmem:[#allocation2 + $0x68] sm:$0xff]
      %v1922 = vld [vmem:[#allocation2 + $0x70] sm:$0xff]
      %v1923 = vld [vmem:[#allocation2 + $0x78] sm:$0xff]
      %v1924 = vld [vmem:[#allocation2 + $0x80] sm:$0xff]
      %v1925 = vld [vmem:[#allocation2 + $0x88] sm:$0xff]
      %v1926 = vld [vmem:[#allocation2 + $0x90] sm:$0xff]
      %v1927 = vld [vmem:[#allocation2 + $0x98] sm:$0xff]
      %v1928 = vld [vmem:[#allocation2 + $0xa0] sm:$0xff]
      %v1929 = vld [vmem:[#allocation2 + $0xa8] sm:$0xff]
      %v1930 = vld [vmem:[#allocation2 + $0xb0] sm:$0xff]
      %v1931 = vld [vmem:[#allocation2 + $0xb8] sm:$0xff]
      %v1932 = vld [vmem:[#allocation2 + $0xc0] sm:$0xff]
      %v1933 = vld [vmem:[#allocation2 + $0xc8] sm:$0xff]
      %v1934 = vld [vmem:[#allocation2 + $0xd0] sm:$0xff]
      %v1935 = vld [vmem:[#allocation2 + $0xd8] sm:$0xff]
      %v1936 = vld [vmem:[#allocation2 + $0xe0] sm:$0xff]
      %v1937 = vld [vmem:[#allocation2 + $0xe8] sm:$0xff]
      %v1938 = vld [vmem:[#allocation2 + $0xf0] sm:$0xff]
      %v1939 = vld [vmem:[#allocation2 + $0xf8] sm:$0xff]
      %v1940 = vld [vmem:[#allocation2 + $0x100] sm:$0xff]
      %v1941 = vld [vmem:[#allocation2 + $0x108] sm:$0xff]
      %v1942 = vld [vmem:[%s2] sm:$0x1]
      %v1944 = vlaneseq
      %v1945 = vshrl.u32 %v1944, 7
      %v1946 = vsub.s32 0, %v1945
      %v1947 = vrot.slane %v1942, %v1946
      %v1949 = vadd.f32 %v1908, %v1947
      %v1950 = vadd.f32 %v1909, %v1947
      %v1951 = vadd.f32 %v1910, %v1947
      %v1952 = vadd.f32 %v1911, %v1947
      %v1953 = vadd.f32 %v1912, %v1947
      %v1954 = vadd.f32 %v1913, %v1947
      %v1955 = vadd.f32 %v1914, %v1947
      %v1956 = vadd.f32 %v1915, %v1947
      %v1957 = vadd.f32 %v1916, %v1947
      %v1958 = vadd.f32 %v1917, %v1947
      %v1959 = vadd.f32 %v1918, %v1947
      %v1960 = vadd.f32 %v1919, %v1947
      %v1961 = vadd.f32 %v1920, %v1947
      %v1962 = vadd.f32 %v1921, %v1947
      %v1963 = vadd.f32 %v1922, %v1947
      %v1964 = vadd.f32 %v1923, %v1947
      %v1965 = vadd.f32 %v1924, %v1947
      %v1966 = vadd.f32 %v1925, %v1947
      %v1967 = vadd.f32 %v1926, %v1947
      %v1968 = vadd.f32 %v1927, %v1947
      %v1969 = vadd.f32 %v1928, %v1947
      %v1970 = vadd.f32 %v1929, %v1947
      %v1971 = vadd.f32 %v1930, %v1947
      %v1972 = vadd.f32 %v1931, %v1947
      %v1973 = vadd.f32 %v1932, %v1947
      %v1974 = vadd.f32 %v1933, %v1947
      %v1975 = vadd.f32 %v1934, %v1947
      %v1976 = vadd.f32 %v1935, %v1947
      %v1977 = vadd.f32 %v1936, %v1947
      %v1978 = vadd.f32 %v1937, %v1947
      %v1979 = vadd.f32 %v1938, %v1947
      %v1980 = vadd.f32 %v1939, %v1947
      %v1981 = vadd.f32 %v1940, %v1947
      %v1982 = vadd.f32 %v1941, %v1947
      %1983 = vst.msk [vmem:[%s206] sm:$0xff] %vm209, %v1949
      %1984 = vst.msk [vmem:[%s206 + $0x8] sm:$0xff] %vm209, %v1950
      %1985 = vst.msk [vmem:[%s206 + $0x10] sm:$0xff] %vm209, %v1951
      %1986 = vst.msk [vmem:[%s206 + $0x18] sm:$0xff] %vm209, %v1952
      %1987 = vst.msk [vmem:[%s206 + $0x20] sm:$0xff] %vm209, %v1953
      %1988 = vst.msk [vmem:[%s206 + $0x28] sm:$0xff] %vm209, %v1954
      %1989 = vst.msk [vmem:[%s206 + $0x30] sm:$0xff] %vm209, %v1955
      %1990 = vst.msk [vmem:[%s206 + $0x38] sm:$0xff] %vm209, %v1956
      %1991 = vst.msk [vmem:[%s206 + $0x40] sm:$0xff] %vm209, %v1957
      %1992 = vst.msk [vmem:[%s206 + $0x48] sm:$0xff] %vm209, %v1958
      %1993 = vst.msk [vmem:[%s206 + $0x50] sm:$0xff] %vm209, %v1959
      %1994 = vst.msk [vmem:[%s206 + $0x58] sm:$0xff] %vm209, %v1960
      %1995 = vst.msk [vmem:[%s206 + $0x60] sm:$0xff] %vm209, %v1961
      %1996 = vst.msk [vmem:[%s206 + $0x68] sm:$0xff] %vm209, %v1962
      %1997 = vst.msk [vmem:[%s206 + $0x70] sm:$0xff] %vm209, %v1963
      %1998 = vst.msk [vmem:[%s206 + $0x78] sm:$0xff] %vm209, %v1964
      %1999 = vst.msk [vmem:[%s206 + $0x80] sm:$0xff] %vm209, %v1965
      %2000 = vst.msk [vmem:[%s206 + $0x88] sm:$0xff] %vm209, %v1966
      %2001 = vst.msk [vmem:[%s206 + $0x90] sm:$0xff] %vm209, %v1967
      %2002 = vst.msk [vmem:[%s206 + $0x98] sm:$0xff] %vm209, %v1968
      %2003 = vst.msk [vmem:[%s206 + $0xa0] sm:$0xff] %vm209, %v1969
      %2004 = vst.msk [vmem:[%s206 + $0xa8] sm:$0xff] %vm209, %v1970
      %2005 = vst.msk [vmem:[%s206 + $0xb0] sm:$0xff] %vm209, %v1971
      %2006 = vst.msk [vmem:[%s206 + $0xb8] sm:$0xff] %vm209, %v1972
      %2007 = vst.msk [vmem:[%s206 + $0xc0] sm:$0xff] %vm209, %v1973
      %2008 = vst.msk [vmem:[%s206 + $0xc8] sm:$0xff] %vm209, %v1974
      %2009 = vst.msk [vmem:[%s206 + $0xd0] sm:$0xff] %vm209, %v1975
      %2010 = vst.msk [vmem:[%s206 + $0xd8] sm:$0xff] %vm209, %v1976
      %2011 = vst.msk [vmem:[%s206 + $0xe0] sm:$0xff] %vm209, %v1977
      %2012 = vst.msk [vmem:[%s206 + $0xe8] sm:$0xff] %vm209, %v1978
      %2013 = vst.msk [vmem:[%s206 + $0xf0] sm:$0xff] %vm209, %v1979
      %2014 = vst.msk [vmem:[%s206 + $0xf8] sm:$0xff] %vm209, %v1980
      %2015 = vst.msk [vmem:[%s206 + $0x100] sm:$0xff] %vm209, %v1981
      %2016 = vst.msk [vmem:[%s206 + $0x108] sm:$0xff] %vm209, %v1982
      %s2017 = smul.u32 34, %s19
      %p2018 = scmp.lt.s32.totalorder %s18, 1
      %s2019 = scalar_select %p2018, %s18, 1
      %p2020 = scmp.lt.s32.totalorder %s2017, 33
      %s2021 = scalar_select %p2020, %s2017, 33
      %s2022 = smul.addr %s2019, 34
      %s2023 = sadd.s32 %s2021, %s2022
      %s2024 = smul.addr %s2023, 8
      %s2025 = scalar_lea.vmem %s3, %s2024
      // Predicated region
      $region33: #{_lambda_.25} parent=31 // pred_check
        %p2026 = pneg %p116
      $region34: #{_lambda_.25} parent=31 // pred_check_branch
        %2028 = sbr.rel (%p2026) target = $region36
      $region35: #{_lambda_.25} parent=31 // pred_region
        %s2029 = smul.u32 34, %s19
      $region36: #{_lambda_.25} parent=31 // pred_fallthru
        _
    $region32: #{_lambda_.25} parent=5 // pred_fallthru
      _
    %p2030 = scmp.le.s32.totalorder 2, %s9
    // Predicated region
    $region37: #{_lambda_.25} parent=5 // pred_check
      %p2031 = pneg %p2030
    $region38: #{_lambda_.25} parent=5 // pred_check_branch
      %2033 = sbr.rel (%p2031) target = $region40
    $region39: #{_lambda_.25} parent=5 // pred_region
      %s2034 = ssub.s32 %s9, 2
      // Predicated region
      $region41: #{_lambda_.25} parent=39 // pred_check
        %p2035 = pneg %p122
      $region42: #{_lambda_.25} parent=39 // pred_check_branch
        %2037 = sbr.rel (%p2035) target = $region44
      $region43: #{_lambda_.25} parent=39 // pred_region
        %s2038 = smul.u32 34, %s21
        %p2039 = scmp.lt.s32.totalorder %s20, 1
        %s2040 = scalar_select %p2039, %s20, 1
        %p2041 = scmp.lt.s32.totalorder %s2038, 33
        %s2042 = scalar_select %p2041, %s2038, 33
        %s2043 = smul.addr %s2040, 34
        %s2044 = sadd.s32 %s2042, %s2043
        %s2045 = smul.addr %s2044, 8
        %s2046 = scalar_lea.vmem %s3, %s2045
      $region44: #{_lambda_.25} parent=39 // pred_fallthru
        _
    $region40: #{_lambda_.25} parent=5 // pred_fallthru
      _
  $region6: #{_lambda_.25} parent=0 // loop_footer
    %s13 = sadd.s32 1, %s9
  $region7: #{_lambda_.25} parent=0 // loop_footer_branch
    %8 = sbr.rel target = $region3
  $region8: #{_lambda_.25} parent=0 // loop_exit
    _

</llo_original>
